<compile_context>
chip_gen: v7x
topology: tpu7x:2x2x1
jax: 0.10.0
libtpu: 0.0.40
codegen_flags: <defaults>
</compile_context>

<pallas_src>
import functools

import jax
import jax.numpy as jnp
from jax.experimental import pallas as pl
from jax.experimental.pallas import tpu as pltpu

BN_EPS = 1e-5
MM_DTYPE = jnp.bfloat16   # MXU operand dtype; accumulation stays f32.


# ----------------------------- in-kernel helpers --------------------------- #

def _bias_relu_bn(acc, b, gamma, beta):
    """bias + ReLU + training-mode BatchNorm (batch stats, biased var, one pass)."""
    acc = jnp.maximum(acc + b, 0.0)
    inv_m = 1.0 / acc.shape[0]
    mean = jnp.sum(acc, axis=0, keepdims=True) * inv_m
    ex2 = jnp.sum(acc * acc, axis=0, keepdims=True) * inv_m
    var = jnp.maximum(ex2 - mean * mean, 0.0)
    scale = gamma * jax.lax.rsqrt(var + BN_EPS)
    return acc * scale + (beta - mean * scale)


def _store_padded(xp_ref, act):
    """Write act (N,H,W,C) into a zero-initialized 1-pixel-halo VMEM scratch."""
    n, hh, ww, _ = act.shape
    xp_ref[...] = jnp.zeros(xp_ref.shape, xp_ref.dtype)
    xp_ref[:, 1:hh + 1, 1:ww + 1, :] = act.astype(xp_ref.dtype)


def _conv3x3(xp_ref, w_ref, *, n, hh, ww):
    """3x3 'same' conv as 9 accumulating MXU dots over shifted padded windows.

    xp_ref: (N, H+2, W+2, C) zero-padded activation in VMEM (f32).
    w_ref : (9*C, Cout) weight (bf16), row block k = tap (di, dj) with k=3*di+dj.
    """
    cin = xp_ref.shape[-1]
    m = n * hh * ww
    acc = None
    for di in range(3):
        for dj in range(3):
            k = di * 3 + dj
            tap = xp_ref[:, di:di + hh, dj:dj + ww, :].reshape(m, cin)
            part = jnp.dot(tap.astype(MM_DTYPE), w_ref[k * cin:(k + 1) * cin, :],
                           preferred_element_type=jnp.float32)
            acc = part if acc is None else acc + part
    return acc


def _maxpool2x2(acc, pool_ref, *, nh, ww):
    """Fused 2x2 max-pool of a row-major (nh*ww, C) activation.

    The activation is staged through a (nh, ww, C) VMEM scratch so W-pairs come
    back as stride-2 sublane reads; H-pairs are adjacent row blocks handled with
    a leading-dim-only reshape.  Returns (nh//2, ww//2, C).
    """
    c = acc.shape[-1]
    pool_ref[...] = acc.reshape(nh, ww, c)
    even = pool_ref[:, pl.ds(0, ww // 2, 2), :]          # w = 0, 2, 4, ...
    odd = pool_ref[:, pl.ds(1, ww // 2, 2), :]           # w = 1, 3, 5, ...
    wpool = jnp.maximum(even, odd)                       # (nh, ww//2, C)
    wpool = wpool.reshape(nh // 2, 2, ww // 2, c)        # split leading dim only
    return jnp.maximum(wpool[:, 0], wpool[:, 1])         # (nh//2, ww//2, C)


# ------------------------------- fused kernel ------------------------------ #

def _fcnn_kernel(p0_ref, w0_ref, b0_ref, g0_ref, bb0_ref,
                 w1_ref, b1_ref, g1_ref, bb1_ref,
                 w2_hbm, b2_ref, g2_ref, bb2_ref,
                 w3_hbm, b3_ref,
                 w4_ref, b4_ref,
                 o_ref,
                 xp1_ref, xp2_ref, xp3_ref, ps1_ref, ps3_ref,
                 w2_vmem, w3_vmem, dma_sem,
                 *, n, h, w):
    c = w0_ref.shape[-1]                # 128 (conv0 Cout zero-padded to 128)
    hp, wp = h // 2, w // 2             # after first max-pool
    hq, wq = hp // 2, wp // 2           # after second max-pool

    # Prefetch conv2/conv3 weights HBM -> VMEM; overlaps with stage0/1 compute.
    cp_w2 = pltpu.make_async_copy(w2_hbm, w2_vmem, dma_sem.at[0])
    cp_w3 = pltpu.make_async_copy(w3_hbm, w3_vmem, dma_sem.at[1])
    cp_w2.start()
    cp_w3.start()

    # ---- stage 0: conv(1->32, 3x3, padded to 128 lanes) + ReLU + BN ----
    a0 = jnp.dot(p0_ref[...].astype(MM_DTYPE), w0_ref[...],
                 preferred_element_type=jnp.float32)                 # (N*H*W, 128)
    a0 = _bias_relu_bn(a0, b0_ref[...], g0_ref[...], bb0_ref[...])

    # ---- stage 1: conv(128->128, 3x3) + ReLU + BN + 2x2 max-pool ----
    _store_padded(xp1_ref, a0.reshape(n, h, w, c))
    acc = _conv3x3(xp1_ref, w1_ref, n=n, hh=h, ww=w)
    acc = _bias_relu_bn(acc, b1_ref[...], g1_ref[...], bb1_ref[...])
    a1 = _maxpool2x2(acc, ps1_ref, nh=n * h, ww=w)                   # (N*Hp, Wp, 128)

    # ---- stage 2: conv(128->128, 3x3) + ReLU + BN ----
    cp_w2.wait()
    _store_padded(xp2_ref, a1.reshape(n, hp, wp, c))
    acc = _conv3x3(xp2_ref, w2_vmem, n=n, hh=hp, ww=wp)
    acc = _bias_relu_bn(acc, b2_ref[...], g2_ref[...], bb2_ref[...])

    # ---- stage 3: conv(128->128, 3x3) + ReLU + 2x2 max-pool (no BN) ----
    cp_w3.wait()
    _store_padded(xp3_ref, acc.reshape(n, hp, wp, c))
    acc = _conv3x3(xp3_ref, w3_vmem, n=n, hh=hp, ww=wp)
    acc = jnp.maximum(acc + b3_ref[...], 0.0)
    a3 = _maxpool2x2(acc, ps3_ref, nh=n * hp, ww=wp)                 # (N*Hq, Wq, 128)

    # ---- head: global avg pool (commutes with the 1x1 conv) + matmul + softmax
    a3 = a3.reshape(n, hq, wq, c)
    pooled = jnp.sum(jnp.sum(a3, axis=1), axis=1) * (1.0 / (hq * wq))  # (N, 128)
    logits = jnp.dot(pooled, w4_ref[...],
                     preferred_element_type=jnp.float32) + b4_ref[...]  # (N, 10)
    z = logits - jnp.max(logits, axis=-1, keepdims=True)
    e = jnp.exp(z)
    o_ref[...] = e / jnp.sum(e, axis=-1, keepdims=True)


# ------------------------------- JAX wrapper ------------------------------- #

def _im2col_3x3(x_nhwc):
    """(N,H,W,Cin) -> (N*H*W, 9*Cin) patches for a 3x3 same-padded conv."""
    n, h, w, cin = x_nhwc.shape
    xp = jnp.pad(x_nhwc, ((0, 0), (1, 1), (1, 1), (0, 0)))
    cols = [xp[:, i:i + h, j:j + w, :] for i in range(3) for j in range(3)]
    return jnp.concatenate(cols, axis=-1).reshape(n * h * w, 9 * cin)


def fcnn_forward(params, x_nchw):
    # PyTorch reference consumes NCHW; the kernel runs channels-last (C on lanes).
    x = jnp.transpose(x_nchw, (0, 2, 3, 1)).astype(jnp.float32)
    n, h, w, _ = x.shape
    assert h % 4 == 0 and w % 4 == 0
    c = 128
    h_half, w_half = h // 2, w // 2

    # conv0 patches (Cin=1, 18 KB) built with XLA ops — a lane-dim-1 in-kernel
    # im2col does not lower well; everything else is inside the fused kernel.
    p0 = _im2col_3x3(x)                                               # (N*H*W, 9)

    # ---- pack / pad parameters (tiny XLA ops) ----
    # conv0: pad Cout 32 -> 128 so later stages are 128-lane aligned; padded
    # channels have zero weight/bias/gamma/beta => they stay exactly 0.
    w0p = jnp.zeros((9, c), MM_DTYPE).at[:, :32].set(
        params["w0"].reshape(9, 32).astype(MM_DTYPE))
    b0p = jnp.zeros((1, c), jnp.float32).at[:, :32].set(params["b0"].reshape(1, 32))
    g0p = jnp.zeros((1, c), jnp.float32).at[:, :32].set(params["bn_g0"].reshape(1, 32))
    bb0p = jnp.zeros((1, c), jnp.float32).at[:, :32].set(params["bn_b0"].reshape(1, 32))
    # conv1: pad Cin 32 -> 128 (zero rows) to match the padded a0 channels.
    w1p = jnp.zeros((3, 3, c, c), MM_DTYPE).at[:, :, :32, :].set(
        params["w1"].astype(MM_DTYPE)).reshape(9 * c, c)
    w2r = params["w2"].astype(MM_DTYPE).reshape(9 * c, c)
    w3r = params["w3"].astype(MM_DTYPE).reshape(9 * c, c)
    w4r = params["w4"].reshape(c, 10)
    b1r, g1r, bb1r = (params["b1"].reshape(1, c), params["bn_g1"].reshape(1, c),
                      params["bn_b1"].reshape(1, c))
    b2r, g2r, bb2r = (params["b2"].reshape(1, c), params["bn_g2"].reshape(1, c),
                      params["bn_b2"].reshape(1, c))
    b3r = params["b3"].reshape(1, c)
    b4r = params["b4"].reshape(1, 10)

    vmem_spec = pl.BlockSpec(memory_space=pltpu.MemorySpace.VMEM)
    hbm_spec = pl.BlockSpec(memory_space=pl.ANY)
    in_specs = [vmem_spec] * 17
    in_specs[9] = hbm_spec    # conv2 weight: stays in HBM, prefetched in-kernel
    in_specs[13] = hbm_spec   # conv3 weight: stays in HBM, prefetched in-kernel

    scratch_shapes = [
        pltpu.VMEM((n, h + 2, w + 2, c), jnp.float32),            # xp1: padded a0
        pltpu.VMEM((n, h_half + 2, w_half + 2, c), jnp.float32),  # xp2: padded a1
        pltpu.VMEM((n, h_half + 2, w_half + 2, c), jnp.float32),  # xp3: padded a2
        pltpu.VMEM((n * h, w, c), jnp.float32),                   # ps1: pool stage
        pltpu.VMEM((n * h_half, w_half, c), jnp.float32),         # ps3: pool stage
        pltpu.VMEM((9 * c, c), MM_DTYPE),                         # conv2 W (VMEM)
        pltpu.VMEM((9 * c, c), MM_DTYPE),                         # conv3 W (VMEM)
        pltpu.SemaphoreType.DMA((2,)),                            # prefetch sems
    ]

    return pl.pallas_call(
        functools.partial(_fcnn_kernel, n=n, h=h, w=w),
        out_shape=jax.ShapeDtypeStruct((n, 10), jnp.float32),
        in_specs=in_specs,
        scratch_shapes=scratch_shapes,
    )(p0, w0p, b0p, g0p, bb0p,
      w1p, b1r, g1r, bb1r,
      w2r, b2r, g2r, bb2r,
      w3r, b3r,
      w4r, b4r)


# ------------------------------- init & reference -------------------------- #

def init_params(key):
    """Deterministic init (PyTorch Conv2d default: U(-1/sqrt(fan_in), +))."""
    conv_cfg = [(3, 1, 32), (3, 32, 128), (3, 128, 128), (3, 128, 128), (1, 128, 10)]
    params = {}
    keys = jax.random.split(key, 2 * len(conv_cfg))
    for i, (k, cin, cout) in enumerate(conv_cfg):
        bound = 1.0 / float(cin * k * k) ** 0.5
        params[f"w{i}"] = jax.random.uniform(
            keys[2 * i], (k, k, cin, cout), jnp.float32, -bound, bound)   # HWIO
        params[f"b{i}"] = jax.random.uniform(
            keys[2 * i + 1], (cout,), jnp.float32, -bound, bound)
    for j, cc in enumerate([32, 128, 128]):
        params[f"bn_g{j}"] = jnp.ones((cc,), jnp.float32)
        params[f"bn_b{j}"] = jnp.zeros((cc,), jnp.float32)
    return params


def _conv_ref(x, w_hwio, b):
    y = jax.lax.conv_general_dilated(
        x, w_hwio, window_strides=(1, 1), padding="SAME",
        dimension_numbers=("NHWC", "HWIO", "NHWC"))
    return y + b


def _bn_ref(x, gamma, beta):
    mean = jnp.mean(x, axis=(0, 1, 2), keepdims=True)
    var = jnp.mean(jnp.square(x - mean), axis=(0, 1, 2), keepdims=True)
    return (x - mean) * jax.lax.rsqrt(var + BN_EPS) * gamma + beta


def _maxpool_ref(x):
    return jax.lax.reduce_window(x, -jnp.inf, jax.lax.max,
                                 (1, 2, 2, 1), (1, 2, 2, 1), "VALID")


def fcnn_reference(params, x_nchw):
    """Pure-JAX (XLA) reference with the exact PyTorch op order, all f32."""
    a = jnp.transpose(x_nchw, (0, 2, 3, 1)).astype(jnp.float32)
    a = _bn_ref(jax.nn.relu(_conv_ref(a, params["w0"], params["b0"])),
                params["bn_g0"], params["bn_b0"])
    a = _bn_ref(jax.nn.relu(_conv_ref(a, params["w1"], params["b1"])),
                params["bn_g1"], params["bn_b1"])
    a = _maxpool_ref(a)
    a = _bn_ref(jax.nn.relu(_conv_ref(a, params["w2"], params["b2"])),
                params["bn_g2"], params["bn_b2"])
    a = jax.nn.relu(_conv_ref(a, params["w3"], params["b3"]))
    a = _maxpool_ref(a)
    y = jnp.einsum("nhwc,cd->nhwd", a, params["w4"].reshape(128, 10)) + params["b4"]
    logits = jnp.mean(y, axis=(1, 2))
    return jax.nn.softmax(logits, axis=-1)


if __name__ == "__main__":
    key = jax.random.PRNGKey(0)
    k_in, k_par = jax.random.split(key)
    params = init_params(k_par)
    # PyTorch input layout NCHW: (batch=2, channels=1, 16, 16)
    x_nchw = jax.random.normal(k_in, (2, 1, 16, 16), dtype=jnp.float32)

    out = jax.block_until_ready(jax.jit(fcnn_forward)(params, x_nchw))
    ref = jax.block_until_ready(jax.jit(fcnn_reference)(params, x_nchw))

    assert out.shape == (2, 10), out.shape
    assert bool(jnp.all(jnp.isfinite(out)))
    assert bool(jnp.allclose(jnp.sum(out, axis=-1), 1.0, atol=1e-5))
    max_err = float(jnp.max(jnp.abs(out - ref)))
    assert max_err < 3e-2, f"kernel deviates from pure-JAX reference: {max_err}"
    print("KERNEL_OK")
</pallas_src>

<mosaic_0001>
module attributes {stable_mosaic.version = 11 : i64} {
  func.func @_fcnn_kernel(%arg0: memref<512x9xf32, #tpu.memory_space<vmem>>, %arg1: memref<9x128xbf16, #tpu.memory_space<vmem>>, %arg2: memref<1x128xf32, #tpu.memory_space<vmem>>, %arg3: memref<1x128xf32, #tpu.memory_space<vmem>>, %arg4: memref<1x128xf32, #tpu.memory_space<vmem>>, %arg5: memref<1152x128xbf16, #tpu.memory_space<vmem>>, %arg6: memref<1x128xf32, #tpu.memory_space<vmem>>, %arg7: memref<1x128xf32, #tpu.memory_space<vmem>>, %arg8: memref<1x128xf32, #tpu.memory_space<vmem>>, %arg9: memref<1152x128xbf16, #tpu.memory_space<any>>, %arg10: memref<1x128xf32, #tpu.memory_space<vmem>>, %arg11: memref<1x128xf32, #tpu.memory_space<vmem>>, %arg12: memref<1x128xf32, #tpu.memory_space<vmem>>, %arg13: memref<1152x128xbf16, #tpu.memory_space<any>>, %arg14: memref<1x128xf32, #tpu.memory_space<vmem>>, %arg15: memref<128x10xf32, #tpu.memory_space<vmem>>, %arg16: memref<1x10xf32, #tpu.memory_space<vmem>>, %arg17: memref<2x10xf32, #tpu.memory_space<vmem>>, %arg18: memref<2x18x18x128xf32, #tpu.memory_space<vmem>>, %arg19: memref<2x10x10x128xf32, #tpu.memory_space<vmem>>, %arg20: memref<2x10x10x128xf32, #tpu.memory_space<vmem>>, %arg21: memref<32x16x128xf32, #tpu.memory_space<vmem>>, %arg22: memref<16x8x128xf32, #tpu.memory_space<vmem>>, %arg23: memref<1152x128xbf16, #tpu.memory_space<vmem>>, %arg24: memref<1152x128xbf16, #tpu.memory_space<vmem>>, %arg25: memref<2x!tpu.dma_semaphore, #tpu.memory_space<semaphore_mem>>) attributes {dimension_semantics = [], scalar_prefetch = 0 : i64, scratch_operands = 8 : i64, tpu.core_type = #tpu.core_type<tc>} {
    %c0_i32 = arith.constant 0 : i32
    %0 = tpu.memref_slice %arg25[%c0_i32] : memref<2x!tpu.dma_semaphore, #tpu.memory_space<semaphore_mem>> -> memref<1x!tpu.dma_semaphore, #tpu.memory_space<semaphore_mem>>
    %1 = tpu.memref_squeeze %0 : memref<1x!tpu.dma_semaphore, #tpu.memory_space<semaphore_mem>> -> memref<!tpu.dma_semaphore, #tpu.memory_space<semaphore_mem>>
    tpu.enqueue_dma source(%arg9 : memref<1152x128xbf16, #tpu.memory_space<any>>) target(%arg23 : memref<1152x128xbf16, #tpu.memory_space<vmem>>) target_semaphore(%1 : memref<!tpu.dma_semaphore, #tpu.memory_space<semaphore_mem>>)
    %c1_i32 = arith.constant 1 : i32
    %2 = tpu.memref_slice %arg25[%c1_i32] : memref<2x!tpu.dma_semaphore, #tpu.memory_space<semaphore_mem>> -> memref<1x!tpu.dma_semaphore, #tpu.memory_space<semaphore_mem>>
    %3 = tpu.memref_squeeze %2 : memref<1x!tpu.dma_semaphore, #tpu.memory_space<semaphore_mem>> -> memref<!tpu.dma_semaphore, #tpu.memory_space<semaphore_mem>>
    tpu.enqueue_dma source(%arg13 : memref<1152x128xbf16, #tpu.memory_space<any>>) target(%arg24 : memref<1152x128xbf16, #tpu.memory_space<vmem>>) target_semaphore(%3 : memref<!tpu.dma_semaphore, #tpu.memory_space<semaphore_mem>>)
    %c0 = arith.constant 0 : index
    %c0_0 = arith.constant 0 : index
    %4 = vector.load %arg0[%c0, %c0_0] : memref<512x9xf32, #tpu.memory_space<vmem>>, vector<512x9xf32>
    %5 = arith.truncf %4 : vector<512x9xf32> to vector<512x9xbf16>
    %c0_1 = arith.constant 0 : index
    %c0_2 = arith.constant 0 : index
    %6 = vector.load %arg1[%c0_1, %c0_2] : memref<9x128xbf16, #tpu.memory_space<vmem>>, vector<9x128xbf16>
    %cst = arith.constant dense<0.000000e+00> : vector<512x128xf32>
    %7 = tpu.matmul %5, %6, %cst {dimension_numbers = #tpu.dot_dimension_numbers<[1], [0], [0], [1], [0, 0, 1, 1], [], []>} : vector<512x9xbf16>, vector<9x128xbf16>, vector<512x128xf32> -> vector<512x128xf32>
    %c0_3 = arith.constant 0 : index
    %c0_4 = arith.constant 0 : index
    %8 = vector.load %arg2[%c0_3, %c0_4] : memref<1x128xf32, #tpu.memory_space<vmem>>, vector<1x128xf32>
    %c0_5 = arith.constant 0 : index
    %c0_6 = arith.constant 0 : index
    %9 = vector.load %arg3[%c0_5, %c0_6] : memref<1x128xf32, #tpu.memory_space<vmem>>, vector<1x128xf32>
    %c0_7 = arith.constant 0 : index
    %c0_8 = arith.constant 0 : index
    %10 = vector.load %arg4[%c0_7, %c0_8] : memref<1x128xf32, #tpu.memory_space<vmem>>, vector<1x128xf32>
    %11 = vector.broadcast %8 : vector<1x128xf32> to vector<512x128xf32>
    %12 = arith.addf %7, %11 : vector<512x128xf32>
    %cst_9 = arith.constant 0.000000e+00 : f32
    %13 = vector.broadcast %cst_9 : f32 to vector<512x128xf32>
    %14 = arith.maximumf %12, %13 : vector<512x128xf32>
    %cst_10 = arith.constant dense<0.000000e+00> : vector<128xf32>
    %15 = vector.multi_reduction <add>, %14, %cst_10 [0] : vector<512x128xf32> to vector<128xf32>
    %16 = vector.shape_cast %15 : vector<128xf32> to vector<1x128xf32>
    %cst_11 = arith.constant 0.001953125 : f32
    %17 = vector.broadcast %cst_11 : f32 to vector<1x128xf32>
    %18 = arith.mulf %16, %17 : vector<1x128xf32>
    %19 = arith.mulf %14, %14 : vector<512x128xf32>
    %cst_12 = arith.constant dense<0.000000e+00> : vector<128xf32>
    %20 = vector.multi_reduction <add>, %19, %cst_12 [0] : vector<512x128xf32> to vector<128xf32>
    %21 = vector.shape_cast %20 : vector<128xf32> to vector<1x128xf32>
    %cst_13 = arith.constant 0.001953125 : f32
    %22 = vector.broadcast %cst_13 : f32 to vector<1x128xf32>
    %23 = arith.mulf %21, %22 : vector<1x128xf32>
    %24 = arith.mulf %18, %18 : vector<1x128xf32>
    %25 = arith.subf %23, %24 : vector<1x128xf32>
    %cst_14 = arith.constant 0.000000e+00 : f32
    %26 = vector.broadcast %cst_14 : f32 to vector<1x128xf32>
    %27 = arith.maximumf %25, %26 : vector<1x128xf32>
    %cst_15 = arith.constant 9.99999974E-6 : f32
    %28 = vector.broadcast %cst_15 : f32 to vector<1x128xf32>
    %29 = arith.addf %27, %28 : vector<1x128xf32>
    %30 = math.rsqrt %29 : vector<1x128xf32>
    %31 = arith.mulf %9, %30 : vector<1x128xf32>
    %32 = vector.broadcast %31 : vector<1x128xf32> to vector<512x128xf32>
    %33 = arith.mulf %14, %32 : vector<512x128xf32>
    %34 = arith.mulf %18, %31 : vector<1x128xf32>
    %35 = arith.subf %10, %34 : vector<1x128xf32>
    %36 = vector.broadcast %35 : vector<1x128xf32> to vector<512x128xf32>
    %37 = arith.addf %33, %36 : vector<512x128xf32>
    %38 = vector.shape_cast %37 : vector<512x128xf32> to vector<2x16x16x128xf32>
    %cst_16 = arith.constant 0.000000e+00 : f32
    %39 = vector.broadcast %cst_16 : f32 to vector<2x18x18x128xf32>
    %c0_17 = arith.constant 0 : index
    %c0_18 = arith.constant 0 : index
    %c0_19 = arith.constant 0 : index
    %c0_20 = arith.constant 0 : index
    %40 = vector.load %arg18[%c0_17, %c0_18, %c0_19, %c0_20] : memref<2x18x18x128xf32, #tpu.memory_space<vmem>>, vector<2x18x18x128xf32>
    tpu.vector_store %arg18[%c0_17, %c0_18, %c0_19, %c0_20], %39 {strides = array<i32>} : memref<2x18x18x128xf32, #tpu.memory_space<vmem>>, vector<2x18x18x128xf32>,
    %c0_21 = arith.constant 0 : index
    %c1 = arith.constant 1 : index
    %c1_22 = arith.constant 1 : index
    %c0_23 = arith.constant 0 : index
    %41 = vector.load %arg18[%c0_21, %c1, %c1_22, %c0_23] : memref<2x18x18x128xf32, #tpu.memory_space<vmem>>, vector<2x16x16x128xf32>
    tpu.vector_store %arg18[%c0_21, %c1, %c1_22, %c0_23], %38 {strides = array<i32>} : memref<2x18x18x128xf32, #tpu.memory_space<vmem>>, vector<2x16x16x128xf32>,
    %c0_24 = arith.constant 0 : index
    %c0_25 = arith.constant 0 : index
    %c0_26 = arith.constant 0 : index
    %c0_27 = arith.constant 0 : index
    %42 = vector.load %arg18[%c0_24, %c0_25, %c0_26, %c0_27] : memref<2x18x18x128xf32, #tpu.memory_space<vmem>>, vector<2x16x16x128xf32>
    %43 = vector.shape_cast %42 : vector<2x16x16x128xf32> to vector<512x128xf32>
    %44 = arith.truncf %43 : vector<512x128xf32> to vector<512x128xbf16>
    %c0_28 = arith.constant 0 : index
    %c0_29 = arith.constant 0 : index
    %45 = vector.load %arg5[%c0_28, %c0_29] : memref<1152x128xbf16, #tpu.memory_space<vmem>>, vector<128x128xbf16>
    %cst_30 = arith.constant dense<0.000000e+00> : vector<512x128xf32>
    %46 = tpu.matmul %44, %45, %cst_30 {dimension_numbers = #tpu.dot_dimension_numbers<[1], [0], [0], [1], [0, 0, 1, 1], [], []>} : vector<512x128xbf16>, vector<128x128xbf16>, vector<512x128xf32> -> vector<512x128xf32>
    %c0_31 = arith.constant 0 : index
    %c0_32 = arith.constant 0 : index
    %c1_33 = arith.constant 1 : index
    %c0_34 = arith.constant 0 : index
    %47 = vector.load %arg18[%c0_31, %c0_32, %c1_33, %c0_34] : memref<2x18x18x128xf32, #tpu.memory_space<vmem>>, vector<2x16x16x128xf32>
    %48 = vector.shape_cast %47 : vector<2x16x16x128xf32> to vector<512x128xf32>
    %49 = arith.truncf %48 : vector<512x128xf32> to vector<512x128xbf16>
    %c128 = arith.constant 128 : index
    %c0_35 = arith.constant 0 : index
    %50 = vector.load %arg5[%c128, %c0_35] : memref<1152x128xbf16, #tpu.memory_space<vmem>>, vector<128x128xbf16>
    %cst_36 = arith.constant dense<0.000000e+00> : vector<512x128xf32>
    %51 = tpu.matmul %49, %50, %cst_36 {dimension_numbers = #tpu.dot_dimension_numbers<[1], [0], [0], [1], [0, 0, 1, 1], [], []>} : vector<512x128xbf16>, vector<128x128xbf16>, vector<512x128xf32> -> vector<512x128xf32>
    %52 = arith.addf %46, %51 : vector<512x128xf32>
    %c0_37 = arith.constant 0 : index
    %c0_38 = arith.constant 0 : index
    %c2 = arith.constant 2 : index
    %c0_39 = arith.constant 0 : index
    %53 = vector.load %arg18[%c0_37, %c0_38, %c2, %c0_39] : memref<2x18x18x128xf32, #tpu.memory_space<vmem>>, vector<2x16x16x128xf32>
    %54 = vector.shape_cast %53 : vector<2x16x16x128xf32> to vector<512x128xf32>
    %55 = arith.truncf %54 : vector<512x128xf32> to vector<512x128xbf16>
    %c256 = arith.constant 256 : index
    %c0_40 = arith.constant 0 : index
    %56 = vector.load %arg5[%c256, %c0_40] : memref<1152x128xbf16, #tpu.memory_space<vmem>>, vector<128x128xbf16>
    %cst_41 = arith.constant dense<0.000000e+00> : vector<512x128xf32>
    %57 = tpu.matmul %55, %56, %cst_41 {dimension_numbers = #tpu.dot_dimension_numbers<[1], [0], [0], [1], [0, 0, 1, 1], [], []>} : vector<512x128xbf16>, vector<128x128xbf16>, vector<512x128xf32> -> vector<512x128xf32>
    %58 = arith.addf %52, %57 : vector<512x128xf32>
    %c0_42 = arith.constant 0 : index
    %c1_43 = arith.constant 1 : index
    %c0_44 = arith.constant 0 : index
    %c0_45 = arith.constant 0 : index
    %59 = vector.load %arg18[%c0_42, %c1_43, %c0_44, %c0_45] : memref<2x18x18x128xf32, #tpu.memory_space<vmem>>, vector<2x16x16x128xf32>
    %60 = vector.shape_cast %59 : vector<2x16x16x128xf32> to vector<512x128xf32>
    %61 = arith.truncf %60 : vector<512x128xf32> to vector<512x128xbf16>
    %c384 = arith.constant 384 : index
    %c0_46 = arith.constant 0 : index
    %62 = vector.load %arg5[%c384, %c0_46] : memref<1152x128xbf16, #tpu.memory_space<vmem>>, vector<128x128xbf16>
    %cst_47 = arith.constant dense<0.000000e+00> : vector<512x128xf32>
    %63 = tpu.matmul %61, %62, %cst_47 {dimension_numbers = #tpu.dot_dimension_numbers<[1], [0], [0], [1], [0, 0, 1, 1], [], []>} : vector<512x128xbf16>, vector<128x128xbf16>, vector<512x128xf32> -> vector<512x128xf32>
    %64 = arith.addf %58, %63 : vector<512x128xf32>
    %c0_48 = arith.constant 0 : index
    %c1_49 = arith.constant 1 : index
    %c1_50 = arith.constant 1 : index
    %c0_51 = arith.constant 0 : index
    %65 = vector.load %arg18[%c0_48, %c1_49, %c1_50, %c0_51] : memref<2x18x18x128xf32, #tpu.memory_space<vmem>>, vector<2x16x16x128xf32>
    %66 = vector.shape_cast %65 : vector<2x16x16x128xf32> to vector<512x128xf32>
    %67 = arith.truncf %66 : vector<512x128xf32> to vector<512x128xbf16>
    %c512 = arith.constant 512 : index
    %c0_52 = arith.constant 0 : index
    %68 = vector.load %arg5[%c512, %c0_52] : memref<1152x128xbf16, #tpu.memory_space<vmem>>, vector<128x128xbf16>
    %cst_53 = arith.constant dense<0.000000e+00> : vector<512x128xf32>
    %69 = tpu.matmul %67, %68, %cst_53 {dimension_numbers = #tpu.dot_dimension_numbers<[1], [0], [0], [1], [0, 0, 1, 1], [], []>} : vector<512x128xbf16>, vector<128x128xbf16>, vector<512x128xf32> -> vector<512x128xf32>
    %70 = arith.addf %64, %69 : vector<512x128xf32>
    %c0_54 = arith.constant 0 : index
    %c1_55 = arith.constant 1 : index
    %c2_56 = arith.constant 2 : index
    %c0_57 = arith.constant 0 : index
    %71 = vector.load %arg18[%c0_54, %c1_55, %c2_56, %c0_57] : memref<2x18x18x128xf32, #tpu.memory_space<vmem>>, vector<2x16x16x128xf32>
    %72 = vector.shape_cast %71 : vector<2x16x16x128xf32> to vector<512x128xf32>
    %73 = arith.truncf %72 : vector<512x128xf32> to vector<512x128xbf16>
    %c640 = arith.constant 640 : index
    %c0_58 = arith.constant 0 : index
    %74 = vector.load %arg5[%c640, %c0_58] : memref<1152x128xbf16, #tpu.memory_space<vmem>>, vector<128x128xbf16>
    %cst_59 = arith.constant dense<0.000000e+00> : vector<512x128xf32>
    %75 = tpu.matmul %73, %74, %cst_59 {dimension_numbers = #tpu.dot_dimension_numbers<[1], [0], [0], [1], [0, 0, 1, 1], [], []>} : vector<512x128xbf16>, vector<128x128xbf16>, vector<512x128xf32> -> vector<512x128xf32>
    %76 = arith.addf %70, %75 : vector<512x128xf32>
    %c0_60 = arith.constant 0 : index
    %c2_61 = arith.constant 2 : index
    %c0_62 = arith.constant 0 : index
    %c0_63 = arith.constant 0 : index
    %77 = vector.load %arg18[%c0_60, %c2_61, %c0_62, %c0_63] : memref<2x18x18x128xf32, #tpu.memory_space<vmem>>, vector<2x16x16x128xf32>
    %78 = vector.shape_cast %77 : vector<2x16x16x128xf32> to vector<512x128xf32>
    %79 = arith.truncf %78 : vector<512x128xf32> to vector<512x128xbf16>
    %c768 = arith.constant 768 : index
    %c0_64 = arith.constant 0 : index
    %80 = vector.load %arg5[%c768, %c0_64] : memref<1152x128xbf16, #tpu.memory_space<vmem>>, vector<128x128xbf16>
    %cst_65 = arith.constant dense<0.000000e+00> : vector<512x128xf32>
    %81 = tpu.matmul %79, %80, %cst_65 {dimension_numbers = #tpu.dot_dimension_numbers<[1], [0], [0], [1], [0, 0, 1, 1], [], []>} : vector<512x128xbf16>, vector<128x128xbf16>, vector<512x128xf32> -> vector<512x128xf32>
    %82 = arith.addf %76, %81 : vector<512x128xf32>
    %c0_66 = arith.constant 0 : index
    %c2_67 = arith.constant 2 : index
    %c1_68 = arith.constant 1 : index
    %c0_69 = arith.constant 0 : index
    %83 = vector.load %arg18[%c0_66, %c2_67, %c1_68, %c0_69] : memref<2x18x18x128xf32, #tpu.memory_space<vmem>>, vector<2x16x16x128xf32>
    %84 = vector.shape_cast %83 : vector<2x16x16x128xf32> to vector<512x128xf32>
    %85 = arith.truncf %84 : vector<512x128xf32> to vector<512x128xbf16>
    %c896 = arith.constant 896 : index
    %c0_70 = arith.constant 0 : index
    %86 = vector.load %arg5[%c896, %c0_70] : memref<1152x128xbf16, #tpu.memory_space<vmem>>, vector<128x128xbf16>
    %cst_71 = arith.constant dense<0.000000e+00> : vector<512x128xf32>
    %87 = tpu.matmul %85, %86, %cst_71 {dimension_numbers = #tpu.dot_dimension_numbers<[1], [0], [0], [1], [0, 0, 1, 1], [], []>} : vector<512x128xbf16>, vector<128x128xbf16>, vector<512x128xf32> -> vector<512x128xf32>
    %88 = arith.addf %82, %87 : vector<512x128xf32>
    %c0_72 = arith.constant 0 : index
    %c2_73 = arith.constant 2 : index
    %c2_74 = arith.constant 2 : index
    %c0_75 = arith.constant 0 : index
    %89 = vector.load %arg18[%c0_72, %c2_73, %c2_74, %c0_75] : memref<2x18x18x128xf32, #tpu.memory_space<vmem>>, vector<2x16x16x128xf32>
    %90 = vector.shape_cast %89 : vector<2x16x16x128xf32> to vector<512x128xf32>
    %91 = arith.truncf %90 : vector<512x128xf32> to vector<512x128xbf16>
    %c1024 = arith.constant 1024 : index
    %c0_76 = arith.constant 0 : index
    %92 = vector.load %arg5[%c1024, %c0_76] : memref<1152x128xbf16, #tpu.memory_space<vmem>>, vector<128x128xbf16>
    %cst_77 = arith.constant dense<0.000000e+00> : vector<512x128xf32>
    %93 = tpu.matmul %91, %92, %cst_77 {dimension_numbers = #tpu.dot_dimension_numbers<[1], [0], [0], [1], [0, 0, 1, 1], [], []>} : vector<512x128xbf16>, vector<128x128xbf16>, vector<512x128xf32> -> vector<512x128xf32>
    %94 = arith.addf %88, %93 : vector<512x128xf32>
    %c0_78 = arith.constant 0 : index
    %c0_79 = arith.constant 0 : index
    %95 = vector.load %arg6[%c0_78, %c0_79] : memref<1x128xf32, #tpu.memory_space<vmem>>, vector<1x128xf32>
    %c0_80 = arith.constant 0 : index
    %c0_81 = arith.constant 0 : index
    %96 = vector.load %arg7[%c0_80, %c0_81] : memref<1x128xf32, #tpu.memory_space<vmem>>, vector<1x128xf32>
    %c0_82 = arith.constant 0 : index
    %c0_83 = arith.constant 0 : index
    %97 = vector.load %arg8[%c0_82, %c0_83] : memref<1x128xf32, #tpu.memory_space<vmem>>, vector<1x128xf32>
    %98 = vector.broadcast %95 : vector<1x128xf32> to vector<512x128xf32>
    %99 = arith.addf %94, %98 : vector<512x128xf32>
    %cst_84 = arith.constant 0.000000e+00 : f32
    %100 = vector.broadcast %cst_84 : f32 to vector<512x128xf32>
    %101 = arith.maximumf %99, %100 : vector<512x128xf32>
    %cst_85 = arith.constant dense<0.000000e+00> : vector<128xf32>
    %102 = vector.multi_reduction <add>, %101, %cst_85 [0] : vector<512x128xf32> to vector<128xf32>
    %103 = vector.shape_cast %102 : vector<128xf32> to vector<1x128xf32>
    %cst_86 = arith.constant 0.001953125 : f32
    %104 = vector.broadcast %cst_86 : f32 to vector<1x128xf32>
    %105 = arith.mulf %103, %104 : vector<1x128xf32>
    %106 = arith.mulf %101, %101 : vector<512x128xf32>
    %cst_87 = arith.constant dense<0.000000e+00> : vector<128xf32>
    %107 = vector.multi_reduction <add>, %106, %cst_87 [0] : vector<512x128xf32> to vector<128xf32>
    %108 = vector.shape_cast %107 : vector<128xf32> to vector<1x128xf32>
    %cst_88 = arith.constant 0.001953125 : f32
    %109 = vector.broadcast %cst_88 : f32 to vector<1x128xf32>
    %110 = arith.mulf %108, %109 : vector<1x128xf32>
    %111 = arith.mulf %105, %105 : vector<1x128xf32>
    %112 = arith.subf %110, %111 : vector<1x128xf32>
    %cst_89 = arith.constant 0.000000e+00 : f32
    %113 = vector.broadcast %cst_89 : f32 to vector<1x128xf32>
    %114 = arith.maximumf %112, %113 : vector<1x128xf32>
    %cst_90 = arith.constant 9.99999974E-6 : f32
    %115 = vector.broadcast %cst_90 : f32 to vector<1x128xf32>
    %116 = arith.addf %114, %115 : vector<1x128xf32>
    %117 = math.rsqrt %116 : vector<1x128xf32>
    %118 = arith.mulf %96, %117 : vector<1x128xf32>
    %119 = vector.broadcast %118 : vector<1x128xf32> to vector<512x128xf32>
    %120 = arith.mulf %101, %119 : vector<512x128xf32>
    %121 = arith.mulf %105, %118 : vector<1x128xf32>
    %122 = arith.subf %97, %121 : vector<1x128xf32>
    %123 = vector.broadcast %122 : vector<1x128xf32> to vector<512x128xf32>
    %124 = arith.addf %120, %123 : vector<512x128xf32>
    %125 = vector.shape_cast %124 : vector<512x128xf32> to vector<32x16x128xf32>
    %c0_91 = arith.constant 0 : index
    %c0_92 = arith.constant 0 : index
    %c0_93 = arith.constant 0 : index
    %126 = vector.load %arg21[%c0_91, %c0_92, %c0_93] : memref<32x16x128xf32, #tpu.memory_space<vmem>>, vector<32x16x128xf32>
    tpu.vector_store %arg21[%c0_91, %c0_92, %c0_93], %125 {strides = array<i32>} : memref<32x16x128xf32, #tpu.memory_space<vmem>>, vector<32x16x128xf32>,
    %c0_94 = arith.constant 0 : index
    %c0_95 = arith.constant 0 : index
    %c0_96 = arith.constant 0 : index
    %127 = tpu.strided_load %arg21[%c0_94, %c0_95, %c0_96] {strides = array<i32: 1, 2, 1>} : memref<32x16x128xf32, #tpu.memory_space<vmem>>, vector<32x8x128xf32>
    %c0_97 = arith.constant 0 : index
    %c1_98 = arith.constant 1 : index
    %c0_99 = arith.constant 0 : index
    %128 = tpu.strided_load %arg21[%c0_97, %c1_98, %c0_99] {strides = array<i32: 1, 2, 1>} : memref<32x16x128xf32, #tpu.memory_space<vmem>>, vector<32x8x128xf32>
    %129 = arith.maximumf %127, %128 : vector<32x8x128xf32>
    %130 = vector.shape_cast %129 : vector<32x8x128xf32> to vector<16x2x8x128xf32>
    %131 = vector.extract_strided_slice %130 {offsets = [0, 0, 0, 0], sizes = [16, 1, 8, 128], strides = [1, 1, 1, 1]} : vector<16x2x8x128xf32> to vector<16x1x8x128xf32>
    %132 = vector.shape_cast %131 : vector<16x1x8x128xf32> to vector<16x8x128xf32>
    %133 = vector.extract_strided_slice %130 {offsets = [0, 1, 0, 0], sizes = [16, 1, 8, 128], strides = [1, 1, 1, 1]} : vector<16x2x8x128xf32> to vector<16x1x8x128xf32>
    %134 = vector.shape_cast %133 : vector<16x1x8x128xf32> to vector<16x8x128xf32>
    %135 = arith.maximumf %132, %134 : vector<16x8x128xf32>
    %c0_i32_100 = arith.constant 0 : i32
    %136 = tpu.memref_slice %arg25[%c0_i32_100] : memref<2x!tpu.dma_semaphore, #tpu.memory_space<semaphore_mem>> -> memref<1x!tpu.dma_semaphore, #tpu.memory_space<semaphore_mem>>
    %137 = tpu.memref_squeeze %136 : memref<1x!tpu.dma_semaphore, #tpu.memory_space<semaphore_mem>> -> memref<!tpu.dma_semaphore, #tpu.memory_space<semaphore_mem>>
    tpu.wait_dma2 semaphore(%137 : memref<!tpu.dma_semaphore, #tpu.memory_space<semaphore_mem>>) src(%arg9 : memref<1152x128xbf16, #tpu.memory_space<any>>) dst(%arg23 : memref<1152x128xbf16, #tpu.memory_space<vmem>>)
    %138 = vector.shape_cast %135 : vector<16x8x128xf32> to vector<2x8x8x128xf32>
    %cst_101 = arith.constant 0.000000e+00 : f32
    %139 = vector.broadcast %cst_101 : f32 to vector<2x10x10x128xf32>
    %c0_102 = arith.constant 0 : index
    %c0_103 = arith.constant 0 : index
    %c0_104 = arith.constant 0 : index
    %c0_105 = arith.constant 0 : index
    %140 = vector.load %arg19[%c0_102, %c0_103, %c0_104, %c0_105] : memref<2x10x10x128xf32, #tpu.memory_space<vmem>>, vector<2x10x10x128xf32>
    tpu.vector_store %arg19[%c0_102, %c0_103, %c0_104, %c0_105], %139 {strides = array<i32>} : memref<2x10x10x128xf32, #tpu.memory_space<vmem>>, vector<2x10x10x128xf32>,
    %c0_106 = arith.constant 0 : index
    %c1_107 = arith.constant 1 : index
    %c1_108 = arith.constant 1 : index
    %c0_109 = arith.constant 0 : index
    %141 = vector.load %arg19[%c0_106, %c1_107, %c1_108, %c0_109] : memref<2x10x10x128xf32, #tpu.memory_space<vmem>>, vector<2x8x8x128xf32>
    tpu.vector_store %arg19[%c0_106, %c1_107, %c1_108, %c0_109], %138 {strides = array<i32>} : memref<2x10x10x128xf32, #tpu.memory_space<vmem>>, vector<2x8x8x128xf32>,
    %c0_110 = arith.constant 0 : index
    %c0_111 = arith.constant 0 : index
    %c0_112 = arith.constant 0 : index
    %c0_113 = arith.constant 0 : index
    %142 = vector.load %arg19[%c0_110, %c0_111, %c0_112, %c0_113] : memref<2x10x10x128xf32, #tpu.memory_space<vmem>>, vector<2x8x8x128xf32>
    %143 = vector.shape_cast %142 : vector<2x8x8x128xf32> to vector<128x128xf32>
    %144 = arith.truncf %143 : vector<128x128xf32> to vector<128x128xbf16>
    %c0_114 = arith.constant 0 : index
    %c0_115 = arith.constant 0 : index
    %145 = vector.load %arg23[%c0_114, %c0_115] : memref<1152x128xbf16, #tpu.memory_space<vmem>>, vector<128x128xbf16>
    %cst_116 = arith.constant dense<0.000000e+00> : vector<128x128xf32>
    %146 = tpu.matmul %144, %145, %cst_116 {dimension_numbers = #tpu.dot_dimension_numbers<[1], [0], [0], [1], [0, 0, 1, 1], [], []>} : vector<128x128xbf16>, vector<128x128xbf16>, vector<128x128xf32> -> vector<128x128xf32>
    %c0_117 = arith.constant 0 : index
    %c0_118 = arith.constant 0 : index
    %c1_119 = arith.constant 1 : index
    %c0_120 = arith.constant 0 : index
    %147 = vector.load %arg19[%c0_117, %c0_118, %c1_119, %c0_120] : memref<2x10x10x128xf32, #tpu.memory_space<vmem>>, vector<2x8x8x128xf32>
    %148 = vector.shape_cast %147 : vector<2x8x8x128xf32> to vector<128x128xf32>
    %149 = arith.truncf %148 : vector<128x128xf32> to vector<128x128xbf16>
    %c128_121 = arith.constant 128 : index
    %c0_122 = arith.constant 0 : index
    %150 = vector.load %arg23[%c128_121, %c0_122] : memref<1152x128xbf16, #tpu.memory_space<vmem>>, vector<128x128xbf16>
    %cst_123 = arith.constant dense<0.000000e+00> : vector<128x128xf32>
    %151 = tpu.matmul %149, %150, %cst_123 {dimension_numbers = #tpu.dot_dimension_numbers<[1], [0], [0], [1], [0, 0, 1, 1], [], []>} : vector<128x128xbf16>, vector<128x128xbf16>, vector<128x128xf32> -> vector<128x128xf32>
    %152 = arith.addf %146, %151 : vector<128x128xf32>
    %c0_124 = arith.constant 0 : index
    %c0_125 = arith.constant 0 : index
    %c2_126 = arith.constant 2 : index
    %c0_127 = arith.constant 0 : index
    %153 = vector.load %arg19[%c0_124, %c0_125, %c2_126, %c0_127] : memref<2x10x10x128xf32, #tpu.memory_space<vmem>>, vector<2x8x8x128xf32>
    %154 = vector.shape_cast %153 : vector<2x8x8x128xf32> to vector<128x128xf32>
    %155 = arith.truncf %154 : vector<128x128xf32> to vector<128x128xbf16>
    %c256_128 = arith.constant 256 : index
    %c0_129 = arith.constant 0 : index
    %156 = vector.load %arg23[%c256_128, %c0_129] : memref<1152x128xbf16, #tpu.memory_space<vmem>>, vector<128x128xbf16>
    %cst_130 = arith.constant dense<0.000000e+00> : vector<128x128xf32>
    %157 = tpu.matmul %155, %156, %cst_130 {dimension_numbers = #tpu.dot_dimension_numbers<[1], [0], [0], [1], [0, 0, 1, 1], [], []>} : vector<128x128xbf16>, vector<128x128xbf16>, vector<128x128xf32> -> vector<128x128xf32>
    %158 = arith.addf %152, %157 : vector<128x128xf32>
    %c0_131 = arith.constant 0 : index
    %c1_132 = arith.constant 1 : index
    %c0_133 = arith.constant 0 : index
    %c0_134 = arith.constant 0 : index
    %159 = vector.load %arg19[%c0_131, %c1_132, %c0_133, %c0_134] : memref<2x10x10x128xf32, #tpu.memory_space<vmem>>, vector<2x8x8x128xf32>
    %160 = vector.shape_cast %159 : vector<2x8x8x128xf32> to vector<128x128xf32>
    %161 = arith.truncf %160 : vector<128x128xf32> to vector<128x128xbf16>
    %c384_135 = arith.constant 384 : index
    %c0_136 = arith.constant 0 : index
    %162 = vector.load %arg23[%c384_135, %c0_136] : memref<1152x128xbf16, #tpu.memory_space<vmem>>, vector<128x128xbf16>
    %cst_137 = arith.constant dense<0.000000e+00> : vector<128x128xf32>
    %163 = tpu.matmul %161, %162, %cst_137 {dimension_numbers = #tpu.dot_dimension_numbers<[1], [0], [0], [1], [0, 0, 1, 1], [], []>} : vector<128x128xbf16>, vector<128x128xbf16>, vector<128x128xf32> -> vector<128x128xf32>
    %164 = arith.addf %158, %163 : vector<128x128xf32>
    %c0_138 = arith.constant 0 : index
    %c1_139 = arith.constant 1 : index
    %c1_140 = arith.constant 1 : index
    %c0_141 = arith.constant 0 : index
    %165 = vector.load %arg19[%c0_138, %c1_139, %c1_140, %c0_141] : memref<2x10x10x128xf32, #tpu.memory_space<vmem>>, vector<2x8x8x128xf32>
    %166 = vector.shape_cast %165 : vector<2x8x8x128xf32> to vector<128x128xf32>
    %167 = arith.truncf %166 : vector<128x128xf32> to vector<128x128xbf16>
    %c512_142 = arith.constant 512 : index
    %c0_143 = arith.constant 0 : index
    %168 = vector.load %arg23[%c512_142, %c0_143] : memref<1152x128xbf16, #tpu.memory_space<vmem>>, vector<128x128xbf16>
    %cst_144 = arith.constant dense<0.000000e+00> : vector<128x128xf32>
    %169 = tpu.matmul %167, %168, %cst_144 {dimension_numbers = #tpu.dot_dimension_numbers<[1], [0], [0], [1], [0, 0, 1, 1], [], []>} : vector<128x128xbf16>, vector<128x128xbf16>, vector<128x128xf32> -> vector<128x128xf32>
    %170 = arith.addf %164, %169 : vector<128x128xf32>
    %c0_145 = arith.constant 0 : index
    %c1_146 = arith.constant 1 : index
    %c2_147 = arith.constant 2 : index
    %c0_148 = arith.constant 0 : index
    %171 = vector.load %arg19[%c0_145, %c1_146, %c2_147, %c0_148] : memref<2x10x10x128xf32, #tpu.memory_space<vmem>>, vector<2x8x8x128xf32>
    %172 = vector.shape_cast %171 : vector<2x8x8x128xf32> to vector<128x128xf32>
    %173 = arith.truncf %172 : vector<128x128xf32> to vector<128x128xbf16>
    %c640_149 = arith.constant 640 : index
    %c0_150 = arith.constant 0 : index
    %174 = vector.load %arg23[%c640_149, %c0_150] : memref<1152x128xbf16, #tpu.memory_space<vmem>>, vector<128x128xbf16>
    %cst_151 = arith.constant dense<0.000000e+00> : vector<128x128xf32>
    %175 = tpu.matmul %173, %174, %cst_151 {dimension_numbers = #tpu.dot_dimension_numbers<[1], [0], [0], [1], [0, 0, 1, 1], [], []>} : vector<128x128xbf16>, vector<128x128xbf16>, vector<128x128xf32> -> vector<128x128xf32>
    %176 = arith.addf %170, %175 : vector<128x128xf32>
    %c0_152 = arith.constant 0 : index
    %c2_153 = arith.constant 2 : index
    %c0_154 = arith.constant 0 : index
    %c0_155 = arith.constant 0 : index
    %177 = vector.load %arg19[%c0_152, %c2_153, %c0_154, %c0_155] : memref<2x10x10x128xf32, #tpu.memory_space<vmem>>, vector<2x8x8x128xf32>
    %178 = vector.shape_cast %177 : vector<2x8x8x128xf32> to vector<128x128xf32>
    %179 = arith.truncf %178 : vector<128x128xf32> to vector<128x128xbf16>
    %c768_156 = arith.constant 768 : index
    %c0_157 = arith.constant 0 : index
    %180 = vector.load %arg23[%c768_156, %c0_157] : memref<1152x128xbf16, #tpu.memory_space<vmem>>, vector<128x128xbf16>
    %cst_158 = arith.constant dense<0.000000e+00> : vector<128x128xf32>
    %181 = tpu.matmul %179, %180, %cst_158 {dimension_numbers = #tpu.dot_dimension_numbers<[1], [0], [0], [1], [0, 0, 1, 1], [], []>} : vector<128x128xbf16>, vector<128x128xbf16>, vector<128x128xf32> -> vector<128x128xf32>
    %182 = arith.addf %176, %181 : vector<128x128xf32>
    %c0_159 = arith.constant 0 : index
    %c2_160 = arith.constant 2 : index
    %c1_161 = arith.constant 1 : index
    %c0_162 = arith.constant 0 : index
    %183 = vector.load %arg19[%c0_159, %c2_160, %c1_161, %c0_162] : memref<2x10x10x128xf32, #tpu.memory_space<vmem>>, vector<2x8x8x128xf32>
    %184 = vector.shape_cast %183 : vector<2x8x8x128xf32> to vector<128x128xf32>
    %185 = arith.truncf %184 : vector<128x128xf32> to vector<128x128xbf16>
    %c896_163 = arith.constant 896 : index
    %c0_164 = arith.constant 0 : index
    %186 = vector.load %arg23[%c896_163, %c0_164] : memref<1152x128xbf16, #tpu.memory_space<vmem>>, vector<128x128xbf16>
    %cst_165 = arith.constant dense<0.000000e+00> : vector<128x128xf32>
    %187 = tpu.matmul %185, %186, %cst_165 {dimension_numbers = #tpu.dot_dimension_numbers<[1], [0], [0], [1], [0, 0, 1, 1], [], []>} : vector<128x128xbf16>, vector<128x128xbf16>, vector<128x128xf32> -> vector<128x128xf32>
    %188 = arith.addf %182, %187 : vector<128x128xf32>
    %c0_166 = arith.constant 0 : index
    %c2_167 = arith.constant 2 : index
    %c2_168 = arith.constant 2 : index
    %c0_169 = arith.constant 0 : index
    %189 = vector.load %arg19[%c0_166, %c2_167, %c2_168, %c0_169] : memref<2x10x10x128xf32, #tpu.memory_space<vmem>>, vector<2x8x8x128xf32>
    %190 = vector.shape_cast %189 : vector<2x8x8x128xf32> to vector<128x128xf32>
    %191 = arith.truncf %190 : vector<128x128xf32> to vector<128x128xbf16>
    %c1024_170 = arith.constant 1024 : index
    %c0_171 = arith.constant 0 : index
    %192 = vector.load %arg23[%c1024_170, %c0_171] : memref<1152x128xbf16, #tpu.memory_space<vmem>>, vector<128x128xbf16>
    %cst_172 = arith.constant dense<0.000000e+00> : vector<128x128xf32>
    %193 = tpu.matmul %191, %192, %cst_172 {dimension_numbers = #tpu.dot_dimension_numbers<[1], [0], [0], [1], [0, 0, 1, 1], [], []>} : vector<128x128xbf16>, vector<128x128xbf16>, vector<128x128xf32> -> vector<128x128xf32>
    %194 = arith.addf %188, %193 : vector<128x128xf32>
    %c0_173 = arith.constant 0 : index
    %c0_174 = arith.constant 0 : index
    %195 = vector.load %arg10[%c0_173, %c0_174] : memref<1x128xf32, #tpu.memory_space<vmem>>, vector<1x128xf32>
    %c0_175 = arith.constant 0 : index
    %c0_176 = arith.constant 0 : index
    %196 = vector.load %arg11[%c0_175, %c0_176] : memref<1x128xf32, #tpu.memory_space<vmem>>, vector<1x128xf32>
    %c0_177 = arith.constant 0 : index
    %c0_178 = arith.constant 0 : index
    %197 = vector.load %arg12[%c0_177, %c0_178] : memref<1x128xf32, #tpu.memory_space<vmem>>, vector<1x128xf32>
    %198 = vector.broadcast %195 : vector<1x128xf32> to vector<128x128xf32>
    %199 = arith.addf %194, %198 : vector<128x128xf32>
    %cst_179 = arith.constant 0.000000e+00 : f32
    %200 = vector.broadcast %cst_179 : f32 to vector<128x128xf32>
    %201 = arith.maximumf %199, %200 : vector<128x128xf32>
    %cst_180 = arith.constant dense<0.000000e+00> : vector<128xf32>
    %202 = vector.multi_reduction <add>, %201, %cst_180 [0] : vector<128x128xf32> to vector<128xf32>
    %203 = vector.shape_cast %202 : vector<128xf32> to vector<1x128xf32>
    %cst_181 = arith.constant 7.812500e-03 : f32
    %204 = vector.broadcast %cst_181 : f32 to vector<1x128xf32>
    %205 = arith.mulf %203, %204 : vector<1x128xf32>
    %206 = arith.mulf %201, %201 : vector<128x128xf32>
    %cst_182 = arith.constant dense<0.000000e+00> : vector<128xf32>
    %207 = vector.multi_reduction <add>, %206, %cst_182 [0] : vector<128x128xf32> to vector<128xf32>
    %208 = vector.shape_cast %207 : vector<128xf32> to vector<1x128xf32>
    %cst_183 = arith.constant 7.812500e-03 : f32
    %209 = vector.broadcast %cst_183 : f32 to vector<1x128xf32>
    %210 = arith.mulf %208, %209 : vector<1x128xf32>
    %211 = arith.mulf %205, %205 : vector<1x128xf32>
    %212 = arith.subf %210, %211 : vector<1x128xf32>
    %cst_184 = arith.constant 0.000000e+00 : f32
    %213 = vector.broadcast %cst_184 : f32 to vector<1x128xf32>
    %214 = arith.maximumf %212, %213 : vector<1x128xf32>
    %cst_185 = arith.constant 9.99999974E-6 : f32
    %215 = vector.broadcast %cst_185 : f32 to vector<1x128xf32>
    %216 = arith.addf %214, %215 : vector<1x128xf32>
    %217 = math.rsqrt %216 : vector<1x128xf32>
    %218 = arith.mulf %196, %217 : vector<1x128xf32>
    %219 = vector.broadcast %218 : vector<1x128xf32> to vector<128x128xf32>
    %220 = arith.mulf %201, %219 : vector<128x128xf32>
    %221 = arith.mulf %205, %218 : vector<1x128xf32>
    %222 = arith.subf %197, %221 : vector<1x128xf32>
    %223 = vector.broadcast %222 : vector<1x128xf32> to vector<128x128xf32>
    %224 = arith.addf %220, %223 : vector<128x128xf32>
    %c1_i32_186 = arith.constant 1 : i32
    %225 = tpu.memref_slice %arg25[%c1_i32_186] : memref<2x!tpu.dma_semaphore, #tpu.memory_space<semaphore_mem>> -> memref<1x!tpu.dma_semaphore, #tpu.memory_space<semaphore_mem>>
    %226 = tpu.memref_squeeze %225 : memref<1x!tpu.dma_semaphore, #tpu.memory_space<semaphore_mem>> -> memref<!tpu.dma_semaphore, #tpu.memory_space<semaphore_mem>>
    tpu.wait_dma2 semaphore(%226 : memref<!tpu.dma_semaphore, #tpu.memory_space<semaphore_mem>>) src(%arg13 : memref<1152x128xbf16, #tpu.memory_space<any>>) dst(%arg24 : memref<1152x128xbf16, #tpu.memory_space<vmem>>)
    %227 = vector.shape_cast %224 : vector<128x128xf32> to vector<2x8x8x128xf32>
    %cst_187 = arith.constant 0.000000e+00 : f32
    %228 = vector.broadcast %cst_187 : f32 to vector<2x10x10x128xf32>
    %c0_188 = arith.constant 0 : index
    %c0_189 = arith.constant 0 : index
    %c0_190 = arith.constant 0 : index
    %c0_191 = arith.constant 0 : index
    %229 = vector.load %arg20[%c0_188, %c0_189, %c0_190, %c0_191] : memref<2x10x10x128xf32, #tpu.memory_space<vmem>>, vector<2x10x10x128xf32>
    tpu.vector_store %arg20[%c0_188, %c0_189, %c0_190, %c0_191], %228 {strides = array<i32>} : memref<2x10x10x128xf32, #tpu.memory_space<vmem>>, vector<2x10x10x128xf32>,
    %c0_192 = arith.constant 0 : index
    %c1_193 = arith.constant 1 : index
    %c1_194 = arith.constant 1 : index
    %c0_195 = arith.constant 0 : index
    %230 = vector.load %arg20[%c0_192, %c1_193, %c1_194, %c0_195] : memref<2x10x10x128xf32, #tpu.memory_space<vmem>>, vector<2x8x8x128xf32>
    tpu.vector_store %arg20[%c0_192, %c1_193, %c1_194, %c0_195], %227 {strides = array<i32>} : memref<2x10x10x128xf32, #tpu.memory_space<vmem>>, vector<2x8x8x128xf32>,
    %c0_196 = arith.constant 0 : index
    %c0_197 = arith.constant 0 : index
    %c0_198 = arith.constant 0 : index
    %c0_199 = arith.constant 0 : index
    %231 = vector.load %arg20[%c0_196, %c0_197, %c0_198, %c0_199] : memref<2x10x10x128xf32, #tpu.memory_space<vmem>>, vector<2x8x8x128xf32>
    %232 = vector.shape_cast %231 : vector<2x8x8x128xf32> to vector<128x128xf32>
    %233 = arith.truncf %232 : vector<128x128xf32> to vector<128x128xbf16>
    %c0_200 = arith.constant 0 : index
    %c0_201 = arith.constant 0 : index
    %234 = vector.load %arg24[%c0_200, %c0_201] : memref<1152x128xbf16, #tpu.memory_space<vmem>>, vector<128x128xbf16>
    %cst_202 = arith.constant dense<0.000000e+00> : vector<128x128xf32>
    %235 = tpu.matmul %233, %234, %cst_202 {dimension_numbers = #tpu.dot_dimension_numbers<[1], [0], [0], [1], [0, 0, 1, 1], [], []>} : vector<128x128xbf16>, vector<128x128xbf16>, vector<128x128xf32> -> vector<128x128xf32>
    %c0_203 = arith.constant 0 : index
    %c0_204 = arith.constant 0 : index
    %c1_205 = arith.constant 1 : index
    %c0_206 = arith.constant 0 : index
    %236 = vector.load %arg20[%c0_203, %c0_204, %c1_205, %c0_206] : memref<2x10x10x128xf32, #tpu.memory_space<vmem>>, vector<2x8x8x128xf32>
    %237 = vector.shape_cast %236 : vector<2x8x8x128xf32> to vector<128x128xf32>
    %238 = arith.truncf %237 : vector<128x128xf32> to vector<128x128xbf16>
    %c128_207 = arith.constant 128 : index
    %c0_208 = arith.constant 0 : index
    %239 = vector.load %arg24[%c128_207, %c0_208] : memref<1152x128xbf16, #tpu.memory_space<vmem>>, vector<128x128xbf16>
    %cst_209 = arith.constant dense<0.000000e+00> : vector<128x128xf32>
    %240 = tpu.matmul %238, %239, %cst_209 {dimension_numbers = #tpu.dot_dimension_numbers<[1], [0], [0], [1], [0, 0, 1, 1], [], []>} : vector<128x128xbf16>, vector<128x128xbf16>, vector<128x128xf32> -> vector<128x128xf32>
    %241 = arith.addf %235, %240 : vector<128x128xf32>
    %c0_210 = arith.constant 0 : index
    %c0_211 = arith.constant 0 : index
    %c2_212 = arith.constant 2 : index
    %c0_213 = arith.constant 0 : index
    %242 = vector.load %arg20[%c0_210, %c0_211, %c2_212, %c0_213] : memref<2x10x10x128xf32, #tpu.memory_space<vmem>>, vector<2x8x8x128xf32>
    %243 = vector.shape_cast %242 : vector<2x8x8x128xf32> to vector<128x128xf32>
    %244 = arith.truncf %243 : vector<128x128xf32> to vector<128x128xbf16>
    %c256_214 = arith.constant 256 : index
    %c0_215 = arith.constant 0 : index
    %245 = vector.load %arg24[%c256_214, %c0_215] : memref<1152x128xbf16, #tpu.memory_space<vmem>>, vector<128x128xbf16>
    %cst_216 = arith.constant dense<0.000000e+00> : vector<128x128xf32>
    %246 = tpu.matmul %244, %245, %cst_216 {dimension_numbers = #tpu.dot_dimension_numbers<[1], [0], [0], [1], [0, 0, 1, 1], [], []>} : vector<128x128xbf16>, vector<128x128xbf16>, vector<128x128xf32> -> vector<128x128xf32>
    %247 = arith.addf %241, %246 : vector<128x128xf32>
    %c0_217 = arith.constant 0 : index
    %c1_218 = arith.constant 1 : index
    %c0_219 = arith.constant 0 : index
    %c0_220 = arith.constant 0 : index
    %248 = vector.load %arg20[%c0_217, %c1_218, %c0_219, %c0_220] : memref<2x10x10x128xf32, #tpu.memory_space<vmem>>, vector<2x8x8x128xf32>
    %249 = vector.shape_cast %248 : vector<2x8x8x128xf32> to vector<128x128xf32>
    %250 = arith.truncf %249 : vector<128x128xf32> to vector<128x128xbf16>
    %c384_221 = arith.constant 384 : index
    %c0_222 = arith.constant 0 : index
    %251 = vector.load %arg24[%c384_221, %c0_222] : memref<1152x128xbf16, #tpu.memory_space<vmem>>, vector<128x128xbf16>
    %cst_223 = arith.constant dense<0.000000e+00> : vector<128x128xf32>
    %252 = tpu.matmul %250, %251, %cst_223 {dimension_numbers = #tpu.dot_dimension_numbers<[1], [0], [0], [1], [0, 0, 1, 1], [], []>} : vector<128x128xbf16>, vector<128x128xbf16>, vector<128x128xf32> -> vector<128x128xf32>
    %253 = arith.addf %247, %252 : vector<128x128xf32>
    %c0_224 = arith.constant 0 : index
    %c1_225 = arith.constant 1 : index
    %c1_226 = arith.constant 1 : index
    %c0_227 = arith.constant 0 : index
    %254 = vector.load %arg20[%c0_224, %c1_225, %c1_226, %c0_227] : memref<2x10x10x128xf32, #tpu.memory_space<vmem>>, vector<2x8x8x128xf32>
    %255 = vector.shape_cast %254 : vector<2x8x8x128xf32> to vector<128x128xf32>
    %256 = arith.truncf %255 : vector<128x128xf32> to vector<128x128xbf16>
    %c512_228 = arith.constant 512 : index
    %c0_229 = arith.constant 0 : index
    %257 = vector.load %arg24[%c512_228, %c0_229] : memref<1152x128xbf16, #tpu.memory_space<vmem>>, vector<128x128xbf16>
    %cst_230 = arith.constant dense<0.000000e+00> : vector<128x128xf32>
    %258 = tpu.matmul %256, %257, %cst_230 {dimension_numbers = #tpu.dot_dimension_numbers<[1], [0], [0], [1], [0, 0, 1, 1], [], []>} : vector<128x128xbf16>, vector<128x128xbf16>, vector<128x128xf32> -> vector<128x128xf32>
    %259 = arith.addf %253, %258 : vector<128x128xf32>
    %c0_231 = arith.constant 0 : index
    %c1_232 = arith.constant 1 : index
    %c2_233 = arith.constant 2 : index
    %c0_234 = arith.constant 0 : index
    %260 = vector.load %arg20[%c0_231, %c1_232, %c2_233, %c0_234] : memref<2x10x10x128xf32, #tpu.memory_space<vmem>>, vector<2x8x8x128xf32>
    %261 = vector.shape_cast %260 : vector<2x8x8x128xf32> to vector<128x128xf32>
    %262 = arith.truncf %261 : vector<128x128xf32> to vector<128x128xbf16>
    %c640_235 = arith.constant 640 : index
    %c0_236 = arith.constant 0 : index
    %263 = vector.load %arg24[%c640_235, %c0_236] : memref<1152x128xbf16, #tpu.memory_space<vmem>>, vector<128x128xbf16>
    %cst_237 = arith.constant dense<0.000000e+00> : vector<128x128xf32>
    %264 = tpu.matmul %262, %263, %cst_237 {dimension_numbers = #tpu.dot_dimension_numbers<[1], [0], [0], [1], [0, 0, 1, 1], [], []>} : vector<128x128xbf16>, vector<128x128xbf16>, vector<128x128xf32> -> vector<128x128xf32>
    %265 = arith.addf %259, %264 : vector<128x128xf32>
    %c0_238 = arith.constant 0 : index
    %c2_239 = arith.constant 2 : index
    %c0_240 = arith.constant 0 : index
    %c0_241 = arith.constant 0 : index
    %266 = vector.load %arg20[%c0_238, %c2_239, %c0_240, %c0_241] : memref<2x10x10x128xf32, #tpu.memory_space<vmem>>, vector<2x8x8x128xf32>
    %267 = vector.shape_cast %266 : vector<2x8x8x128xf32> to vector<128x128xf32>
    %268 = arith.truncf %267 : vector<128x128xf32> to vector<128x128xbf16>
    %c768_242 = arith.constant 768 : index
    %c0_243 = arith.constant 0 : index
    %269 = vector.load %arg24[%c768_242, %c0_243] : memref<1152x128xbf16, #tpu.memory_space<vmem>>, vector<128x128xbf16>
    %cst_244 = arith.constant dense<0.000000e+00> : vector<128x128xf32>
    %270 = tpu.matmul %268, %269, %cst_244 {dimension_numbers = #tpu.dot_dimension_numbers<[1], [0], [0], [1], [0, 0, 1, 1], [], []>} : vector<128x128xbf16>, vector<128x128xbf16>, vector<128x128xf32> -> vector<128x128xf32>
    %271 = arith.addf %265, %270 : vector<128x128xf32>
    %c0_245 = arith.constant 0 : index
    %c2_246 = arith.constant 2 : index
    %c1_247 = arith.constant 1 : index
    %c0_248 = arith.constant 0 : index
    %272 = vector.load %arg20[%c0_245, %c2_246, %c1_247, %c0_248] : memref<2x10x10x128xf32, #tpu.memory_space<vmem>>, vector<2x8x8x128xf32>
    %273 = vector.shape_cast %272 : vector<2x8x8x128xf32> to vector<128x128xf32>
    %274 = arith.truncf %273 : vector<128x128xf32> to vector<128x128xbf16>
    %c896_249 = arith.constant 896 : index
    %c0_250 = arith.constant 0 : index
    %275 = vector.load %arg24[%c896_249, %c0_250] : memref<1152x128xbf16, #tpu.memory_space<vmem>>, vector<128x128xbf16>
    %cst_251 = arith.constant dense<0.000000e+00> : vector<128x128xf32>
    %276 = tpu.matmul %274, %275, %cst_251 {dimension_numbers = #tpu.dot_dimension_numbers<[1], [0], [0], [1], [0, 0, 1, 1], [], []>} : vector<128x128xbf16>, vector<128x128xbf16>, vector<128x128xf32> -> vector<128x128xf32>
    %277 = arith.addf %271, %276 : vector<128x128xf32>
    %c0_252 = arith.constant 0 : index
    %c2_253 = arith.constant 2 : index
    %c2_254 = arith.constant 2 : index
    %c0_255 = arith.constant 0 : index
    %278 = vector.load %arg20[%c0_252, %c2_253, %c2_254, %c0_255] : memref<2x10x10x128xf32, #tpu.memory_space<vmem>>, vector<2x8x8x128xf32>
    %279 = vector.shape_cast %278 : vector<2x8x8x128xf32> to vector<128x128xf32>
    %280 = arith.truncf %279 : vector<128x128xf32> to vector<128x128xbf16>
    %c1024_256 = arith.constant 1024 : index
    %c0_257 = arith.constant 0 : index
    %281 = vector.load %arg24[%c1024_256, %c0_257] : memref<1152x128xbf16, #tpu.memory_space<vmem>>, vector<128x128xbf16>
    %cst_258 = arith.constant dense<0.000000e+00> : vector<128x128xf32>
    %282 = tpu.matmul %280, %281, %cst_258 {dimension_numbers = #tpu.dot_dimension_numbers<[1], [0], [0], [1], [0, 0, 1, 1], [], []>} : vector<128x128xbf16>, vector<128x128xbf16>, vector<128x128xf32> -> vector<128x128xf32>
    %283 = arith.addf %277, %282 : vector<128x128xf32>
    %c0_259 = arith.constant 0 : index
    %c0_260 = arith.constant 0 : index
    %284 = vector.load %arg14[%c0_259, %c0_260] : memref<1x128xf32, #tpu.memory_space<vmem>>, vector<1x128xf32>
    %285 = vector.broadcast %284 : vector<1x128xf32> to vector<128x128xf32>
    %286 = arith.addf %283, %285 : vector<128x128xf32>
    %cst_261 = arith.constant 0.000000e+00 : f32
    %287 = vector.broadcast %cst_261 : f32 to vector<128x128xf32>
    %288 = arith.maximumf %286, %287 : vector<128x128xf32>
    %289 = vector.shape_cast %288 : vector<128x128xf32> to vector<16x8x128xf32>
    %c0_262 = arith.constant 0 : index
    %c0_263 = arith.constant 0 : index
    %c0_264 = arith.constant 0 : index
    %290 = vector.load %arg22[%c0_262, %c0_263, %c0_264] : memref<16x8x128xf32, #tpu.memory_space<vmem>>, vector<16x8x128xf32>
    tpu.vector_store %arg22[%c0_262, %c0_263, %c0_264], %289 {strides = array<i32>} : memref<16x8x128xf32, #tpu.memory_space<vmem>>, vector<16x8x128xf32>,
    %c0_265 = arith.constant 0 : index
    %c0_266 = arith.constant 0 : index
    %c0_267 = arith.constant 0 : index
    %291 = tpu.strided_load %arg22[%c0_265, %c0_266, %c0_267] {strides = array<i32: 1, 2, 1>} : memref<16x8x128xf32, #tpu.memory_space<vmem>>, vector<16x4x128xf32>
    %c0_268 = arith.constant 0 : index
    %c1_269 = arith.constant 1 : index
    %c0_270 = arith.constant 0 : index
    %292 = tpu.strided_load %arg22[%c0_268, %c1_269, %c0_270] {strides = array<i32: 1, 2, 1>} : memref<16x8x128xf32, #tpu.memory_space<vmem>>, vector<16x4x128xf32>
    %293 = arith.maximumf %291, %292 : vector<16x4x128xf32>
    %294 = vector.shape_cast %293 : vector<16x4x128xf32> to vector<8x2x4x128xf32>
    %295 = vector.extract_strided_slice %294 {offsets = [0, 0, 0, 0], sizes = [8, 1, 4, 128], strides = [1, 1, 1, 1]} : vector<8x2x4x128xf32> to vector<8x1x4x128xf32>
    %296 = vector.shape_cast %295 : vector<8x1x4x128xf32> to vector<8x4x128xf32>
    %297 = vector.extract_strided_slice %294 {offsets = [0, 1, 0, 0], sizes = [8, 1, 4, 128], strides = [1, 1, 1, 1]} : vector<8x2x4x128xf32> to vector<8x1x4x128xf32>
    %298 = vector.shape_cast %297 : vector<8x1x4x128xf32> to vector<8x4x128xf32>
    %299 = arith.maximumf %296, %298 : vector<8x4x128xf32>
    %300 = vector.shape_cast %299 : vector<8x4x128xf32> to vector<2x4x4x128xf32>
    %cst_271 = arith.constant dense<0.000000e+00> : vector<2x4x128xf32>
    %301 = vector.multi_reduction <add>, %300, %cst_271 [1] : vector<2x4x4x128xf32> to vector<2x4x128xf32>
    %cst_272 = arith.constant dense<0.000000e+00> : vector<2x128xf32>
    %302 = vector.multi_reduction <add>, %301, %cst_272 [1] : vector<2x4x128xf32> to vector<2x128xf32>
    %cst_273 = arith.constant 6.250000e-02 : f32
    %303 = vector.broadcast %cst_273 : f32 to vector<2x128xf32>
    %304 = arith.mulf %302, %303 : vector<2x128xf32>
    %c0_274 = arith.constant 0 : index
    %c0_275 = arith.constant 0 : index
    %305 = vector.load %arg15[%c0_274, %c0_275] : memref<128x10xf32, #tpu.memory_space<vmem>>, vector<128x10xf32>
    %cst_276 = arith.constant dense<0.000000e+00> : vector<2x10xf32>
    %306 = tpu.matmul %304, %305, %cst_276 {dimension_numbers = #tpu.dot_dimension_numbers<[1], [0], [0], [1], [0, 0, 1, 1], [], []>} : vector<2x128xf32>, vector<128x10xf32>, vector<2x10xf32> -> vector<2x10xf32>
    %c0_277 = arith.constant 0 : index
    %c0_278 = arith.constant 0 : index
    %307 = vector.load %arg16[%c0_277, %c0_278] : memref<1x10xf32, #tpu.memory_space<vmem>>, vector<1x10xf32>
    %308 = vector.broadcast %307 : vector<1x10xf32> to vector<2x10xf32>
    %309 = arith.addf %306, %308 : vector<2x10xf32>
    %cst_279 = arith.constant dense<0xFF800000> : vector<2xf32>
    %310 = vector.multi_reduction <maximumf>, %309, %cst_279 [1] : vector<2x10xf32> to vector<2xf32>
    %311 = vector.shape_cast %310 : vector<2xf32> to vector<2x1xf32>
    %312 = vector.broadcast %311 : vector<2x1xf32> to vector<2x10xf32>
    %313 = arith.subf %309, %312 : vector<2x10xf32>
    %314 = math.exp %313 : vector<2x10xf32>
    %cst_280 = arith.constant dense<0.000000e+00> : vector<2xf32>
    %315 = vector.multi_reduction <add>, %314, %cst_280 [1] : vector<2x10xf32> to vector<2xf32>
    %316 = vector.shape_cast %315 : vector<2xf32> to vector<2x1xf32>
    %317 = vector.broadcast %316 : vector<2x1xf32> to vector<2x10xf32>
    %318 = arith.divf %314, %317 : vector<2x10xf32>
    %c0_281 = arith.constant 0 : index
    %c0_282 = arith.constant 0 : index
    %319 = vector.load %arg17[%c0_281, %c0_282] : memref<2x10xf32, #tpu.memory_space<vmem>>, vector<2x10xf32>
    tpu.vector_store %arg17[%c0_281, %c0_282], %318 {strides = array<i32>} : memref<2x10xf32, #tpu.memory_space<vmem>>, vector<2x10xf32>,
    return
  }
}

</mosaic_0001>

<llo_original>
// kernel: fcnn_forward.1
$region0: #{fcnn_forward.1}
  #allocation0 [shape = 'u32[]', space=smem, size = 0x4, offset = 0x4, fixed_abs, tag = 'smem constant byte address 0x4 - core index']
  #allocation1 [shape = 'u32[144,128]{1,0:T(1,128)}', space=vmem, size = 0x12000, scoped, tag = 'internal scratch']
  #allocation2 [shape = 'f32[2,18,18,128]{3,2,1,0:T(8,128)}', space=vmem, size = 0x6c000, scoped, tag = 'scratch operand']
  #allocation3 [shape = 'f32[2,10,10,128]{3,2,1,0:T(8,128)}', space=vmem, size = 0x28000, scoped, tag = 'scratch operand']
  #allocation4 [shape = 'f32[2,10,10,128]{3,2,1,0:T(8,128)}', space=vmem, size = 0x28000, scoped, tag = 'scratch operand']
  #allocation5 [shape = 'f32[32,16,128]{2,1,0:T(8,128)}', space=vmem, size = 0x40000, scoped, tag = 'scratch operand']
  #allocation6 [shape = 'f32[16,8,128]{2,1,0:T(8,128)}', space=vmem, size = 0x10000, scoped, tag = 'scratch operand']
  #allocation7 [shape = 'bf16[1152,128]{1,0:T(16,128)(2,1)}', space=vmem, size = 0x48000, scoped, tag = 'scratch operand']
  #allocation8 [shape = 'bf16[1152,128]{1,0:T(16,128)(2,1)}', space=vmem, size = 0x48000, scoped, tag = 'scratch operand']
  #allocation9 [shape = 's32[2]{0}', space=sflag, size = 0x8, scoped, tag = 'scratch operand']
  #allocation12 [shape = 's32[]', space=sflag, size = 0x4, offset = 0, fixed_abs, tag = 'sflag constant byte address 0x0 - dummy sync flag']
  #allocation13 [shape = 's32[]', space=sflag, size = 0x4, offset = 0, fixed_abs, tag = 'sflag constant byte address 0x0 - dummy sync flag']
  %s0 = inlined_call_operand.vmem [shape: f32[512,9], index: 0, kind: input, shape index: {}]
  %s1 = inlined_call_operand.vmem [shape: bf16[9,128], index: 1, kind: input, shape index: {}]
  %s2 = inlined_call_operand.vmem [shape: f32[1,128], index: 2, kind: input, shape index: {}]
  %s3 = inlined_call_operand.vmem [shape: f32[1,128], index: 3, kind: input, shape index: {}]
  %s4 = inlined_call_operand.vmem [shape: f32[1,128], index: 4, kind: input, shape index: {}]
  %s5 = inlined_call_operand.vmem [shape: bf16[1152,128], index: 5, kind: input, shape index: {}]
  %s6 = inlined_call_operand.vmem [shape: f32[1,128], index: 6, kind: input, shape index: {}]
  %s7 = inlined_call_operand.vmem [shape: f32[1,128], index: 7, kind: input, shape index: {}]
  %s8 = inlined_call_operand.vmem [shape: f32[1,128], index: 8, kind: input, shape index: {}]
  %s9 = inlined_call_operand.vmem [shape: bf16[1152,128], index: 9, kind: input, shape index: {}]
  %s10 = inlined_call_operand.vmem [shape: f32[1,128], index: 10, kind: input, shape index: {}]
  %s11 = inlined_call_operand.vmem [shape: f32[1,128], index: 11, kind: input, shape index: {}]
  %s12 = inlined_call_operand.vmem [shape: f32[1,128], index: 12, kind: input, shape index: {}]
  %s13 = inlined_call_operand.vmem [shape: bf16[1152,128], index: 13, kind: input, shape index: {}]
  %s14 = inlined_call_operand.vmem [shape: f32[1,128], index: 14, kind: input, shape index: {}]
  %s15 = inlined_call_operand.vmem [shape: f32[128,10], index: 15, kind: input, shape index: {}]
  %s16 = inlined_call_operand.vmem [shape: f32[1,10], index: 16, kind: input, shape index: {}]
  %s17 = inlined_call_operand.hbm [shape: f32[2,10], index: 17, kind: output, shape index: {}]
  %s18 = sld [smem:[#allocation0]]
  $region138: #{fcnn_forward.1} parent=0
    _
  %s20 = ssub.s32 1, %s18
  %s21 = scalar_select 0, %s20, %s18
  $region1: #{fcnn_forward.1} parent=0
    #allocation10 [shape = 'u8[1024]{0}', space=vmem, size = 0x400, scoped, tag = 'output window, operand 0, single buffered']
    #allocation11 [shape = 's32[1]{0}', space=sflag, size = 0x4, scoped, tag = 'scoped memory for fcnn_forward.1']
    %22 = vsyncpa [#allocation11], 0
    // Predicated region
    $region2: #{fcnn_forward.1} parent=1 // pred_check
      _
    $region3: #{fcnn_forward.1} parent=1 // pred_check_branch
      %24 = sbr.rel (0) target = $region5
    $region4: #{fcnn_forward.1} parent=1 // pred_region
      _
    $region5: #{fcnn_forward.1} parent=1 // pred_fallthru
      _
    // Predicated region
    $region6: #{fcnn_forward.1} parent=1 // pred_check
      _
    $region7: #{fcnn_forward.1} parent=1 // pred_check_branch
      %26 = sbr.rel (0) target = $region9
    $region8: #{fcnn_forward.1} parent=1 // pred_region
      _
    $region9: #{fcnn_forward.1} parent=1 // pred_fallthru
      _
    // Predicated region
    $region10: #{fcnn_forward.1} parent=1 // pred_check
      _
    $region11: #{fcnn_forward.1} parent=1 // pred_check_branch
      %28 = sbr.rel (0) target = $region13
    $region12: #{fcnn_forward.1} parent=1 // pred_region
      _
    $region13: #{fcnn_forward.1} parent=1 // pred_fallthru
      _
    // Predicated region
    $region14: #{fcnn_forward.1} parent=1 // pred_check
      _
    $region15: #{fcnn_forward.1} parent=1 // pred_check_branch
      %30 = sbr.rel (0) target = $region17
    $region16: #{fcnn_forward.1} parent=1 // pred_region
      _
    $region17: #{fcnn_forward.1} parent=1 // pred_fallthru
      _
    // Predicated region
    $region18: #{fcnn_forward.1} parent=1 // pred_check
      _
    $region19: #{fcnn_forward.1} parent=1 // pred_check_branch
      %32 = sbr.rel (0) target = $region21
    $region20: #{fcnn_forward.1} parent=1 // pred_region
      _
    $region21: #{fcnn_forward.1} parent=1 // pred_fallthru
      _
    // Predicated region
    $region22: #{fcnn_forward.1} parent=1 // pred_check
      _
    $region23: #{fcnn_forward.1} parent=1 // pred_check_branch
      %34 = sbr.rel (0) target = $region25
    $region24: #{fcnn_forward.1} parent=1 // pred_region
      _
    $region25: #{fcnn_forward.1} parent=1 // pred_fallthru
      _
    // Predicated region
    $region26: #{fcnn_forward.1} parent=1 // pred_check
      _
    $region27: #{fcnn_forward.1} parent=1 // pred_check_branch
      %36 = sbr.rel (0) target = $region29
    $region28: #{fcnn_forward.1} parent=1 // pred_region
      _
    $region29: #{fcnn_forward.1} parent=1 // pred_fallthru
      _
    // Predicated region
    $region30: #{fcnn_forward.1} parent=1 // pred_check
      _
    $region31: #{fcnn_forward.1} parent=1 // pred_check_branch
      %38 = sbr.rel (0) target = $region33
    $region32: #{fcnn_forward.1} parent=1 // pred_region
      _
    $region33: #{fcnn_forward.1} parent=1 // pred_fallthru
      _
    // Predicated region
    $region34: #{fcnn_forward.1} parent=1 // pred_check
      _
    $region35: #{fcnn_forward.1} parent=1 // pred_check_branch
      %40 = sbr.rel (0) target = $region37
    $region36: #{fcnn_forward.1} parent=1 // pred_region
      _
    $region37: #{fcnn_forward.1} parent=1 // pred_fallthru
      _
    // Predicated region
    $region38: #{fcnn_forward.1} parent=1 // pred_check
      _
    $region39: #{fcnn_forward.1} parent=1 // pred_check_branch
      %42 = sbr.rel (0) target = $region41
    $region40: #{fcnn_forward.1} parent=1 // pred_region
      _
    $region41: #{fcnn_forward.1} parent=1 // pred_fallthru
      _
    // Predicated region
    $region42: #{fcnn_forward.1} parent=1 // pred_check
      _
    $region43: #{fcnn_forward.1} parent=1 // pred_check_branch
      %44 = sbr.rel (0) target = $region45
    $region44: #{fcnn_forward.1} parent=1 // pred_region
      _
    $region45: #{fcnn_forward.1} parent=1 // pred_fallthru
      _
    // Predicated region
    $region46: #{fcnn_forward.1} parent=1 // pred_check
      _
    $region47: #{fcnn_forward.1} parent=1 // pred_check_branch
      %46 = sbr.rel (0) target = $region49
    $region48: #{fcnn_forward.1} parent=1 // pred_region
      _
    $region49: #{fcnn_forward.1} parent=1 // pred_fallthru
      _
    // Predicated region
    $region50: #{fcnn_forward.1} parent=1 // pred_check
      _
    $region51: #{fcnn_forward.1} parent=1 // pred_check_branch
      %48 = sbr.rel (0) target = $region53
    $region52: #{fcnn_forward.1} parent=1 // pred_region
      _
    $region53: #{fcnn_forward.1} parent=1 // pred_fallthru
      _
    // Predicated region
    $region54: #{fcnn_forward.1} parent=1 // pred_check
      _
    $region55: #{fcnn_forward.1} parent=1 // pred_check_branch
      %50 = sbr.rel (0) target = $region57
    $region56: #{fcnn_forward.1} parent=1 // pred_region
      _
    $region57: #{fcnn_forward.1} parent=1 // pred_fallthru
      _
    // Predicated region
    $region58: #{fcnn_forward.1} parent=1 // pred_check
      _
    $region59: #{fcnn_forward.1} parent=1 // pred_check_branch
      %52 = sbr.rel (0) target = $region61
    $region60: #{fcnn_forward.1} parent=1 // pred_region
      _
    $region61: #{fcnn_forward.1} parent=1 // pred_fallthru
      _
    %p55 = scmp.lt.u32.totalorder 576, 8
    %p56 = pneg %p55
    // Predicated region
    $region62: #{fcnn_forward.1} parent=1 // pred_check
      _
    $region63: #{fcnn_forward.1} parent=1 // pred_check_branch
      %58 = sbr.rel (%p55) target = $region65
    $region64: #{fcnn_forward.1} parent=1 // pred_region
      %s73 = sand.u32 576, 7
      %p74 = scmp.eq.s32.totalorder %s73, 0
      // Predicated region
      $region77: #{fcnn_forward.1} parent=64 // pred_check
        %p75 = pneg %p74
      $region78: #{fcnn_forward.1} parent=64 // pred_check_branch
        %77 = sbr.rel (%p75) target = $region80
      $region79: #{fcnn_forward.1} parent=64 // pred_region
        loop: start=0, step=1, limit=1
        $region81: #{fcnn_forward.1} parent=79 // loop_pre_header
          _
        $region82: #{fcnn_forward.1} parent=79 // loop_header
          %s79 = sphi 0, %s83
          %p80 = scmp.ge.s32.totalorder %s79, 1
          %s84 = sphi %s9, %s9
          %s85 = sphi [#allocation7], [#allocation7]
        $region83: #{fcnn_forward.1} parent=79 // loop_header_branch
          %82 = sbr.rel (%p80) target = $region87
        $region84: #{fcnn_forward.1} parent=79 // loop_body
          %v86 = vld [vmem:[%s84] sm:$0xff]
          %87 = vst [vmem:[%s85] sm:$0xff] %v86
          %v88 = vld [vmem:[%s84 + $0x8] sm:$0xff]
          %89 = vst [vmem:[%s85 + $0x8] sm:$0xff] %v88
          %v90 = vld [vmem:[%s84 + $0x10] sm:$0xff]
          %91 = vst [vmem:[%s85 + $0x10] sm:$0xff] %v90
          %v92 = vld [vmem:[%s84 + $0x18] sm:$0xff]
          %93 = vst [vmem:[%s85 + $0x18] sm:$0xff] %v92
          %v94 = vld [vmem:[%s84 + $0x20] sm:$0xff]
          %95 = vst [vmem:[%s85 + $0x20] sm:$0xff] %v94
          %v96 = vld [vmem:[%s84 + $0x28] sm:$0xff]
          %97 = vst [vmem:[%s85 + $0x28] sm:$0xff] %v96
          %v98 = vld [vmem:[%s84 + $0x30] sm:$0xff]
          %99 = vst [vmem:[%s85 + $0x30] sm:$0xff] %v98
          %v100 = vld [vmem:[%s84 + $0x38] sm:$0xff]
          %101 = vst [vmem:[%s85 + $0x38] sm:$0xff] %v100
          %v102 = vld [vmem:[%s84 + $0x40] sm:$0xff]
          %103 = vst [vmem:[%s85 + $0x40] sm:$0xff] %v102
          %v104 = vld [vmem:[%s84 + $0x48] sm:$0xff]
          %105 = vst [vmem:[%s85 + $0x48] sm:$0xff] %v104
          %v106 = vld [vmem:[%s84 + $0x50] sm:$0xff]
          %107 = vst [vmem:[%s85 + $0x50] sm:$0xff] %v106
          %v108 = vld [vmem:[%s84 + $0x58] sm:$0xff]
          %109 = vst [vmem:[%s85 + $0x58] sm:$0xff] %v108
          %v110 = vld [vmem:[%s84 + $0x60] sm:$0xff]
          %111 = vst [vmem:[%s85 + $0x60] sm:$0xff] %v110
          %v112 = vld [vmem:[%s84 + $0x68] sm:$0xff]
          %113 = vst [vmem:[%s85 + $0x68] sm:$0xff] %v112
          %v114 = vld [vmem:[%s84 + $0x70] sm:$0xff]
          %115 = vst [vmem:[%s85 + $0x70] sm:$0xff] %v114
          %v116 = vld [vmem:[%s84 + $0x78] sm:$0xff]
          %117 = vst [vmem:[%s85 + $0x78] sm:$0xff] %v116
          %v118 = vld [vmem:[%s84 + $0x80] sm:$0xff]
          %119 = vst [vmem:[%s85 + $0x80] sm:$0xff] %v118
          %v120 = vld [vmem:[%s84 + $0x88] sm:$0xff]
          %121 = vst [vmem:[%s85 + $0x88] sm:$0xff] %v120
          %v122 = vld [vmem:[%s84 + $0x90] sm:$0xff]
          %123 = vst [vmem:[%s85 + $0x90] sm:$0xff] %v122
          %v124 = vld [vmem:[%s84 + $0x98] sm:$0xff]
          %125 = vst [vmem:[%s85 + $0x98] sm:$0xff] %v124
          %v126 = vld [vmem:[%s84 + $0xa0] sm:$0xff]
          %127 = vst [vmem:[%s85 + $0xa0] sm:$0xff] %v126
          %v128 = vld [vmem:[%s84 + $0xa8] sm:$0xff]
          %129 = vst [vmem:[%s85 + $0xa8] sm:$0xff] %v128
          %v130 = vld [vmem:[%s84 + $0xb0] sm:$0xff]
          %131 = vst [vmem:[%s85 + $0xb0] sm:$0xff] %v130
          %v132 = vld [vmem:[%s84 + $0xb8] sm:$0xff]
          %133 = vst [vmem:[%s85 + $0xb8] sm:$0xff] %v132
          %v134 = vld [vmem:[%s84 + $0xc0] sm:$0xff]
          %135 = vst [vmem:[%s85 + $0xc0] sm:$0xff] %v134
          %v136 = vld [vmem:[%s84 + $0xc8] sm:$0xff]
          %137 = vst [vmem:[%s85 + $0xc8] sm:$0xff] %v136
          %v138 = vld [vmem:[%s84 + $0xd0] sm:$0xff]
          %139 = vst [vmem:[%s85 + $0xd0] sm:$0xff] %v138
          %v140 = vld [vmem:[%s84 + $0xd8] sm:$0xff]
          %141 = vst [vmem:[%s85 + $0xd8] sm:$0xff] %v140
          %v142 = vld [vmem:[%s84 + $0xe0] sm:$0xff]
          %143 = vst [vmem:[%s85 + $0xe0] sm:$0xff] %v142
          %v144 = vld [vmem:[%s84 + $0xe8] sm:$0xff]
          %145 = vst [vmem:[%s85 + $0xe8] sm:$0xff] %v144
          %v146 = vld [vmem:[%s84 + $0xf0] sm:$0xff]
          %147 = vst [vmem:[%s85 + $0xf0] sm:$0xff] %v146
          %v148 = vld [vmem:[%s84 + $0xf8] sm:$0xff]
          %149 = vst [vmem:[%s85 + $0xf8] sm:$0xff] %v148
          %v150 = vld [vmem:[%s84 + $0x100] sm:$0xff]
          %151 = vst [vmem:[%s85 + $0x100] sm:$0xff] %v150
          %v152 = vld [vmem:[%s84 + $0x108] sm:$0xff]
          %153 = vst [vmem:[%s85 + $0x108] sm:$0xff] %v152
          %v154 = vld [vmem:[%s84 + $0x110] sm:$0xff]
          %155 = vst [vmem:[%s85 + $0x110] sm:$0xff] %v154
          %v156 = vld [vmem:[%s84 + $0x118] sm:$0xff]
          %157 = vst [vmem:[%s85 + $0x118] sm:$0xff] %v156
          %v158 = vld [vmem:[%s84 + $0x120] sm:$0xff]
          %159 = vst [vmem:[%s85 + $0x120] sm:$0xff] %v158
          %v160 = vld [vmem:[%s84 + $0x128] sm:$0xff]
          %161 = vst [vmem:[%s85 + $0x128] sm:$0xff] %v160
          %v162 = vld [vmem:[%s84 + $0x130] sm:$0xff]
          %163 = vst [vmem:[%s85 + $0x130] sm:$0xff] %v162
          %v164 = vld [vmem:[%s84 + $0x138] sm:$0xff]
          %165 = vst [vmem:[%s85 + $0x138] sm:$0xff] %v164
          %v166 = vld [vmem:[%s84 + $0x140] sm:$0xff]
          %167 = vst [vmem:[%s85 + $0x140] sm:$0xff] %v166
          %v168 = vld [vmem:[%s84 + $0x148] sm:$0xff]
          %169 = vst [vmem:[%s85 + $0x148] sm:$0xff] %v168
          %v170 = vld [vmem:[%s84 + $0x150] sm:$0xff]
          %171 = vst [vmem:[%s85 + $0x150] sm:$0xff] %v170
          %v172 = vld [vmem:[%s84 + $0x158] sm:$0xff]
          %173 = vst [vmem:[%s85 + $0x158] sm:$0xff] %v172
          %v174 = vld [vmem:[%s84 + $0x160] sm:$0xff]
          %175 = vst [vmem:[%s85 + $0x160] sm:$0xff] %v174
          %v176 = vld [vmem:[%s84 + $0x168] sm:$0xff]
          %177 = vst [vmem:[%s85 + $0x168] sm:$0xff] %v176
          %v178 = vld [vmem:[%s84 + $0x170] sm:$0xff]
          %179 = vst [vmem:[%s85 + $0x170] sm:$0xff] %v178
          %v180 = vld [vmem:[%s84 + $0x178] sm:$0xff]
          %181 = vst [vmem:[%s85 + $0x178] sm:$0xff] %v180
          %v182 = vld [vmem:[%s84 + $0x180] sm:$0xff]
          %183 = vst [vmem:[%s85 + $0x180] sm:$0xff] %v182
          %v184 = vld [vmem:[%s84 + $0x188] sm:$0xff]
          %185 = vst [vmem:[%s85 + $0x188] sm:$0xff] %v184
          %v186 = vld [vmem:[%s84 + $0x190] sm:$0xff]
          %187 = vst [vmem:[%s85 + $0x190] sm:$0xff] %v186
          %v188 = vld [vmem:[%s84 + $0x198] sm:$0xff]
          %189 = vst [vmem:[%s85 + $0x198] sm:$0xff] %v188
          %v190 = vld [vmem:[%s84 + $0x1a0] sm:$0xff]
          %191 = vst [vmem:[%s85 + $0x1a0] sm:$0xff] %v190
          %v192 = vld [vmem:[%s84 + $0x1a8] sm:$0xff]
          %193 = vst [vmem:[%s85 + $0x1a8] sm:$0xff] %v192
          %v194 = vld [vmem:[%s84 + $0x1b0] sm:$0xff]
          %195 = vst [vmem:[%s85 + $0x1b0] sm:$0xff] %v194
          %v196 = vld [vmem:[%s84 + $0x1b8] sm:$0xff]
          %197 = vst [vmem:[%s85 + $0x1b8] sm:$0xff] %v196
          %v198 = vld [vmem:[%s84 + $0x1c0] sm:$0xff]
          %199 = vst [vmem:[%s85 + $0x1c0] sm:$0xff] %v198
          %v200 = vld [vmem:[%s84 + $0x1c8] sm:$0xff]
          %201 = vst [vmem:[%s85 + $0x1c8] sm:$0xff] %v200
          %v202 = vld [vmem:[%s84 + $0x1d0] sm:$0xff]
          %203 = vst [vmem:[%s85 + $0x1d0] sm:$0xff] %v202
          %v204 = vld [vmem:[%s84 + $0x1d8] sm:$0xff]
          %205 = vst [vmem:[%s85 + $0x1d8] sm:$0xff] %v204
          %v206 = vld [vmem:[%s84 + $0x1e0] sm:$0xff]
          %207 = vst [vmem:[%s85 + $0x1e0] sm:$0xff] %v206
          %v208 = vld [vmem:[%s84 + $0x1e8] sm:$0xff]
          %209 = vst [vmem:[%s85 + $0x1e8] sm:$0xff] %v208
          %v210 = vld [vmem:[%s84 + $0x1f0] sm:$0xff]
          %211 = vst [vmem:[%s85 + $0x1f0] sm:$0xff] %v210
          %v212 = vld [vmem:[%s84 + $0x1f8] sm:$0xff]
          %213 = vst [vmem:[%s85 + $0x1f8] sm:$0xff] %v212
          %v214 = vld [vmem:[%s84 + $0x200] sm:$0xff]
          %215 = vst [vmem:[%s85 + $0x200] sm:$0xff] %v214
          %v216 = vld [vmem:[%s84 + $0x208] sm:$0xff]
          %217 = vst [vmem:[%s85 + $0x208] sm:$0xff] %v216
          %v218 = vld [vmem:[%s84 + $0x210] sm:$0xff]
          %219 = vst [vmem:[%s85 + $0x210] sm:$0xff] %v218
          %v220 = vld [vmem:[%s84 + $0x218] sm:$0xff]
          %221 = vst [vmem:[%s85 + $0x218] sm:$0xff] %v220
          %v222 = vld [vmem:[%s84 + $0x220] sm:$0xff]
          %223 = vst [vmem:[%s85 + $0x220] sm:$0xff] %v222
          %v224 = vld [vmem:[%s84 + $0x228] sm:$0xff]
          %225 = vst [vmem:[%s85 + $0x228] sm:$0xff] %v224
          %v226 = vld [vmem:[%s84 + $0x230] sm:$0xff]
          %227 = vst [vmem:[%s85 + $0x230] sm:$0xff] %v226
          %v228 = vld [vmem:[%s84 + $0x238] sm:$0xff]
          %229 = vst [vmem:[%s85 + $0x238] sm:$0xff] %v228
        $region85: #{fcnn_forward.1} parent=79 // loop_footer
          %s83 = sadd.s32 1, %s79
        $region86: #{fcnn_forward.1} parent=79 // loop_footer_branch
          %78 = sbr.rel target = $region82
        $region87: #{fcnn_forward.1} parent=79 // loop_exit
          _
      $region80: #{fcnn_forward.1} parent=64 // pred_fallthru
        _
      %p230 = pneg %p74
      // Predicated region
      $region88: #{fcnn_forward.1} parent=64 // pred_check
        _
      $region89: #{fcnn_forward.1} parent=64 // pred_check_branch
        %232 = sbr.rel (%p74) target = $region91
      $region90: #{fcnn_forward.1} parent=64 // pred_region
        %s233 = sand.u32 576, 7
      $region91: #{fcnn_forward.1} parent=64 // pred_fallthru
        _
    $region65: #{fcnn_forward.1} parent=1 // pred_fallthru
      _
    // Predicated region
    $region66: #{fcnn_forward.1} parent=1 // pred_check
      %p59 = pneg %p55
    $region67: #{fcnn_forward.1} parent=1 // pred_check_branch
      %61 = sbr.rel (%p59) target = $region69
    $region68: #{fcnn_forward.1} parent=1 // pred_region
      %s62 = sshllo.u32 0, 576
      loop: start=0, step=1, limit=1
      $region70: #{fcnn_forward.1} parent=68 // loop_pre_header
        _
      $region71: #{fcnn_forward.1} parent=68 // loop_header
        %s64 = sphi 0, %s68
        %p65 = scmp.ge.s32.totalorder %s64, 1
        %s69 = sphi %s9, %s9
        %s70 = sphi [#allocation7], [#allocation7]
      $region72: #{fcnn_forward.1} parent=68 // loop_header_branch
        %67 = sbr.rel (%p65) target = $region76
      $region73: #{fcnn_forward.1} parent=68 // loop_body
        %v71 = vld [vmem:[%s69] sm:%s62]
        %72 = vst [vmem:[%s70] sm:%s62] %v71
      $region74: #{fcnn_forward.1} parent=68 // loop_footer
        %s68 = sadd.s32 1, %s64
      $region75: #{fcnn_forward.1} parent=68 // loop_footer_branch
        %63 = sbr.rel target = $region71
      $region76: #{fcnn_forward.1} parent=68 // loop_exit
        _
    $region69: #{fcnn_forward.1} parent=1 // pred_fallthru
      _
    // Predicated region
    $region92: #{fcnn_forward.1} parent=1 // pred_check
      _
    $region93: #{fcnn_forward.1} parent=1 // pred_check_branch
      %236 = sbr.rel (0) target = $region95
    $region94: #{fcnn_forward.1} parent=1 // pred_region
      %237 = vsyncadd [#allocation9], 9216
    $region95: #{fcnn_forward.1} parent=1 // pred_fallthru
      _
    %s238 = scalar_lea.sflag [#allocation9], 1
    %p240 = scmp.lt.u32.totalorder 576, 8
    %p241 = pneg %p240
    // Predicated region
    $region96: #{fcnn_forward.1} parent=1 // pred_check
      _
    $region97: #{fcnn_forward.1} parent=1 // pred_check_branch
      %243 = sbr.rel (%p240) target = $region99
    $region98: #{fcnn_forward.1} parent=1 // pred_region
      %s258 = sand.u32 576, 7
      %p259 = scmp.eq.s32.totalorder %s258, 0
      // Predicated region
      $region111: #{fcnn_forward.1} parent=98 // pred_check
        %p260 = pneg %p259
      $region112: #{fcnn_forward.1} parent=98 // pred_check_branch
        %262 = sbr.rel (%p260) target = $region114
      $region113: #{fcnn_forward.1} parent=98 // pred_region
        loop: start=0, step=1, limit=1
        $region115: #{fcnn_forward.1} parent=113 // loop_pre_header
          _
        $region116: #{fcnn_forward.1} parent=113 // loop_header
          %s264 = sphi 0, %s268
          %p265 = scmp.ge.s32.totalorder %s264, 1
          %s269 = sphi %s13, %s13
          %s270 = sphi [#allocation8], [#allocation8]
        $region117: #{fcnn_forward.1} parent=113 // loop_header_branch
          %267 = sbr.rel (%p265) target = $region121
        $region118: #{fcnn_forward.1} parent=113 // loop_body
          %v271 = vld [vmem:[%s269] sm:$0xff]
          %272 = vst [vmem:[%s270] sm:$0xff] %v271
          %v273 = vld [vmem:[%s269 + $0x8] sm:$0xff]
          %274 = vst [vmem:[%s270 + $0x8] sm:$0xff] %v273
          %v275 = vld [vmem:[%s269 + $0x10] sm:$0xff]
          %276 = vst [vmem:[%s270 + $0x10] sm:$0xff] %v275
          %v277 = vld [vmem:[%s269 + $0x18] sm:$0xff]
          %278 = vst [vmem:[%s270 + $0x18] sm:$0xff] %v277
          %v279 = vld [vmem:[%s269 + $0x20] sm:$0xff]
          %280 = vst [vmem:[%s270 + $0x20] sm:$0xff] %v279
          %v281 = vld [vmem:[%s269 + $0x28] sm:$0xff]
          %282 = vst [vmem:[%s270 + $0x28] sm:$0xff] %v281
          %v283 = vld [vmem:[%s269 + $0x30] sm:$0xff]
          %284 = vst [vmem:[%s270 + $0x30] sm:$0xff] %v283
          %v285 = vld [vmem:[%s269 + $0x38] sm:$0xff]
          %286 = vst [vmem:[%s270 + $0x38] sm:$0xff] %v285
          %v287 = vld [vmem:[%s269 + $0x40] sm:$0xff]
          %288 = vst [vmem:[%s270 + $0x40] sm:$0xff] %v287
          %v289 = vld [vmem:[%s269 + $0x48] sm:$0xff]
          %290 = vst [vmem:[%s270 + $0x48] sm:$0xff] %v289
          %v291 = vld [vmem:[%s269 + $0x50] sm:$0xff]
          %292 = vst [vmem:[%s270 + $0x50] sm:$0xff] %v291
          %v293 = vld [vmem:[%s269 + $0x58] sm:$0xff]
          %294 = vst [vmem:[%s270 + $0x58] sm:$0xff] %v293
          %v295 = vld [vmem:[%s269 + $0x60] sm:$0xff]
          %296 = vst [vmem:[%s270 + $0x60] sm:$0xff] %v295
          %v297 = vld [vmem:[%s269 + $0x68] sm:$0xff]
          %298 = vst [vmem:[%s270 + $0x68] sm:$0xff] %v297
          %v299 = vld [vmem:[%s269 + $0x70] sm:$0xff]
          %300 = vst [vmem:[%s270 + $0x70] sm:$0xff] %v299
          %v301 = vld [vmem:[%s269 + $0x78] sm:$0xff]
          %302 = vst [vmem:[%s270 + $0x78] sm:$0xff] %v301
          %v303 = vld [vmem:[%s269 + $0x80] sm:$0xff]
          %304 = vst [vmem:[%s270 + $0x80] sm:$0xff] %v303
          %v305 = vld [vmem:[%s269 + $0x88] sm:$0xff]
          %306 = vst [vmem:[%s270 + $0x88] sm:$0xff] %v305
          %v307 = vld [vmem:[%s269 + $0x90] sm:$0xff]
          %308 = vst [vmem:[%s270 + $0x90] sm:$0xff] %v307
          %v309 = vld [vmem:[%s269 + $0x98] sm:$0xff]
          %310 = vst [vmem:[%s270 + $0x98] sm:$0xff] %v309
          %v311 = vld [vmem:[%s269 + $0xa0] sm:$0xff]
          %312 = vst [vmem:[%s270 + $0xa0] sm:$0xff] %v311
          %v313 = vld [vmem:[%s269 + $0xa8] sm:$0xff]
          %314 = vst [vmem:[%s270 + $0xa8] sm:$0xff] %v313
          %v315 = vld [vmem:[%s269 + $0xb0] sm:$0xff]
          %316 = vst [vmem:[%s270 + $0xb0] sm:$0xff] %v315
          %v317 = vld [vmem:[%s269 + $0xb8] sm:$0xff]
          %318 = vst [vmem:[%s270 + $0xb8] sm:$0xff] %v317
          %v319 = vld [vmem:[%s269 + $0xc0] sm:$0xff]
          %320 = vst [vmem:[%s270 + $0xc0] sm:$0xff] %v319
          %v321 = vld [vmem:[%s269 + $0xc8] sm:$0xff]
          %322 = vst [vmem:[%s270 + $0xc8] sm:$0xff] %v321
          %v323 = vld [vmem:[%s269 + $0xd0] sm:$0xff]
          %324 = vst [vmem:[%s270 + $0xd0] sm:$0xff] %v323
          %v325 = vld [vmem:[%s269 + $0xd8] sm:$0xff]
          %326 = vst [vmem:[%s270 + $0xd8] sm:$0xff] %v325
          %v327 = vld [vmem:[%s269 + $0xe0] sm:$0xff]
          %328 = vst [vmem:[%s270 + $0xe0] sm:$0xff] %v327
          %v329 = vld [vmem:[%s269 + $0xe8] sm:$0xff]
          %330 = vst [vmem:[%s270 + $0xe8] sm:$0xff] %v329
          %v331 = vld [vmem:[%s269 + $0xf0] sm:$0xff]
          %332 = vst [vmem:[%s270 + $0xf0] sm:$0xff] %v331
          %v333 = vld [vmem:[%s269 + $0xf8] sm:$0xff]
          %334 = vst [vmem:[%s270 + $0xf8] sm:$0xff] %v333
          %v335 = vld [vmem:[%s269 + $0x100] sm:$0xff]
          %336 = vst [vmem:[%s270 + $0x100] sm:$0xff] %v335
          %v337 = vld [vmem:[%s269 + $0x108] sm:$0xff]
          %338 = vst [vmem:[%s270 + $0x108] sm:$0xff] %v337
          %v339 = vld [vmem:[%s269 + $0x110] sm:$0xff]
          %340 = vst [vmem:[%s270 + $0x110] sm:$0xff] %v339
          %v341 = vld [vmem:[%s269 + $0x118] sm:$0xff]
          %342 = vst [vmem:[%s270 + $0x118] sm:$0xff] %v341
          %v343 = vld [vmem:[%s269 + $0x120] sm:$0xff]
          %344 = vst [vmem:[%s270 + $0x120] sm:$0xff] %v343
          %v345 = vld [vmem:[%s269 + $0x128] sm:$0xff]
          %346 = vst [vmem:[%s270 + $0x128] sm:$0xff] %v345
          %v347 = vld [vmem:[%s269 + $0x130] sm:$0xff]
          %348 = vst [vmem:[%s270 + $0x130] sm:$0xff] %v347
          %v349 = vld [vmem:[%s269 + $0x138] sm:$0xff]
          %350 = vst [vmem:[%s270 + $0x138] sm:$0xff] %v349
          %v351 = vld [vmem:[%s269 + $0x140] sm:$0xff]
          %352 = vst [vmem:[%s270 + $0x140] sm:$0xff] %v351
          %v353 = vld [vmem:[%s269 + $0x148] sm:$0xff]
          %354 = vst [vmem:[%s270 + $0x148] sm:$0xff] %v353
          %v355 = vld [vmem:[%s269 + $0x150] sm:$0xff]
          %356 = vst [vmem:[%s270 + $0x150] sm:$0xff] %v355
          %v357 = vld [vmem:[%s269 + $0x158] sm:$0xff]
          %358 = vst [vmem:[%s270 + $0x158] sm:$0xff] %v357
          %v359 = vld [vmem:[%s269 + $0x160] sm:$0xff]
          %360 = vst [vmem:[%s270 + $0x160] sm:$0xff] %v359
          %v361 = vld [vmem:[%s269 + $0x168] sm:$0xff]
          %362 = vst [vmem:[%s270 + $0x168] sm:$0xff] %v361
          %v363 = vld [vmem:[%s269 + $0x170] sm:$0xff]
          %364 = vst [vmem:[%s270 + $0x170] sm:$0xff] %v363
          %v365 = vld [vmem:[%s269 + $0x178] sm:$0xff]
          %366 = vst [vmem:[%s270 + $0x178] sm:$0xff] %v365
          %v367 = vld [vmem:[%s269 + $0x180] sm:$0xff]
          %368 = vst [vmem:[%s270 + $0x180] sm:$0xff] %v367
          %v369 = vld [vmem:[%s269 + $0x188] sm:$0xff]
          %370 = vst [vmem:[%s270 + $0x188] sm:$0xff] %v369
          %v371 = vld [vmem:[%s269 + $0x190] sm:$0xff]
          %372 = vst [vmem:[%s270 + $0x190] sm:$0xff] %v371
          %v373 = vld [vmem:[%s269 + $0x198] sm:$0xff]
          %374 = vst [vmem:[%s270 + $0x198] sm:$0xff] %v373
          %v375 = vld [vmem:[%s269 + $0x1a0] sm:$0xff]
          %376 = vst [vmem:[%s270 + $0x1a0] sm:$0xff] %v375
          %v377 = vld [vmem:[%s269 + $0x1a8] sm:$0xff]
          %378 = vst [vmem:[%s270 + $0x1a8] sm:$0xff] %v377
          %v379 = vld [vmem:[%s269 + $0x1b0] sm:$0xff]
          %380 = vst [vmem:[%s270 + $0x1b0] sm:$0xff] %v379
          %v381 = vld [vmem:[%s269 + $0x1b8] sm:$0xff]
          %382 = vst [vmem:[%s270 + $0x1b8] sm:$0xff] %v381
          %v383 = vld [vmem:[%s269 + $0x1c0] sm:$0xff]
          %384 = vst [vmem:[%s270 + $0x1c0] sm:$0xff] %v383
          %v385 = vld [vmem:[%s269 + $0x1c8] sm:$0xff]
          %386 = vst [vmem:[%s270 + $0x1c8] sm:$0xff] %v385
          %v387 = vld [vmem:[%s269 + $0x1d0] sm:$0xff]
          %388 = vst [vmem:[%s270 + $0x1d0] sm:$0xff] %v387
          %v389 = vld [vmem:[%s269 + $0x1d8] sm:$0xff]
          %390 = vst [vmem:[%s270 + $0x1d8] sm:$0xff] %v389
          %v391 = vld [vmem:[%s269 + $0x1e0] sm:$0xff]
          %392 = vst [vmem:[%s270 + $0x1e0] sm:$0xff] %v391
          %v393 = vld [vmem:[%s269 + $0x1e8] sm:$0xff]
          %394 = vst [vmem:[%s270 + $0x1e8] sm:$0xff] %v393
          %v395 = vld [vmem:[%s269 + $0x1f0] sm:$0xff]
          %396 = vst [vmem:[%s270 + $0x1f0] sm:$0xff] %v395
          %v397 = vld [vmem:[%s269 + $0x1f8] sm:$0xff]
          %398 = vst [vmem:[%s270 + $0x1f8] sm:$0xff] %v397
          %v399 = vld [vmem:[%s269 + $0x200] sm:$0xff]
          %400 = vst [vmem:[%s270 + $0x200] sm:$0xff] %v399
          %v401 = vld [vmem:[%s269 + $0x208] sm:$0xff]
          %402 = vst [vmem:[%s270 + $0x208] sm:$0xff] %v401
          %v403 = vld [vmem:[%s269 + $0x210] sm:$0xff]
          %404 = vst [vmem:[%s270 + $0x210] sm:$0xff] %v403
          %v405 = vld [vmem:[%s269 + $0x218] sm:$0xff]
          %406 = vst [vmem:[%s270 + $0x218] sm:$0xff] %v405
          %v407 = vld [vmem:[%s269 + $0x220] sm:$0xff]
          %408 = vst [vmem:[%s270 + $0x220] sm:$0xff] %v407
          %v409 = vld [vmem:[%s269 + $0x228] sm:$0xff]
          %410 = vst [vmem:[%s270 + $0x228] sm:$0xff] %v409
          %v411 = vld [vmem:[%s269 + $0x230] sm:$0xff]
          %412 = vst [vmem:[%s270 + $0x230] sm:$0xff] %v411
          %v413 = vld [vmem:[%s269 + $0x238] sm:$0xff]
          %414 = vst [vmem:[%s270 + $0x238] sm:$0xff] %v413
        $region119: #{fcnn_forward.1} parent=113 // loop_footer
          %s268 = sadd.s32 1, %s264
        $region120: #{fcnn_forward.1} parent=113 // loop_footer_branch
          %263 = sbr.rel target = $region116
        $region121: #{fcnn_forward.1} parent=113 // loop_exit
          _
      $region114: #{fcnn_forward.1} parent=98 // pred_fallthru
        _
      %p415 = pneg %p259
      // Predicated region
      $region122: #{fcnn_forward.1} parent=98 // pred_check
        _
      $region123: #{fcnn_forward.1} parent=98 // pred_check_branch
        %417 = sbr.rel (%p259) target = $region125
      $region124: #{fcnn_forward.1} parent=98 // pred_region
        %s418 = sand.u32 576, 7
      $region125: #{fcnn_forward.1} parent=98 // pred_fallthru
        _
    $region99: #{fcnn_forward.1} parent=1 // pred_fallthru
      _
    // Predicated region
    $region100: #{fcnn_forward.1} parent=1 // pred_check
      %p244 = pneg %p240
    $region101: #{fcnn_forward.1} parent=1 // pred_check_branch
      %246 = sbr.rel (%p244) target = $region103
    $region102: #{fcnn_forward.1} parent=1 // pred_region
      %s247 = sshllo.u32 0, 576
      loop: start=0, step=1, limit=1
      $region104: #{fcnn_forward.1} parent=102 // loop_pre_header
        _
      $region105: #{fcnn_forward.1} parent=102 // loop_header
        %s249 = sphi 0, %s253
        %p250 = scmp.ge.s32.totalorder %s249, 1
        %s254 = sphi %s13, %s13
        %s255 = sphi [#allocation8], [#allocation8]
      $region106: #{fcnn_forward.1} parent=102 // loop_header_branch
        %252 = sbr.rel (%p250) target = $region110
      $region107: #{fcnn_forward.1} parent=102 // loop_body
        %v256 = vld [vmem:[%s254] sm:%s247]
        %257 = vst [vmem:[%s255] sm:%s247] %v256
      $region108: #{fcnn_forward.1} parent=102 // loop_footer
        %s253 = sadd.s32 1, %s249
      $region109: #{fcnn_forward.1} parent=102 // loop_footer_branch
        %248 = sbr.rel target = $region105
      $region110: #{fcnn_forward.1} parent=102 // loop_exit
        _
    $region103: #{fcnn_forward.1} parent=1 // pred_fallthru
      _
    // Predicated region
    $region126: #{fcnn_forward.1} parent=1 // pred_check
      _
    $region127: #{fcnn_forward.1} parent=1 // pred_check_branch
      %421 = sbr.rel (0) target = $region129
    $region128: #{fcnn_forward.1} parent=1 // pred_region
      %422 = vsyncadd %s238, 9216
    $region129: #{fcnn_forward.1} parent=1 // pred_fallthru
      _
    %v423 = vld [vmem:[%s0] sm:$0xff]
    %v424 = vld [vmem:[%s0 + $0x8] sm:$0xff]
    %v425 = vld [vmem:[%s0 + $0x10] sm:$0xff]
    %v426 = vld [vmem:[%s0 + $0x18] sm:$0xff]
    %v427 = vld [vmem:[%s0 + $0x20] sm:$0xff]
    %v428 = vld [vmem:[%s0 + $0x28] sm:$0xff]
    %v429 = vld [vmem:[%s0 + $0x30] sm:$0xff]
    %v430 = vld [vmem:[%s0 + $0x38] sm:$0xff]
    %v431 = vld [vmem:[%s0 + $0x40] sm:$0xff]
    %v432 = vld [vmem:[%s0 + $0x48] sm:$0xff]
    %v433 = vld [vmem:[%s0 + $0x50] sm:$0xff]
    %v434 = vld [vmem:[%s0 + $0x58] sm:$0xff]
    %v435 = vld [vmem:[%s0 + $0x60] sm:$0xff]
    %v436 = vld [vmem:[%s0 + $0x68] sm:$0xff]
    %v437 = vld [vmem:[%s0 + $0x70] sm:$0xff]
    %v438 = vld [vmem:[%s0 + $0x78] sm:$0xff]
    %v439 = vld [vmem:[%s0 + $0x80] sm:$0xff]
    %v440 = vld [vmem:[%s0 + $0x88] sm:$0xff]
    %v441 = vld [vmem:[%s0 + $0x90] sm:$0xff]
    %v442 = vld [vmem:[%s0 + $0x98] sm:$0xff]
    %v443 = vld [vmem:[%s0 + $0xa0] sm:$0xff]
    %v444 = vld [vmem:[%s0 + $0xa8] sm:$0xff]
    %v445 = vld [vmem:[%s0 + $0xb0] sm:$0xff]
    %v446 = vld [vmem:[%s0 + $0xb8] sm:$0xff]
    %v447 = vld [vmem:[%s0 + $0xc0] sm:$0xff]
    %v448 = vld [vmem:[%s0 + $0xc8] sm:$0xff]
    %v449 = vld [vmem:[%s0 + $0xd0] sm:$0xff]
    %v450 = vld [vmem:[%s0 + $0xd8] sm:$0xff]
    %v451 = vld [vmem:[%s0 + $0xe0] sm:$0xff]
    %v452 = vld [vmem:[%s0 + $0xe8] sm:$0xff]
    %v453 = vld [vmem:[%s0 + $0xf0] sm:$0xff]
    %v454 = vld [vmem:[%s0 + $0xf8] sm:$0xff]
    %v455 = vld [vmem:[%s0 + $0x100] sm:$0xff]
    %v456 = vld [vmem:[%s0 + $0x108] sm:$0xff]
    %v457 = vld [vmem:[%s0 + $0x110] sm:$0xff]
    %v458 = vld [vmem:[%s0 + $0x118] sm:$0xff]
    %v459 = vld [vmem:[%s0 + $0x120] sm:$0xff]
    %v460 = vld [vmem:[%s0 + $0x128] sm:$0xff]
    %v461 = vld [vmem:[%s0 + $0x130] sm:$0xff]
    %v462 = vld [vmem:[%s0 + $0x138] sm:$0xff]
    %v463 = vld [vmem:[%s0 + $0x140] sm:$0xff]
    %v464 = vld [vmem:[%s0 + $0x148] sm:$0xff]
    %v465 = vld [vmem:[%s0 + $0x150] sm:$0xff]
    %v466 = vld [vmem:[%s0 + $0x158] sm:$0xff]
    %v467 = vld [vmem:[%s0 + $0x160] sm:$0xff]
    %v468 = vld [vmem:[%s0 + $0x168] sm:$0xff]
    %v469 = vld [vmem:[%s0 + $0x170] sm:$0xff]
    %v470 = vld [vmem:[%s0 + $0x178] sm:$0xff]
    %v471 = vld [vmem:[%s0 + $0x180] sm:$0xff]
    %v472 = vld [vmem:[%s0 + $0x188] sm:$0xff]
    %v473 = vld [vmem:[%s0 + $0x190] sm:$0xff]
    %v474 = vld [vmem:[%s0 + $0x198] sm:$0xff]
    %v475 = vld [vmem:[%s0 + $0x1a0] sm:$0xff]
    %v476 = vld [vmem:[%s0 + $0x1a8] sm:$0xff]
    %v477 = vld [vmem:[%s0 + $0x1b0] sm:$0xff]
    %v478 = vld [vmem:[%s0 + $0x1b8] sm:$0xff]
    %v479 = vld [vmem:[%s0 + $0x1c0] sm:$0xff]
    %v480 = vld [vmem:[%s0 + $0x1c8] sm:$0xff]
    %v481 = vld [vmem:[%s0 + $0x1d0] sm:$0xff]
    %v482 = vld [vmem:[%s0 + $0x1d8] sm:$0xff]
    %v483 = vld [vmem:[%s0 + $0x1e0] sm:$0xff]
    %v484 = vld [vmem:[%s0 + $0x1e8] sm:$0xff]
    %v485 = vld [vmem:[%s0 + $0x1f0] sm:$0xff]
    %v486 = vld [vmem:[%s0 + $0x1f8] sm:$0xff]
    %v487 = vpack.c.bf16 %v424, %v423
    %v488 = vpack.c.bf16 %v426, %v425
    %v489 = vpack.c.bf16 %v428, %v427
    %v490 = vpack.c.bf16 %v430, %v429
    %v491 = vpack.c.bf16 %v432, %v431
    %v492 = vpack.c.bf16 %v434, %v433
    %v493 = vpack.c.bf16 %v436, %v435
    %v494 = vpack.c.bf16 %v438, %v437
    %v495 = vpack.c.bf16 %v440, %v439
    %v496 = vpack.c.bf16 %v442, %v441
    %v497 = vpack.c.bf16 %v444, %v443
    %v498 = vpack.c.bf16 %v446, %v445
    %v499 = vpack.c.bf16 %v448, %v447
    %v500 = vpack.c.bf16 %v450, %v449
    %v501 = vpack.c.bf16 %v452, %v451
    %v502 = vpack.c.bf16 %v454, %v453
    %v503 = vpack.c.bf16 %v456, %v455
    %v504 = vpack.c.bf16 %v458, %v457
    %v505 = vpack.c.bf16 %v460, %v459
    %v506 = vpack.c.bf16 %v462, %v461
    %v507 = vpack.c.bf16 %v464, %v463
    %v508 = vpack.c.bf16 %v466, %v465
    %v509 = vpack.c.bf16 %v468, %v467
    %v510 = vpack.c.bf16 %v470, %v469
    %v511 = vpack.c.bf16 %v472, %v471
    %v512 = vpack.c.bf16 %v474, %v473
    %v513 = vpack.c.bf16 %v476, %v475
    %v514 = vpack.c.bf16 %v478, %v477
    %v515 = vpack.c.bf16 %v480, %v479
    %v516 = vpack.c.bf16 %v482, %v481
    %v517 = vpack.c.bf16 %v484, %v483
    %v518 = vpack.c.bf16 %v486, %v485
    %v519 = vld [vmem:[%s1] sm:$0xf]
    %v520 = vld [vmem:[%s1 + $0x4] sm:$0x1]
    %v521 = vld [vmem:[%s2] sm:$0x1]
    %v522 = vld [vmem:[%s3] sm:$0x1]
    %v523 = vld [vmem:[%s4] sm:$0x1]
    %v525 = vlaneseq
    %v526 = vshrl.u32 %v525, 7
    %v527 = vsub.s32 0, %v526
    %v528 = vrot.slane %v521, %v527
    %v532 = vunpack.c.l.b16 %v519
    %v533 = vunpack.c.l.b16 %v520
    %v534 = vpack.c.b16 %v533, %v532
    %vm535 = vcmask 72704
    %v537 = vsel %vm535, %v487, 0
    %v540 = vsel %vm535, %v488, 0
    %v543 = vsel %vm535, %v489, 0
    %v546 = vsel %vm535, %v490, 0
    %v549 = vsel %vm535, %v491, 0
    %v552 = vsel %vm535, %v492, 0
    %v555 = vsel %vm535, %v493, 0
    %v558 = vsel %vm535, %v494, 0
    %v561 = vsel %vm535, %v495, 0
    %v564 = vsel %vm535, %v496, 0
    %v567 = vsel %vm535, %v497, 0
    %v570 = vsel %vm535, %v498, 0
    %v573 = vsel %vm535, %v499, 0
    %v576 = vsel %vm535, %v500, 0
    %v579 = vsel %vm535, %v501, 0
    %v582 = vsel %vm535, %v502, 0
    %v585 = vsel %vm535, %v503, 0
    %v588 = vsel %vm535, %v504, 0
    %v591 = vsel %vm535, %v505, 0
    %v594 = vsel %vm535, %v506, 0
    %v597 = vsel %vm535, %v507, 0
    %v600 = vsel %vm535, %v508, 0
    %v603 = vsel %vm535, %v509, 0
    %v606 = vsel %vm535, %v510, 0
    %v609 = vsel %vm535, %v511, 0
    %v612 = vsel %vm535, %v512, 0
    %v615 = vsel %vm535, %v513, 0
    %v618 = vsel %vm535, %v514, 0
    %v621 = vsel %vm535, %v515, 0
    %v624 = vsel %vm535, %v516, 0
    %v627 = vsel %vm535, %v517, 0
    %v630 = vsel %vm535, %v518, 0
    %vm632 = vcmask 1043456
    %vm633 = vcmask 1044480
    %v634 = vsel %vm632, 4294967295, 65535
    %v635 = vsel %vm633, %v634, 0
    %v637 = vand.u32 %v534, %v635
    %639 = vmatprep.subr.bf16.mxu0 0
    %640 = vmatpush1.bf16.msra.mxu0 %v637
    %641 = vmatprep.subr.bf16.mxu0 0
    %642 = vmatpush1.bf16.msra.mxu0 0
    %643 = vmatprep.subr.bf16.mxu0 0
    %644 = vmatpush1.bf16.msra.mxu0 0
    %645 = vmatprep.subr.bf16.mxu0 0
    %646 = vmatpush1.bf16.msra.mxu0 0
    %647 = vmatprep.subr.bf16.mxu0 0
    %648 = vmatpush1.bf16.msra.mxu0 0
    %649 = vmatprep.subr.bf16.mxu0 0
    %650 = vmatpush1.bf16.msra.mxu0 0
    %651 = vmatprep.subr.bf16.mxu0 0
    %652 = vmatpush1.bf16.msra.mxu0 0
    %653 = vmatprep.subr.bf16.mxu0 0
    %654 = vmatpush1.bf16.msra.mxu0 0
    %655 = vmatprep.subr.bf16.mxu0 0
    %656 = vmatpush1.bf16.msra.mxu0 0
    %657 = vmatprep.subr.bf16.mxu0 0
    %658 = vmatpush1.bf16.msra.mxu0 0
    %659 = vmatprep.subr.bf16.mxu0 0
    %660 = vmatpush1.bf16.msra.mxu0 0
    %661 = vmatprep.subr.bf16.mxu0 0
    %662 = vmatpush1.bf16.msra.mxu0 0
    %663 = vmatprep.subr.bf16.mxu0 0
    %664 = vmatpush1.bf16.msra.mxu0 0
    %665 = vmatprep.subr.bf16.mxu0 0
    %666 = vmatpush1.bf16.msra.mxu0 0
    %667 = vmatprep.subr.bf16.mxu0 0
    %668 = vmatpush1.bf16.msra.mxu0 0
    %669 = vmatprep.subr.bf16.mxu0 0
    %670 = vmatpush1.bf16.msra.mxu0 0
    %671 = vmatprep.mubr.bf16.mxu0 0
    %672 = vmatmul.mubr.bf16.gmra.mrb[0].mxu0 %v537
    %v673 = vpop.f32.mrb[0].mxu0
    %v674 = vadd.f32 %v528, %v673
    %v675 = vpop.f32.mrb[0].mxu0
    %v676 = vpop.f32.mrb[0].mxu0
    %v677 = vadd.f32 %v528, %v676
    %v678 = vpop.f32.mrb[0].mxu0
    %679 = vmatprep.mubr.bf16.mxu0 0
    %680 = vmatmul.mubr.bf16.gmra.mrb[0].mxu0 %v540
    %v681 = vpop.f32.mrb[0].mxu0
    %v682 = vadd.f32 %v528, %v681
    %v683 = vpop.f32.mrb[0].mxu0
    %v684 = vpop.f32.mrb[0].mxu0
    %v685 = vadd.f32 %v528, %v684
    %v686 = vpop.f32.mrb[0].mxu0
    %687 = vmatprep.mubr.bf16.mxu0 0
    %688 = vmatmul.mubr.bf16.gmra.mrb[0].mxu0 %v543
    %v689 = vpop.f32.mrb[0].mxu0
    %v690 = vadd.f32 %v528, %v689
    %v691 = vpop.f32.mrb[0].mxu0
    %v692 = vpop.f32.mrb[0].mxu0
    %v693 = vadd.f32 %v528, %v692
    %v694 = vpop.f32.mrb[0].mxu0
    %695 = vmatprep.mubr.bf16.mxu0 0
    %696 = vmatmul.mubr.bf16.gmra.mrb[0].mxu0 %v546
    %v697 = vpop.f32.mrb[0].mxu0
    %v698 = vadd.f32 %v528, %v697
    %v699 = vpop.f32.mrb[0].mxu0
    %v700 = vpop.f32.mrb[0].mxu0
    %v701 = vadd.f32 %v528, %v700
    %v702 = vpop.f32.mrb[0].mxu0
    %703 = vmatprep.mubr.bf16.mxu0 0
    %704 = vmatmul.mubr.bf16.gmra.mrb[0].mxu0 %v549
    %v705 = vpop.f32.mrb[0].mxu0
    %v706 = vadd.f32 %v528, %v705
    %v707 = vpop.f32.mrb[0].mxu0
    %v708 = vpop.f32.mrb[0].mxu0
    %v709 = vadd.f32 %v528, %v708
    %v710 = vpop.f32.mrb[0].mxu0
    %711 = vmatprep.mubr.bf16.mxu0 0
    %712 = vmatmul.mubr.bf16.gmra.mrb[0].mxu0 %v552
    %v713 = vpop.f32.mrb[0].mxu0
    %v714 = vadd.f32 %v528, %v713
    %v715 = vpop.f32.mrb[0].mxu0
    %v716 = vpop.f32.mrb[0].mxu0
    %v717 = vadd.f32 %v528, %v716
    %v718 = vpop.f32.mrb[0].mxu0
    %719 = vmatprep.mubr.bf16.mxu0 0
    %720 = vmatmul.mubr.bf16.gmra.mrb[0].mxu0 %v555
    %v721 = vpop.f32.mrb[0].mxu0
    %v722 = vadd.f32 %v528, %v721
    %v723 = vpop.f32.mrb[0].mxu0
    %v724 = vpop.f32.mrb[0].mxu0
    %v725 = vadd.f32 %v528, %v724
    %v726 = vpop.f32.mrb[0].mxu0
    %727 = vmatprep.mubr.bf16.mxu0 0
    %728 = vmatmul.mubr.bf16.gmra.mrb[0].mxu0 %v558
    %v729 = vpop.f32.mrb[0].mxu0
    %v730 = vadd.f32 %v528, %v729
    %v731 = vpop.f32.mrb[0].mxu0
    %v732 = vpop.f32.mrb[0].mxu0
    %v733 = vadd.f32 %v528, %v732
    %v734 = vpop.f32.mrb[0].mxu0
    %735 = vmatprep.mubr.bf16.mxu0 0
    %736 = vmatmul.mubr.bf16.gmra.mrb[0].mxu0 %v561
    %v737 = vpop.f32.mrb[0].mxu0
    %v738 = vadd.f32 %v528, %v737
    %v739 = vpop.f32.mrb[0].mxu0
    %v740 = vpop.f32.mrb[0].mxu0
    %v741 = vadd.f32 %v528, %v740
    %v742 = vpop.f32.mrb[0].mxu0
    %743 = vmatprep.mubr.bf16.mxu0 0
    %744 = vmatmul.mubr.bf16.gmra.mrb[0].mxu0 %v564
    %v745 = vpop.f32.mrb[0].mxu0
    %v746 = vadd.f32 %v528, %v745
    %v747 = vpop.f32.mrb[0].mxu0
    %v748 = vpop.f32.mrb[0].mxu0
    %v749 = vadd.f32 %v528, %v748
    %v750 = vpop.f32.mrb[0].mxu0
    %751 = vmatprep.mubr.bf16.mxu0 0
    %752 = vmatmul.mubr.bf16.gmra.mrb[0].mxu0 %v567
    %v753 = vpop.f32.mrb[0].mxu0
    %v754 = vadd.f32 %v528, %v753
    %v755 = vpop.f32.mrb[0].mxu0
    %v756 = vpop.f32.mrb[0].mxu0
    %v757 = vadd.f32 %v528, %v756
    %v758 = vpop.f32.mrb[0].mxu0
    %759 = vmatprep.mubr.bf16.mxu0 0
    %760 = vmatmul.mubr.bf16.gmra.mrb[0].mxu0 %v570
    %v761 = vpop.f32.mrb[0].mxu0
    %v762 = vadd.f32 %v528, %v761
    %v763 = vpop.f32.mrb[0].mxu0
    %v764 = vpop.f32.mrb[0].mxu0
    %v765 = vadd.f32 %v528, %v764
    %v766 = vpop.f32.mrb[0].mxu0
    %767 = vmatprep.mubr.bf16.mxu0 0
    %768 = vmatmul.mubr.bf16.gmra.mrb[0].mxu0 %v573
    %v769 = vpop.f32.mrb[0].mxu0
    %v770 = vadd.f32 %v528, %v769
    %v771 = vpop.f32.mrb[0].mxu0
    %v772 = vpop.f32.mrb[0].mxu0
    %v773 = vadd.f32 %v528, %v772
    %v774 = vpop.f32.mrb[0].mxu0
    %775 = vmatprep.mubr.bf16.mxu0 0
    %776 = vmatmul.mubr.bf16.gmra.mrb[0].mxu0 %v576
    %v777 = vpop.f32.mrb[0].mxu0
    %v778 = vadd.f32 %v528, %v777
    %v779 = vpop.f32.mrb[0].mxu0
    %v780 = vpop.f32.mrb[0].mxu0
    %v781 = vadd.f32 %v528, %v780
    %v782 = vpop.f32.mrb[0].mxu0
    %783 = vmatprep.mubr.bf16.mxu0 0
    %784 = vmatmul.mubr.bf16.gmra.mrb[0].mxu0 %v579
    %v785 = vpop.f32.mrb[0].mxu0
    %v786 = vadd.f32 %v528, %v785
    %v787 = vpop.f32.mrb[0].mxu0
    %v788 = vpop.f32.mrb[0].mxu0
    %v789 = vadd.f32 %v528, %v788
    %v790 = vpop.f32.mrb[0].mxu0
    %791 = vmatprep.mubr.bf16.mxu0 0
    %792 = vmatmul.mubr.bf16.gmra.mrb[0].mxu0 %v582
    %v793 = vpop.f32.mrb[0].mxu0
    %v794 = vadd.f32 %v528, %v793
    %v795 = vpop.f32.mrb[0].mxu0
    %v796 = vpop.f32.mrb[0].mxu0
    %v797 = vadd.f32 %v528, %v796
    %v798 = vpop.f32.mrb[0].mxu0
    %799 = vmatprep.mubr.bf16.mxu0 0
    %800 = vmatmul.mubr.bf16.gmra.mrb[0].mxu0 %v585
    %v801 = vpop.f32.mrb[0].mxu0
    %v802 = vadd.f32 %v528, %v801
    %v803 = vpop.f32.mrb[0].mxu0
    %v804 = vpop.f32.mrb[0].mxu0
    %v805 = vadd.f32 %v528, %v804
    %v806 = vpop.f32.mrb[0].mxu0
    %807 = vmatprep.mubr.bf16.mxu0 0
    %808 = vmatmul.mubr.bf16.gmra.mrb[0].mxu0 %v588
    %v809 = vpop.f32.mrb[0].mxu0
    %v810 = vadd.f32 %v528, %v809
    %v811 = vpop.f32.mrb[0].mxu0
    %v812 = vpop.f32.mrb[0].mxu0
    %v813 = vadd.f32 %v528, %v812
    %v814 = vpop.f32.mrb[0].mxu0
    %815 = vmatprep.mubr.bf16.mxu0 0
    %816 = vmatmul.mubr.bf16.gmra.mrb[0].mxu0 %v591
    %v817 = vpop.f32.mrb[0].mxu0
    %v818 = vadd.f32 %v528, %v817
    %v819 = vpop.f32.mrb[0].mxu0
    %v820 = vpop.f32.mrb[0].mxu0
    %v821 = vadd.f32 %v528, %v820
    %v822 = vpop.f32.mrb[0].mxu0
    %823 = vmatprep.mubr.bf16.mxu0 0
    %824 = vmatmul.mubr.bf16.gmra.mrb[0].mxu0 %v594
    %v825 = vpop.f32.mrb[0].mxu0
    %v826 = vadd.f32 %v528, %v825
    %v827 = vpop.f32.mrb[0].mxu0
    %v828 = vpop.f32.mrb[0].mxu0
    %v829 = vadd.f32 %v528, %v828
    %v830 = vpop.f32.mrb[0].mxu0
    %831 = vmatprep.mubr.bf16.mxu0 0
    %832 = vmatmul.mubr.bf16.gmra.mrb[0].mxu0 %v597
    %v833 = vpop.f32.mrb[0].mxu0
    %v834 = vadd.f32 %v528, %v833
    %v835 = vpop.f32.mrb[0].mxu0
    %v836 = vpop.f32.mrb[0].mxu0
    %v837 = vadd.f32 %v528, %v836
    %v838 = vpop.f32.mrb[0].mxu0
    %839 = vmatprep.mubr.bf16.mxu0 0
    %840 = vmatmul.mubr.bf16.gmra.mrb[0].mxu0 %v600
    %v841 = vpop.f32.mrb[0].mxu0
    %v842 = vadd.f32 %v528, %v841
    %v843 = vpop.f32.mrb[0].mxu0
    %v844 = vpop.f32.mrb[0].mxu0
    %v845 = vadd.f32 %v528, %v844
    %v846 = vpop.f32.mrb[0].mxu0
    %847 = vmatprep.mubr.bf16.mxu0 0
    %848 = vmatmul.mubr.bf16.gmra.mrb[0].mxu0 %v603
    %v849 = vpop.f32.mrb[0].mxu0
    %v850 = vadd.f32 %v528, %v849
    %v851 = vpop.f32.mrb[0].mxu0
    %v852 = vpop.f32.mrb[0].mxu0
    %v853 = vadd.f32 %v528, %v852
    %v854 = vpop.f32.mrb[0].mxu0
    %855 = vmatprep.mubr.bf16.mxu0 0
    %856 = vmatmul.mubr.bf16.gmra.mrb[0].mxu0 %v606
    %v857 = vpop.f32.mrb[0].mxu0
    %v858 = vadd.f32 %v528, %v857
    %v859 = vpop.f32.mrb[0].mxu0
    %v860 = vpop.f32.mrb[0].mxu0
    %v861 = vadd.f32 %v528, %v860
    %v862 = vpop.f32.mrb[0].mxu0
    %863 = vmatprep.mubr.bf16.mxu0 0
    %864 = vmatmul.mubr.bf16.gmra.mrb[0].mxu0 %v609
    %v865 = vpop.f32.mrb[0].mxu0
    %v866 = vadd.f32 %v528, %v865
    %v867 = vpop.f32.mrb[0].mxu0
    %v868 = vpop.f32.mrb[0].mxu0
    %v869 = vadd.f32 %v528, %v868
    %v870 = vpop.f32.mrb[0].mxu0
    %871 = vmatprep.mubr.bf16.mxu0 0
    %872 = vmatmul.mubr.bf16.gmra.mrb[0].mxu0 %v612
    %v873 = vpop.f32.mrb[0].mxu0
    %v874 = vadd.f32 %v528, %v873
    %v875 = vpop.f32.mrb[0].mxu0
    %v876 = vpop.f32.mrb[0].mxu0
    %v877 = vadd.f32 %v528, %v876
    %v878 = vpop.f32.mrb[0].mxu0
    %879 = vmatprep.mubr.bf16.mxu0 0
    %880 = vmatmul.mubr.bf16.gmra.mrb[0].mxu0 %v615
    %v881 = vpop.f32.mrb[0].mxu0
    %v882 = vadd.f32 %v528, %v881
    %v883 = vpop.f32.mrb[0].mxu0
    %v884 = vpop.f32.mrb[0].mxu0
    %v885 = vadd.f32 %v528, %v884
    %v886 = vpop.f32.mrb[0].mxu0
    %887 = vmatprep.mubr.bf16.mxu0 0
    %888 = vmatmul.mubr.bf16.gmra.mrb[0].mxu0 %v618
    %v889 = vpop.f32.mrb[0].mxu0
    %v890 = vadd.f32 %v528, %v889
    %v891 = vpop.f32.mrb[0].mxu0
    %v892 = vpop.f32.mrb[0].mxu0
    %v893 = vadd.f32 %v528, %v892
    %v894 = vpop.f32.mrb[0].mxu0
    %895 = vmatprep.mubr.bf16.mxu0 0
    %896 = vmatmul.mubr.bf16.gmra.mrb[0].mxu0 %v621
    %v897 = vpop.f32.mrb[0].mxu0
    %v898 = vadd.f32 %v528, %v897
    %v899 = vpop.f32.mrb[0].mxu0
    %v900 = vpop.f32.mrb[0].mxu0
    %v901 = vadd.f32 %v528, %v900
    %v902 = vpop.f32.mrb[0].mxu0
    %903 = vmatprep.mubr.bf16.mxu0 0
    %904 = vmatmul.mubr.bf16.gmra.mrb[0].mxu0 %v624
    %v905 = vpop.f32.mrb[0].mxu0
    %v906 = vadd.f32 %v528, %v905
    %v907 = vpop.f32.mrb[0].mxu0
    %v908 = vpop.f32.mrb[0].mxu0
    %v909 = vadd.f32 %v528, %v908
    %v910 = vpop.f32.mrb[0].mxu0
    %911 = vmatprep.mubr.bf16.mxu0 0
    %912 = vmatmul.mubr.bf16.gmra.mrb[0].mxu0 %v627
    %v913 = vpop.f32.mrb[0].mxu0
    %v914 = vadd.f32 %v528, %v913
    %v915 = vpop.f32.mrb[0].mxu0
    %v916 = vpop.f32.mrb[0].mxu0
    %v917 = vadd.f32 %v528, %v916
    %v918 = vpop.f32.mrb[0].mxu0
    %919 = vmatprep.mubr.bf16.mxu0 0
    %920 = vmatmul.mubr.bf16.gmra.mrb[0].mxu0 %v630
    %v921 = vpop.f32.mrb[0].mxu0
    %v922 = vadd.f32 %v528, %v921
    %v923 = vpop.f32.mrb[0].mxu0
    %v924 = vpop.f32.mrb[0].mxu0
    %v925 = vadd.f32 %v528, %v924
    %v926 = vpop.f32.mrb[0].mxu0
    %927 = vdwg.mxu0
    %v928 = vmax.f32 %v674, 0.0
    %v929 = vmax.f32 %v677, 0.0
    %v930 = vmax.f32 %v682, 0.0
    %v931 = vmax.f32 %v685, 0.0
    %v932 = vmax.f32 %v690, 0.0
    %v933 = vmax.f32 %v693, 0.0
    %v934 = vmax.f32 %v698, 0.0
    %v935 = vmax.f32 %v701, 0.0
    %v936 = vmax.f32 %v706, 0.0
    %v937 = vmax.f32 %v709, 0.0
    %v938 = vmax.f32 %v714, 0.0
    %v939 = vmax.f32 %v717, 0.0
    %v940 = vmax.f32 %v722, 0.0
    %v941 = vmax.f32 %v725, 0.0
    %v942 = vmax.f32 %v730, 0.0
    %v943 = vmax.f32 %v733, 0.0
    %v944 = vmax.f32 %v738, 0.0
    %v945 = vmax.f32 %v741, 0.0
    %v946 = vmax.f32 %v746, 0.0
    %v947 = vmax.f32 %v749, 0.0
    %v948 = vmax.f32 %v754, 0.0
    %v949 = vmax.f32 %v757, 0.0
    %v950 = vmax.f32 %v762, 0.0
    %v951 = vmax.f32 %v765, 0.0
    %v952 = vmax.f32 %v770, 0.0
    %v953 = vmax.f32 %v773, 0.0
    %v954 = vmax.f32 %v778, 0.0
    %v955 = vmax.f32 %v781, 0.0
    %v956 = vmax.f32 %v786, 0.0
    %v957 = vmax.f32 %v789, 0.0
    %v958 = vmax.f32 %v794, 0.0
    %v959 = vmax.f32 %v797, 0.0
    %v960 = vmax.f32 %v802, 0.0
    %v961 = vmax.f32 %v805, 0.0
    %v962 = vmax.f32 %v810, 0.0
    %v963 = vmax.f32 %v813, 0.0
    %v964 = vmax.f32 %v818, 0.0
    %v965 = vmax.f32 %v821, 0.0
    %v966 = vmax.f32 %v826, 0.0
    %v967 = vmax.f32 %v829, 0.0
    %v968 = vmax.f32 %v834, 0.0
    %v969 = vmax.f32 %v837, 0.0
    %v970 = vmax.f32 %v842, 0.0
    %v971 = vmax.f32 %v845, 0.0
    %v972 = vmax.f32 %v850, 0.0
    %v973 = vmax.f32 %v853, 0.0
    %v974 = vmax.f32 %v858, 0.0
    %v975 = vmax.f32 %v861, 0.0
    %v976 = vmax.f32 %v866, 0.0
    %v977 = vmax.f32 %v869, 0.0
    %v978 = vmax.f32 %v874, 0.0
    %v979 = vmax.f32 %v877, 0.0
    %v980 = vmax.f32 %v882, 0.0
    %v981 = vmax.f32 %v885, 0.0
    %v982 = vmax.f32 %v890, 0.0
    %v983 = vmax.f32 %v893, 0.0
    %v984 = vmax.f32 %v898, 0.0
    %v985 = vmax.f32 %v901, 0.0
    %v986 = vmax.f32 %v906, 0.0
    %v987 = vmax.f32 %v909, 0.0
    %v988 = vmax.f32 %v914, 0.0
    %v989 = vmax.f32 %v917, 0.0
    %v990 = vmax.f32 %v922, 0.0
    %v991 = vmax.f32 %v925, 0.0
    %v992 = vadd.f32 %v928, %v929
    %v993 = vadd.f32 %v992, %v930
    %v994 = vadd.f32 %v993, %v931
    %v995 = vadd.f32 %v994, %v932
    %v996 = vadd.f32 %v995, %v933
    %v997 = vadd.f32 %v996, %v934
    %v998 = vadd.f32 %v997, %v935
    %v999 = vadd.f32 %v998, %v936
    %v1000 = vadd.f32 %v999, %v937
    %v1001 = vadd.f32 %v1000, %v938
    %v1002 = vadd.f32 %v1001, %v939
    %v1003 = vadd.f32 %v1002, %v940
    %v1004 = vadd.f32 %v1003, %v941
    %v1005 = vadd.f32 %v1004, %v942
    %v1006 = vadd.f32 %v1005, %v943
    %v1007 = vadd.f32 %v1006, %v944
    %v1008 = vadd.f32 %v1007, %v945
    %v1009 = vadd.f32 %v1008, %v946
    %v1010 = vadd.f32 %v1009, %v947
    %v1011 = vadd.f32 %v1010, %v948
    %v1012 = vadd.f32 %v1011, %v949
    %v1013 = vadd.f32 %v1012, %v950
    %v1014 = vadd.f32 %v1013, %v951
    %v1015 = vadd.f32 %v1014, %v952
    %v1016 = vadd.f32 %v1015, %v953
    %v1017 = vadd.f32 %v1016, %v954
    %v1018 = vadd.f32 %v1017, %v955
    %v1019 = vadd.f32 %v1018, %v956
    %v1020 = vadd.f32 %v1019, %v957
    %v1021 = vadd.f32 %v1020, %v958
    %v1022 = vadd.f32 %v1021, %v959
    %v1023 = vadd.f32 %v1022, %v960
    %v1024 = vadd.f32 %v1023, %v961
    %v1025 = vadd.f32 %v1024, %v962
    %v1026 = vadd.f32 %v1025, %v963
    %v1027 = vadd.f32 %v1026, %v964
    %v1028 = vadd.f32 %v1027, %v965
    %v1029 = vadd.f32 %v1028, %v966
    %v1030 = vadd.f32 %v1029, %v967
    %v1031 = vadd.f32 %v1030, %v968
    %v1032 = vadd.f32 %v1031, %v969
    %v1033 = vadd.f32 %v1032, %v970
    %v1034 = vadd.f32 %v1033, %v971
    %v1035 = vadd.f32 %v1034, %v972
    %v1036 = vadd.f32 %v1035, %v973
    %v1037 = vadd.f32 %v1036, %v974
    %v1038 = vadd.f32 %v1037, %v975
    %v1039 = vadd.f32 %v1038, %v976
    %v1040 = vadd.f32 %v1039, %v977
    %v1041 = vadd.f32 %v1040, %v978
    %v1042 = vadd.f32 %v1041, %v979
    %v1043 = vadd.f32 %v1042, %v980
    %v1044 = vadd.f32 %v1043, %v981
    %v1045 = vadd.f32 %v1044, %v982
    %v1046 = vadd.f32 %v1045, %v983
    %v1047 = vadd.f32 %v1046, %v984
    %v1048 = vadd.f32 %v1047, %v985
    %v1049 = vadd.f32 %v1048, %v986
    %v1050 = vadd.f32 %v1049, %v987
    %v1051 = vadd.f32 %v1050, %v988
    %v1052 = vadd.f32 %v1051, %v989
    %v1053 = vadd.f32 %v1052, %v990
    %v1054 = vadd.f32 %v1053, %v991
    %v1055 = vrot.slane %v1054, 4
    %v1056 = vadd.f32 %v1054, %v1055
    %v1057 = vrot.slane %v1056, 2
    %v1058 = vadd.f32 %v1056, %v1057
    %v1059 = vrot.slane %v1058, 1
    %v1060 = vadd.f32 %v1058, %v1059
    %v1061 = vmul.f32 %v1060, 0.001953125
    %v1062 = vmul.f32 %v928, %v928
    %v1063 = vmul.f32 %v929, %v929
    %v1064 = vmul.f32 %v930, %v930
    %v1065 = vmul.f32 %v931, %v931
    %v1066 = vmul.f32 %v932, %v932
    %v1067 = vmul.f32 %v933, %v933
    %v1068 = vmul.f32 %v934, %v934
    %v1069 = vmul.f32 %v935, %v935
    %v1070 = vmul.f32 %v936, %v936
    %v1071 = vmul.f32 %v937, %v937
    %v1072 = vmul.f32 %v938, %v938
    %v1073 = vmul.f32 %v939, %v939
    %v1074 = vmul.f32 %v940, %v940
    %v1075 = vmul.f32 %v941, %v941
    %v1076 = vmul.f32 %v942, %v942
    %v1077 = vmul.f32 %v943, %v943
    %v1078 = vmul.f32 %v944, %v944
    %v1079 = vmul.f32 %v945, %v945
    %v1080 = vmul.f32 %v946, %v946
    %v1081 = vmul.f32 %v947, %v947
    %v1082 = vmul.f32 %v948, %v948
    %v1083 = vmul.f32 %v949, %v949
    %v1084 = vmul.f32 %v950, %v950
    %v1085 = vmul.f32 %v951, %v951
    %v1086 = vmul.f32 %v952, %v952
    %v1087 = vmul.f32 %v953, %v953
    %v1088 = vmul.f32 %v954, %v954
    %v1089 = vmul.f32 %v955, %v955
    %v1090 = vmul.f32 %v956, %v956
    %v1091 = vmul.f32 %v957, %v957
    %v1092 = vmul.f32 %v958, %v958
    %v1093 = vmul.f32 %v959, %v959
    %v1094 = vmul.f32 %v960, %v960
    %v1095 = vmul.f32 %v961, %v961
    %v1096 = vmul.f32 %v962, %v962
    %v1097 = vmul.f32 %v963, %v963
    %v1098 = vmul.f32 %v964, %v964
    %v1099 = vmul.f32 %v965, %v965
    %v1100 = vmul.f32 %v966, %v966
    %v1101 = vmul.f32 %v967, %v967
    %v1102 = vmul.f32 %v968, %v968
    %v1103 = vmul.f32 %v969, %v969
    %v1104 = vmul.f32 %v970, %v970
    %v1105 = vmul.f32 %v971, %v971
    %v1106 = vmul.f32 %v972, %v972
    %v1107 = vmul.f32 %v973, %v973
    %v1108 = vmul.f32 %v974, %v974
    %v1109 = vmul.f32 %v975, %v975
    %v1110 = vmul.f32 %v976, %v976
    %v1111 = vmul.f32 %v977, %v977
    %v1112 = vmul.f32 %v978, %v978
    %v1113 = vmul.f32 %v979, %v979
    %v1114 = vmul.f32 %v980, %v980
    %v1115 = vmul.f32 %v981, %v981
    %v1116 = vmul.f32 %v982, %v982
    %v1117 = vmul.f32 %v983, %v983
    %v1118 = vmul.f32 %v984, %v984
    %v1119 = vmul.f32 %v985, %v985
    %v1120 = vmul.f32 %v986, %v986
    %v1121 = vmul.f32 %v987, %v987
    %v1122 = vmul.f32 %v988, %v988
    %v1123 = vmul.f32 %v989, %v989
    %v1124 = vmul.f32 %v990, %v990
    %v1125 = vmul.f32 %v991, %v991
    %v1126 = vadd.f32 %v1062, %v1063
    %v1127 = vadd.f32 %v1126, %v1064
    %v1128 = vadd.f32 %v1127, %v1065
    %v1129 = vadd.f32 %v1128, %v1066
    %v1130 = vadd.f32 %v1129, %v1067
    %v1131 = vadd.f32 %v1130, %v1068
    %v1132 = vadd.f32 %v1131, %v1069
    %v1133 = vadd.f32 %v1132, %v1070
    %v1134 = vadd.f32 %v1133, %v1071
    %v1135 = vadd.f32 %v1134, %v1072
    %v1136 = vadd.f32 %v1135, %v1073
    %v1137 = vadd.f32 %v1136, %v1074
    %v1138 = vadd.f32 %v1137, %v1075
    %v1139 = vadd.f32 %v1138, %v1076
    %v1140 = vadd.f32 %v1139, %v1077
    %v1141 = vadd.f32 %v1140, %v1078
    %v1142 = vadd.f32 %v1141, %v1079
    %v1143 = vadd.f32 %v1142, %v1080
    %v1144 = vadd.f32 %v1143, %v1081
    %v1145 = vadd.f32 %v1144, %v1082
    %v1146 = vadd.f32 %v1145, %v1083
    %v1147 = vadd.f32 %v1146, %v1084
    %v1148 = vadd.f32 %v1147, %v1085
    %v1149 = vadd.f32 %v1148, %v1086
    %v1150 = vadd.f32 %v1149, %v1087
    %v1151 = vadd.f32 %v1150, %v1088
    %v1152 = vadd.f32 %v1151, %v1089
    %v1153 = vadd.f32 %v1152, %v1090
    %v1154 = vadd.f32 %v1153, %v1091
    %v1155 = vadd.f32 %v1154, %v1092
    %v1156 = vadd.f32 %v1155, %v1093
    %v1157 = vadd.f32 %v1156, %v1094
    %v1158 = vadd.f32 %v1157, %v1095
    %v1159 = vadd.f32 %v1158, %v1096
    %v1160 = vadd.f32 %v1159, %v1097
    %v1161 = vadd.f32 %v1160, %v1098
    %v1162 = vadd.f32 %v1161, %v1099
    %v1163 = vadd.f32 %v1162, %v1100
    %v1164 = vadd.f32 %v1163, %v1101
    %v1165 = vadd.f32 %v1164, %v1102
    %v1166 = vadd.f32 %v1165, %v1103
    %v1167 = vadd.f32 %v1166, %v1104
    %v1168 = vadd.f32 %v1167, %v1105
    %v1169 = vadd.f32 %v1168, %v1106
    %v1170 = vadd.f32 %v1169, %v1107
    %v1171 = vadd.f32 %v1170, %v1108
    %v1172 = vadd.f32 %v1171, %v1109
    %v1173 = vadd.f32 %v1172, %v1110
    %v1174 = vadd.f32 %v1173, %v1111
    %v1175 = vadd.f32 %v1174, %v1112
    %v1176 = vadd.f32 %v1175, %v1113
    %v1177 = vadd.f32 %v1176, %v1114
    %v1178 = vadd.f32 %v1177, %v1115
    %v1179 = vadd.f32 %v1178, %v1116
    %v1180 = vadd.f32 %v1179, %v1117
    %v1181 = vadd.f32 %v1180, %v1118
    %v1182 = vadd.f32 %v1181, %v1119
    %v1183 = vadd.f32 %v1182, %v1120
    %v1184 = vadd.f32 %v1183, %v1121
    %v1185 = vadd.f32 %v1184, %v1122
    %v1186 = vadd.f32 %v1185, %v1123
    %v1187 = vadd.f32 %v1186, %v1124
    %v1188 = vadd.f32 %v1187, %v1125
    %v1189 = vrot.slane %v1188, 4
    %v1190 = vadd.f32 %v1188, %v1189
    %v1191 = vrot.slane %v1190, 2
    %v1192 = vadd.f32 %v1190, %v1191
    %v1193 = vrot.slane %v1192, 1
    %v1194 = vadd.f32 %v1192, %v1193
    %v1195 = vmul.f32 %v1194, 0.001953125
    %v1196 = vmul.f32 %v1061, %v1061
    %v1197 = vsub.f32 %v1195, %v1196
    %v1198 = vmax.f32 %v1197, 0.0
    %v1199 = vadd.f32 %v1198, 1e-05
    %v1200 = vrsqrt.pop %v1199
    %v1201 = vmul.f32 %v522, %v1200
    %v1203 = vlaneseq
    %v1204 = vshrl.u32 %v1203, 7
    %v1205 = vsub.s32 0, %v1204
    %v1206 = vrot.slane %v1201, %v1205
    %v1208 = vmul.f32 %v928, %v1206
    %v1209 = vmul.f32 %v929, %v1206
    %v1210 = vmul.f32 %v930, %v1206
    %v1211 = vmul.f32 %v931, %v1206
    %v1212 = vmul.f32 %v932, %v1206
    %v1213 = vmul.f32 %v933, %v1206
    %v1214 = vmul.f32 %v934, %v1206
    %v1215 = vmul.f32 %v935, %v1206
    %v1216 = vmul.f32 %v936, %v1206
    %v1217 = vmul.f32 %v937, %v1206
    %v1218 = vmul.f32 %v938, %v1206
    %v1219 = vmul.f32 %v939, %v1206
    %v1220 = vmul.f32 %v940, %v1206
    %v1221 = vmul.f32 %v941, %v1206
    %v1222 = vmul.f32 %v942, %v1206
    %v1223 = vmul.f32 %v943, %v1206
    %v1224 = vmul.f32 %v944, %v1206
    %v1225 = vmul.f32 %v945, %v1206
    %v1226 = vmul.f32 %v946, %v1206
    %v1227 = vmul.f32 %v947, %v1206
    %v1228 = vmul.f32 %v948, %v1206
    %v1229 = vmul.f32 %v949, %v1206
    %v1230 = vmul.f32 %v950, %v1206
    %v1231 = vmul.f32 %v951, %v1206
    %v1232 = vmul.f32 %v952, %v1206
    %v1233 = vmul.f32 %v953, %v1206
    %v1234 = vmul.f32 %v954, %v1206
    %v1235 = vmul.f32 %v955, %v1206
    %v1236 = vmul.f32 %v956, %v1206
    %v1237 = vmul.f32 %v957, %v1206
    %v1238 = vmul.f32 %v958, %v1206
    %v1239 = vmul.f32 %v959, %v1206
    %v1240 = vmul.f32 %v960, %v1206
    %v1241 = vmul.f32 %v961, %v1206
    %v1242 = vmul.f32 %v962, %v1206
    %v1243 = vmul.f32 %v963, %v1206
    %v1244 = vmul.f32 %v964, %v1206
    %v1245 = vmul.f32 %v965, %v1206
    %v1246 = vmul.f32 %v966, %v1206
    %v1247 = vmul.f32 %v967, %v1206
    %v1248 = vmul.f32 %v968, %v1206
    %v1249 = vmul.f32 %v969, %v1206
    %v1250 = vmul.f32 %v970, %v1206
    %v1251 = vmul.f32 %v971, %v1206
    %v1252 = vmul.f32 %v972, %v1206
    %v1253 = vmul.f32 %v973, %v1206
    %v1254 = vmul.f32 %v974, %v1206
    %v1255 = vmul.f32 %v975, %v1206
    %v1256 = vmul.f32 %v976, %v1206
    %v1257 = vmul.f32 %v977, %v1206
    %v1258 = vmul.f32 %v978, %v1206
    %v1259 = vmul.f32 %v979, %v1206
    %v1260 = vmul.f32 %v980, %v1206
    %v1261 = vmul.f32 %v981, %v1206
    %v1262 = vmul.f32 %v982, %v1206
    %v1263 = vmul.f32 %v983, %v1206
    %v1264 = vmul.f32 %v984, %v1206
    %v1265 = vmul.f32 %v985, %v1206
    %v1266 = vmul.f32 %v986, %v1206
    %v1267 = vmul.f32 %v987, %v1206
    %v1268 = vmul.f32 %v988, %v1206
    %v1269 = vmul.f32 %v989, %v1206
    %v1270 = vmul.f32 %v990, %v1206
    %v1271 = vmul.f32 %v991, %v1206
    %v1272 = vmul.f32 %v1061, %v1201
    %v1273 = vsub.f32 %v523, %v1272
    %v1275 = vlaneseq
    %v1276 = vshrl.u32 %v1275, 7
    %v1277 = vsub.s32 0, %v1276
    %v1278 = vrot.slane %v1273, %v1277
    %v1280 = vadd.f32 %v1208, %v1278
    %v1281 = vadd.f32 %v1209, %v1278
    %v1282 = vadd.f32 %v1210, %v1278
    %v1283 = vadd.f32 %v1211, %v1278
    %v1284 = vadd.f32 %v1212, %v1278
    %v1285 = vadd.f32 %v1213, %v1278
    %v1286 = vadd.f32 %v1214, %v1278
    %v1287 = vadd.f32 %v1215, %v1278
    %v1288 = vadd.f32 %v1216, %v1278
    %v1289 = vadd.f32 %v1217, %v1278
    %v1290 = vadd.f32 %v1218, %v1278
    %v1291 = vadd.f32 %v1219, %v1278
    %v1292 = vadd.f32 %v1220, %v1278
    %v1293 = vadd.f32 %v1221, %v1278
    %v1294 = vadd.f32 %v1222, %v1278
    %v1295 = vadd.f32 %v1223, %v1278
    %v1296 = vadd.f32 %v1224, %v1278
    %v1297 = vadd.f32 %v1225, %v1278
    %v1298 = vadd.f32 %v1226, %v1278
    %v1299 = vadd.f32 %v1227, %v1278
    %v1300 = vadd.f32 %v1228, %v1278
    %v1301 = vadd.f32 %v1229, %v1278
    %v1302 = vadd.f32 %v1230, %v1278
    %v1303 = vadd.f32 %v1231, %v1278
    %v1304 = vadd.f32 %v1232, %v1278
    %v1305 = vadd.f32 %v1233, %v1278
    %v1306 = vadd.f32 %v1234, %v1278
    %v1307 = vadd.f32 %v1235, %v1278
    %v1308 = vadd.f32 %v1236, %v1278
    %v1309 = vadd.f32 %v1237, %v1278
    %v1310 = vadd.f32 %v1238, %v1278
    %v1311 = vadd.f32 %v1239, %v1278
    %v1312 = vadd.f32 %v1240, %v1278
    %v1313 = vadd.f32 %v1241, %v1278
    %v1314 = vadd.f32 %v1242, %v1278
    %v1315 = vadd.f32 %v1243, %v1278
    %v1316 = vadd.f32 %v1244, %v1278
    %v1317 = vadd.f32 %v1245, %v1278
    %v1318 = vadd.f32 %v1246, %v1278
    %v1319 = vadd.f32 %v1247, %v1278
    %v1320 = vadd.f32 %v1248, %v1278
    %v1321 = vadd.f32 %v1249, %v1278
    %v1322 = vadd.f32 %v1250, %v1278
    %v1323 = vadd.f32 %v1251, %v1278
    %v1324 = vadd.f32 %v1252, %v1278
    %v1325 = vadd.f32 %v1253, %v1278
    %v1326 = vadd.f32 %v1254, %v1278
    %v1327 = vadd.f32 %v1255, %v1278
    %v1328 = vadd.f32 %v1256, %v1278
    %v1329 = vadd.f32 %v1257, %v1278
    %v1330 = vadd.f32 %v1258, %v1278
    %v1331 = vadd.f32 %v1259, %v1278
    %v1332 = vadd.f32 %v1260, %v1278
    %v1333 = vadd.f32 %v1261, %v1278
    %v1334 = vadd.f32 %v1262, %v1278
    %v1335 = vadd.f32 %v1263, %v1278
    %v1336 = vadd.f32 %v1264, %v1278
    %v1337 = vadd.f32 %v1265, %v1278
    %v1338 = vadd.f32 %v1266, %v1278
    %v1339 = vadd.f32 %v1267, %v1278
    %v1340 = vadd.f32 %v1268, %v1278
    %v1341 = vadd.f32 %v1269, %v1278
    %v1342 = vadd.f32 %v1270, %v1278
    %v1343 = vadd.f32 %v1271, %v1278
    %1344 = vst [vmem:[#allocation2] sm:$0xff] 0.0
    %1345 = vst [vmem:[#allocation2 + $0x8] sm:$0xff] 0.0
    %1346 = vst [vmem:[#allocation2 + $0x10] sm:$0x3] 0.0
    %1347 = vst [vmem:[#allocation2 + $0x18] sm:$0xff] 0.0
    %1348 = vst [vmem:[#allocation2 + $0x20] sm:$0xff] 0.0
    %1349 = vst [vmem:[#allocation2 + $0x28] sm:$0x3] 0.0
    %1350 = vst [vmem:[#allocation2 + $0x30] sm:$0xff] 0.0
    %1351 = vst [vmem:[#allocation2 + $0x38] sm:$0xff] 0.0
    %1352 = vst [vmem:[#allocation2 + $0x40] sm:$0x3] 0.0
    %1353 = vst [vmem:[#allocation2 + $0x48] sm:$0xff] 0.0
    %1354 = vst [vmem:[#allocation2 + $0x50] sm:$0xff] 0.0
    %1355 = vst [vmem:[#allocation2 + $0x58] sm:$0x3] 0.0
    %1356 = vst [vmem:[#allocation2 + $0x60] sm:$0xff] 0.0
    %1357 = vst [vmem:[#allocation2 + $0x68] sm:$0xff] 0.0
    %1358 = vst [vmem:[#allocation2 + $0x70] sm:$0x3] 0.0
    %1359 = vst [vmem:[#allocation2 + $0x78] sm:$0xff] 0.0
    %1360 = vst [vmem:[#allocation2 + $0x80] sm:$0xff] 0.0
    %1361 = vst [vmem:[#allocation2 + $0x88] sm:$0x3] 0.0
    %1362 = vst [vmem:[#allocation2 + $0x90] sm:$0xff] 0.0
    %1363 = vst [vmem:[#allocation2 + $0x98] sm:$0xff] 0.0
    %1364 = vst [vmem:[#allocation2 + $0xa0] sm:$0x3] 0.0
    %1365 = vst [vmem:[#allocation2 + $0xa8] sm:$0xff] 0.0
    %1366 = vst [vmem:[#allocation2 + $0xb0] sm:$0xff] 0.0
    %1367 = vst [vmem:[#allocation2 + $0xb8] sm:$0x3] 0.0
    %1368 = vst [vmem:[#allocation2 + $0xc0] sm:$0xff] 0.0
    %1369 = vst [vmem:[#allocation2 + $0xc8] sm:$0xff] 0.0
    %1370 = vst [vmem:[#allocation2 + $0xd0] sm:$0x3] 0.0
    %1371 = vst [vmem:[#allocation2 + $0xd8] sm:$0xff] 0.0
    %1372 = vst [vmem:[#allocation2 + $0xe0] sm:$0xff] 0.0
    %1373 = vst [vmem:[#allocation2 + $0xe8] sm:$0x3] 0.0
    %1374 = vst [vmem:[#allocation2 + $0xf0] sm:$0xff] 0.0
    %1375 = vst [vmem:[#allocation2 + $0xf8] sm:$0xff] 0.0
    %1376 = vst [vmem:[#allocation2 + $0x100] sm:$0x3] 0.0
    %1377 = vst [vmem:[#allocation2 + $0x108] sm:$0xff] 0.0
    %1378 = vst [vmem:[#allocation2 + $0x110] sm:$0xff] 0.0
    %1379 = vst [vmem:[#allocation2 + $0x118] sm:$0x3] 0.0
    %1380 = vst [vmem:[#allocation2 + $0x120] sm:$0xff] 0.0
    %1381 = vst [vmem:[#allocation2 + $0x128] sm:$0xff] 0.0
    %1382 = vst [vmem:[#allocation2 + $0x130] sm:$0x3] 0.0
    %1383 = vst [vmem:[#allocation2 + $0x138] sm:$0xff] 0.0
    %1384 = vst [vmem:[#allocation2 + $0x140] sm:$0xff] 0.0
    %1385 = vst [vmem:[#allocation2 + $0x148] sm:$0x3] 0.0
    %1386 = vst [vmem:[#allocation2 + $0x150] sm:$0xff] 0.0
    %1387 = vst [vmem:[#allocation2 + $0x158] sm:$0xff] 0.0
    %1388 = vst [vmem:[#allocation2 + $0x160] sm:$0x3] 0.0
    %1389 = vst [vmem:[#allocation2 + $0x168] sm:$0xff] 0.0
    %1390 = vst [vmem:[#allocation2 + $0x170] sm:$0xff] 0.0
    %1391 = vst [vmem:[#allocation2 + $0x178] sm:$0x3] 0.0
    %1392 = vst [vmem:[#allocation2 + $0x180] sm:$0xff] 0.0
    %1393 = vst [vmem:[#allocation2 + $0x188] sm:$0xff] 0.0
    %1394 = vst [vmem:[#allocation2 + $0x190] sm:$0x3] 0.0
    %1395 = vst [vmem:[#allocation2 + $0x198] sm:$0xff] 0.0
    %1396 = vst [vmem:[#allocation2 + $0x1a0] sm:$0xff] 0.0
    %1397 = vst [vmem:[#allocation2 + $0x1a8] sm:$0x3] 0.0
    %1398 = vst [vmem:[#allocation2 + $0x1b0] sm:$0xff] 0.0
    %1399 = vst [vmem:[#allocation2 + $0x1b8] sm:$0xff] 0.0
    %1400 = vst [vmem:[#allocation2 + $0x1c0] sm:$0x3] 0.0
    %1401 = vst [vmem:[#allocation2 + $0x1c8] sm:$0xff] 0.0
    %1402 = vst [vmem:[#allocation2 + $0x1d0] sm:$0xff] 0.0
    %1403 = vst [vmem:[#allocation2 + $0x1d8] sm:$0x3] 0.0
    %1404 = vst [vmem:[#allocation2 + $0x1e0] sm:$0xff] 0.0
    %1405 = vst [vmem:[#allocation2 + $0x1e8] sm:$0xff] 0.0
    %1406 = vst [vmem:[#allocation2 + $0x1f0] sm:$0x3] 0.0
    %1407 = vst [vmem:[#allocation2 + $0x1f8] sm:$0xff] 0.0
    %1408 = vst [vmem:[#allocation2 + $0x200] sm:$0xff] 0.0
    %1409 = vst [vmem:[#allocation2 + $0x208] sm:$0x3] 0.0
    %1410 = vst [vmem:[#allocation2 + $0x210] sm:$0xff] 0.0
    %1411 = vst [vmem:[#allocation2 + $0x218] sm:$0xff] 0.0
    %1412 = vst [vmem:[#allocation2 + $0x220] sm:$0x3] 0.0
    %1413 = vst [vmem:[#allocation2 + $0x228] sm:$0xff] 0.0
    %1414 = vst [vmem:[#allocation2 + $0x230] sm:$0xff] 0.0
    %1415 = vst [vmem:[#allocation2 + $0x238] sm:$0x3] 0.0
    %1416 = vst [vmem:[#allocation2 + $0x240] sm:$0xff] 0.0
    %1417 = vst [vmem:[#allocation2 + $0x248] sm:$0xff] 0.0
    %1418 = vst [vmem:[#allocation2 + $0x250] sm:$0x3] 0.0
    %1419 = vst [vmem:[#allocation2 + $0x258] sm:$0xff] 0.0
    %1420 = vst [vmem:[#allocation2 + $0x260] sm:$0xff] 0.0
    %1421 = vst [vmem:[#allocation2 + $0x268] sm:$0x3] 0.0
    %1422 = vst [vmem:[#allocation2 + $0x270] sm:$0xff] 0.0
    %1423 = vst [vmem:[#allocation2 + $0x278] sm:$0xff] 0.0
    %1424 = vst [vmem:[#allocation2 + $0x280] sm:$0x3] 0.0
    %1425 = vst [vmem:[#allocation2 + $0x288] sm:$0xff] 0.0
    %1426 = vst [vmem:[#allocation2 + $0x290] sm:$0xff] 0.0
    %1427 = vst [vmem:[#allocation2 + $0x298] sm:$0x3] 0.0
    %1428 = vst [vmem:[#allocation2 + $0x2a0] sm:$0xff] 0.0
    %1429 = vst [vmem:[#allocation2 + $0x2a8] sm:$0xff] 0.0
    %1430 = vst [vmem:[#allocation2 + $0x2b0] sm:$0x3] 0.0
    %1431 = vst [vmem:[#allocation2 + $0x2b8] sm:$0xff] 0.0
    %1432 = vst [vmem:[#allocation2 + $0x2c0] sm:$0xff] 0.0
    %1433 = vst [vmem:[#allocation2 + $0x2c8] sm:$0x3] 0.0
    %1434 = vst [vmem:[#allocation2 + $0x2d0] sm:$0xff] 0.0
    %1435 = vst [vmem:[#allocation2 + $0x2d8] sm:$0xff] 0.0
    %1436 = vst [vmem:[#allocation2 + $0x2e0] sm:$0x3] 0.0
    %1437 = vst [vmem:[#allocation2 + $0x2e8] sm:$0xff] 0.0
    %1438 = vst [vmem:[#allocation2 + $0x2f0] sm:$0xff] 0.0
    %1439 = vst [vmem:[#allocation2 + $0x2f8] sm:$0x3] 0.0
    %1440 = vst [vmem:[#allocation2 + $0x300] sm:$0xff] 0.0
    %1441 = vst [vmem:[#allocation2 + $0x308] sm:$0xff] 0.0
    %1442 = vst [vmem:[#allocation2 + $0x310] sm:$0x3] 0.0
    %1443 = vst [vmem:[#allocation2 + $0x318] sm:$0xff] 0.0
    %1444 = vst [vmem:[#allocation2 + $0x320] sm:$0xff] 0.0
    %1445 = vst [vmem:[#allocation2 + $0x328] sm:$0x3] 0.0
    %1446 = vst [vmem:[#allocation2 + $0x330] sm:$0xff] 0.0
    %1447 = vst [vmem:[#allocation2 + $0x338] sm:$0xff] 0.0
    %1448 = vst [vmem:[#allocation2 + $0x340] sm:$0x3] 0.0
    %1449 = vst [vmem:[#allocation2 + $0x348] sm:$0xff] 0.0
    %1450 = vst [vmem:[#allocation2 + $0x350] sm:$0xff] 0.0
    %1451 = vst [vmem:[#allocation2 + $0x358] sm:$0x3] 0.0
    %s1452 = scalar_lea.vmem [#allocation2], 24
    %1453 = vst [vmem:[%s1452 + $0x1] sm:$0xff] %v1280
    %1454 = vst [vmem:[%s1452 + $0x9] sm:$0xff] %v1281
    %1455 = vst [vmem:[%s1452 + $0x19] sm:$0xff] %v1282
    %1456 = vst [vmem:[%s1452 + $0x21] sm:$0xff] %v1283
    %1457 = vst [vmem:[%s1452 + $0x31] sm:$0xff] %v1284
    %1458 = vst [vmem:[%s1452 + $0x39] sm:$0xff] %v1285
    %1459 = vst [vmem:[%s1452 + $0x49] sm:$0xff] %v1286
    %1460 = vst [vmem:[%s1452 + $0x51] sm:$0xff] %v1287
    %1461 = vst [vmem:[%s1452 + $0x61] sm:$0xff] %v1288
    %1462 = vst [vmem:[%s1452 + $0x69] sm:$0xff] %v1289
    %1463 = vst [vmem:[%s1452 + $0x79] sm:$0xff] %v1290
    %1464 = vst [vmem:[%s1452 + $0x81] sm:$0xff] %v1291
    %1465 = vst [vmem:[%s1452 + $0x91] sm:$0xff] %v1292
    %1466 = vst [vmem:[%s1452 + $0x99] sm:$0xff] %v1293
    %1467 = vst [vmem:[%s1452 + $0xa9] sm:$0xff] %v1294
    %1468 = vst [vmem:[%s1452 + $0xb1] sm:$0xff] %v1295
    %1469 = vst [vmem:[%s1452 + $0xc1] sm:$0xff] %v1296
    %1470 = vst [vmem:[%s1452 + $0xc9] sm:$0xff] %v1297
    %1471 = vst [vmem:[%s1452 + $0xd9] sm:$0xff] %v1298
    %1472 = vst [vmem:[%s1452 + $0xe1] sm:$0xff] %v1299
    %1473 = vst [vmem:[%s1452 + $0xf1] sm:$0xff] %v1300
    %1474 = vst [vmem:[%s1452 + $0xf9] sm:$0xff] %v1301
    %1475 = vst [vmem:[%s1452 + $0x109] sm:$0xff] %v1302
    %1476 = vst [vmem:[%s1452 + $0x111] sm:$0xff] %v1303
    %1477 = vst [vmem:[%s1452 + $0x121] sm:$0xff] %v1304
    %1478 = vst [vmem:[%s1452 + $0x129] sm:$0xff] %v1305
    %1479 = vst [vmem:[%s1452 + $0x139] sm:$0xff] %v1306
    %1480 = vst [vmem:[%s1452 + $0x141] sm:$0xff] %v1307
    %1481 = vst [vmem:[%s1452 + $0x151] sm:$0xff] %v1308
    %1482 = vst [vmem:[%s1452 + $0x159] sm:$0xff] %v1309
    %1483 = vst [vmem:[%s1452 + $0x169] sm:$0xff] %v1310
    %1484 = vst [vmem:[%s1452 + $0x171] sm:$0xff] %v1311
    %1485 = vst [vmem:[%s1452 + $0x1b1] sm:$0xff] %v1312
    %1486 = vst [vmem:[%s1452 + $0x1b9] sm:$0xff] %v1313
    %1487 = vst [vmem:[%s1452 + $0x1c9] sm:$0xff] %v1314
    %1488 = vst [vmem:[%s1452 + $0x1d1] sm:$0xff] %v1315
    %1489 = vst [vmem:[%s1452 + $0x1e1] sm:$0xff] %v1316
    %1490 = vst [vmem:[%s1452 + $0x1e9] sm:$0xff] %v1317
    %1491 = vst [vmem:[%s1452 + $0x1f9] sm:$0xff] %v1318
    %1492 = vst [vmem:[%s1452 + $0x201] sm:$0xff] %v1319
    %1493 = vst [vmem:[%s1452 + $0x211] sm:$0xff] %v1320
    %1494 = vst [vmem:[%s1452 + $0x219] sm:$0xff] %v1321
    %1495 = vst [vmem:[%s1452 + $0x229] sm:$0xff] %v1322
    %1496 = vst [vmem:[%s1452 + $0x231] sm:$0xff] %v1323
    %1497 = vst [vmem:[%s1452 + $0x241] sm:$0xff] %v1324
    %1498 = vst [vmem:[%s1452 + $0x249] sm:$0xff] %v1325
    %1499 = vst [vmem:[%s1452 + $0x259] sm:$0xff] %v1326
    %1500 = vst [vmem:[%s1452 + $0x261] sm:$0xff] %v1327
    %1501 = vst [vmem:[%s1452 + $0x271] sm:$0xff] %v1328
    %1502 = vst [vmem:[%s1452 + $0x279] sm:$0xff] %v1329
    %1503 = vst [vmem:[%s1452 + $0x289] sm:$0xff] %v1330
    %1504 = vst [vmem:[%s1452 + $0x291] sm:$0xff] %v1331
    %1505 = vst [vmem:[%s1452 + $0x2a1] sm:$0xff] %v1332
    %1506 = vst [vmem:[%s1452 + $0x2a9] sm:$0xff] %v1333
    %1507 = vst [vmem:[%s1452 + $0x2b9] sm:$0xff] %v1334
    %1508 = vst [vmem:[%s1452 + $0x2c1] sm:$0xff] %v1335
    %1509 = vst [vmem:[%s1452 + $0x2d1] sm:$0xff] %v1336
    %1510 = vst [vmem:[%s1452 + $0x2d9] sm:$0xff] %v1337
    %1511 = vst [vmem:[%s1452 + $0x2e9] sm:$0xff] %v1338
    %1512 = vst [vmem:[%s1452 + $0x2f1] sm:$0xff] %v1339
    %1513 = vst [vmem:[%s1452 + $0x301] sm:$0xff] %v1340
    %1514 = vst [vmem:[%s1452 + $0x309] sm:$0xff] %v1341
    %1515 = vst [vmem:[%s1452 + $0x319] sm:$0xff] %v1342
    %1516 = vst [vmem:[%s1452 + $0x321] sm:$0xff] %v1343
    %v1517 = vld [vmem:[#allocation2] sm:$0xff]
    %v1518 = vld [vmem:[#allocation2 + $0x8] sm:$0xff]
    %v1519 = vld [vmem:[#allocation2 + $0x18] sm:$0xff]
    %v1520 = vld [vmem:[#allocation2 + $0x20] sm:$0xff]
    %v1521 = vld [vmem:[#allocation2 + $0x30] sm:$0xff]
    %v1522 = vld [vmem:[#allocation2 + $0x38] sm:$0xff]
    %v1523 = vld [vmem:[#allocation2 + $0x48] sm:$0xff]
    %v1524 = vld [vmem:[#allocation2 + $0x50] sm:$0xff]
    %v1525 = vld [vmem:[#allocation2 + $0x60] sm:$0xff]
    %v1526 = vld [vmem:[#allocation2 + $0x68] sm:$0xff]
    %v1527 = vld [vmem:[#allocation2 + $0x78] sm:$0xff]
    %v1528 = vld [vmem:[#allocation2 + $0x80] sm:$0xff]
    %v1529 = vld [vmem:[#allocation2 + $0x90] sm:$0xff]
    %v1530 = vld [vmem:[#allocation2 + $0x98] sm:$0xff]
    %v1531 = vld [vmem:[#allocation2 + $0xa8] sm:$0xff]
    %v1532 = vld [vmem:[#allocation2 + $0xb0] sm:$0xff]
    %v1533 = vld [vmem:[#allocation2 + $0xc0] sm:$0xff]
    %v1534 = vld [vmem:[#allocation2 + $0xc8] sm:$0xff]
    %v1535 = vld [vmem:[#allocation2 + $0xd8] sm:$0xff]
    %v1536 = vld [vmem:[#allocation2 + $0xe0] sm:$0xff]
    %v1537 = vld [vmem:[#allocation2 + $0xf0] sm:$0xff]
    %v1538 = vld [vmem:[#allocation2 + $0xf8] sm:$0xff]
    %v1539 = vld [vmem:[#allocation2 + $0x108] sm:$0xff]
    %v1540 = vld [vmem:[#allocation2 + $0x110] sm:$0xff]
    %v1541 = vld [vmem:[#allocation2 + $0x120] sm:$0xff]
    %v1542 = vld [vmem:[#allocation2 + $0x128] sm:$0xff]
    %v1543 = vld [vmem:[#allocation2 + $0x138] sm:$0xff]
    %v1544 = vld [vmem:[#allocation2 + $0x140] sm:$0xff]
    %v1545 = vld [vmem:[#allocation2 + $0x150] sm:$0xff]
    %v1546 = vld [vmem:[#allocation2 + $0x158] sm:$0xff]
    %v1547 = vld [vmem:[#allocation2 + $0x168] sm:$0xff]
    %v1548 = vld [vmem:[#allocation2 + $0x170] sm:$0xff]
    %v1549 = vld [vmem:[#allocation2 + $0x1b0] sm:$0xff]
    %v1550 = vld [vmem:[#allocation2 + $0x1b8] sm:$0xff]
    %v1551 = vld [vmem:[#allocation2 + $0x1c8] sm:$0xff]
    %v1552 = vld [vmem:[#allocation2 + $0x1d0] sm:$0xff]
    %v1553 = vld [vmem:[#allocation2 + $0x1e0] sm:$0xff]
    %v1554 = vld [vmem:[#allocation2 + $0x1e8] sm:$0xff]
    %v1555 = vld [vmem:[#allocation2 + $0x1f8] sm:$0xff]
    %v1556 = vld [vmem:[#allocation2 + $0x200] sm:$0xff]
    %v1557 = vld [vmem:[#allocation2 + $0x210] sm:$0xff]
    %v1558 = vld [vmem:[#allocation2 + $0x218] sm:$0xff]
    %v1559 = vld [vmem:[#allocation2 + $0x228] sm:$0xff]
    %v1560 = vld [vmem:[#allocation2 + $0x230] sm:$0xff]
    %v1561 = vld [vmem:[#allocation2 + $0x240] sm:$0xff]
    %v1562 = vld [vmem:[#allocation2 + $0x248] sm:$0xff]
    %v1563 = vld [vmem:[#allocation2 + $0x258] sm:$0xff]
    %v1564 = vld [vmem:[#allocation2 + $0x260] sm:$0xff]
    %v1565 = vld [vmem:[#allocation2 + $0x270] sm:$0xff]
    %v1566 = vld [vmem:[#allocation2 + $0x278] sm:$0xff]
    %v1567 = vld [vmem:[#allocation2 + $0x288] sm:$0xff]
    %v1568 = vld [vmem:[#allocation2 + $0x290] sm:$0xff]
    %v1569 = vld [vmem:[#allocation2 + $0x2a0] sm:$0xff]
    %v1570 = vld [vmem:[#allocation2 + $0x2a8] sm:$0xff]
    %v1571 = vld [vmem:[#allocation2 + $0x2b8] sm:$0xff]
    %v1572 = vld [vmem:[#allocation2 + $0x2c0] sm:$0xff]
    %v1573 = vld [vmem:[#allocation2 + $0x2d0] sm:$0xff]
    %v1574 = vld [vmem:[#allocation2 + $0x2d8] sm:$0xff]
    %v1575 = vld [vmem:[#allocation2 + $0x2e8] sm:$0xff]
    %v1576 = vld [vmem:[#allocation2 + $0x2f0] sm:$0xff]
    %v1577 = vld [vmem:[#allocation2 + $0x300] sm:$0xff]
    %v1578 = vld [vmem:[#allocation2 + $0x308] sm:$0xff]
    %v1579 = vld [vmem:[#allocation2 + $0x318] sm:$0xff]
    %v1580 = vld [vmem:[#allocation2 + $0x320] sm:$0xff]
    %v1581 = vpack.c.bf16 %v1518, %v1517
    %v1582 = vpack.c.bf16 %v1520, %v1519
    %v1583 = vpack.c.bf16 %v1522, %v1521
    %v1584 = vpack.c.bf16 %v1524, %v1523
    %v1585 = vpack.c.bf16 %v1526, %v1525
    %v1586 = vpack.c.bf16 %v1528, %v1527
    %v1587 = vpack.c.bf16 %v1530, %v1529
    %v1588 = vpack.c.bf16 %v1532, %v1531
    %v1589 = vpack.c.bf16 %v1534, %v1533
    %v1590 = vpack.c.bf16 %v1536, %v1535
    %v1591 = vpack.c.bf16 %v1538, %v1537
    %v1592 = vpack.c.bf16 %v1540, %v1539
    %v1593 = vpack.c.bf16 %v1542, %v1541
    %v1594 = vpack.c.bf16 %v1544, %v1543
    %v1595 = vpack.c.bf16 %v1546, %v1545
    %v1596 = vpack.c.bf16 %v1548, %v1547
    %v1597 = vpack.c.bf16 %v1550, %v1549
    %v1598 = vpack.c.bf16 %v1552, %v1551
    %v1599 = vpack.c.bf16 %v1554, %v1553
    %v1600 = vpack.c.bf16 %v1556, %v1555
    %v1601 = vpack.c.bf16 %v1558, %v1557
    %v1602 = vpack.c.bf16 %v1560, %v1559
    %v1603 = vpack.c.bf16 %v1562, %v1561
    %v1604 = vpack.c.bf16 %v1564, %v1563
    %v1605 = vpack.c.bf16 %v1566, %v1565
    %v1606 = vpack.c.bf16 %v1568, %v1567
    %v1607 = vpack.c.bf16 %v1570, %v1569
    %v1608 = vpack.c.bf16 %v1572, %v1571
    %v1609 = vpack.c.bf16 %v1574, %v1573
    %v1610 = vpack.c.bf16 %v1576, %v1575
    %v1611 = vpack.c.bf16 %v1578, %v1577
    %v1612 = vpack.c.bf16 %v1580, %v1579
    %v1613 = vld [vmem:[%s5] sm:$0xf]
    %v1614 = vld [vmem:[%s5 + $0x4] sm:$0xf]
    %v1615 = vld [vmem:[%s5 + $0x8] sm:$0xf]
    %v1616 = vld [vmem:[%s5 + $0xc] sm:$0xf]
    %v1617 = vld [vmem:[%s5 + $0x10] sm:$0xf]
    %v1618 = vld [vmem:[%s5 + $0x14] sm:$0xf]
    %v1619 = vld [vmem:[%s5 + $0x18] sm:$0xf]
    %v1620 = vld [vmem:[%s5 + $0x1c] sm:$0xf]
    %v1621 = vld [vmem:[%s5 + $0x20] sm:$0xf]
    %v1622 = vld [vmem:[%s5 + $0x24] sm:$0xf]
    %v1623 = vld [vmem:[%s5 + $0x28] sm:$0xf]
    %v1624 = vld [vmem:[%s5 + $0x2c] sm:$0xf]
    %v1625 = vld [vmem:[%s5 + $0x30] sm:$0xf]
    %v1626 = vld [vmem:[%s5 + $0x34] sm:$0xf]
    %v1627 = vld [vmem:[%s5 + $0x38] sm:$0xf]
    %v1628 = vld [vmem:[%s5 + $0x3c] sm:$0xf]
    %v1629 = vld [vmem:[#allocation2 + $0x1] sm:$0xff]
    %v1630 = vld [vmem:[#allocation2 + $0x9] sm:$0xff]
    %v1631 = vld [vmem:[#allocation2 + $0x19] sm:$0xff]
    %v1632 = vld [vmem:[#allocation2 + $0x21] sm:$0xff]
    %v1633 = vld [vmem:[#allocation2 + $0x31] sm:$0xff]
    %v1634 = vld [vmem:[#allocation2 + $0x39] sm:$0xff]
    %v1635 = vld [vmem:[#allocation2 + $0x49] sm:$0xff]
    %v1636 = vld [vmem:[#allocation2 + $0x51] sm:$0xff]
    %v1637 = vld [vmem:[#allocation2 + $0x61] sm:$0xff]
    %v1638 = vld [vmem:[#allocation2 + $0x69] sm:$0xff]
    %v1639 = vld [vmem:[#allocation2 + $0x79] sm:$0xff]
    %v1640 = vld [vmem:[#allocation2 + $0x81] sm:$0xff]
    %v1641 = vld [vmem:[#allocation2 + $0x91] sm:$0xff]
    %v1642 = vld [vmem:[#allocation2 + $0x99] sm:$0xff]
    %v1643 = vld [vmem:[#allocation2 + $0xa9] sm:$0xff]
    %v1644 = vld [vmem:[#allocation2 + $0xb1] sm:$0xff]
    %v1645 = vld [vmem:[#allocation2 + $0xc1] sm:$0xff]
    %v1646 = vld [vmem:[#allocation2 + $0xc9] sm:$0xff]
    %v1647 = vld [vmem:[#allocation2 + $0xd9] sm:$0xff]
    %v1648 = vld [vmem:[#allocation2 + $0xe1] sm:$0xff]
    %v1649 = vld [vmem:[#allocation2 + $0xf1] sm:$0xff]
    %v1650 = vld [vmem:[#allocation2 + $0xf9] sm:$0xff]
    %v1651 = vld [vmem:[#allocation2 + $0x109] sm:$0xff]
    %v1652 = vld [vmem:[#allocation2 + $0x111] sm:$0xff]
    %v1653 = vld [vmem:[#allocation2 + $0x121] sm:$0xff]
    %v1654 = vld [vmem:[#allocation2 + $0x129] sm:$0xff]
    %v1655 = vld [vmem:[#allocation2 + $0x139] sm:$0xff]
    %v1656 = vld [vmem:[#allocation2 + $0x141] sm:$0xff]
    %v1657 = vld [vmem:[#allocation2 + $0x151] sm:$0xff]
    %v1658 = vld [vmem:[#allocation2 + $0x159] sm:$0xff]
    %v1659 = vld [vmem:[#allocation2 + $0x169] sm:$0xff]
    %v1660 = vld [vmem:[#allocation2 + $0x171] sm:$0xff]
    %v1661 = vld [vmem:[#allocation2 + $0x1b1] sm:$0xff]
    %v1662 = vld [vmem:[#allocation2 + $0x1b9] sm:$0xff]
    %v1663 = vld [vmem:[#allocation2 + $0x1c9] sm:$0xff]
    %v1664 = vld [vmem:[#allocation2 + $0x1d1] sm:$0xff]
    %v1665 = vld [vmem:[#allocation2 + $0x1e1] sm:$0xff]
    %v1666 = vld [vmem:[#allocation2 + $0x1e9] sm:$0xff]
    %v1667 = vld [vmem:[#allocation2 + $0x1f9] sm:$0xff]
    %v1668 = vld [vmem:[#allocation2 + $0x201] sm:$0xff]
    %v1669 = vld [vmem:[#allocation2 + $0x211] sm:$0xff]
    %v1670 = vld [vmem:[#allocation2 + $0x219] sm:$0xff]
    %v1671 = vld [vmem:[#allocation2 + $0x229] sm:$0xff]
    %v1672 = vld [vmem:[#allocation2 + $0x231] sm:$0xff]
    %v1673 = vld [vmem:[#allocation2 + $0x241] sm:$0xff]
    %v1674 = vld [vmem:[#allocation2 + $0x249] sm:$0xff]
    %v1675 = vld [vmem:[#allocation2 + $0x259] sm:$0xff]
    %v1676 = vld [vmem:[#allocation2 + $0x261] sm:$0xff]
    %v1677 = vld [vmem:[#allocation2 + $0x271] sm:$0xff]
    %v1678 = vld [vmem:[#allocation2 + $0x279] sm:$0xff]
    %v1679 = vld [vmem:[#allocation2 + $0x289] sm:$0xff]
    %v1680 = vld [vmem:[#allocation2 + $0x291] sm:$0xff]
    %v1681 = vld [vmem:[#allocation2 + $0x2a1] sm:$0xff]
    %v1682 = vld [vmem:[#allocation2 + $0x2a9] sm:$0xff]
    %v1683 = vld [vmem:[#allocation2 + $0x2b9] sm:$0xff]
    %v1684 = vld [vmem:[#allocation2 + $0x2c1] sm:$0xff]
    %v1685 = vld [vmem:[#allocation2 + $0x2d1] sm:$0xff]
    %v1686 = vld [vmem:[#allocation2 + $0x2d9] sm:$0xff]
    %v1687 = vld [vmem:[#allocation2 + $0x2e9] sm:$0xff]
    %v1688 = vld [vmem:[#allocation2 + $0x2f1] sm:$0xff]
    %v1689 = vld [vmem:[#allocation2 + $0x301] sm:$0xff]
    %v1690 = vld [vmem:[#allocation2 + $0x309] sm:$0xff]
    %v1691 = vld [vmem:[#allocation2 + $0x319] sm:$0xff]
    %v1692 = vld [vmem:[#allocation2 + $0x321] sm:$0xff]
    %v1693 = vpack.c.bf16 %v1630, %v1629
    %v1694 = vpack.c.bf16 %v1632, %v1631
    %v1695 = vpack.c.bf16 %v1634, %v1633
    %v1696 = vpack.c.bf16 %v1636, %v1635
    %v1697 = vpack.c.bf16 %v1638, %v1637
    %v1698 = vpack.c.bf16 %v1640, %v1639
    %v1699 = vpack.c.bf16 %v1642, %v1641
    %v1700 = vpack.c.bf16 %v1644, %v1643
    %v1701 = vpack.c.bf16 %v1646, %v1645
    %v1702 = vpack.c.bf16 %v1648, %v1647
    %v1703 = vpack.c.bf16 %v1650, %v1649
    %v1704 = vpack.c.bf16 %v1652, %v1651
    %v1705 = vpack.c.bf16 %v1654, %v1653
    %v1706 = vpack.c.bf16 %v1656, %v1655
    %v1707 = vpack.c.bf16 %v1658, %v1657
    %v1708 = vpack.c.bf16 %v1660, %v1659
    %v1709 = vpack.c.bf16 %v1662, %v1661
    %v1710 = vpack.c.bf16 %v1664, %v1663
    %v1711 = vpack.c.bf16 %v1666, %v1665
    %v1712 = vpack.c.bf16 %v1668, %v1667
    %v1713 = vpack.c.bf16 %v1670, %v1669
    %v1714 = vpack.c.bf16 %v1672, %v1671
    %v1715 = vpack.c.bf16 %v1674, %v1673
    %v1716 = vpack.c.bf16 %v1676, %v1675
    %v1717 = vpack.c.bf16 %v1678, %v1677
    %v1718 = vpack.c.bf16 %v1680, %v1679
    %v1719 = vpack.c.bf16 %v1682, %v1681
    %v1720 = vpack.c.bf16 %v1684, %v1683
    %v1721 = vpack.c.bf16 %v1686, %v1685
    %v1722 = vpack.c.bf16 %v1688, %v1687
    %v1723 = vpack.c.bf16 %v1690, %v1689
    %v1724 = vpack.c.bf16 %v1692, %v1691
    %v1725 = vld [vmem:[%s5 + $0x40] sm:$0xf]
    %v1726 = vld [vmem:[%s5 + $0x44] sm:$0xf]
    %v1727 = vld [vmem:[%s5 + $0x48] sm:$0xf]
    %v1728 = vld [vmem:[%s5 + $0x4c] sm:$0xf]
    %v1729 = vld [vmem:[%s5 + $0x50] sm:$0xf]
    %v1730 = vld [vmem:[%s5 + $0x54] sm:$0xf]
    %v1731 = vld [vmem:[%s5 + $0x58] sm:$0xf]
    %v1732 = vld [vmem:[%s5 + $0x5c] sm:$0xf]
    %v1733 = vld [vmem:[%s5 + $0x60] sm:$0xf]
    %v1734 = vld [vmem:[%s5 + $0x64] sm:$0xf]
    %v1735 = vld [vmem:[%s5 + $0x68] sm:$0xf]
    %v1736 = vld [vmem:[%s5 + $0x6c] sm:$0xf]
    %v1737 = vld [vmem:[%s5 + $0x70] sm:$0xf]
    %v1738 = vld [vmem:[%s5 + $0x74] sm:$0xf]
    %v1739 = vld [vmem:[%s5 + $0x78] sm:$0xf]
    %v1740 = vld [vmem:[%s5 + $0x7c] sm:$0xf]
    %v1757 = vunpack.c.l.b16 %v1725
    %v1758 = vunpack.c.l.b16 %v1726
    %v1759 = vunpack.c.l.b16 %v1727
    %v1760 = vunpack.c.l.b16 %v1728
    %v1761 = vunpack.c.l.b16 %v1729
    %v1762 = vunpack.c.l.b16 %v1730
    %v1763 = vunpack.c.l.b16 %v1731
    %v1764 = vunpack.c.l.b16 %v1732
    %v1765 = vunpack.c.l.b16 %v1733
    %v1766 = vunpack.c.l.b16 %v1734
    %v1767 = vunpack.c.l.b16 %v1735
    %v1768 = vunpack.c.l.b16 %v1736
    %v1769 = vunpack.c.l.b16 %v1737
    %v1770 = vunpack.c.l.b16 %v1738
    %v1771 = vunpack.c.l.b16 %v1739
    %v1772 = vunpack.c.l.b16 %v1740
    %v1773 = vpack.c.b16 %v1758, %v1757
    %v1774 = vpack.c.b16 %v1760, %v1759
    %v1775 = vpack.c.b16 %v1762, %v1761
    %v1776 = vpack.c.b16 %v1764, %v1763
    %v1777 = vpack.c.b16 %v1766, %v1765
    %v1778 = vpack.c.b16 %v1768, %v1767
    %v1779 = vpack.c.b16 %v1770, %v1769
    %v1780 = vpack.c.b16 %v1772, %v1771
    %1789 = vmatprep.subr.bf16.mxu0 0
    %1790 = vmatpush1.bf16.msra.mxu0 %v1773
    %1791 = vmatprep.subr.bf16.mxu0 0
    %1792 = vmatpush1.bf16.msra.mxu0 %v1774
    %1793 = vmatprep.subr.bf16.mxu0 0
    %1794 = vmatpush1.bf16.msra.mxu0 %v1775
    %1795 = vmatprep.subr.bf16.mxu0 0
    %1796 = vmatpush1.bf16.msra.mxu0 %v1776
    %1797 = vmatprep.subr.bf16.mxu0 0
    %1798 = vmatpush1.bf16.msra.mxu0 %v1777
    %1799 = vmatprep.subr.bf16.mxu0 0
    %1800 = vmatpush1.bf16.msra.mxu0 %v1778
    %1801 = vmatprep.subr.bf16.mxu0 0
    %1802 = vmatpush1.bf16.msra.mxu0 %v1779
    %1803 = vmatprep.subr.bf16.mxu0 0
    %1804 = vmatpush1.bf16.msra.mxu0 %v1780
    %1805 = vmatprep.subr.bf16.mxu0 0
    %1806 = vmatpush1.bf16.msra.mxu0 0
    %1807 = vmatprep.subr.bf16.mxu0 0
    %1808 = vmatpush1.bf16.msra.mxu0 0
    %1809 = vmatprep.subr.bf16.mxu0 0
    %1810 = vmatpush1.bf16.msra.mxu0 0
    %1811 = vmatprep.subr.bf16.mxu0 0
    %1812 = vmatpush1.bf16.msra.mxu0 0
    %1813 = vmatprep.subr.bf16.mxu0 0
    %1814 = vmatpush1.bf16.msra.mxu0 0
    %1815 = vmatprep.subr.bf16.mxu0 0
    %1816 = vmatpush1.bf16.msra.mxu0 0
    %1817 = vmatprep.subr.bf16.mxu0 0
    %1818 = vmatpush1.bf16.msra.mxu0 0
    %1819 = vmatprep.subr.bf16.mxu0 0
    %1820 = vmatpush1.bf16.msra.mxu0 0
    %1821 = vmatprep.mubr.bf16.mxu0 0
    %1822 = vmatmul.mubr.bf16.gmra.mrb[0].mxu0 %v1693
    %v1823 = vpop.f32.mrb[0].mxu0
    %v1824 = vadd.f32 0.0, %v1823
    %v1825 = vpop.f32.mrb[0].mxu0
    %v1826 = vpop.f32.mrb[0].mxu0
    %v1827 = vadd.f32 0.0, %v1826
    %v1828 = vpop.f32.mrb[0].mxu0
    %1829 = vmatprep.mubr.bf16.mxu0 0
    %1830 = vmatmul.mubr.bf16.gmra.mrb[0].mxu0 %v1694
    %v1831 = vpop.f32.mrb[0].mxu0
    %v1832 = vadd.f32 0.0, %v1831
    %v1833 = vpop.f32.mrb[0].mxu0
    %v1834 = vpop.f32.mrb[0].mxu0
    %v1835 = vadd.f32 0.0, %v1834
    %v1836 = vpop.f32.mrb[0].mxu0
    %1837 = vmatprep.mubr.bf16.mxu0 0
    %1838 = vmatmul.mubr.bf16.gmra.mrb[0].mxu0 %v1695
    %v1839 = vpop.f32.mrb[0].mxu0
    %v1840 = vadd.f32 0.0, %v1839
    %v1841 = vpop.f32.mrb[0].mxu0
    %v1842 = vpop.f32.mrb[0].mxu0
    %v1843 = vadd.f32 0.0, %v1842
    %v1844 = vpop.f32.mrb[0].mxu0
    %1845 = vmatprep.mubr.bf16.mxu0 0
    %1846 = vmatmul.mubr.bf16.gmra.mrb[0].mxu0 %v1696
    %v1847 = vpop.f32.mrb[0].mxu0
    %v1848 = vadd.f32 0.0, %v1847
    %v1849 = vpop.f32.mrb[0].mxu0
    %v1850 = vpop.f32.mrb[0].mxu0
    %v1851 = vadd.f32 0.0, %v1850
    %v1852 = vpop.f32.mrb[0].mxu0
    %1853 = vmatprep.mubr.bf16.mxu0 0
    %1854 = vmatmul.mubr.bf16.gmra.mrb[0].mxu0 %v1697
    %v1855 = vpop.f32.mrb[0].mxu0
    %v1856 = vadd.f32 0.0, %v1855
    %v1857 = vpop.f32.mrb[0].mxu0
    %v1858 = vpop.f32.mrb[0].mxu0
    %v1859 = vadd.f32 0.0, %v1858
    %v1860 = vpop.f32.mrb[0].mxu0
    %1861 = vmatprep.mubr.bf16.mxu0 0
    %1862 = vmatmul.mubr.bf16.gmra.mrb[0].mxu0 %v1698
    %v1863 = vpop.f32.mrb[0].mxu0
    %v1864 = vadd.f32 0.0, %v1863
    %v1865 = vpop.f32.mrb[0].mxu0
    %v1866 = vpop.f32.mrb[0].mxu0
    %v1867 = vadd.f32 0.0, %v1866
    %v1868 = vpop.f32.mrb[0].mxu0
    %1869 = vmatprep.mubr.bf16.mxu0 0
    %1870 = vmatmul.mubr.bf16.gmra.mrb[0].mxu0 %v1699
    %v1871 = vpop.f32.mrb[0].mxu0
    %v1872 = vadd.f32 0.0, %v1871
    %v1873 = vpop.f32.mrb[0].mxu0
    %v1874 = vpop.f32.mrb[0].mxu0
    %v1875 = vadd.f32 0.0, %v1874
    %v1876 = vpop.f32.mrb[0].mxu0
    %1877 = vmatprep.mubr.bf16.mxu0 0
    %1878 = vmatmul.mubr.bf16.gmra.mrb[0].mxu0 %v1700
    %v1879 = vpop.f32.mrb[0].mxu0
    %v1880 = vadd.f32 0.0, %v1879
    %v1881 = vpop.f32.mrb[0].mxu0
    %v1882 = vpop.f32.mrb[0].mxu0
    %v1883 = vadd.f32 0.0, %v1882
    %v1884 = vpop.f32.mrb[0].mxu0
    %1885 = vmatprep.mubr.bf16.mxu0 0
    %1886 = vmatmul.mubr.bf16.gmra.mrb[0].mxu0 %v1701
    %v1887 = vpop.f32.mrb[0].mxu0
    %v1888 = vadd.f32 0.0, %v1887
    %v1889 = vpop.f32.mrb[0].mxu0
    %v1890 = vpop.f32.mrb[0].mxu0
    %v1891 = vadd.f32 0.0, %v1890
    %v1892 = vpop.f32.mrb[0].mxu0
    %1893 = vmatprep.mubr.bf16.mxu0 0
    %1894 = vmatmul.mubr.bf16.gmra.mrb[0].mxu0 %v1702
    %v1895 = vpop.f32.mrb[0].mxu0
    %v1896 = vadd.f32 0.0, %v1895
    %v1897 = vpop.f32.mrb[0].mxu0
    %v1898 = vpop.f32.mrb[0].mxu0
    %v1899 = vadd.f32 0.0, %v1898
    %v1900 = vpop.f32.mrb[0].mxu0
    %1901 = vmatprep.mubr.bf16.mxu0 0
    %1902 = vmatmul.mubr.bf16.gmra.mrb[0].mxu0 %v1703
    %v1903 = vpop.f32.mrb[0].mxu0
    %v1904 = vadd.f32 0.0, %v1903
    %v1905 = vpop.f32.mrb[0].mxu0
    %v1906 = vpop.f32.mrb[0].mxu0
    %v1907 = vadd.f32 0.0, %v1906
    %v1908 = vpop.f32.mrb[0].mxu0
    %1909 = vmatprep.mubr.bf16.mxu0 0
    %1910 = vmatmul.mubr.bf16.gmra.mrb[0].mxu0 %v1704
    %v1911 = vpop.f32.mrb[0].mxu0
    %v1912 = vadd.f32 0.0, %v1911
    %v1913 = vpop.f32.mrb[0].mxu0
    %v1914 = vpop.f32.mrb[0].mxu0
    %v1915 = vadd.f32 0.0, %v1914
    %v1916 = vpop.f32.mrb[0].mxu0
    %1917 = vmatprep.mubr.bf16.mxu0 0
    %1918 = vmatmul.mubr.bf16.gmra.mrb[0].mxu0 %v1705
    %v1919 = vpop.f32.mrb[0].mxu0
    %v1920 = vadd.f32 0.0, %v1919
    %v1921 = vpop.f32.mrb[0].mxu0
    %v1922 = vpop.f32.mrb[0].mxu0
    %v1923 = vadd.f32 0.0, %v1922
    %v1924 = vpop.f32.mrb[0].mxu0
    %1925 = vmatprep.mubr.bf16.mxu0 0
    %1926 = vmatmul.mubr.bf16.gmra.mrb[0].mxu0 %v1706
    %v1927 = vpop.f32.mrb[0].mxu0
    %v1928 = vadd.f32 0.0, %v1927
    %v1929 = vpop.f32.mrb[0].mxu0
    %v1930 = vpop.f32.mrb[0].mxu0
    %v1931 = vadd.f32 0.0, %v1930
    %v1932 = vpop.f32.mrb[0].mxu0
    %1933 = vmatprep.mubr.bf16.mxu0 0
    %1934 = vmatmul.mubr.bf16.gmra.mrb[0].mxu0 %v1707
    %v1935 = vpop.f32.mrb[0].mxu0
    %v1936 = vadd.f32 0.0, %v1935
    %v1937 = vpop.f32.mrb[0].mxu0
    %v1938 = vpop.f32.mrb[0].mxu0
    %v1939 = vadd.f32 0.0, %v1938
    %v1940 = vpop.f32.mrb[0].mxu0
    %1941 = vmatprep.mubr.bf16.mxu0 0
    %1942 = vmatmul.mubr.bf16.gmra.mrb[0].mxu0 %v1708
    %v1943 = vpop.f32.mrb[0].mxu0
    %v1944 = vadd.f32 0.0, %v1943
    %v1945 = vpop.f32.mrb[0].mxu0
    %v1946 = vpop.f32.mrb[0].mxu0
    %v1947 = vadd.f32 0.0, %v1946
    %v1948 = vpop.f32.mrb[0].mxu0
    %1949 = vmatprep.mubr.bf16.mxu0 0
    %1950 = vmatmul.mubr.bf16.gmra.mrb[0].mxu0 %v1709
    %v1951 = vpop.f32.mrb[0].mxu0
    %v1952 = vadd.f32 0.0, %v1951
    %v1953 = vpop.f32.mrb[0].mxu0
    %v1954 = vpop.f32.mrb[0].mxu0
    %v1955 = vadd.f32 0.0, %v1954
    %v1956 = vpop.f32.mrb[0].mxu0
    %1957 = vmatprep.mubr.bf16.mxu0 0
    %1958 = vmatmul.mubr.bf16.gmra.mrb[0].mxu0 %v1710
    %v1959 = vpop.f32.mrb[0].mxu0
    %v1960 = vadd.f32 0.0, %v1959
    %v1961 = vpop.f32.mrb[0].mxu0
    %v1962 = vpop.f32.mrb[0].mxu0
    %v1963 = vadd.f32 0.0, %v1962
    %v1964 = vpop.f32.mrb[0].mxu0
    %1965 = vmatprep.mubr.bf16.mxu0 0
    %1966 = vmatmul.mubr.bf16.gmra.mrb[0].mxu0 %v1711
    %v1967 = vpop.f32.mrb[0].mxu0
    %v1968 = vadd.f32 0.0, %v1967
    %v1969 = vpop.f32.mrb[0].mxu0
    %v1970 = vpop.f32.mrb[0].mxu0
    %v1971 = vadd.f32 0.0, %v1970
    %v1972 = vpop.f32.mrb[0].mxu0
    %1973 = vmatprep.mubr.bf16.mxu0 0
    %1974 = vmatmul.mubr.bf16.gmra.mrb[0].mxu0 %v1712
    %v1975 = vpop.f32.mrb[0].mxu0
    %v1976 = vadd.f32 0.0, %v1975
    %v1977 = vpop.f32.mrb[0].mxu0
    %v1978 = vpop.f32.mrb[0].mxu0
    %v1979 = vadd.f32 0.0, %v1978
    %v1980 = vpop.f32.mrb[0].mxu0
    %1981 = vmatprep.mubr.bf16.mxu0 0
    %1982 = vmatmul.mubr.bf16.gmra.mrb[0].mxu0 %v1713
    %v1983 = vpop.f32.mrb[0].mxu0
    %v1984 = vadd.f32 0.0, %v1983
    %v1985 = vpop.f32.mrb[0].mxu0
    %v1986 = vpop.f32.mrb[0].mxu0
    %v1987 = vadd.f32 0.0, %v1986
    %v1988 = vpop.f32.mrb[0].mxu0
    %1989 = vmatprep.mubr.bf16.mxu0 0
    %1990 = vmatmul.mubr.bf16.gmra.mrb[0].mxu0 %v1714
    %v1991 = vpop.f32.mrb[0].mxu0
    %v1992 = vadd.f32 0.0, %v1991
    %v1993 = vpop.f32.mrb[0].mxu0
    %v1994 = vpop.f32.mrb[0].mxu0
    %v1995 = vadd.f32 0.0, %v1994
    %v1996 = vpop.f32.mrb[0].mxu0
    %1997 = vmatprep.mubr.bf16.mxu0 0
    %1998 = vmatmul.mubr.bf16.gmra.mrb[0].mxu0 %v1715
    %v1999 = vpop.f32.mrb[0].mxu0
    %v2000 = vadd.f32 0.0, %v1999
    %v2001 = vpop.f32.mrb[0].mxu0
    %v2002 = vpop.f32.mrb[0].mxu0
    %v2003 = vadd.f32 0.0, %v2002
    %v2004 = vpop.f32.mrb[0].mxu0
    %2005 = vmatprep.mubr.bf16.mxu0 0
    %2006 = vmatmul.mubr.bf16.gmra.mrb[0].mxu0 %v1716
    %v2007 = vpop.f32.mrb[0].mxu0
    %v2008 = vadd.f32 0.0, %v2007
    %v2009 = vpop.f32.mrb[0].mxu0
    %v2010 = vpop.f32.mrb[0].mxu0
    %v2011 = vadd.f32 0.0, %v2010
    %v2012 = vpop.f32.mrb[0].mxu0
    %2013 = vmatprep.mubr.bf16.mxu0 0
    %2014 = vmatmul.mubr.bf16.gmra.mrb[0].mxu0 %v1717
    %v2015 = vpop.f32.mrb[0].mxu0
    %v2016 = vadd.f32 0.0, %v2015
    %v2017 = vpop.f32.mrb[0].mxu0
    %v2018 = vpop.f32.mrb[0].mxu0
    %v2019 = vadd.f32 0.0, %v2018
    %v2020 = vpop.f32.mrb[0].mxu0
    %2021 = vmatprep.mubr.bf16.mxu0 0
    %2022 = vmatmul.mubr.bf16.gmra.mrb[0].mxu0 %v1718
    %v2023 = vpop.f32.mrb[0].mxu0
    %v2024 = vadd.f32 0.0, %v2023
    %v2025 = vpop.f32.mrb[0].mxu0
    %v2026 = vpop.f32.mrb[0].mxu0
    %v2027 = vadd.f32 0.0, %v2026
    %v2028 = vpop.f32.mrb[0].mxu0
    %2029 = vmatprep.mubr.bf16.mxu0 0
    %2030 = vmatmul.mubr.bf16.gmra.mrb[0].mxu0 %v1719
    %v2031 = vpop.f32.mrb[0].mxu0
    %v2032 = vadd.f32 0.0, %v2031
    %v2033 = vpop.f32.mrb[0].mxu0
    %v2034 = vpop.f32.mrb[0].mxu0
    %v2035 = vadd.f32 0.0, %v2034
    %v2036 = vpop.f32.mrb[0].mxu0
    %2037 = vmatprep.mubr.bf16.mxu0 0
    %2038 = vmatmul.mubr.bf16.gmra.mrb[0].mxu0 %v1720
    %v2039 = vpop.f32.mrb[0].mxu0
    %v2040 = vadd.f32 0.0, %v2039
    %v2041 = vpop.f32.mrb[0].mxu0
    %v2042 = vpop.f32.mrb[0].mxu0
    %v2043 = vadd.f32 0.0, %v2042
    %v2044 = vpop.f32.mrb[0].mxu0
    %2045 = vmatprep.mubr.bf16.mxu0 0
    %2046 = vmatmul.mubr.bf16.gmra.mrb[0].mxu0 %v1721
    %v2047 = vpop.f32.mrb[0].mxu0
    %v2048 = vadd.f32 0.0, %v2047
    %v2049 = vpop.f32.mrb[0].mxu0
    %v2050 = vpop.f32.mrb[0].mxu0
    %v2051 = vadd.f32 0.0, %v2050
    %v2052 = vpop.f32.mrb[0].mxu0
    %2053 = vmatprep.mubr.bf16.mxu0 0
    %2054 = vmatmul.mubr.bf16.gmra.mrb[0].mxu0 %v1722
    %v2055 = vpop.f32.mrb[0].mxu0
    %v2056 = vadd.f32 0.0, %v2055
    %v2057 = vpop.f32.mrb[0].mxu0
    %v2058 = vpop.f32.mrb[0].mxu0
    %v2059 = vadd.f32 0.0, %v2058
    %v2060 = vpop.f32.mrb[0].mxu0
    %2061 = vmatprep.mubr.bf16.mxu0 0
    %2062 = vmatmul.mubr.bf16.gmra.mrb[0].mxu0 %v1723
    %v2063 = vpop.f32.mrb[0].mxu0
    %v2064 = vadd.f32 0.0, %v2063
    %v2065 = vpop.f32.mrb[0].mxu0
    %v2066 = vpop.f32.mrb[0].mxu0
    %v2067 = vadd.f32 0.0, %v2066
    %v2068 = vpop.f32.mrb[0].mxu0
    %2069 = vmatprep.mubr.bf16.mxu0 0
    %2070 = vmatmul.mubr.bf16.gmra.mrb[0].mxu0 %v1724
    %v2071 = vpop.f32.mrb[0].mxu0
    %v2072 = vadd.f32 0.0, %v2071
    %v2073 = vpop.f32.mrb[0].mxu0
    %v2074 = vpop.f32.mrb[0].mxu0
    %v2075 = vadd.f32 0.0, %v2074
    %v2076 = vpop.f32.mrb[0].mxu0
    %2077 = vdwg.mxu0
    %v2094 = vunpack.c.l.b16 %v1613
    %v2095 = vunpack.c.l.b16 %v1614
    %v2096 = vunpack.c.l.b16 %v1615
    %v2097 = vunpack.c.l.b16 %v1616
    %v2098 = vunpack.c.l.b16 %v1617
    %v2099 = vunpack.c.l.b16 %v1618
    %v2100 = vunpack.c.l.b16 %v1619
    %v2101 = vunpack.c.l.b16 %v1620
    %v2102 = vunpack.c.l.b16 %v1621
    %v2103 = vunpack.c.l.b16 %v1622
    %v2104 = vunpack.c.l.b16 %v1623
    %v2105 = vunpack.c.l.b16 %v1624
    %v2106 = vunpack.c.l.b16 %v1625
    %v2107 = vunpack.c.l.b16 %v1626
    %v2108 = vunpack.c.l.b16 %v1627
    %v2109 = vunpack.c.l.b16 %v1628
    %v2110 = vpack.c.b16 %v2095, %v2094
    %v2111 = vpack.c.b16 %v2097, %v2096
    %v2112 = vpack.c.b16 %v2099, %v2098
    %v2113 = vpack.c.b16 %v2101, %v2100
    %v2114 = vpack.c.b16 %v2103, %v2102
    %v2115 = vpack.c.b16 %v2105, %v2104
    %v2116 = vpack.c.b16 %v2107, %v2106
    %v2117 = vpack.c.b16 %v2109, %v2108
    %2126 = vmatprep.subr.bf16.mxu0 0
    %2127 = vmatpush1.bf16.msra.mxu0 %v2110
    %2128 = vmatprep.subr.bf16.mxu0 0
    %2129 = vmatpush1.bf16.msra.mxu0 %v2111
    %2130 = vmatprep.subr.bf16.mxu0 0
    %2131 = vmatpush1.bf16.msra.mxu0 %v2112
    %2132 = vmatprep.subr.bf16.mxu0 0
    %2133 = vmatpush1.bf16.msra.mxu0 %v2113
    %2134 = vmatprep.subr.bf16.mxu0 0
    %2135 = vmatpush1.bf16.msra.mxu0 %v2114
    %2136 = vmatprep.subr.bf16.mxu0 0
    %2137 = vmatpush1.bf16.msra.mxu0 %v2115
    %2138 = vmatprep.subr.bf16.mxu0 0
    %2139 = vmatpush1.bf16.msra.mxu0 %v2116
    %2140 = vmatprep.subr.bf16.mxu0 0
    %2141 = vmatpush1.bf16.msra.mxu0 %v2117
    %2142 = vmatprep.subr.bf16.mxu0 0
    %2143 = vmatpush1.bf16.msra.mxu0 0
    %2144 = vmatprep.subr.bf16.mxu0 0
    %2145 = vmatpush1.bf16.msra.mxu0 0
    %2146 = vmatprep.subr.bf16.mxu0 0
    %2147 = vmatpush1.bf16.msra.mxu0 0
    %2148 = vmatprep.subr.bf16.mxu0 0
    %2149 = vmatpush1.bf16.msra.mxu0 0
    %2150 = vmatprep.subr.bf16.mxu0 0
    %2151 = vmatpush1.bf16.msra.mxu0 0
    %2152 = vmatprep.subr.bf16.mxu0 0
    %2153 = vmatpush1.bf16.msra.mxu0 0
    %2154 = vmatprep.subr.bf16.mxu0 0
    %2155 = vmatpush1.bf16.msra.mxu0 0
    %2156 = vmatprep.subr.bf16.mxu0 0
    %2157 = vmatpush1.bf16.msra.mxu0 0
    %2158 = vmatprep.mubr.bf16.mxu0 0
    %2159 = vmatmul.mubr.bf16.gmra.mrb[0].mxu0 %v1581
    %v2160 = vpop.f32.mrb[0].mxu0
    %v2161 = vadd.f32 %v1824, %v2160
    %v2162 = vpop.f32.mrb[0].mxu0
    %v2163 = vpop.f32.mrb[0].mxu0
    %v2164 = vadd.f32 %v1827, %v2163
    %v2165 = vpop.f32.mrb[0].mxu0
    %2166 = vmatprep.mubr.bf16.mxu0 0
    %2167 = vmatmul.mubr.bf16.gmra.mrb[0].mxu0 %v1582
    %v2168 = vpop.f32.mrb[0].mxu0
    %v2169 = vadd.f32 %v1832, %v2168
    %v2170 = vpop.f32.mrb[0].mxu0
    %v2171 = vpop.f32.mrb[0].mxu0
    %v2172 = vadd.f32 %v1835, %v2171
    %v2173 = vpop.f32.mrb[0].mxu0
    %2174 = vmatprep.mubr.bf16.mxu0 0
    %2175 = vmatmul.mubr.bf16.gmra.mrb[0].mxu0 %v1583
    %v2176 = vpop.f32.mrb[0].mxu0
    %v2177 = vadd.f32 %v1840, %v2176
    %v2178 = vpop.f32.mrb[0].mxu0
    %v2179 = vpop.f32.mrb[0].mxu0
    %v2180 = vadd.f32 %v1843, %v2179
    %v2181 = vpop.f32.mrb[0].mxu0
    %2182 = vmatprep.mubr.bf16.mxu0 0
    %2183 = vmatmul.mubr.bf16.gmra.mrb[0].mxu0 %v1584
    %v2184 = vpop.f32.mrb[0].mxu0
    %v2185 = vadd.f32 %v1848, %v2184
    %v2186 = vpop.f32.mrb[0].mxu0
    %v2187 = vpop.f32.mrb[0].mxu0
    %v2188 = vadd.f32 %v1851, %v2187
    %v2189 = vpop.f32.mrb[0].mxu0
    %2190 = vmatprep.mubr.bf16.mxu0 0
    %2191 = vmatmul.mubr.bf16.gmra.mrb[0].mxu0 %v1585
    %v2192 = vpop.f32.mrb[0].mxu0
    %v2193 = vadd.f32 %v1856, %v2192
    %v2194 = vpop.f32.mrb[0].mxu0
    %v2195 = vpop.f32.mrb[0].mxu0
    %v2196 = vadd.f32 %v1859, %v2195
    %v2197 = vpop.f32.mrb[0].mxu0
    %2198 = vmatprep.mubr.bf16.mxu0 0
    %2199 = vmatmul.mubr.bf16.gmra.mrb[0].mxu0 %v1586
    %v2200 = vpop.f32.mrb[0].mxu0
    %v2201 = vadd.f32 %v1864, %v2200
    %v2202 = vpop.f32.mrb[0].mxu0
    %v2203 = vpop.f32.mrb[0].mxu0
    %v2204 = vadd.f32 %v1867, %v2203
    %v2205 = vpop.f32.mrb[0].mxu0
    %2206 = vmatprep.mubr.bf16.mxu0 0
    %2207 = vmatmul.mubr.bf16.gmra.mrb[0].mxu0 %v1587
    %v2208 = vpop.f32.mrb[0].mxu0
    %v2209 = vadd.f32 %v1872, %v2208
    %v2210 = vpop.f32.mrb[0].mxu0
    %v2211 = vpop.f32.mrb[0].mxu0
    %v2212 = vadd.f32 %v1875, %v2211
    %v2213 = vpop.f32.mrb[0].mxu0
    %2214 = vmatprep.mubr.bf16.mxu0 0
    %2215 = vmatmul.mubr.bf16.gmra.mrb[0].mxu0 %v1588
    %v2216 = vpop.f32.mrb[0].mxu0
    %v2217 = vadd.f32 %v1880, %v2216
    %v2218 = vpop.f32.mrb[0].mxu0
    %v2219 = vpop.f32.mrb[0].mxu0
    %v2220 = vadd.f32 %v1883, %v2219
    %v2221 = vpop.f32.mrb[0].mxu0
    %2222 = vmatprep.mubr.bf16.mxu0 0
    %2223 = vmatmul.mubr.bf16.gmra.mrb[0].mxu0 %v1589
    %v2224 = vpop.f32.mrb[0].mxu0
    %v2225 = vadd.f32 %v1888, %v2224
    %v2226 = vpop.f32.mrb[0].mxu0
    %v2227 = vpop.f32.mrb[0].mxu0
    %v2228 = vadd.f32 %v1891, %v2227
    %v2229 = vpop.f32.mrb[0].mxu0
    %2230 = vmatprep.mubr.bf16.mxu0 0
    %2231 = vmatmul.mubr.bf16.gmra.mrb[0].mxu0 %v1590
    %v2232 = vpop.f32.mrb[0].mxu0
    %v2233 = vadd.f32 %v1896, %v2232
    %v2234 = vpop.f32.mrb[0].mxu0
    %v2235 = vpop.f32.mrb[0].mxu0
    %v2236 = vadd.f32 %v1899, %v2235
    %v2237 = vpop.f32.mrb[0].mxu0
    %2238 = vmatprep.mubr.bf16.mxu0 0
    %2239 = vmatmul.mubr.bf16.gmra.mrb[0].mxu0 %v1591
    %v2240 = vpop.f32.mrb[0].mxu0
    %v2241 = vadd.f32 %v1904, %v2240
    %v2242 = vpop.f32.mrb[0].mxu0
    %v2243 = vpop.f32.mrb[0].mxu0
    %v2244 = vadd.f32 %v1907, %v2243
    %v2245 = vpop.f32.mrb[0].mxu0
    %2246 = vmatprep.mubr.bf16.mxu0 0
    %2247 = vmatmul.mubr.bf16.gmra.mrb[0].mxu0 %v1592
    %v2248 = vpop.f32.mrb[0].mxu0
    %v2249 = vadd.f32 %v1912, %v2248
    %v2250 = vpop.f32.mrb[0].mxu0
    %v2251 = vpop.f32.mrb[0].mxu0
    %v2252 = vadd.f32 %v1915, %v2251
    %v2253 = vpop.f32.mrb[0].mxu0
    %2254 = vmatprep.mubr.bf16.mxu0 0
    %2255 = vmatmul.mubr.bf16.gmra.mrb[0].mxu0 %v1593
    %v2256 = vpop.f32.mrb[0].mxu0
    %v2257 = vadd.f32 %v1920, %v2256
    %v2258 = vpop.f32.mrb[0].mxu0
    %v2259 = vpop.f32.mrb[0].mxu0
    %v2260 = vadd.f32 %v1923, %v2259
    %v2261 = vpop.f32.mrb[0].mxu0
    %2262 = vmatprep.mubr.bf16.mxu0 0
    %2263 = vmatmul.mubr.bf16.gmra.mrb[0].mxu0 %v1594
    %v2264 = vpop.f32.mrb[0].mxu0
    %v2265 = vadd.f32 %v1928, %v2264
    %v2266 = vpop.f32.mrb[0].mxu0
    %v2267 = vpop.f32.mrb[0].mxu0
    %v2268 = vadd.f32 %v1931, %v2267
    %v2269 = vpop.f32.mrb[0].mxu0
    %2270 = vmatprep.mubr.bf16.mxu0 0
    %2271 = vmatmul.mubr.bf16.gmra.mrb[0].mxu0 %v1595
    %v2272 = vpop.f32.mrb[0].mxu0
    %v2273 = vadd.f32 %v1936, %v2272
    %v2274 = vpop.f32.mrb[0].mxu0
    %v2275 = vpop.f32.mrb[0].mxu0
    %v2276 = vadd.f32 %v1939, %v2275
    %v2277 = vpop.f32.mrb[0].mxu0
    %2278 = vmatprep.mubr.bf16.mxu0 0
    %2279 = vmatmul.mubr.bf16.gmra.mrb[0].mxu0 %v1596
    %v2280 = vpop.f32.mrb[0].mxu0
    %v2281 = vadd.f32 %v1944, %v2280
    %v2282 = vpop.f32.mrb[0].mxu0
    %v2283 = vpop.f32.mrb[0].mxu0
    %v2284 = vadd.f32 %v1947, %v2283
    %v2285 = vpop.f32.mrb[0].mxu0
    %2286 = vmatprep.mubr.bf16.mxu0 0
    %2287 = vmatmul.mubr.bf16.gmra.mrb[0].mxu0 %v1597
    %v2288 = vpop.f32.mrb[0].mxu0
    %v2289 = vadd.f32 %v1952, %v2288
    %v2290 = vpop.f32.mrb[0].mxu0
    %v2291 = vpop.f32.mrb[0].mxu0
    %v2292 = vadd.f32 %v1955, %v2291
    %v2293 = vpop.f32.mrb[0].mxu0
    %2294 = vmatprep.mubr.bf16.mxu0 0
    %2295 = vmatmul.mubr.bf16.gmra.mrb[0].mxu0 %v1598
    %v2296 = vpop.f32.mrb[0].mxu0
    %v2297 = vadd.f32 %v1960, %v2296
    %v2298 = vpop.f32.mrb[0].mxu0
    %v2299 = vpop.f32.mrb[0].mxu0
    %v2300 = vadd.f32 %v1963, %v2299
    %v2301 = vpop.f32.mrb[0].mxu0
    %2302 = vmatprep.mubr.bf16.mxu0 0
    %2303 = vmatmul.mubr.bf16.gmra.mrb[0].mxu0 %v1599
    %v2304 = vpop.f32.mrb[0].mxu0
    %v2305 = vadd.f32 %v1968, %v2304
    %v2306 = vpop.f32.mrb[0].mxu0
    %v2307 = vpop.f32.mrb[0].mxu0
    %v2308 = vadd.f32 %v1971, %v2307
    %v2309 = vpop.f32.mrb[0].mxu0
    %2310 = vmatprep.mubr.bf16.mxu0 0
    %2311 = vmatmul.mubr.bf16.gmra.mrb[0].mxu0 %v1600
    %v2312 = vpop.f32.mrb[0].mxu0
    %v2313 = vadd.f32 %v1976, %v2312
    %v2314 = vpop.f32.mrb[0].mxu0
    %v2315 = vpop.f32.mrb[0].mxu0
    %v2316 = vadd.f32 %v1979, %v2315
    %v2317 = vpop.f32.mrb[0].mxu0
    %2318 = vmatprep.mubr.bf16.mxu0 0
    %2319 = vmatmul.mubr.bf16.gmra.mrb[0].mxu0 %v1601
    %v2320 = vpop.f32.mrb[0].mxu0
    %v2321 = vadd.f32 %v1984, %v2320
    %v2322 = vpop.f32.mrb[0].mxu0
    %v2323 = vpop.f32.mrb[0].mxu0
    %v2324 = vadd.f32 %v1987, %v2323
    %v2325 = vpop.f32.mrb[0].mxu0
    %2326 = vmatprep.mubr.bf16.mxu0 0
    %2327 = vmatmul.mubr.bf16.gmra.mrb[0].mxu0 %v1602
    %v2328 = vpop.f32.mrb[0].mxu0
    %v2329 = vadd.f32 %v1992, %v2328
    %v2330 = vpop.f32.mrb[0].mxu0
    %v2331 = vpop.f32.mrb[0].mxu0
    %v2332 = vadd.f32 %v1995, %v2331
    %v2333 = vpop.f32.mrb[0].mxu0
    %2334 = vmatprep.mubr.bf16.mxu0 0
    %2335 = vmatmul.mubr.bf16.gmra.mrb[0].mxu0 %v1603
    %v2336 = vpop.f32.mrb[0].mxu0
    %v2337 = vadd.f32 %v2000, %v2336
    %v2338 = vpop.f32.mrb[0].mxu0
    %v2339 = vpop.f32.mrb[0].mxu0
    %v2340 = vadd.f32 %v2003, %v2339
    %v2341 = vpop.f32.mrb[0].mxu0
    %2342 = vmatprep.mubr.bf16.mxu0 0
    %2343 = vmatmul.mubr.bf16.gmra.mrb[0].mxu0 %v1604
    %v2344 = vpop.f32.mrb[0].mxu0
    %v2345 = vadd.f32 %v2008, %v2344
    %v2346 = vpop.f32.mrb[0].mxu0
    %v2347 = vpop.f32.mrb[0].mxu0
    %v2348 = vadd.f32 %v2011, %v2347
    %v2349 = vpop.f32.mrb[0].mxu0
    %2350 = vmatprep.mubr.bf16.mxu0 0
    %2351 = vmatmul.mubr.bf16.gmra.mrb[0].mxu0 %v1605
    %v2352 = vpop.f32.mrb[0].mxu0
    %v2353 = vadd.f32 %v2016, %v2352
    %v2354 = vpop.f32.mrb[0].mxu0
    %v2355 = vpop.f32.mrb[0].mxu0
    %v2356 = vadd.f32 %v2019, %v2355
    %v2357 = vpop.f32.mrb[0].mxu0
    %2358 = vmatprep.mubr.bf16.mxu0 0
    %2359 = vmatmul.mubr.bf16.gmra.mrb[0].mxu0 %v1606
    %v2360 = vpop.f32.mrb[0].mxu0
    %v2361 = vadd.f32 %v2024, %v2360
    %v2362 = vpop.f32.mrb[0].mxu0
    %v2363 = vpop.f32.mrb[0].mxu0
    %v2364 = vadd.f32 %v2027, %v2363
    %v2365 = vpop.f32.mrb[0].mxu0
    %2366 = vmatprep.mubr.bf16.mxu0 0
    %2367 = vmatmul.mubr.bf16.gmra.mrb[0].mxu0 %v1607
    %v2368 = vpop.f32.mrb[0].mxu0
    %v2369 = vadd.f32 %v2032, %v2368
    %v2370 = vpop.f32.mrb[0].mxu0
    %v2371 = vpop.f32.mrb[0].mxu0
    %v2372 = vadd.f32 %v2035, %v2371
    %v2373 = vpop.f32.mrb[0].mxu0
    %2374 = vmatprep.mubr.bf16.mxu0 0
    %2375 = vmatmul.mubr.bf16.gmra.mrb[0].mxu0 %v1608
    %v2376 = vpop.f32.mrb[0].mxu0
    %v2377 = vadd.f32 %v2040, %v2376
    %v2378 = vpop.f32.mrb[0].mxu0
    %v2379 = vpop.f32.mrb[0].mxu0
    %v2380 = vadd.f32 %v2043, %v2379
    %v2381 = vpop.f32.mrb[0].mxu0
    %2382 = vmatprep.mubr.bf16.mxu0 0
    %2383 = vmatmul.mubr.bf16.gmra.mrb[0].mxu0 %v1609
    %v2384 = vpop.f32.mrb[0].mxu0
    %v2385 = vadd.f32 %v2048, %v2384
    %v2386 = vpop.f32.mrb[0].mxu0
    %v2387 = vpop.f32.mrb[0].mxu0
    %v2388 = vadd.f32 %v2051, %v2387
    %v2389 = vpop.f32.mrb[0].mxu0
    %2390 = vmatprep.mubr.bf16.mxu0 0
    %2391 = vmatmul.mubr.bf16.gmra.mrb[0].mxu0 %v1610
    %v2392 = vpop.f32.mrb[0].mxu0
    %v2393 = vadd.f32 %v2056, %v2392
    %v2394 = vpop.f32.mrb[0].mxu0
    %v2395 = vpop.f32.mrb[0].mxu0
    %v2396 = vadd.f32 %v2059, %v2395
    %v2397 = vpop.f32.mrb[0].mxu0
    %2398 = vmatprep.mubr.bf16.mxu0 0
    %2399 = vmatmul.mubr.bf16.gmra.mrb[0].mxu0 %v1611
    %v2400 = vpop.f32.mrb[0].mxu0
    %v2401 = vadd.f32 %v2064, %v2400
    %v2402 = vpop.f32.mrb[0].mxu0
    %v2403 = vpop.f32.mrb[0].mxu0
    %v2404 = vadd.f32 %v2067, %v2403
    %v2405 = vpop.f32.mrb[0].mxu0
    %2406 = vmatprep.mubr.bf16.mxu0 0
    %2407 = vmatmul.mubr.bf16.gmra.mrb[0].mxu0 %v1612
    %v2408 = vpop.f32.mrb[0].mxu0
    %v2409 = vadd.f32 %v2072, %v2408
    %v2410 = vpop.f32.mrb[0].mxu0
    %v2411 = vpop.f32.mrb[0].mxu0
    %v2412 = vadd.f32 %v2075, %v2411
    %v2413 = vpop.f32.mrb[0].mxu0
    %2414 = vdwg.mxu0
    %v2415 = vld [vmem:[#allocation2 + $0x2] sm:$0xff]
    %v2416 = vld [vmem:[#allocation2 + $0xa] sm:$0xff]
    %v2417 = vld [vmem:[#allocation2 + $0x1a] sm:$0xff]
    %v2418 = vld [vmem:[#allocation2 + $0x22] sm:$0xff]
    %v2419 = vld [vmem:[#allocation2 + $0x32] sm:$0xff]
    %v2420 = vld [vmem:[#allocation2 + $0x3a] sm:$0xff]
    %v2421 = vld [vmem:[#allocation2 + $0x4a] sm:$0xff]
    %v2422 = vld [vmem:[#allocation2 + $0x52] sm:$0xff]
    %v2423 = vld [vmem:[#allocation2 + $0x62] sm:$0xff]
    %v2424 = vld [vmem:[#allocation2 + $0x6a] sm:$0xff]
    %v2425 = vld [vmem:[#allocation2 + $0x7a] sm:$0xff]
    %v2426 = vld [vmem:[#allocation2 + $0x82] sm:$0xff]
    %v2427 = vld [vmem:[#allocation2 + $0x92] sm:$0xff]
    %v2428 = vld [vmem:[#allocation2 + $0x9a] sm:$0xff]
    %v2429 = vld [vmem:[#allocation2 + $0xaa] sm:$0xff]
    %v2430 = vld [vmem:[#allocation2 + $0xb2] sm:$0xff]
    %v2431 = vld [vmem:[#allocation2 + $0xc2] sm:$0xff]
    %v2432 = vld [vmem:[#allocation2 + $0xca] sm:$0xff]
    %v2433 = vld [vmem:[#allocation2 + $0xda] sm:$0xff]
    %v2434 = vld [vmem:[#allocation2 + $0xe2] sm:$0xff]
    %v2435 = vld [vmem:[#allocation2 + $0xf2] sm:$0xff]
    %v2436 = vld [vmem:[#allocation2 + $0xfa] sm:$0xff]
    %v2437 = vld [vmem:[#allocation2 + $0x10a] sm:$0xff]
    %v2438 = vld [vmem:[#allocation2 + $0x112] sm:$0xff]
    %v2439 = vld [vmem:[#allocation2 + $0x122] sm:$0xff]
    %v2440 = vld [vmem:[#allocation2 + $0x12a] sm:$0xff]
    %v2441 = vld [vmem:[#allocation2 + $0x13a] sm:$0xff]
    %v2442 = vld [vmem:[#allocation2 + $0x142] sm:$0xff]
    %v2443 = vld [vmem:[#allocation2 + $0x152] sm:$0xff]
    %v2444 = vld [vmem:[#allocation2 + $0x15a] sm:$0xff]
    %v2445 = vld [vmem:[#allocation2 + $0x16a] sm:$0xff]
    %v2446 = vld [vmem:[#allocation2 + $0x172] sm:$0xff]
    %v2447 = vld [vmem:[#allocation2 + $0x1b2] sm:$0xff]
    %v2448 = vld [vmem:[#allocation2 + $0x1ba] sm:$0xff]
    %v2449 = vld [vmem:[#allocation2 + $0x1ca] sm:$0xff]
    %v2450 = vld [vmem:[#allocation2 + $0x1d2] sm:$0xff]
    %v2451 = vld [vmem:[#allocation2 + $0x1e2] sm:$0xff]
    %v2452 = vld [vmem:[#allocation2 + $0x1ea] sm:$0xff]
    %v2453 = vld [vmem:[#allocation2 + $0x1fa] sm:$0xff]
    %v2454 = vld [vmem:[#allocation2 + $0x202] sm:$0xff]
    %v2455 = vld [vmem:[#allocation2 + $0x212] sm:$0xff]
    %v2456 = vld [vmem:[#allocation2 + $0x21a] sm:$0xff]
    %v2457 = vld [vmem:[#allocation2 + $0x22a] sm:$0xff]
    %v2458 = vld [vmem:[#allocation2 + $0x232] sm:$0xff]
    %v2459 = vld [vmem:[#allocation2 + $0x242] sm:$0xff]
    %v2460 = vld [vmem:[#allocation2 + $0x24a] sm:$0xff]
    %v2461 = vld [vmem:[#allocation2 + $0x25a] sm:$0xff]
    %v2462 = vld [vmem:[#allocation2 + $0x262] sm:$0xff]
    %v2463 = vld [vmem:[#allocation2 + $0x272] sm:$0xff]
    %v2464 = vld [vmem:[#allocation2 + $0x27a] sm:$0xff]
    %v2465 = vld [vmem:[#allocation2 + $0x28a] sm:$0xff]
    %v2466 = vld [vmem:[#allocation2 + $0x292] sm:$0xff]
    %v2467 = vld [vmem:[#allocation2 + $0x2a2] sm:$0xff]
    %v2468 = vld [vmem:[#allocation2 + $0x2aa] sm:$0xff]
    %v2469 = vld [vmem:[#allocation2 + $0x2ba] sm:$0xff]
    %v2470 = vld [vmem:[#allocation2 + $0x2c2] sm:$0xff]
    %v2471 = vld [vmem:[#allocation2 + $0x2d2] sm:$0xff]
    %v2472 = vld [vmem:[#allocation2 + $0x2da] sm:$0xff]
    %v2473 = vld [vmem:[#allocation2 + $0x2ea] sm:$0xff]
    %v2474 = vld [vmem:[#allocation2 + $0x2f2] sm:$0xff]
    %v2475 = vld [vmem:[#allocation2 + $0x302] sm:$0xff]
    %v2476 = vld [vmem:[#allocation2 + $0x30a] sm:$0xff]
    %v2477 = vld [vmem:[#allocation2 + $0x31a] sm:$0xff]
    %v2478 = vld [vmem:[#allocation2 + $0x322] sm:$0xff]
    %v2479 = vpack.c.bf16 %v2416, %v2415
    %v2480 = vpack.c.bf16 %v2418, %v2417
    %v2481 = vpack.c.bf16 %v2420, %v2419
    %v2482 = vpack.c.bf16 %v2422, %v2421
    %v2483 = vpack.c.bf16 %v2424, %v2423
    %v2484 = vpack.c.bf16 %v2426, %v2425
    %v2485 = vpack.c.bf16 %v2428, %v2427
    %v2486 = vpack.c.bf16 %v2430, %v2429
    %v2487 = vpack.c.bf16 %v2432, %v2431
    %v2488 = vpack.c.bf16 %v2434, %v2433
    %v2489 = vpack.c.bf16 %v2436, %v2435
    %v2490 = vpack.c.bf16 %v2438, %v2437
    %v2491 = vpack.c.bf16 %v2440, %v2439
    %v2492 = vpack.c.bf16 %v2442, %v2441
    %v2493 = vpack.c.bf16 %v2444, %v2443
    %v2494 = vpack.c.bf16 %v2446, %v2445
    %v2495 = vpack.c.bf16 %v2448, %v2447
    %v2496 = vpack.c.bf16 %v2450, %v2449
    %v2497 = vpack.c.bf16 %v2452, %v2451
    %v2498 = vpack.c.bf16 %v2454, %v2453
    %v2499 = vpack.c.bf16 %v2456, %v2455
    %v2500 = vpack.c.bf16 %v2458, %v2457
    %v2501 = vpack.c.bf16 %v2460, %v2459
    %v2502 = vpack.c.bf16 %v2462, %v2461
    %v2503 = vpack.c.bf16 %v2464, %v2463
    %v2504 = vpack.c.bf16 %v2466, %v2465
    %v2505 = vpack.c.bf16 %v2468, %v2467
    %v2506 = vpack.c.bf16 %v2470, %v2469
    %v2507 = vpack.c.bf16 %v2472, %v2471
    %v2508 = vpack.c.bf16 %v2474, %v2473
    %v2509 = vpack.c.bf16 %v2476, %v2475
    %v2510 = vpack.c.bf16 %v2478, %v2477
    %v2511 = vld [vmem:[%s5 + $0x80] sm:$0xf]
    %v2512 = vld [vmem:[%s5 + $0x84] sm:$0xf]
    %v2513 = vld [vmem:[%s5 + $0x88] sm:$0xf]
    %v2514 = vld [vmem:[%s5 + $0x8c] sm:$0xf]
    %v2515 = vld [vmem:[%s5 + $0x90] sm:$0xf]
    %v2516 = vld [vmem:[%s5 + $0x94] sm:$0xf]
    %v2517 = vld [vmem:[%s5 + $0x98] sm:$0xf]
    %v2518 = vld [vmem:[%s5 + $0x9c] sm:$0xf]
    %v2519 = vld [vmem:[%s5 + $0xa0] sm:$0xf]
    %v2520 = vld [vmem:[%s5 + $0xa4] sm:$0xf]
    %v2521 = vld [vmem:[%s5 + $0xa8] sm:$0xf]
    %v2522 = vld [vmem:[%s5 + $0xac] sm:$0xf]
    %v2523 = vld [vmem:[%s5 + $0xb0] sm:$0xf]
    %v2524 = vld [vmem:[%s5 + $0xb4] sm:$0xf]
    %v2525 = vld [vmem:[%s5 + $0xb8] sm:$0xf]
    %v2526 = vld [vmem:[%s5 + $0xbc] sm:$0xf]
    %v2543 = vunpack.c.l.b16 %v2511
    %v2544 = vunpack.c.l.b16 %v2512
    %v2545 = vunpack.c.l.b16 %v2513
    %v2546 = vunpack.c.l.b16 %v2514
    %v2547 = vunpack.c.l.b16 %v2515
    %v2548 = vunpack.c.l.b16 %v2516
    %v2549 = vunpack.c.l.b16 %v2517
    %v2550 = vunpack.c.l.b16 %v2518
    %v2551 = vunpack.c.l.b16 %v2519
    %v2552 = vunpack.c.l.b16 %v2520
    %v2553 = vunpack.c.l.b16 %v2521
    %v2554 = vunpack.c.l.b16 %v2522
    %v2555 = vunpack.c.l.b16 %v2523
    %v2556 = vunpack.c.l.b16 %v2524
    %v2557 = vunpack.c.l.b16 %v2525
    %v2558 = vunpack.c.l.b16 %v2526
    %v2559 = vpack.c.b16 %v2544, %v2543
    %v2560 = vpack.c.b16 %v2546, %v2545
    %v2561 = vpack.c.b16 %v2548, %v2547
    %v2562 = vpack.c.b16 %v2550, %v2549
    %v2563 = vpack.c.b16 %v2552, %v2551
    %v2564 = vpack.c.b16 %v2554, %v2553
    %v2565 = vpack.c.b16 %v2556, %v2555
    %v2566 = vpack.c.b16 %v2558, %v2557
    %2575 = vmatprep.subr.bf16.mxu0 0
    %2576 = vmatpush1.bf16.msra.mxu0 %v2559
    %2577 = vmatprep.subr.bf16.mxu0 0
    %2578 = vmatpush1.bf16.msra.mxu0 %v2560
    %2579 = vmatprep.subr.bf16.mxu0 0
    %2580 = vmatpush1.bf16.msra.mxu0 %v2561
    %2581 = vmatprep.subr.bf16.mxu0 0
    %2582 = vmatpush1.bf16.msra.mxu0 %v2562
    %2583 = vmatprep.subr.bf16.mxu0 0
    %2584 = vmatpush1.bf16.msra.mxu0 %v2563
    %2585 = vmatprep.subr.bf16.mxu0 0
    %2586 = vmatpush1.bf16.msra.mxu0 %v2564
    %2587 = vmatprep.subr.bf16.mxu0 0
    %2588 = vmatpush1.bf16.msra.mxu0 %v2565
    %2589 = vmatprep.subr.bf16.mxu0 0
    %2590 = vmatpush1.bf16.msra.mxu0 %v2566
    %2591 = vmatprep.subr.bf16.mxu0 0
    %2592 = vmatpush1.bf16.msra.mxu0 0
    %2593 = vmatprep.subr.bf16.mxu0 0
    %2594 = vmatpush1.bf16.msra.mxu0 0
    %2595 = vmatprep.subr.bf16.mxu0 0
    %2596 = vmatpush1.bf16.msra.mxu0 0
    %2597 = vmatprep.subr.bf16.mxu0 0
    %2598 = vmatpush1.bf16.msra.mxu0 0
    %2599 = vmatprep.subr.bf16.mxu0 0
    %2600 = vmatpush1.bf16.msra.mxu0 0
    %2601 = vmatprep.subr.bf16.mxu0 0
    %2602 = vmatpush1.bf16.msra.mxu0 0
    %2603 = vmatprep.subr.bf16.mxu0 0
    %2604 = vmatpush1.bf16.msra.mxu0 0
    %2605 = vmatprep.subr.bf16.mxu0 0
    %2606 = vmatpush1.bf16.msra.mxu0 0
    %2607 = vmatprep.mubr.bf16.mxu0 0
    %2608 = vmatmul.mubr.bf16.gmra.mrb[0].mxu0 %v2479
    %v2609 = vpop.f32.mrb[0].mxu0
    %v2610 = vadd.f32 0.0, %v2609
    %v2611 = vpop.f32.mrb[0].mxu0
    %v2612 = vpop.f32.mrb[0].mxu0
    %v2613 = vadd.f32 0.0, %v2612
    %v2614 = vpop.f32.mrb[0].mxu0
    %2615 = vmatprep.mubr.bf16.mxu0 0
    %2616 = vmatmul.mubr.bf16.gmra.mrb[0].mxu0 %v2480
    %v2617 = vpop.f32.mrb[0].mxu0
    %v2618 = vadd.f32 0.0, %v2617
    %v2619 = vpop.f32.mrb[0].mxu0
    %v2620 = vpop.f32.mrb[0].mxu0
    %v2621 = vadd.f32 0.0, %v2620
    %v2622 = vpop.f32.mrb[0].mxu0
    %2623 = vmatprep.mubr.bf16.mxu0 0
    %2624 = vmatmul.mubr.bf16.gmra.mrb[0].mxu0 %v2481
    %v2625 = vpop.f32.mrb[0].mxu0
    %v2626 = vadd.f32 0.0, %v2625
    %v2627 = vpop.f32.mrb[0].mxu0
    %v2628 = vpop.f32.mrb[0].mxu0
    %v2629 = vadd.f32 0.0, %v2628
    %v2630 = vpop.f32.mrb[0].mxu0
    %2631 = vmatprep.mubr.bf16.mxu0 0
    %2632 = vmatmul.mubr.bf16.gmra.mrb[0].mxu0 %v2482
    %v2633 = vpop.f32.mrb[0].mxu0
    %v2634 = vadd.f32 0.0, %v2633
    %v2635 = vpop.f32.mrb[0].mxu0
    %v2636 = vpop.f32.mrb[0].mxu0
    %v2637 = vadd.f32 0.0, %v2636
    %v2638 = vpop.f32.mrb[0].mxu0
    %2639 = vmatprep.mubr.bf16.mxu0 0
    %2640 = vmatmul.mubr.bf16.gmra.mrb[0].mxu0 %v2483
    %v2641 = vpop.f32.mrb[0].mxu0
    %v2642 = vadd.f32 0.0, %v2641
    %v2643 = vpop.f32.mrb[0].mxu0
    %v2644 = vpop.f32.mrb[0].mxu0
    %v2645 = vadd.f32 0.0, %v2644
    %v2646 = vpop.f32.mrb[0].mxu0
    %2647 = vmatprep.mubr.bf16.mxu0 0
    %2648 = vmatmul.mubr.bf16.gmra.mrb[0].mxu0 %v2484
    %v2649 = vpop.f32.mrb[0].mxu0
    %v2650 = vadd.f32 0.0, %v2649
    %v2651 = vpop.f32.mrb[0].mxu0
    %v2652 = vpop.f32.mrb[0].mxu0
    %v2653 = vadd.f32 0.0, %v2652
    %v2654 = vpop.f32.mrb[0].mxu0
    %2655 = vmatprep.mubr.bf16.mxu0 0
    %2656 = vmatmul.mubr.bf16.gmra.mrb[0].mxu0 %v2485
    %v2657 = vpop.f32.mrb[0].mxu0
    %v2658 = vadd.f32 0.0, %v2657
    %v2659 = vpop.f32.mrb[0].mxu0
    %v2660 = vpop.f32.mrb[0].mxu0
    %v2661 = vadd.f32 0.0, %v2660
    %v2662 = vpop.f32.mrb[0].mxu0
    %2663 = vmatprep.mubr.bf16.mxu0 0
    %2664 = vmatmul.mubr.bf16.gmra.mrb[0].mxu0 %v2486
    %v2665 = vpop.f32.mrb[0].mxu0
    %v2666 = vadd.f32 0.0, %v2665
    %v2667 = vpop.f32.mrb[0].mxu0
    %v2668 = vpop.f32.mrb[0].mxu0
    %v2669 = vadd.f32 0.0, %v2668
    %v2670 = vpop.f32.mrb[0].mxu0
    %2671 = vmatprep.mubr.bf16.mxu0 0
    %2672 = vmatmul.mubr.bf16.gmra.mrb[0].mxu0 %v2487
    %v2673 = vpop.f32.mrb[0].mxu0
    %v2674 = vadd.f32 0.0, %v2673
    %v2675 = vpop.f32.mrb[0].mxu0
    %v2676 = vpop.f32.mrb[0].mxu0
    %v2677 = vadd.f32 0.0, %v2676
    %v2678 = vpop.f32.mrb[0].mxu0
    %2679 = vmatprep.mubr.bf16.mxu0 0
    %2680 = vmatmul.mubr.bf16.gmra.mrb[0].mxu0 %v2488
    %v2681 = vpop.f32.mrb[0].mxu0
    %v2682 = vadd.f32 0.0, %v2681
    %v2683 = vpop.f32.mrb[0].mxu0
    %v2684 = vpop.f32.mrb[0].mxu0
    %v2685 = vadd.f32 0.0, %v2684
    %v2686 = vpop.f32.mrb[0].mxu0
    %2687 = vmatprep.mubr.bf16.mxu0 0
    %2688 = vmatmul.mubr.bf16.gmra.mrb[0].mxu0 %v2489
    %v2689 = vpop.f32.mrb[0].mxu0
    %v2690 = vadd.f32 0.0, %v2689
    %v2691 = vpop.f32.mrb[0].mxu0
    %v2692 = vpop.f32.mrb[0].mxu0
    %v2693 = vadd.f32 0.0, %v2692
    %v2694 = vpop.f32.mrb[0].mxu0
    %2695 = vmatprep.mubr.bf16.mxu0 0
    %2696 = vmatmul.mubr.bf16.gmra.mrb[0].mxu0 %v2490
    %v2697 = vpop.f32.mrb[0].mxu0
    %v2698 = vadd.f32 0.0, %v2697
    %v2699 = vpop.f32.mrb[0].mxu0
    %v2700 = vpop.f32.mrb[0].mxu0
    %v2701 = vadd.f32 0.0, %v2700
    %v2702 = vpop.f32.mrb[0].mxu0
    %2703 = vmatprep.mubr.bf16.mxu0 0
    %2704 = vmatmul.mubr.bf16.gmra.mrb[0].mxu0 %v2491
    %v2705 = vpop.f32.mrb[0].mxu0
    %v2706 = vadd.f32 0.0, %v2705
    %v2707 = vpop.f32.mrb[0].mxu0
    %v2708 = vpop.f32.mrb[0].mxu0
    %v2709 = vadd.f32 0.0, %v2708
    %v2710 = vpop.f32.mrb[0].mxu0
    %2711 = vmatprep.mubr.bf16.mxu0 0
    %2712 = vmatmul.mubr.bf16.gmra.mrb[0].mxu0 %v2492
    %v2713 = vpop.f32.mrb[0].mxu0
    %v2714 = vadd.f32 0.0, %v2713
    %v2715 = vpop.f32.mrb[0].mxu0
    %v2716 = vpop.f32.mrb[0].mxu0
    %v2717 = vadd.f32 0.0, %v2716
    %v2718 = vpop.f32.mrb[0].mxu0
    %2719 = vmatprep.mubr.bf16.mxu0 0
    %2720 = vmatmul.mubr.bf16.gmra.mrb[0].mxu0 %v2493
    %v2721 = vpop.f32.mrb[0].mxu0
    %v2722 = vadd.f32 0.0, %v2721
    %v2723 = vpop.f32.mrb[0].mxu0
    %v2724 = vpop.f32.mrb[0].mxu0
    %v2725 = vadd.f32 0.0, %v2724
    %v2726 = vpop.f32.mrb[0].mxu0
    %2727 = vmatprep.mubr.bf16.mxu0 0
    %2728 = vmatmul.mubr.bf16.gmra.mrb[0].mxu0 %v2494
    %v2729 = vpop.f32.mrb[0].mxu0
    %v2730 = vadd.f32 0.0, %v2729
    %v2731 = vpop.f32.mrb[0].mxu0
    %v2732 = vpop.f32.mrb[0].mxu0
    %v2733 = vadd.f32 0.0, %v2732
    %v2734 = vpop.f32.mrb[0].mxu0
    %2735 = vmatprep.mubr.bf16.mxu0 0
    %2736 = vmatmul.mubr.bf16.gmra.mrb[0].mxu0 %v2495
    %v2737 = vpop.f32.mrb[0].mxu0
    %v2738 = vadd.f32 0.0, %v2737
    %v2739 = vpop.f32.mrb[0].mxu0
    %v2740 = vpop.f32.mrb[0].mxu0
    %v2741 = vadd.f32 0.0, %v2740
    %v2742 = vpop.f32.mrb[0].mxu0
    %2743 = vmatprep.mubr.bf16.mxu0 0
    %2744 = vmatmul.mubr.bf16.gmra.mrb[0].mxu0 %v2496
    %v2745 = vpop.f32.mrb[0].mxu0
    %v2746 = vadd.f32 0.0, %v2745
    %v2747 = vpop.f32.mrb[0].mxu0
    %v2748 = vpop.f32.mrb[0].mxu0
    %v2749 = vadd.f32 0.0, %v2748
    %v2750 = vpop.f32.mrb[0].mxu0
    %2751 = vmatprep.mubr.bf16.mxu0 0
    %2752 = vmatmul.mubr.bf16.gmra.mrb[0].mxu0 %v2497
    %v2753 = vpop.f32.mrb[0].mxu0
    %v2754 = vadd.f32 0.0, %v2753
    %v2755 = vpop.f32.mrb[0].mxu0
    %v2756 = vpop.f32.mrb[0].mxu0
    %v2757 = vadd.f32 0.0, %v2756
    %v2758 = vpop.f32.mrb[0].mxu0
    %2759 = vmatprep.mubr.bf16.mxu0 0
    %2760 = vmatmul.mubr.bf16.gmra.mrb[0].mxu0 %v2498
    %v2761 = vpop.f32.mrb[0].mxu0
    %v2762 = vadd.f32 0.0, %v2761
    %v2763 = vpop.f32.mrb[0].mxu0
    %v2764 = vpop.f32.mrb[0].mxu0
    %v2765 = vadd.f32 0.0, %v2764
    %v2766 = vpop.f32.mrb[0].mxu0
    %2767 = vmatprep.mubr.bf16.mxu0 0
    %2768 = vmatmul.mubr.bf16.gmra.mrb[0].mxu0 %v2499
    %v2769 = vpop.f32.mrb[0].mxu0
    %v2770 = vadd.f32 0.0, %v2769
    %v2771 = vpop.f32.mrb[0].mxu0
    %v2772 = vpop.f32.mrb[0].mxu0
    %v2773 = vadd.f32 0.0, %v2772
    %v2774 = vpop.f32.mrb[0].mxu0
    %2775 = vmatprep.mubr.bf16.mxu0 0
    %2776 = vmatmul.mubr.bf16.gmra.mrb[0].mxu0 %v2500
    %v2777 = vpop.f32.mrb[0].mxu0
    %v2778 = vadd.f32 0.0, %v2777
    %v2779 = vpop.f32.mrb[0].mxu0
    %v2780 = vpop.f32.mrb[0].mxu0
    %v2781 = vadd.f32 0.0, %v2780
    %v2782 = vpop.f32.mrb[0].mxu0
    %2783 = vmatprep.mubr.bf16.mxu0 0
    %2784 = vmatmul.mubr.bf16.gmra.mrb[0].mxu0 %v2501
    %v2785 = vpop.f32.mrb[0].mxu0
    %v2786 = vadd.f32 0.0, %v2785
    %v2787 = vpop.f32.mrb[0].mxu0
    %v2788 = vpop.f32.mrb[0].mxu0
    %v2789 = vadd.f32 0.0, %v2788
    %v2790 = vpop.f32.mrb[0].mxu0
    %2791 = vmatprep.mubr.bf16.mxu0 0
    %2792 = vmatmul.mubr.bf16.gmra.mrb[0].mxu0 %v2502
    %v2793 = vpop.f32.mrb[0].mxu0
    %v2794 = vadd.f32 0.0, %v2793
    %v2795 = vpop.f32.mrb[0].mxu0
    %v2796 = vpop.f32.mrb[0].mxu0
    %v2797 = vadd.f32 0.0, %v2796
    %v2798 = vpop.f32.mrb[0].mxu0
    %2799 = vmatprep.mubr.bf16.mxu0 0
    %2800 = vmatmul.mubr.bf16.gmra.mrb[0].mxu0 %v2503
    %v2801 = vpop.f32.mrb[0].mxu0
    %v2802 = vadd.f32 0.0, %v2801
    %v2803 = vpop.f32.mrb[0].mxu0
    %v2804 = vpop.f32.mrb[0].mxu0
    %v2805 = vadd.f32 0.0, %v2804
    %v2806 = vpop.f32.mrb[0].mxu0
    %2807 = vmatprep.mubr.bf16.mxu0 0
    %2808 = vmatmul.mubr.bf16.gmra.mrb[0].mxu0 %v2504
    %v2809 = vpop.f32.mrb[0].mxu0
    %v2810 = vadd.f32 0.0, %v2809
    %v2811 = vpop.f32.mrb[0].mxu0
    %v2812 = vpop.f32.mrb[0].mxu0
    %v2813 = vadd.f32 0.0, %v2812
    %v2814 = vpop.f32.mrb[0].mxu0
    %2815 = vmatprep.mubr.bf16.mxu0 0
    %2816 = vmatmul.mubr.bf16.gmra.mrb[0].mxu0 %v2505
    %v2817 = vpop.f32.mrb[0].mxu0
    %v2818 = vadd.f32 0.0, %v2817
    %v2819 = vpop.f32.mrb[0].mxu0
    %v2820 = vpop.f32.mrb[0].mxu0
    %v2821 = vadd.f32 0.0, %v2820
    %v2822 = vpop.f32.mrb[0].mxu0
    %2823 = vmatprep.mubr.bf16.mxu0 0
    %2824 = vmatmul.mubr.bf16.gmra.mrb[0].mxu0 %v2506
    %v2825 = vpop.f32.mrb[0].mxu0
    %v2826 = vadd.f32 0.0, %v2825
    %v2827 = vpop.f32.mrb[0].mxu0
    %v2828 = vpop.f32.mrb[0].mxu0
    %v2829 = vadd.f32 0.0, %v2828
    %v2830 = vpop.f32.mrb[0].mxu0
    %2831 = vmatprep.mubr.bf16.mxu0 0
    %2832 = vmatmul.mubr.bf16.gmra.mrb[0].mxu0 %v2507
    %v2833 = vpop.f32.mrb[0].mxu0
    %v2834 = vadd.f32 0.0, %v2833
    %v2835 = vpop.f32.mrb[0].mxu0
    %v2836 = vpop.f32.mrb[0].mxu0
    %v2837 = vadd.f32 0.0, %v2836
    %v2838 = vpop.f32.mrb[0].mxu0
    %2839 = vmatprep.mubr.bf16.mxu0 0
    %2840 = vmatmul.mubr.bf16.gmra.mrb[0].mxu0 %v2508
    %v2841 = vpop.f32.mrb[0].mxu0
    %v2842 = vadd.f32 0.0, %v2841
    %v2843 = vpop.f32.mrb[0].mxu0
    %v2844 = vpop.f32.mrb[0].mxu0
    %v2845 = vadd.f32 0.0, %v2844
    %v2846 = vpop.f32.mrb[0].mxu0
    %2847 = vmatprep.mubr.bf16.mxu0 0
    %2848 = vmatmul.mubr.bf16.gmra.mrb[0].mxu0 %v2509
    %v2849 = vpop.f32.mrb[0].mxu0
    %v2850 = vadd.f32 0.0, %v2849
    %v2851 = vpop.f32.mrb[0].mxu0
    %v2852 = vpop.f32.mrb[0].mxu0
    %v2853 = vadd.f32 0.0, %v2852
    %v2854 = vpop.f32.mrb[0].mxu0
    %2855 = vmatprep.mubr.bf16.mxu0 0
    %2856 = vmatmul.mubr.bf16.gmra.mrb[0].mxu0 %v2510
    %v2857 = vpop.f32.mrb[0].mxu0
    %v2858 = vadd.f32 0.0, %v2857
    %v2859 = vpop.f32.mrb[0].mxu0
    %v2860 = vpop.f32.mrb[0].mxu0
    %v2861 = vadd.f32 0.0, %v2860
    %v2862 = vpop.f32.mrb[0].mxu0
    %2863 = vdwg.mxu0
    %v2864 = vadd.f32 %v2161, %v2610
    %v2865 = vadd.f32 %v2164, %v2613
    %v2866 = vadd.f32 %v2169, %v2618
    %v2867 = vadd.f32 %v2172, %v2621
    %v2868 = vadd.f32 %v2177, %v2626
    %v2869 = vadd.f32 %v2180, %v2629
    %v2870 = vadd.f32 %v2185, %v2634
    %v2871 = vadd.f32 %v2188, %v2637
    %v2872 = vadd.f32 %v2193, %v2642
    %v2873 = vadd.f32 %v2196, %v2645
    %v2874 = vadd.f32 %v2201, %v2650
    %v2875 = vadd.f32 %v2204, %v2653
    %v2876 = vadd.f32 %v2209, %v2658
    %v2877 = vadd.f32 %v2212, %v2661
    %v2878 = vadd.f32 %v2217, %v2666
    %v2879 = vadd.f32 %v2220, %v2669
    %v2880 = vadd.f32 %v2225, %v2674
    %v2881 = vadd.f32 %v2228, %v2677
    %v2882 = vadd.f32 %v2233, %v2682
    %v2883 = vadd.f32 %v2236, %v2685
    %v2884 = vadd.f32 %v2241, %v2690
    %v2885 = vadd.f32 %v2244, %v2693
    %v2886 = vadd.f32 %v2249, %v2698
    %v2887 = vadd.f32 %v2252, %v2701
    %v2888 = vadd.f32 %v2257, %v2706
    %v2889 = vadd.f32 %v2260, %v2709
    %v2890 = vadd.f32 %v2265, %v2714
    %v2891 = vadd.f32 %v2268, %v2717
    %v2892 = vadd.f32 %v2273, %v2722
    %v2893 = vadd.f32 %v2276, %v2725
    %v2894 = vadd.f32 %v2281, %v2730
    %v2895 = vadd.f32 %v2284, %v2733
    %v2896 = vadd.f32 %v2289, %v2738
    %v2897 = vadd.f32 %v2292, %v2741
    %v2898 = vadd.f32 %v2297, %v2746
    %v2899 = vadd.f32 %v2300, %v2749
    %v2900 = vadd.f32 %v2305, %v2754
    %v2901 = vadd.f32 %v2308, %v2757
    %v2902 = vadd.f32 %v2313, %v2762
    %v2903 = vadd.f32 %v2316, %v2765
    %v2904 = vadd.f32 %v2321, %v2770
    %v2905 = vadd.f32 %v2324, %v2773
    %v2906 = vadd.f32 %v2329, %v2778
    %v2907 = vadd.f32 %v2332, %v2781
    %v2908 = vadd.f32 %v2337, %v2786
    %v2909 = vadd.f32 %v2340, %v2789
    %v2910 = vadd.f32 %v2345, %v2794
    %v2911 = vadd.f32 %v2348, %v2797
    %v2912 = vadd.f32 %v2353, %v2802
    %v2913 = vadd.f32 %v2356, %v2805
    %v2914 = vadd.f32 %v2361, %v2810
    %v2915 = vadd.f32 %v2364, %v2813
    %v2916 = vadd.f32 %v2369, %v2818
    %v2917 = vadd.f32 %v2372, %v2821
    %v2918 = vadd.f32 %v2377, %v2826
    %v2919 = vadd.f32 %v2380, %v2829
    %v2920 = vadd.f32 %v2385, %v2834
    %v2921 = vadd.f32 %v2388, %v2837
    %v2922 = vadd.f32 %v2393, %v2842
    %v2923 = vadd.f32 %v2396, %v2845
    %v2924 = vadd.f32 %v2401, %v2850
    %v2925 = vadd.f32 %v2404, %v2853
    %v2926 = vadd.f32 %v2409, %v2858
    %v2927 = vadd.f32 %v2412, %v2861
    %v2928 = vld [vmem:[%s1452] sm:$0xff]
    %v2929 = vld [vmem:[%s1452 + $0x8] sm:$0xff]
    %v2930 = vld [vmem:[%s1452 + $0x18] sm:$0xff]
    %v2931 = vld [vmem:[%s1452 + $0x20] sm:$0xff]
    %v2932 = vld [vmem:[%s1452 + $0x30] sm:$0xff]
    %v2933 = vld [vmem:[%s1452 + $0x38] sm:$0xff]
    %v2934 = vld [vmem:[%s1452 + $0x48] sm:$0xff]
    %v2935 = vld [vmem:[%s1452 + $0x50] sm:$0xff]
    %v2936 = vld [vmem:[%s1452 + $0x60] sm:$0xff]
    %v2937 = vld [vmem:[%s1452 + $0x68] sm:$0xff]
    %v2938 = vld [vmem:[%s1452 + $0x78] sm:$0xff]
    %v2939 = vld [vmem:[%s1452 + $0x80] sm:$0xff]
    %v2940 = vld [vmem:[%s1452 + $0x90] sm:$0xff]
    %v2941 = vld [vmem:[%s1452 + $0x98] sm:$0xff]
    %v2942 = vld [vmem:[%s1452 + $0xa8] sm:$0xff]
    %v2943 = vld [vmem:[%s1452 + $0xb0] sm:$0xff]
    %v2944 = vld [vmem:[%s1452 + $0xc0] sm:$0xff]
    %v2945 = vld [vmem:[%s1452 + $0xc8] sm:$0xff]
    %v2946 = vld [vmem:[%s1452 + $0xd8] sm:$0xff]
    %v2947 = vld [vmem:[%s1452 + $0xe0] sm:$0xff]
    %v2948 = vld [vmem:[%s1452 + $0xf0] sm:$0xff]
    %v2949 = vld [vmem:[%s1452 + $0xf8] sm:$0xff]
    %v2950 = vld [vmem:[%s1452 + $0x108] sm:$0xff]
    %v2951 = vld [vmem:[%s1452 + $0x110] sm:$0xff]
    %v2952 = vld [vmem:[%s1452 + $0x120] sm:$0xff]
    %v2953 = vld [vmem:[%s1452 + $0x128] sm:$0xff]
    %v2954 = vld [vmem:[%s1452 + $0x138] sm:$0xff]
    %v2955 = vld [vmem:[%s1452 + $0x140] sm:$0xff]
    %v2956 = vld [vmem:[%s1452 + $0x150] sm:$0xff]
    %v2957 = vld [vmem:[%s1452 + $0x158] sm:$0xff]
    %v2958 = vld [vmem:[%s1452 + $0x168] sm:$0xff]
    %v2959 = vld [vmem:[%s1452 + $0x170] sm:$0xff]
    %v2960 = vld [vmem:[%s1452 + $0x1b0] sm:$0xff]
    %v2961 = vld [vmem:[%s1452 + $0x1b8] sm:$0xff]
    %v2962 = vld [vmem:[%s1452 + $0x1c8] sm:$0xff]
    %v2963 = vld [vmem:[%s1452 + $0x1d0] sm:$0xff]
    %v2964 = vld [vmem:[%s1452 + $0x1e0] sm:$0xff]
    %v2965 = vld [vmem:[%s1452 + $0x1e8] sm:$0xff]
    %v2966 = vld [vmem:[%s1452 + $0x1f8] sm:$0xff]
    %v2967 = vld [vmem:[%s1452 + $0x200] sm:$0xff]
    %v2968 = vld [vmem:[%s1452 + $0x210] sm:$0xff]
    %v2969 = vld [vmem:[%s1452 + $0x218] sm:$0xff]
    %v2970 = vld [vmem:[%s1452 + $0x228] sm:$0xff]
    %v2971 = vld [vmem:[%s1452 + $0x230] sm:$0xff]
    %v2972 = vld [vmem:[%s1452 + $0x240] sm:$0xff]
    %v2973 = vld [vmem:[%s1452 + $0x248] sm:$0xff]
    %v2974 = vld [vmem:[%s1452 + $0x258] sm:$0xff]
    %v2975 = vld [vmem:[%s1452 + $0x260] sm:$0xff]
    %v2976 = vld [vmem:[%s1452 + $0x270] sm:$0xff]
    %v2977 = vld [vmem:[%s1452 + $0x278] sm:$0xff]
    %v2978 = vld [vmem:[%s1452 + $0x288] sm:$0xff]
    %v2979 = vld [vmem:[%s1452 + $0x290] sm:$0xff]
    %v2980 = vld [vmem:[%s1452 + $0x2a0] sm:$0xff]
    %v2981 = vld [vmem:[%s1452 + $0x2a8] sm:$0xff]
    %v2982 = vld [vmem:[%s1452 + $0x2b8] sm:$0xff]
    %v2983 = vld [vmem:[%s1452 + $0x2c0] sm:$0xff]
    %v2984 = vld [vmem:[%s1452 + $0x2d0] sm:$0xff]
    %v2985 = vld [vmem:[%s1452 + $0x2d8] sm:$0xff]
    %v2986 = vld [vmem:[%s1452 + $0x2e8] sm:$0xff]
    %v2987 = vld [vmem:[%s1452 + $0x2f0] sm:$0xff]
    %v2988 = vld [vmem:[%s1452 + $0x300] sm:$0xff]
    %v2989 = vld [vmem:[%s1452 + $0x308] sm:$0xff]
    %v2990 = vld [vmem:[%s1452 + $0x318] sm:$0xff]
    %v2991 = vld [vmem:[%s1452 + $0x320] sm:$0xff]
    %v2992 = vpack.c.bf16 %v2929, %v2928
    %v2993 = vpack.c.bf16 %v2931, %v2930
    %v2994 = vpack.c.bf16 %v2933, %v2932
    %v2995 = vpack.c.bf16 %v2935, %v2934
    %v2996 = vpack.c.bf16 %v2937, %v2936
    %v2997 = vpack.c.bf16 %v2939, %v2938
    %v2998 = vpack.c.bf16 %v2941, %v2940
    %v2999 = vpack.c.bf16 %v2943, %v2942
    %v3000 = vpack.c.bf16 %v2945, %v2944
    %v3001 = vpack.c.bf16 %v2947, %v2946
    %v3002 = vpack.c.bf16 %v2949, %v2948
    %v3003 = vpack.c.bf16 %v2951, %v2950
    %v3004 = vpack.c.bf16 %v2953, %v2952
    %v3005 = vpack.c.bf16 %v2955, %v2954
    %v3006 = vpack.c.bf16 %v2957, %v2956
    %v3007 = vpack.c.bf16 %v2959, %v2958
    %v3008 = vpack.c.bf16 %v2961, %v2960
    %v3009 = vpack.c.bf16 %v2963, %v2962
    %v3010 = vpack.c.bf16 %v2965, %v2964
    %v3011 = vpack.c.bf16 %v2967, %v2966
    %v3012 = vpack.c.bf16 %v2969, %v2968
    %v3013 = vpack.c.bf16 %v2971, %v2970
    %v3014 = vpack.c.bf16 %v2973, %v2972
    %v3015 = vpack.c.bf16 %v2975, %v2974
    %v3016 = vpack.c.bf16 %v2977, %v2976
    %v3017 = vpack.c.bf16 %v2979, %v2978
    %v3018 = vpack.c.bf16 %v2981, %v2980
    %v3019 = vpack.c.bf16 %v2983, %v2982
    %v3020 = vpack.c.bf16 %v2985, %v2984
    %v3021 = vpack.c.bf16 %v2987, %v2986
    %v3022 = vpack.c.bf16 %v2989, %v2988
    %v3023 = vpack.c.bf16 %v2991, %v2990
    %v3024 = vld [vmem:[%s5 + $0xc0] sm:$0xf]
    %v3025 = vld [vmem:[%s5 + $0xc4] sm:$0xf]
    %v3026 = vld [vmem:[%s5 + $0xc8] sm:$0xf]
    %v3027 = vld [vmem:[%s5 + $0xcc] sm:$0xf]
    %v3028 = vld [vmem:[%s5 + $0xd0] sm:$0xf]
    %v3029 = vld [vmem:[%s5 + $0xd4] sm:$0xf]
    %v3030 = vld [vmem:[%s5 + $0xd8] sm:$0xf]
    %v3031 = vld [vmem:[%s5 + $0xdc] sm:$0xf]
    %v3032 = vld [vmem:[%s5 + $0xe0] sm:$0xf]
    %v3033 = vld [vmem:[%s5 + $0xe4] sm:$0xf]
    %v3034 = vld [vmem:[%s5 + $0xe8] sm:$0xf]
    %v3035 = vld [vmem:[%s5 + $0xec] sm:$0xf]
    %v3036 = vld [vmem:[%s5 + $0xf0] sm:$0xf]
    %v3037 = vld [vmem:[%s5 + $0xf4] sm:$0xf]
    %v3038 = vld [vmem:[%s5 + $0xf8] sm:$0xf]
    %v3039 = vld [vmem:[%s5 + $0xfc] sm:$0xf]
    %v3056 = vunpack.c.l.b16 %v3024
    %v3057 = vunpack.c.l.b16 %v3025
    %v3058 = vunpack.c.l.b16 %v3026
    %v3059 = vunpack.c.l.b16 %v3027
    %v3060 = vunpack.c.l.b16 %v3028
    %v3061 = vunpack.c.l.b16 %v3029
    %v3062 = vunpack.c.l.b16 %v3030
    %v3063 = vunpack.c.l.b16 %v3031
    %v3064 = vunpack.c.l.b16 %v3032
    %v3065 = vunpack.c.l.b16 %v3033
    %v3066 = vunpack.c.l.b16 %v3034
    %v3067 = vunpack.c.l.b16 %v3035
    %v3068 = vunpack.c.l.b16 %v3036
    %v3069 = vunpack.c.l.b16 %v3037
    %v3070 = vunpack.c.l.b16 %v3038
    %v3071 = vunpack.c.l.b16 %v3039
    %v3072 = vpack.c.b16 %v3057, %v3056
    %v3073 = vpack.c.b16 %v3059, %v3058
    %v3074 = vpack.c.b16 %v3061, %v3060
    %v3075 = vpack.c.b16 %v3063, %v3062
    %v3076 = vpack.c.b16 %v3065, %v3064
    %v3077 = vpack.c.b16 %v3067, %v3066
    %v3078 = vpack.c.b16 %v3069, %v3068
    %v3079 = vpack.c.b16 %v3071, %v3070
    %3088 = vmatprep.subr.bf16.mxu0 0
    %3089 = vmatpush1.bf16.msra.mxu0 %v3072
    %3090 = vmatprep.subr.bf16.mxu0 0
    %3091 = vmatpush1.bf16.msra.mxu0 %v3073
    %3092 = vmatprep.subr.bf16.mxu0 0
    %3093 = vmatpush1.bf16.msra.mxu0 %v3074
    %3094 = vmatprep.subr.bf16.mxu0 0
    %3095 = vmatpush1.bf16.msra.mxu0 %v3075
    %3096 = vmatprep.subr.bf16.mxu0 0
    %3097 = vmatpush1.bf16.msra.mxu0 %v3076
    %3098 = vmatprep.subr.bf16.mxu0 0
    %3099 = vmatpush1.bf16.msra.mxu0 %v3077
    %3100 = vmatprep.subr.bf16.mxu0 0
    %3101 = vmatpush1.bf16.msra.mxu0 %v3078
    %3102 = vmatprep.subr.bf16.mxu0 0
    %3103 = vmatpush1.bf16.msra.mxu0 %v3079
    %3104 = vmatprep.subr.bf16.mxu0 0
    %3105 = vmatpush1.bf16.msra.mxu0 0
    %3106 = vmatprep.subr.bf16.mxu0 0
    %3107 = vmatpush1.bf16.msra.mxu0 0
    %3108 = vmatprep.subr.bf16.mxu0 0
    %3109 = vmatpush1.bf16.msra.mxu0 0
    %3110 = vmatprep.subr.bf16.mxu0 0
    %3111 = vmatpush1.bf16.msra.mxu0 0
    %3112 = vmatprep.subr.bf16.mxu0 0
    %3113 = vmatpush1.bf16.msra.mxu0 0
    %3114 = vmatprep.subr.bf16.mxu0 0
    %3115 = vmatpush1.bf16.msra.mxu0 0
    %3116 = vmatprep.subr.bf16.mxu0 0
    %3117 = vmatpush1.bf16.msra.mxu0 0
    %3118 = vmatprep.subr.bf16.mxu0 0
    %3119 = vmatpush1.bf16.msra.mxu0 0
    %3120 = vmatprep.mubr.bf16.mxu0 0
    %3121 = vmatmul.mubr.bf16.gmra.mrb[0].mxu0 %v2992
    %v3122 = vpop.f32.mrb[0].mxu0
    %v3123 = vadd.f32 0.0, %v3122
    %v3124 = vpop.f32.mrb[0].mxu0
    %v3125 = vpop.f32.mrb[0].mxu0
    %v3126 = vadd.f32 0.0, %v3125
    %v3127 = vpop.f32.mrb[0].mxu0
    %3128 = vmatprep.mubr.bf16.mxu0 0
    %3129 = vmatmul.mubr.bf16.gmra.mrb[0].mxu0 %v2993
    %v3130 = vpop.f32.mrb[0].mxu0
    %v3131 = vadd.f32 0.0, %v3130
    %v3132 = vpop.f32.mrb[0].mxu0
    %v3133 = vpop.f32.mrb[0].mxu0
    %v3134 = vadd.f32 0.0, %v3133
    %v3135 = vpop.f32.mrb[0].mxu0
    %3136 = vmatprep.mubr.bf16.mxu0 0
    %3137 = vmatmul.mubr.bf16.gmra.mrb[0].mxu0 %v2994
    %v3138 = vpop.f32.mrb[0].mxu0
    %v3139 = vadd.f32 0.0, %v3138
    %v3140 = vpop.f32.mrb[0].mxu0
    %v3141 = vpop.f32.mrb[0].mxu0
    %v3142 = vadd.f32 0.0, %v3141
    %v3143 = vpop.f32.mrb[0].mxu0
    %3144 = vmatprep.mubr.bf16.mxu0 0
    %3145 = vmatmul.mubr.bf16.gmra.mrb[0].mxu0 %v2995
    %v3146 = vpop.f32.mrb[0].mxu0
    %v3147 = vadd.f32 0.0, %v3146
    %v3148 = vpop.f32.mrb[0].mxu0
    %v3149 = vpop.f32.mrb[0].mxu0
    %v3150 = vadd.f32 0.0, %v3149
    %v3151 = vpop.f32.mrb[0].mxu0
    %3152 = vmatprep.mubr.bf16.mxu0 0
    %3153 = vmatmul.mubr.bf16.gmra.mrb[0].mxu0 %v2996
    %v3154 = vpop.f32.mrb[0].mxu0
    %v3155 = vadd.f32 0.0, %v3154
    %v3156 = vpop.f32.mrb[0].mxu0
    %v3157 = vpop.f32.mrb[0].mxu0
    %v3158 = vadd.f32 0.0, %v3157
    %v3159 = vpop.f32.mrb[0].mxu0
    %3160 = vmatprep.mubr.bf16.mxu0 0
    %3161 = vmatmul.mubr.bf16.gmra.mrb[0].mxu0 %v2997
    %v3162 = vpop.f32.mrb[0].mxu0
    %v3163 = vadd.f32 0.0, %v3162
    %v3164 = vpop.f32.mrb[0].mxu0
    %v3165 = vpop.f32.mrb[0].mxu0
    %v3166 = vadd.f32 0.0, %v3165
    %v3167 = vpop.f32.mrb[0].mxu0
    %3168 = vmatprep.mubr.bf16.mxu0 0
    %3169 = vmatmul.mubr.bf16.gmra.mrb[0].mxu0 %v2998
    %v3170 = vpop.f32.mrb[0].mxu0
    %v3171 = vadd.f32 0.0, %v3170
    %v3172 = vpop.f32.mrb[0].mxu0
    %v3173 = vpop.f32.mrb[0].mxu0
    %v3174 = vadd.f32 0.0, %v3173
    %v3175 = vpop.f32.mrb[0].mxu0
    %3176 = vmatprep.mubr.bf16.mxu0 0
    %3177 = vmatmul.mubr.bf16.gmra.mrb[0].mxu0 %v2999
    %v3178 = vpop.f32.mrb[0].mxu0
    %v3179 = vadd.f32 0.0, %v3178
    %v3180 = vpop.f32.mrb[0].mxu0
    %v3181 = vpop.f32.mrb[0].mxu0
    %v3182 = vadd.f32 0.0, %v3181
    %v3183 = vpop.f32.mrb[0].mxu0
    %3184 = vmatprep.mubr.bf16.mxu0 0
    %3185 = vmatmul.mubr.bf16.gmra.mrb[0].mxu0 %v3000
    %v3186 = vpop.f32.mrb[0].mxu0
    %v3187 = vadd.f32 0.0, %v3186
    %v3188 = vpop.f32.mrb[0].mxu0
    %v3189 = vpop.f32.mrb[0].mxu0
    %v3190 = vadd.f32 0.0, %v3189
    %v3191 = vpop.f32.mrb[0].mxu0
    %3192 = vmatprep.mubr.bf16.mxu0 0
    %3193 = vmatmul.mubr.bf16.gmra.mrb[0].mxu0 %v3001
    %v3194 = vpop.f32.mrb[0].mxu0
    %v3195 = vadd.f32 0.0, %v3194
    %v3196 = vpop.f32.mrb[0].mxu0
    %v3197 = vpop.f32.mrb[0].mxu0
    %v3198 = vadd.f32 0.0, %v3197
    %v3199 = vpop.f32.mrb[0].mxu0
    %3200 = vmatprep.mubr.bf16.mxu0 0
    %3201 = vmatmul.mubr.bf16.gmra.mrb[0].mxu0 %v3002
    %v3202 = vpop.f32.mrb[0].mxu0
    %v3203 = vadd.f32 0.0, %v3202
    %v3204 = vpop.f32.mrb[0].mxu0
    %v3205 = vpop.f32.mrb[0].mxu0
    %v3206 = vadd.f32 0.0, %v3205
    %v3207 = vpop.f32.mrb[0].mxu0
    %3208 = vmatprep.mubr.bf16.mxu0 0
    %3209 = vmatmul.mubr.bf16.gmra.mrb[0].mxu0 %v3003
    %v3210 = vpop.f32.mrb[0].mxu0
    %v3211 = vadd.f32 0.0, %v3210
    %v3212 = vpop.f32.mrb[0].mxu0
    %v3213 = vpop.f32.mrb[0].mxu0
    %v3214 = vadd.f32 0.0, %v3213
    %v3215 = vpop.f32.mrb[0].mxu0
    %3216 = vmatprep.mubr.bf16.mxu0 0
    %3217 = vmatmul.mubr.bf16.gmra.mrb[0].mxu0 %v3004
    %v3218 = vpop.f32.mrb[0].mxu0
    %v3219 = vadd.f32 0.0, %v3218
    %v3220 = vpop.f32.mrb[0].mxu0
    %v3221 = vpop.f32.mrb[0].mxu0
    %v3222 = vadd.f32 0.0, %v3221
    %v3223 = vpop.f32.mrb[0].mxu0
    %3224 = vmatprep.mubr.bf16.mxu0 0
    %3225 = vmatmul.mubr.bf16.gmra.mrb[0].mxu0 %v3005
    %v3226 = vpop.f32.mrb[0].mxu0
    %v3227 = vadd.f32 0.0, %v3226
    %v3228 = vpop.f32.mrb[0].mxu0
    %v3229 = vpop.f32.mrb[0].mxu0
    %v3230 = vadd.f32 0.0, %v3229
    %v3231 = vpop.f32.mrb[0].mxu0
    %3232 = vmatprep.mubr.bf16.mxu0 0
    %3233 = vmatmul.mubr.bf16.gmra.mrb[0].mxu0 %v3006
    %v3234 = vpop.f32.mrb[0].mxu0
    %v3235 = vadd.f32 0.0, %v3234
    %v3236 = vpop.f32.mrb[0].mxu0
    %v3237 = vpop.f32.mrb[0].mxu0
    %v3238 = vadd.f32 0.0, %v3237
    %v3239 = vpop.f32.mrb[0].mxu0
    %3240 = vmatprep.mubr.bf16.mxu0 0
    %3241 = vmatmul.mubr.bf16.gmra.mrb[0].mxu0 %v3007
    %v3242 = vpop.f32.mrb[0].mxu0
    %v3243 = vadd.f32 0.0, %v3242
    %v3244 = vpop.f32.mrb[0].mxu0
    %v3245 = vpop.f32.mrb[0].mxu0
    %v3246 = vadd.f32 0.0, %v3245
    %v3247 = vpop.f32.mrb[0].mxu0
    %3248 = vmatprep.mubr.bf16.mxu0 0
    %3249 = vmatmul.mubr.bf16.gmra.mrb[0].mxu0 %v3008
    %v3250 = vpop.f32.mrb[0].mxu0
    %v3251 = vadd.f32 0.0, %v3250
    %v3252 = vpop.f32.mrb[0].mxu0
    %v3253 = vpop.f32.mrb[0].mxu0
    %v3254 = vadd.f32 0.0, %v3253
    %v3255 = vpop.f32.mrb[0].mxu0
    %3256 = vmatprep.mubr.bf16.mxu0 0
    %3257 = vmatmul.mubr.bf16.gmra.mrb[0].mxu0 %v3009
    %v3258 = vpop.f32.mrb[0].mxu0
    %v3259 = vadd.f32 0.0, %v3258
    %v3260 = vpop.f32.mrb[0].mxu0
    %v3261 = vpop.f32.mrb[0].mxu0
    %v3262 = vadd.f32 0.0, %v3261
    %v3263 = vpop.f32.mrb[0].mxu0
    %3264 = vmatprep.mubr.bf16.mxu0 0
    %3265 = vmatmul.mubr.bf16.gmra.mrb[0].mxu0 %v3010
    %v3266 = vpop.f32.mrb[0].mxu0
    %v3267 = vadd.f32 0.0, %v3266
    %v3268 = vpop.f32.mrb[0].mxu0
    %v3269 = vpop.f32.mrb[0].mxu0
    %v3270 = vadd.f32 0.0, %v3269
    %v3271 = vpop.f32.mrb[0].mxu0
    %3272 = vmatprep.mubr.bf16.mxu0 0
    %3273 = vmatmul.mubr.bf16.gmra.mrb[0].mxu0 %v3011
    %v3274 = vpop.f32.mrb[0].mxu0
    %v3275 = vadd.f32 0.0, %v3274
    %v3276 = vpop.f32.mrb[0].mxu0
    %v3277 = vpop.f32.mrb[0].mxu0
    %v3278 = vadd.f32 0.0, %v3277
    %v3279 = vpop.f32.mrb[0].mxu0
    %3280 = vmatprep.mubr.bf16.mxu0 0
    %3281 = vmatmul.mubr.bf16.gmra.mrb[0].mxu0 %v3012
    %v3282 = vpop.f32.mrb[0].mxu0
    %v3283 = vadd.f32 0.0, %v3282
    %v3284 = vpop.f32.mrb[0].mxu0
    %v3285 = vpop.f32.mrb[0].mxu0
    %v3286 = vadd.f32 0.0, %v3285
    %v3287 = vpop.f32.mrb[0].mxu0
    %3288 = vmatprep.mubr.bf16.mxu0 0
    %3289 = vmatmul.mubr.bf16.gmra.mrb[0].mxu0 %v3013
    %v3290 = vpop.f32.mrb[0].mxu0
    %v3291 = vadd.f32 0.0, %v3290
    %v3292 = vpop.f32.mrb[0].mxu0
    %v3293 = vpop.f32.mrb[0].mxu0
    %v3294 = vadd.f32 0.0, %v3293
    %v3295 = vpop.f32.mrb[0].mxu0
    %3296 = vmatprep.mubr.bf16.mxu0 0
    %3297 = vmatmul.mubr.bf16.gmra.mrb[0].mxu0 %v3014
    %v3298 = vpop.f32.mrb[0].mxu0
    %v3299 = vadd.f32 0.0, %v3298
    %v3300 = vpop.f32.mrb[0].mxu0
    %v3301 = vpop.f32.mrb[0].mxu0
    %v3302 = vadd.f32 0.0, %v3301
    %v3303 = vpop.f32.mrb[0].mxu0
    %3304 = vmatprep.mubr.bf16.mxu0 0
    %3305 = vmatmul.mubr.bf16.gmra.mrb[0].mxu0 %v3015
    %v3306 = vpop.f32.mrb[0].mxu0
    %v3307 = vadd.f32 0.0, %v3306
    %v3308 = vpop.f32.mrb[0].mxu0
    %v3309 = vpop.f32.mrb[0].mxu0
    %v3310 = vadd.f32 0.0, %v3309
    %v3311 = vpop.f32.mrb[0].mxu0
    %3312 = vmatprep.mubr.bf16.mxu0 0
    %3313 = vmatmul.mubr.bf16.gmra.mrb[0].mxu0 %v3016
    %v3314 = vpop.f32.mrb[0].mxu0
    %v3315 = vadd.f32 0.0, %v3314
    %v3316 = vpop.f32.mrb[0].mxu0
    %v3317 = vpop.f32.mrb[0].mxu0
    %v3318 = vadd.f32 0.0, %v3317
    %v3319 = vpop.f32.mrb[0].mxu0
    %3320 = vmatprep.mubr.bf16.mxu0 0
    %3321 = vmatmul.mubr.bf16.gmra.mrb[0].mxu0 %v3017
    %v3322 = vpop.f32.mrb[0].mxu0
    %v3323 = vadd.f32 0.0, %v3322
    %v3324 = vpop.f32.mrb[0].mxu0
    %v3325 = vpop.f32.mrb[0].mxu0
    %v3326 = vadd.f32 0.0, %v3325
    %v3327 = vpop.f32.mrb[0].mxu0
    %3328 = vmatprep.mubr.bf16.mxu0 0
    %3329 = vmatmul.mubr.bf16.gmra.mrb[0].mxu0 %v3018
    %v3330 = vpop.f32.mrb[0].mxu0
    %v3331 = vadd.f32 0.0, %v3330
    %v3332 = vpop.f32.mrb[0].mxu0
    %v3333 = vpop.f32.mrb[0].mxu0
    %v3334 = vadd.f32 0.0, %v3333
    %v3335 = vpop.f32.mrb[0].mxu0
    %3336 = vmatprep.mubr.bf16.mxu0 0
    %3337 = vmatmul.mubr.bf16.gmra.mrb[0].mxu0 %v3019
    %v3338 = vpop.f32.mrb[0].mxu0
    %v3339 = vadd.f32 0.0, %v3338
    %v3340 = vpop.f32.mrb[0].mxu0
    %v3341 = vpop.f32.mrb[0].mxu0
    %v3342 = vadd.f32 0.0, %v3341
    %v3343 = vpop.f32.mrb[0].mxu0
    %3344 = vmatprep.mubr.bf16.mxu0 0
    %3345 = vmatmul.mubr.bf16.gmra.mrb[0].mxu0 %v3020
    %v3346 = vpop.f32.mrb[0].mxu0
    %v3347 = vadd.f32 0.0, %v3346
    %v3348 = vpop.f32.mrb[0].mxu0
    %v3349 = vpop.f32.mrb[0].mxu0
    %v3350 = vadd.f32 0.0, %v3349
    %v3351 = vpop.f32.mrb[0].mxu0
    %3352 = vmatprep.mubr.bf16.mxu0 0
    %3353 = vmatmul.mubr.bf16.gmra.mrb[0].mxu0 %v3021
    %v3354 = vpop.f32.mrb[0].mxu0
    %v3355 = vadd.f32 0.0, %v3354
    %v3356 = vpop.f32.mrb[0].mxu0
    %v3357 = vpop.f32.mrb[0].mxu0
    %v3358 = vadd.f32 0.0, %v3357
    %v3359 = vpop.f32.mrb[0].mxu0
    %3360 = vmatprep.mubr.bf16.mxu0 0
    %3361 = vmatmul.mubr.bf16.gmra.mrb[0].mxu0 %v3022
    %v3362 = vpop.f32.mrb[0].mxu0
    %v3363 = vadd.f32 0.0, %v3362
    %v3364 = vpop.f32.mrb[0].mxu0
    %v3365 = vpop.f32.mrb[0].mxu0
    %v3366 = vadd.f32 0.0, %v3365
    %v3367 = vpop.f32.mrb[0].mxu0
    %3368 = vmatprep.mubr.bf16.mxu0 0
    %3369 = vmatmul.mubr.bf16.gmra.mrb[0].mxu0 %v3023
    %v3370 = vpop.f32.mrb[0].mxu0
    %v3371 = vadd.f32 0.0, %v3370
    %v3372 = vpop.f32.mrb[0].mxu0
    %v3373 = vpop.f32.mrb[0].mxu0
    %v3374 = vadd.f32 0.0, %v3373
    %v3375 = vpop.f32.mrb[0].mxu0
    %3376 = vdwg.mxu0
    %v3377 = vadd.f32 %v2864, %v3123
    %v3378 = vadd.f32 %v2865, %v3126
    %v3379 = vadd.f32 %v2866, %v3131
    %v3380 = vadd.f32 %v2867, %v3134
    %v3381 = vadd.f32 %v2868, %v3139
    %v3382 = vadd.f32 %v2869, %v3142
    %v3383 = vadd.f32 %v2870, %v3147
    %v3384 = vadd.f32 %v2871, %v3150
    %v3385 = vadd.f32 %v2872, %v3155
    %v3386 = vadd.f32 %v2873, %v3158
    %v3387 = vadd.f32 %v2874, %v3163
    %v3388 = vadd.f32 %v2875, %v3166
    %v3389 = vadd.f32 %v2876, %v3171
    %v3390 = vadd.f32 %v2877, %v3174
    %v3391 = vadd.f32 %v2878, %v3179
    %v3392 = vadd.f32 %v2879, %v3182
    %v3393 = vadd.f32 %v2880, %v3187
    %v3394 = vadd.f32 %v2881, %v3190
    %v3395 = vadd.f32 %v2882, %v3195
    %v3396 = vadd.f32 %v2883, %v3198
    %v3397 = vadd.f32 %v2884, %v3203
    %v3398 = vadd.f32 %v2885, %v3206
    %v3399 = vadd.f32 %v2886, %v3211
    %v3400 = vadd.f32 %v2887, %v3214
    %v3401 = vadd.f32 %v2888, %v3219
    %v3402 = vadd.f32 %v2889, %v3222
    %v3403 = vadd.f32 %v2890, %v3227
    %v3404 = vadd.f32 %v2891, %v3230
    %v3405 = vadd.f32 %v2892, %v3235
    %v3406 = vadd.f32 %v2893, %v3238
    %v3407 = vadd.f32 %v2894, %v3243
    %v3408 = vadd.f32 %v2895, %v3246
    %v3409 = vadd.f32 %v2896, %v3251
    %v3410 = vadd.f32 %v2897, %v3254
    %v3411 = vadd.f32 %v2898, %v3259
    %v3412 = vadd.f32 %v2899, %v3262
    %v3413 = vadd.f32 %v2900, %v3267
    %v3414 = vadd.f32 %v2901, %v3270
    %v3415 = vadd.f32 %v2902, %v3275
    %v3416 = vadd.f32 %v2903, %v3278
    %v3417 = vadd.f32 %v2904, %v3283
    %v3418 = vadd.f32 %v2905, %v3286
    %v3419 = vadd.f32 %v2906, %v3291
    %v3420 = vadd.f32 %v2907, %v3294
    %v3421 = vadd.f32 %v2908, %v3299
    %v3422 = vadd.f32 %v2909, %v3302
    %v3423 = vadd.f32 %v2910, %v3307
    %v3424 = vadd.f32 %v2911, %v3310
    %v3425 = vadd.f32 %v2912, %v3315
    %v3426 = vadd.f32 %v2913, %v3318
    %v3427 = vadd.f32 %v2914, %v3323
    %v3428 = vadd.f32 %v2915, %v3326
    %v3429 = vadd.f32 %v2916, %v3331
    %v3430 = vadd.f32 %v2917, %v3334
    %v3431 = vadd.f32 %v2918, %v3339
    %v3432 = vadd.f32 %v2919, %v3342
    %v3433 = vadd.f32 %v2920, %v3347
    %v3434 = vadd.f32 %v2921, %v3350
    %v3435 = vadd.f32 %v2922, %v3355
    %v3436 = vadd.f32 %v2923, %v3358
    %v3437 = vadd.f32 %v2924, %v3363
    %v3438 = vadd.f32 %v2925, %v3366
    %v3439 = vadd.f32 %v2926, %v3371
    %v3440 = vadd.f32 %v2927, %v3374
    %v3441 = vld [vmem:[%s1452 + $0x1] sm:$0xff]
    %v3442 = vld [vmem:[%s1452 + $0x9] sm:$0xff]
    %v3443 = vld [vmem:[%s1452 + $0x19] sm:$0xff]
    %v3444 = vld [vmem:[%s1452 + $0x21] sm:$0xff]
    %v3445 = vld [vmem:[%s1452 + $0x31] sm:$0xff]
    %v3446 = vld [vmem:[%s1452 + $0x39] sm:$0xff]
    %v3447 = vld [vmem:[%s1452 + $0x49] sm:$0xff]
    %v3448 = vld [vmem:[%s1452 + $0x51] sm:$0xff]
    %v3449 = vld [vmem:[%s1452 + $0x61] sm:$0xff]
    %v3450 = vld [vmem:[%s1452 + $0x69] sm:$0xff]
    %v3451 = vld [vmem:[%s1452 + $0x79] sm:$0xff]
    %v3452 = vld [vmem:[%s1452 + $0x81] sm:$0xff]
    %v3453 = vld [vmem:[%s1452 + $0x91] sm:$0xff]
    %v3454 = vld [vmem:[%s1452 + $0x99] sm:$0xff]
    %v3455 = vld [vmem:[%s1452 + $0xa9] sm:$0xff]
    %v3456 = vld [vmem:[%s1452 + $0xb1] sm:$0xff]
    %v3457 = vld [vmem:[%s1452 + $0xc1] sm:$0xff]
    %v3458 = vld [vmem:[%s1452 + $0xc9] sm:$0xff]
    %v3459 = vld [vmem:[%s1452 + $0xd9] sm:$0xff]
    %v3460 = vld [vmem:[%s1452 + $0xe1] sm:$0xff]
    %v3461 = vld [vmem:[%s1452 + $0xf1] sm:$0xff]
    %v3462 = vld [vmem:[%s1452 + $0xf9] sm:$0xff]
    %v3463 = vld [vmem:[%s1452 + $0x109] sm:$0xff]
    %v3464 = vld [vmem:[%s1452 + $0x111] sm:$0xff]
    %v3465 = vld [vmem:[%s1452 + $0x121] sm:$0xff]
    %v3466 = vld [vmem:[%s1452 + $0x129] sm:$0xff]
    %v3467 = vld [vmem:[%s1452 + $0x139] sm:$0xff]
    %v3468 = vld [vmem:[%s1452 + $0x141] sm:$0xff]
    %v3469 = vld [vmem:[%s1452 + $0x151] sm:$0xff]
    %v3470 = vld [vmem:[%s1452 + $0x159] sm:$0xff]
    %v3471 = vld [vmem:[%s1452 + $0x169] sm:$0xff]
    %v3472 = vld [vmem:[%s1452 + $0x171] sm:$0xff]
    %v3473 = vld [vmem:[%s1452 + $0x1b1] sm:$0xff]
    %v3474 = vld [vmem:[%s1452 + $0x1b9] sm:$0xff]
    %v3475 = vld [vmem:[%s1452 + $0x1c9] sm:$0xff]
    %v3476 = vld [vmem:[%s1452 + $0x1d1] sm:$0xff]
    %v3477 = vld [vmem:[%s1452 + $0x1e1] sm:$0xff]
    %v3478 = vld [vmem:[%s1452 + $0x1e9] sm:$0xff]
    %v3479 = vld [vmem:[%s1452 + $0x1f9] sm:$0xff]
    %v3480 = vld [vmem:[%s1452 + $0x201] sm:$0xff]
    %v3481 = vld [vmem:[%s1452 + $0x211] sm:$0xff]
    %v3482 = vld [vmem:[%s1452 + $0x219] sm:$0xff]
    %v3483 = vld [vmem:[%s1452 + $0x229] sm:$0xff]
    %v3484 = vld [vmem:[%s1452 + $0x231] sm:$0xff]
    %v3485 = vld [vmem:[%s1452 + $0x241] sm:$0xff]
    %v3486 = vld [vmem:[%s1452 + $0x249] sm:$0xff]
    %v3487 = vld [vmem:[%s1452 + $0x259] sm:$0xff]
    %v3488 = vld [vmem:[%s1452 + $0x261] sm:$0xff]
    %v3489 = vld [vmem:[%s1452 + $0x271] sm:$0xff]
    %v3490 = vld [vmem:[%s1452 + $0x279] sm:$0xff]
    %v3491 = vld [vmem:[%s1452 + $0x289] sm:$0xff]
    %v3492 = vld [vmem:[%s1452 + $0x291] sm:$0xff]
    %v3493 = vld [vmem:[%s1452 + $0x2a1] sm:$0xff]
    %v3494 = vld [vmem:[%s1452 + $0x2a9] sm:$0xff]
    %v3495 = vld [vmem:[%s1452 + $0x2b9] sm:$0xff]
    %v3496 = vld [vmem:[%s1452 + $0x2c1] sm:$0xff]
    %v3497 = vld [vmem:[%s1452 + $0x2d1] sm:$0xff]
    %v3498 = vld [vmem:[%s1452 + $0x2d9] sm:$0xff]
    %v3499 = vld [vmem:[%s1452 + $0x2e9] sm:$0xff]
    %v3500 = vld [vmem:[%s1452 + $0x2f1] sm:$0xff]
    %v3501 = vld [vmem:[%s1452 + $0x301] sm:$0xff]
    %v3502 = vld [vmem:[%s1452 + $0x309] sm:$0xff]
    %v3503 = vld [vmem:[%s1452 + $0x319] sm:$0xff]
    %v3504 = vld [vmem:[%s1452 + $0x321] sm:$0xff]
    %v3505 = vpack.c.bf16 %v3442, %v3441
    %v3506 = vpack.c.bf16 %v3444, %v3443
    %v3507 = vpack.c.bf16 %v3446, %v3445
    %v3508 = vpack.c.bf16 %v3448, %v3447
    %v3509 = vpack.c.bf16 %v3450, %v3449
    %v3510 = vpack.c.bf16 %v3452, %v3451
    %v3511 = vpack.c.bf16 %v3454, %v3453
    %v3512 = vpack.c.bf16 %v3456, %v3455
    %v3513 = vpack.c.bf16 %v3458, %v3457
    %v3514 = vpack.c.bf16 %v3460, %v3459
    %v3515 = vpack.c.bf16 %v3462, %v3461
    %v3516 = vpack.c.bf16 %v3464, %v3463
    %v3517 = vpack.c.bf16 %v3466, %v3465
    %v3518 = vpack.c.bf16 %v3468, %v3467
    %v3519 = vpack.c.bf16 %v3470, %v3469
    %v3520 = vpack.c.bf16 %v3472, %v3471
    %v3521 = vpack.c.bf16 %v3474, %v3473
    %v3522 = vpack.c.bf16 %v3476, %v3475
    %v3523 = vpack.c.bf16 %v3478, %v3477
    %v3524 = vpack.c.bf16 %v3480, %v3479
    %v3525 = vpack.c.bf16 %v3482, %v3481
    %v3526 = vpack.c.bf16 %v3484, %v3483
    %v3527 = vpack.c.bf16 %v3486, %v3485
    %v3528 = vpack.c.bf16 %v3488, %v3487
    %v3529 = vpack.c.bf16 %v3490, %v3489
    %v3530 = vpack.c.bf16 %v3492, %v3491
    %v3531 = vpack.c.bf16 %v3494, %v3493
    %v3532 = vpack.c.bf16 %v3496, %v3495
    %v3533 = vpack.c.bf16 %v3498, %v3497
    %v3534 = vpack.c.bf16 %v3500, %v3499
    %v3535 = vpack.c.bf16 %v3502, %v3501
    %v3536 = vpack.c.bf16 %v3504, %v3503
    %v3537 = vld [vmem:[%s5 + $0x100] sm:$0xf]
    %v3538 = vld [vmem:[%s5 + $0x104] sm:$0xf]
    %v3539 = vld [vmem:[%s5 + $0x108] sm:$0xf]
    %v3540 = vld [vmem:[%s5 + $0x10c] sm:$0xf]
    %v3541 = vld [vmem:[%s5 + $0x110] sm:$0xf]
    %v3542 = vld [vmem:[%s5 + $0x114] sm:$0xf]
    %v3543 = vld [vmem:[%s5 + $0x118] sm:$0xf]
    %v3544 = vld [vmem:[%s5 + $0x11c] sm:$0xf]
    %v3545 = vld [vmem:[%s5 + $0x120] sm:$0xf]
    %v3546 = vld [vmem:[%s5 + $0x124] sm:$0xf]
    %v3547 = vld [vmem:[%s5 + $0x128] sm:$0xf]
    %v3548 = vld [vmem:[%s5 + $0x12c] sm:$0xf]
    %v3549 = vld [vmem:[%s5 + $0x130] sm:$0xf]
    %v3550 = vld [vmem:[%s5 + $0x134] sm:$0xf]
    %v3551 = vld [vmem:[%s5 + $0x138] sm:$0xf]
    %v3552 = vld [vmem:[%s5 + $0x13c] sm:$0xf]
    %v3569 = vunpack.c.l.b16 %v3537
    %v3570 = vunpack.c.l.b16 %v3538
    %v3571 = vunpack.c.l.b16 %v3539
    %v3572 = vunpack.c.l.b16 %v3540
    %v3573 = vunpack.c.l.b16 %v3541
    %v3574 = vunpack.c.l.b16 %v3542
    %v3575 = vunpack.c.l.b16 %v3543
    %v3576 = vunpack.c.l.b16 %v3544
    %v3577 = vunpack.c.l.b16 %v3545
    %v3578 = vunpack.c.l.b16 %v3546
    %v3579 = vunpack.c.l.b16 %v3547
    %v3580 = vunpack.c.l.b16 %v3548
    %v3581 = vunpack.c.l.b16 %v3549
    %v3582 = vunpack.c.l.b16 %v3550
    %v3583 = vunpack.c.l.b16 %v3551
    %v3584 = vunpack.c.l.b16 %v3552
    %v3585 = vpack.c.b16 %v3570, %v3569
    %v3586 = vpack.c.b16 %v3572, %v3571
    %v3587 = vpack.c.b16 %v3574, %v3573
    %v3588 = vpack.c.b16 %v3576, %v3575
    %v3589 = vpack.c.b16 %v3578, %v3577
    %v3590 = vpack.c.b16 %v3580, %v3579
    %v3591 = vpack.c.b16 %v3582, %v3581
    %v3592 = vpack.c.b16 %v3584, %v3583
    %3601 = vmatprep.subr.bf16.mxu0 0
    %3602 = vmatpush1.bf16.msra.mxu0 %v3585
    %3603 = vmatprep.subr.bf16.mxu0 0
    %3604 = vmatpush1.bf16.msra.mxu0 %v3586
    %3605 = vmatprep.subr.bf16.mxu0 0
    %3606 = vmatpush1.bf16.msra.mxu0 %v3587
    %3607 = vmatprep.subr.bf16.mxu0 0
    %3608 = vmatpush1.bf16.msra.mxu0 %v3588
    %3609 = vmatprep.subr.bf16.mxu0 0
    %3610 = vmatpush1.bf16.msra.mxu0 %v3589
    %3611 = vmatprep.subr.bf16.mxu0 0
    %3612 = vmatpush1.bf16.msra.mxu0 %v3590
    %3613 = vmatprep.subr.bf16.mxu0 0
    %3614 = vmatpush1.bf16.msra.mxu0 %v3591
    %3615 = vmatprep.subr.bf16.mxu0 0
    %3616 = vmatpush1.bf16.msra.mxu0 %v3592
    %3617 = vmatprep.subr.bf16.mxu0 0
    %3618 = vmatpush1.bf16.msra.mxu0 0
    %3619 = vmatprep.subr.bf16.mxu0 0
    %3620 = vmatpush1.bf16.msra.mxu0 0
    %3621 = vmatprep.subr.bf16.mxu0 0
    %3622 = vmatpush1.bf16.msra.mxu0 0
    %3623 = vmatprep.subr.bf16.mxu0 0
    %3624 = vmatpush1.bf16.msra.mxu0 0
    %3625 = vmatprep.subr.bf16.mxu0 0
    %3626 = vmatpush1.bf16.msra.mxu0 0
    %3627 = vmatprep.subr.bf16.mxu0 0
    %3628 = vmatpush1.bf16.msra.mxu0 0
    %3629 = vmatprep.subr.bf16.mxu0 0
    %3630 = vmatpush1.bf16.msra.mxu0 0
    %3631 = vmatprep.subr.bf16.mxu0 0
    %3632 = vmatpush1.bf16.msra.mxu0 0
    %3633 = vmatprep.mubr.bf16.mxu0 0
    %3634 = vmatmul.mubr.bf16.gmra.mrb[0].mxu0 %v3505
    %v3635 = vpop.f32.mrb[0].mxu0
    %v3636 = vadd.f32 0.0, %v3635
    %v3637 = vpop.f32.mrb[0].mxu0
    %v3638 = vpop.f32.mrb[0].mxu0
    %v3639 = vadd.f32 0.0, %v3638
    %v3640 = vpop.f32.mrb[0].mxu0
    %3641 = vmatprep.mubr.bf16.mxu0 0
    %3642 = vmatmul.mubr.bf16.gmra.mrb[0].mxu0 %v3506
    %v3643 = vpop.f32.mrb[0].mxu0
    %v3644 = vadd.f32 0.0, %v3643
    %v3645 = vpop.f32.mrb[0].mxu0
    %v3646 = vpop.f32.mrb[0].mxu0
    %v3647 = vadd.f32 0.0, %v3646
    %v3648 = vpop.f32.mrb[0].mxu0
    %3649 = vmatprep.mubr.bf16.mxu0 0
    %3650 = vmatmul.mubr.bf16.gmra.mrb[0].mxu0 %v3507
    %v3651 = vpop.f32.mrb[0].mxu0
    %v3652 = vadd.f32 0.0, %v3651
    %v3653 = vpop.f32.mrb[0].mxu0
    %v3654 = vpop.f32.mrb[0].mxu0
    %v3655 = vadd.f32 0.0, %v3654
    %v3656 = vpop.f32.mrb[0].mxu0
    %3657 = vmatprep.mubr.bf16.mxu0 0
    %3658 = vmatmul.mubr.bf16.gmra.mrb[0].mxu0 %v3508
    %v3659 = vpop.f32.mrb[0].mxu0
    %v3660 = vadd.f32 0.0, %v3659
    %v3661 = vpop.f32.mrb[0].mxu0
    %v3662 = vpop.f32.mrb[0].mxu0
    %v3663 = vadd.f32 0.0, %v3662
    %v3664 = vpop.f32.mrb[0].mxu0
    %3665 = vmatprep.mubr.bf16.mxu0 0
    %3666 = vmatmul.mubr.bf16.gmra.mrb[0].mxu0 %v3509
    %v3667 = vpop.f32.mrb[0].mxu0
    %v3668 = vadd.f32 0.0, %v3667
    %v3669 = vpop.f32.mrb[0].mxu0
    %v3670 = vpop.f32.mrb[0].mxu0
    %v3671 = vadd.f32 0.0, %v3670
    %v3672 = vpop.f32.mrb[0].mxu0
    %3673 = vmatprep.mubr.bf16.mxu0 0
    %3674 = vmatmul.mubr.bf16.gmra.mrb[0].mxu0 %v3510
    %v3675 = vpop.f32.mrb[0].mxu0
    %v3676 = vadd.f32 0.0, %v3675
    %v3677 = vpop.f32.mrb[0].mxu0
    %v3678 = vpop.f32.mrb[0].mxu0
    %v3679 = vadd.f32 0.0, %v3678
    %v3680 = vpop.f32.mrb[0].mxu0
    %3681 = vmatprep.mubr.bf16.mxu0 0
    %3682 = vmatmul.mubr.bf16.gmra.mrb[0].mxu0 %v3511
    %v3683 = vpop.f32.mrb[0].mxu0
    %v3684 = vadd.f32 0.0, %v3683
    %v3685 = vpop.f32.mrb[0].mxu0
    %v3686 = vpop.f32.mrb[0].mxu0
    %v3687 = vadd.f32 0.0, %v3686
    %v3688 = vpop.f32.mrb[0].mxu0
    %3689 = vmatprep.mubr.bf16.mxu0 0
    %3690 = vmatmul.mubr.bf16.gmra.mrb[0].mxu0 %v3512
    %v3691 = vpop.f32.mrb[0].mxu0
    %v3692 = vadd.f32 0.0, %v3691
    %v3693 = vpop.f32.mrb[0].mxu0
    %v3694 = vpop.f32.mrb[0].mxu0
    %v3695 = vadd.f32 0.0, %v3694
    %v3696 = vpop.f32.mrb[0].mxu0
    %3697 = vmatprep.mubr.bf16.mxu0 0
    %3698 = vmatmul.mubr.bf16.gmra.mrb[0].mxu0 %v3513
    %v3699 = vpop.f32.mrb[0].mxu0
    %v3700 = vadd.f32 0.0, %v3699
    %v3701 = vpop.f32.mrb[0].mxu0
    %v3702 = vpop.f32.mrb[0].mxu0
    %v3703 = vadd.f32 0.0, %v3702
    %v3704 = vpop.f32.mrb[0].mxu0
    %3705 = vmatprep.mubr.bf16.mxu0 0
    %3706 = vmatmul.mubr.bf16.gmra.mrb[0].mxu0 %v3514
    %v3707 = vpop.f32.mrb[0].mxu0
    %v3708 = vadd.f32 0.0, %v3707
    %v3709 = vpop.f32.mrb[0].mxu0
    %v3710 = vpop.f32.mrb[0].mxu0
    %v3711 = vadd.f32 0.0, %v3710
    %v3712 = vpop.f32.mrb[0].mxu0
    %3713 = vmatprep.mubr.bf16.mxu0 0
    %3714 = vmatmul.mubr.bf16.gmra.mrb[0].mxu0 %v3515
    %v3715 = vpop.f32.mrb[0].mxu0
    %v3716 = vadd.f32 0.0, %v3715
    %v3717 = vpop.f32.mrb[0].mxu0
    %v3718 = vpop.f32.mrb[0].mxu0
    %v3719 = vadd.f32 0.0, %v3718
    %v3720 = vpop.f32.mrb[0].mxu0
    %3721 = vmatprep.mubr.bf16.mxu0 0
    %3722 = vmatmul.mubr.bf16.gmra.mrb[0].mxu0 %v3516
    %v3723 = vpop.f32.mrb[0].mxu0
    %v3724 = vadd.f32 0.0, %v3723
    %v3725 = vpop.f32.mrb[0].mxu0
    %v3726 = vpop.f32.mrb[0].mxu0
    %v3727 = vadd.f32 0.0, %v3726
    %v3728 = vpop.f32.mrb[0].mxu0
    %3729 = vmatprep.mubr.bf16.mxu0 0
    %3730 = vmatmul.mubr.bf16.gmra.mrb[0].mxu0 %v3517
    %v3731 = vpop.f32.mrb[0].mxu0
    %v3732 = vadd.f32 0.0, %v3731
    %v3733 = vpop.f32.mrb[0].mxu0
    %v3734 = vpop.f32.mrb[0].mxu0
    %v3735 = vadd.f32 0.0, %v3734
    %v3736 = vpop.f32.mrb[0].mxu0
    %3737 = vmatprep.mubr.bf16.mxu0 0
    %3738 = vmatmul.mubr.bf16.gmra.mrb[0].mxu0 %v3518
    %v3739 = vpop.f32.mrb[0].mxu0
    %v3740 = vadd.f32 0.0, %v3739
    %v3741 = vpop.f32.mrb[0].mxu0
    %v3742 = vpop.f32.mrb[0].mxu0
    %v3743 = vadd.f32 0.0, %v3742
    %v3744 = vpop.f32.mrb[0].mxu0
    %3745 = vmatprep.mubr.bf16.mxu0 0
    %3746 = vmatmul.mubr.bf16.gmra.mrb[0].mxu0 %v3519
    %v3747 = vpop.f32.mrb[0].mxu0
    %v3748 = vadd.f32 0.0, %v3747
    %v3749 = vpop.f32.mrb[0].mxu0
    %v3750 = vpop.f32.mrb[0].mxu0
    %v3751 = vadd.f32 0.0, %v3750
    %v3752 = vpop.f32.mrb[0].mxu0
    %3753 = vmatprep.mubr.bf16.mxu0 0
    %3754 = vmatmul.mubr.bf16.gmra.mrb[0].mxu0 %v3520
    %v3755 = vpop.f32.mrb[0].mxu0
    %v3756 = vadd.f32 0.0, %v3755
    %v3757 = vpop.f32.mrb[0].mxu0
    %v3758 = vpop.f32.mrb[0].mxu0
    %v3759 = vadd.f32 0.0, %v3758
    %v3760 = vpop.f32.mrb[0].mxu0
    %3761 = vmatprep.mubr.bf16.mxu0 0
    %3762 = vmatmul.mubr.bf16.gmra.mrb[0].mxu0 %v3521
    %v3763 = vpop.f32.mrb[0].mxu0
    %v3764 = vadd.f32 0.0, %v3763
    %v3765 = vpop.f32.mrb[0].mxu0
    %v3766 = vpop.f32.mrb[0].mxu0
    %v3767 = vadd.f32 0.0, %v3766
    %v3768 = vpop.f32.mrb[0].mxu0
    %3769 = vmatprep.mubr.bf16.mxu0 0
    %3770 = vmatmul.mubr.bf16.gmra.mrb[0].mxu0 %v3522
    %v3771 = vpop.f32.mrb[0].mxu0
    %v3772 = vadd.f32 0.0, %v3771
    %v3773 = vpop.f32.mrb[0].mxu0
    %v3774 = vpop.f32.mrb[0].mxu0
    %v3775 = vadd.f32 0.0, %v3774
    %v3776 = vpop.f32.mrb[0].mxu0
    %3777 = vmatprep.mubr.bf16.mxu0 0
    %3778 = vmatmul.mubr.bf16.gmra.mrb[0].mxu0 %v3523
    %v3779 = vpop.f32.mrb[0].mxu0
    %v3780 = vadd.f32 0.0, %v3779
    %v3781 = vpop.f32.mrb[0].mxu0
    %v3782 = vpop.f32.mrb[0].mxu0
    %v3783 = vadd.f32 0.0, %v3782
    %v3784 = vpop.f32.mrb[0].mxu0
    %3785 = vmatprep.mubr.bf16.mxu0 0
    %3786 = vmatmul.mubr.bf16.gmra.mrb[0].mxu0 %v3524
    %v3787 = vpop.f32.mrb[0].mxu0
    %v3788 = vadd.f32 0.0, %v3787
    %v3789 = vpop.f32.mrb[0].mxu0
    %v3790 = vpop.f32.mrb[0].mxu0
    %v3791 = vadd.f32 0.0, %v3790
    %v3792 = vpop.f32.mrb[0].mxu0
    %3793 = vmatprep.mubr.bf16.mxu0 0
    %3794 = vmatmul.mubr.bf16.gmra.mrb[0].mxu0 %v3525
    %v3795 = vpop.f32.mrb[0].mxu0
    %v3796 = vadd.f32 0.0, %v3795
    %v3797 = vpop.f32.mrb[0].mxu0
    %v3798 = vpop.f32.mrb[0].mxu0
    %v3799 = vadd.f32 0.0, %v3798
    %v3800 = vpop.f32.mrb[0].mxu0
    %3801 = vmatprep.mubr.bf16.mxu0 0
    %3802 = vmatmul.mubr.bf16.gmra.mrb[0].mxu0 %v3526
    %v3803 = vpop.f32.mrb[0].mxu0
    %v3804 = vadd.f32 0.0, %v3803
    %v3805 = vpop.f32.mrb[0].mxu0
    %v3806 = vpop.f32.mrb[0].mxu0
    %v3807 = vadd.f32 0.0, %v3806
    %v3808 = vpop.f32.mrb[0].mxu0
    %3809 = vmatprep.mubr.bf16.mxu0 0
    %3810 = vmatmul.mubr.bf16.gmra.mrb[0].mxu0 %v3527
    %v3811 = vpop.f32.mrb[0].mxu0
    %v3812 = vadd.f32 0.0, %v3811
    %v3813 = vpop.f32.mrb[0].mxu0
    %v3814 = vpop.f32.mrb[0].mxu0
    %v3815 = vadd.f32 0.0, %v3814
    %v3816 = vpop.f32.mrb[0].mxu0
    %3817 = vmatprep.mubr.bf16.mxu0 0
    %3818 = vmatmul.mubr.bf16.gmra.mrb[0].mxu0 %v3528
    %v3819 = vpop.f32.mrb[0].mxu0
    %v3820 = vadd.f32 0.0, %v3819
    %v3821 = vpop.f32.mrb[0].mxu0
    %v3822 = vpop.f32.mrb[0].mxu0
    %v3823 = vadd.f32 0.0, %v3822
    %v3824 = vpop.f32.mrb[0].mxu0
    %3825 = vmatprep.mubr.bf16.mxu0 0
    %3826 = vmatmul.mubr.bf16.gmra.mrb[0].mxu0 %v3529
    %v3827 = vpop.f32.mrb[0].mxu0
    %v3828 = vadd.f32 0.0, %v3827
    %v3829 = vpop.f32.mrb[0].mxu0
    %v3830 = vpop.f32.mrb[0].mxu0
    %v3831 = vadd.f32 0.0, %v3830
    %v3832 = vpop.f32.mrb[0].mxu0
    %3833 = vmatprep.mubr.bf16.mxu0 0
    %3834 = vmatmul.mubr.bf16.gmra.mrb[0].mxu0 %v3530
    %v3835 = vpop.f32.mrb[0].mxu0
    %v3836 = vadd.f32 0.0, %v3835
    %v3837 = vpop.f32.mrb[0].mxu0
    %v3838 = vpop.f32.mrb[0].mxu0
    %v3839 = vadd.f32 0.0, %v3838
    %v3840 = vpop.f32.mrb[0].mxu0
    %3841 = vmatprep.mubr.bf16.mxu0 0
    %3842 = vmatmul.mubr.bf16.gmra.mrb[0].mxu0 %v3531
    %v3843 = vpop.f32.mrb[0].mxu0
    %v3844 = vadd.f32 0.0, %v3843
    %v3845 = vpop.f32.mrb[0].mxu0
    %v3846 = vpop.f32.mrb[0].mxu0
    %v3847 = vadd.f32 0.0, %v3846
    %v3848 = vpop.f32.mrb[0].mxu0
    %3849 = vmatprep.mubr.bf16.mxu0 0
    %3850 = vmatmul.mubr.bf16.gmra.mrb[0].mxu0 %v3532
    %v3851 = vpop.f32.mrb[0].mxu0
    %v3852 = vadd.f32 0.0, %v3851
    %v3853 = vpop.f32.mrb[0].mxu0
    %v3854 = vpop.f32.mrb[0].mxu0
    %v3855 = vadd.f32 0.0, %v3854
    %v3856 = vpop.f32.mrb[0].mxu0
    %3857 = vmatprep.mubr.bf16.mxu0 0
    %3858 = vmatmul.mubr.bf16.gmra.mrb[0].mxu0 %v3533
    %v3859 = vpop.f32.mrb[0].mxu0
    %v3860 = vadd.f32 0.0, %v3859
    %v3861 = vpop.f32.mrb[0].mxu0
    %v3862 = vpop.f32.mrb[0].mxu0
    %v3863 = vadd.f32 0.0, %v3862
    %v3864 = vpop.f32.mrb[0].mxu0
    %3865 = vmatprep.mubr.bf16.mxu0 0
    %3866 = vmatmul.mubr.bf16.gmra.mrb[0].mxu0 %v3534
    %v3867 = vpop.f32.mrb[0].mxu0
    %v3868 = vadd.f32 0.0, %v3867
    %v3869 = vpop.f32.mrb[0].mxu0
    %v3870 = vpop.f32.mrb[0].mxu0
    %v3871 = vadd.f32 0.0, %v3870
    %v3872 = vpop.f32.mrb[0].mxu0
    %3873 = vmatprep.mubr.bf16.mxu0 0
    %3874 = vmatmul.mubr.bf16.gmra.mrb[0].mxu0 %v3535
    %v3875 = vpop.f32.mrb[0].mxu0
    %v3876 = vadd.f32 0.0, %v3875
    %v3877 = vpop.f32.mrb[0].mxu0
    %v3878 = vpop.f32.mrb[0].mxu0
    %v3879 = vadd.f32 0.0, %v3878
    %v3880 = vpop.f32.mrb[0].mxu0
    %3881 = vmatprep.mubr.bf16.mxu0 0
    %3882 = vmatmul.mubr.bf16.gmra.mrb[0].mxu0 %v3536
    %v3883 = vpop.f32.mrb[0].mxu0
    %v3884 = vadd.f32 0.0, %v3883
    %v3885 = vpop.f32.mrb[0].mxu0
    %v3886 = vpop.f32.mrb[0].mxu0
    %v3887 = vadd.f32 0.0, %v3886
    %v3888 = vpop.f32.mrb[0].mxu0
    %3889 = vdwg.mxu0
    %v3890 = vadd.f32 %v3377, %v3636
    %v3891 = vadd.f32 %v3378, %v3639
    %v3892 = vadd.f32 %v3379, %v3644
    %v3893 = vadd.f32 %v3380, %v3647
    %v3894 = vadd.f32 %v3381, %v3652
    %v3895 = vadd.f32 %v3382, %v3655
    %v3896 = vadd.f32 %v3383, %v3660
    %v3897 = vadd.f32 %v3384, %v3663
    %v3898 = vadd.f32 %v3385, %v3668
    %v3899 = vadd.f32 %v3386, %v3671
    %v3900 = vadd.f32 %v3387, %v3676
    %v3901 = vadd.f32 %v3388, %v3679
    %v3902 = vadd.f32 %v3389, %v3684
    %v3903 = vadd.f32 %v3390, %v3687
    %v3904 = vadd.f32 %v3391, %v3692
    %v3905 = vadd.f32 %v3392, %v3695
    %v3906 = vadd.f32 %v3393, %v3700
    %v3907 = vadd.f32 %v3394, %v3703
    %v3908 = vadd.f32 %v3395, %v3708
    %v3909 = vadd.f32 %v3396, %v3711
    %v3910 = vadd.f32 %v3397, %v3716
    %v3911 = vadd.f32 %v3398, %v3719
    %v3912 = vadd.f32 %v3399, %v3724
    %v3913 = vadd.f32 %v3400, %v3727
    %v3914 = vadd.f32 %v3401, %v3732
    %v3915 = vadd.f32 %v3402, %v3735
    %v3916 = vadd.f32 %v3403, %v3740
    %v3917 = vadd.f32 %v3404, %v3743
    %v3918 = vadd.f32 %v3405, %v3748
    %v3919 = vadd.f32 %v3406, %v3751
    %v3920 = vadd.f32 %v3407, %v3756
    %v3921 = vadd.f32 %v3408, %v3759
    %v3922 = vadd.f32 %v3409, %v3764
    %v3923 = vadd.f32 %v3410, %v3767
    %v3924 = vadd.f32 %v3411, %v3772
    %v3925 = vadd.f32 %v3412, %v3775
    %v3926 = vadd.f32 %v3413, %v3780
    %v3927 = vadd.f32 %v3414, %v3783
    %v3928 = vadd.f32 %v3415, %v3788
    %v3929 = vadd.f32 %v3416, %v3791
    %v3930 = vadd.f32 %v3417, %v3796
    %v3931 = vadd.f32 %v3418, %v3799
    %v3932 = vadd.f32 %v3419, %v3804
    %v3933 = vadd.f32 %v3420, %v3807
    %v3934 = vadd.f32 %v3421, %v3812
    %v3935 = vadd.f32 %v3422, %v3815
    %v3936 = vadd.f32 %v3423, %v3820
    %v3937 = vadd.f32 %v3424, %v3823
    %v3938 = vadd.f32 %v3425, %v3828
    %v3939 = vadd.f32 %v3426, %v3831
    %v3940 = vadd.f32 %v3427, %v3836
    %v3941 = vadd.f32 %v3428, %v3839
    %v3942 = vadd.f32 %v3429, %v3844
    %v3943 = vadd.f32 %v3430, %v3847
    %v3944 = vadd.f32 %v3431, %v3852
    %v3945 = vadd.f32 %v3432, %v3855
    %v3946 = vadd.f32 %v3433, %v3860
    %v3947 = vadd.f32 %v3434, %v3863
    %v3948 = vadd.f32 %v3435, %v3868
    %v3949 = vadd.f32 %v3436, %v3871
    %v3950 = vadd.f32 %v3437, %v3876
    %v3951 = vadd.f32 %v3438, %v3879
    %v3952 = vadd.f32 %v3439, %v3884
    %v3953 = vadd.f32 %v3440, %v3887
    %v3954 = vld [vmem:[%s1452 + $0x2] sm:$0xff]
    %v3955 = vld [vmem:[%s1452 + $0xa] sm:$0xff]
    %v3956 = vld [vmem:[%s1452 + $0x1a] sm:$0xff]
    %v3957 = vld [vmem:[%s1452 + $0x22] sm:$0xff]
    %v3958 = vld [vmem:[%s1452 + $0x32] sm:$0xff]
    %v3959 = vld [vmem:[%s1452 + $0x3a] sm:$0xff]
    %v3960 = vld [vmem:[%s1452 + $0x4a] sm:$0xff]
    %v3961 = vld [vmem:[%s1452 + $0x52] sm:$0xff]
    %v3962 = vld [vmem:[%s1452 + $0x62] sm:$0xff]
    %v3963 = vld [vmem:[%s1452 + $0x6a] sm:$0xff]
    %v3964 = vld [vmem:[%s1452 + $0x7a] sm:$0xff]
    %v3965 = vld [vmem:[%s1452 + $0x82] sm:$0xff]
    %v3966 = vld [vmem:[%s1452 + $0x92] sm:$0xff]
    %v3967 = vld [vmem:[%s1452 + $0x9a] sm:$0xff]
    %v3968 = vld [vmem:[%s1452 + $0xaa] sm:$0xff]
    %v3969 = vld [vmem:[%s1452 + $0xb2] sm:$0xff]
    %v3970 = vld [vmem:[%s1452 + $0xc2] sm:$0xff]
    %v3971 = vld [vmem:[%s1452 + $0xca] sm:$0xff]
    %v3972 = vld [vmem:[%s1452 + $0xda] sm:$0xff]
    %v3973 = vld [vmem:[%s1452 + $0xe2] sm:$0xff]
    %v3974 = vld [vmem:[%s1452 + $0xf2] sm:$0xff]
    %v3975 = vld [vmem:[%s1452 + $0xfa] sm:$0xff]
    %v3976 = vld [vmem:[%s1452 + $0x10a] sm:$0xff]
    %v3977 = vld [vmem:[%s1452 + $0x112] sm:$0xff]
    %v3978 = vld [vmem:[%s1452 + $0x122] sm:$0xff]
    %v3979 = vld [vmem:[%s1452 + $0x12a] sm:$0xff]
    %v3980 = vld [vmem:[%s1452 + $0x13a] sm:$0xff]
    %v3981 = vld [vmem:[%s1452 + $0x142] sm:$0xff]
    %v3982 = vld [vmem:[%s1452 + $0x152] sm:$0xff]
    %v3983 = vld [vmem:[%s1452 + $0x15a] sm:$0xff]
    %v3984 = vld [vmem:[%s1452 + $0x16a] sm:$0xff]
    %v3985 = vld [vmem:[%s1452 + $0x172] sm:$0xff]
    %v3986 = vld [vmem:[%s1452 + $0x1b2] sm:$0xff]
    %v3987 = vld [vmem:[%s1452 + $0x1ba] sm:$0xff]
    %v3988 = vld [vmem:[%s1452 + $0x1ca] sm:$0xff]
    %v3989 = vld [vmem:[%s1452 + $0x1d2] sm:$0xff]
    %v3990 = vld [vmem:[%s1452 + $0x1e2] sm:$0xff]
    %v3991 = vld [vmem:[%s1452 + $0x1ea] sm:$0xff]
    %v3992 = vld [vmem:[%s1452 + $0x1fa] sm:$0xff]
    %v3993 = vld [vmem:[%s1452 + $0x202] sm:$0xff]
    %v3994 = vld [vmem:[%s1452 + $0x212] sm:$0xff]
    %v3995 = vld [vmem:[%s1452 + $0x21a] sm:$0xff]
    %v3996 = vld [vmem:[%s1452 + $0x22a] sm:$0xff]
    %v3997 = vld [vmem:[%s1452 + $0x232] sm:$0xff]
    %v3998 = vld [vmem:[%s1452 + $0x242] sm:$0xff]
    %v3999 = vld [vmem:[%s1452 + $0x24a] sm:$0xff]
    %v4000 = vld [vmem:[%s1452 + $0x25a] sm:$0xff]
    %v4001 = vld [vmem:[%s1452 + $0x262] sm:$0xff]
    %v4002 = vld [vmem:[%s1452 + $0x272] sm:$0xff]
    %v4003 = vld [vmem:[%s1452 + $0x27a] sm:$0xff]
    %v4004 = vld [vmem:[%s1452 + $0x28a] sm:$0xff]
    %v4005 = vld [vmem:[%s1452 + $0x292] sm:$0xff]
    %v4006 = vld [vmem:[%s1452 + $0x2a2] sm:$0xff]
    %v4007 = vld [vmem:[%s1452 + $0x2aa] sm:$0xff]
    %v4008 = vld [vmem:[%s1452 + $0x2ba] sm:$0xff]
    %v4009 = vld [vmem:[%s1452 + $0x2c2] sm:$0xff]
    %v4010 = vld [vmem:[%s1452 + $0x2d2] sm:$0xff]
    %v4011 = vld [vmem:[%s1452 + $0x2da] sm:$0xff]
    %v4012 = vld [vmem:[%s1452 + $0x2ea] sm:$0xff]
    %v4013 = vld [vmem:[%s1452 + $0x2f2] sm:$0xff]
    %v4014 = vld [vmem:[%s1452 + $0x302] sm:$0xff]
    %v4015 = vld [vmem:[%s1452 + $0x30a] sm:$0xff]
    %v4016 = vld [vmem:[%s1452 + $0x31a] sm:$0xff]
    %v4017 = vld [vmem:[%s1452 + $0x322] sm:$0xff]
    %v4018 = vpack.c.bf16 %v3955, %v3954
    %v4019 = vpack.c.bf16 %v3957, %v3956
    %v4020 = vpack.c.bf16 %v3959, %v3958
    %v4021 = vpack.c.bf16 %v3961, %v3960
    %v4022 = vpack.c.bf16 %v3963, %v3962
    %v4023 = vpack.c.bf16 %v3965, %v3964
    %v4024 = vpack.c.bf16 %v3967, %v3966
    %v4025 = vpack.c.bf16 %v3969, %v3968
    %v4026 = vpack.c.bf16 %v3971, %v3970
    %v4027 = vpack.c.bf16 %v3973, %v3972
    %v4028 = vpack.c.bf16 %v3975, %v3974
    %v4029 = vpack.c.bf16 %v3977, %v3976
    %v4030 = vpack.c.bf16 %v3979, %v3978
    %v4031 = vpack.c.bf16 %v3981, %v3980
    %v4032 = vpack.c.bf16 %v3983, %v3982
    %v4033 = vpack.c.bf16 %v3985, %v3984
    %v4034 = vpack.c.bf16 %v3987, %v3986
    %v4035 = vpack.c.bf16 %v3989, %v3988
    %v4036 = vpack.c.bf16 %v3991, %v3990
    %v4037 = vpack.c.bf16 %v3993, %v3992
    %v4038 = vpack.c.bf16 %v3995, %v3994
    %v4039 = vpack.c.bf16 %v3997, %v3996
    %v4040 = vpack.c.bf16 %v3999, %v3998
    %v4041 = vpack.c.bf16 %v4001, %v4000
    %v4042 = vpack.c.bf16 %v4003, %v4002
    %v4043 = vpack.c.bf16 %v4005, %v4004
    %v4044 = vpack.c.bf16 %v4007, %v4006
    %v4045 = vpack.c.bf16 %v4009, %v4008
    %v4046 = vpack.c.bf16 %v4011, %v4010
    %v4047 = vpack.c.bf16 %v4013, %v4012
    %v4048 = vpack.c.bf16 %v4015, %v4014
    %v4049 = vpack.c.bf16 %v4017, %v4016
    %v4050 = vld [vmem:[%s5 + $0x140] sm:$0xf]
    %v4051 = vld [vmem:[%s5 + $0x144] sm:$0xf]
    %v4052 = vld [vmem:[%s5 + $0x148] sm:$0xf]
    %v4053 = vld [vmem:[%s5 + $0x14c] sm:$0xf]
    %v4054 = vld [vmem:[%s5 + $0x150] sm:$0xf]
    %v4055 = vld [vmem:[%s5 + $0x154] sm:$0xf]
    %v4056 = vld [vmem:[%s5 + $0x158] sm:$0xf]
    %v4057 = vld [vmem:[%s5 + $0x15c] sm:$0xf]
    %v4058 = vld [vmem:[%s5 + $0x160] sm:$0xf]
    %v4059 = vld [vmem:[%s5 + $0x164] sm:$0xf]
    %v4060 = vld [vmem:[%s5 + $0x168] sm:$0xf]
    %v4061 = vld [vmem:[%s5 + $0x16c] sm:$0xf]
    %v4062 = vld [vmem:[%s5 + $0x170] sm:$0xf]
    %v4063 = vld [vmem:[%s5 + $0x174] sm:$0xf]
    %v4064 = vld [vmem:[%s5 + $0x178] sm:$0xf]
    %v4065 = vld [vmem:[%s5 + $0x17c] sm:$0xf]
    %v4082 = vunpack.c.l.b16 %v4050
    %v4083 = vunpack.c.l.b16 %v4051
    %v4084 = vunpack.c.l.b16 %v4052
    %v4085 = vunpack.c.l.b16 %v4053
    %v4086 = vunpack.c.l.b16 %v4054
    %v4087 = vunpack.c.l.b16 %v4055
    %v4088 = vunpack.c.l.b16 %v4056
    %v4089 = vunpack.c.l.b16 %v4057
    %v4090 = vunpack.c.l.b16 %v4058
    %v4091 = vunpack.c.l.b16 %v4059
    %v4092 = vunpack.c.l.b16 %v4060
    %v4093 = vunpack.c.l.b16 %v4061
    %v4094 = vunpack.c.l.b16 %v4062
    %v4095 = vunpack.c.l.b16 %v4063
    %v4096 = vunpack.c.l.b16 %v4064
    %v4097 = vunpack.c.l.b16 %v4065
    %v4098 = vpack.c.b16 %v4083, %v4082
    %v4099 = vpack.c.b16 %v4085, %v4084
    %v4100 = vpack.c.b16 %v4087, %v4086
    %v4101 = vpack.c.b16 %v4089, %v4088
    %v4102 = vpack.c.b16 %v4091, %v4090
    %v4103 = vpack.c.b16 %v4093, %v4092
    %v4104 = vpack.c.b16 %v4095, %v4094
    %v4105 = vpack.c.b16 %v4097, %v4096
    %4114 = vmatprep.subr.bf16.mxu0 0
    %4115 = vmatpush1.bf16.msra.mxu0 %v4098
    %4116 = vmatprep.subr.bf16.mxu0 0
    %4117 = vmatpush1.bf16.msra.mxu0 %v4099
    %4118 = vmatprep.subr.bf16.mxu0 0
    %4119 = vmatpush1.bf16.msra.mxu0 %v4100
    %4120 = vmatprep.subr.bf16.mxu0 0
    %4121 = vmatpush1.bf16.msra.mxu0 %v4101
    %4122 = vmatprep.subr.bf16.mxu0 0
    %4123 = vmatpush1.bf16.msra.mxu0 %v4102
    %4124 = vmatprep.subr.bf16.mxu0 0
    %4125 = vmatpush1.bf16.msra.mxu0 %v4103
    %4126 = vmatprep.subr.bf16.mxu0 0
    %4127 = vmatpush1.bf16.msra.mxu0 %v4104
    %4128 = vmatprep.subr.bf16.mxu0 0
    %4129 = vmatpush1.bf16.msra.mxu0 %v4105
    %4130 = vmatprep.subr.bf16.mxu0 0
    %4131 = vmatpush1.bf16.msra.mxu0 0
    %4132 = vmatprep.subr.bf16.mxu0 0
    %4133 = vmatpush1.bf16.msra.mxu0 0
    %4134 = vmatprep.subr.bf16.mxu0 0
    %4135 = vmatpush1.bf16.msra.mxu0 0
    %4136 = vmatprep.subr.bf16.mxu0 0
    %4137 = vmatpush1.bf16.msra.mxu0 0
    %4138 = vmatprep.subr.bf16.mxu0 0
    %4139 = vmatpush1.bf16.msra.mxu0 0
    %4140 = vmatprep.subr.bf16.mxu0 0
    %4141 = vmatpush1.bf16.msra.mxu0 0
    %4142 = vmatprep.subr.bf16.mxu0 0
    %4143 = vmatpush1.bf16.msra.mxu0 0
    %4144 = vmatprep.subr.bf16.mxu0 0
    %4145 = vmatpush1.bf16.msra.mxu0 0
    %4146 = vmatprep.mubr.bf16.mxu0 0
    %4147 = vmatmul.mubr.bf16.gmra.mrb[0].mxu0 %v4018
    %v4148 = vpop.f32.mrb[0].mxu0
    %v4149 = vadd.f32 0.0, %v4148
    %v4150 = vpop.f32.mrb[0].mxu0
    %v4151 = vpop.f32.mrb[0].mxu0
    %v4152 = vadd.f32 0.0, %v4151
    %v4153 = vpop.f32.mrb[0].mxu0
    %4154 = vmatprep.mubr.bf16.mxu0 0
    %4155 = vmatmul.mubr.bf16.gmra.mrb[0].mxu0 %v4019
    %v4156 = vpop.f32.mrb[0].mxu0
    %v4157 = vadd.f32 0.0, %v4156
    %v4158 = vpop.f32.mrb[0].mxu0
    %v4159 = vpop.f32.mrb[0].mxu0
    %v4160 = vadd.f32 0.0, %v4159
    %v4161 = vpop.f32.mrb[0].mxu0
    %4162 = vmatprep.mubr.bf16.mxu0 0
    %4163 = vmatmul.mubr.bf16.gmra.mrb[0].mxu0 %v4020
    %v4164 = vpop.f32.mrb[0].mxu0
    %v4165 = vadd.f32 0.0, %v4164
    %v4166 = vpop.f32.mrb[0].mxu0
    %v4167 = vpop.f32.mrb[0].mxu0
    %v4168 = vadd.f32 0.0, %v4167
    %v4169 = vpop.f32.mrb[0].mxu0
    %4170 = vmatprep.mubr.bf16.mxu0 0
    %4171 = vmatmul.mubr.bf16.gmra.mrb[0].mxu0 %v4021
    %v4172 = vpop.f32.mrb[0].mxu0
    %v4173 = vadd.f32 0.0, %v4172
    %v4174 = vpop.f32.mrb[0].mxu0
    %v4175 = vpop.f32.mrb[0].mxu0
    %v4176 = vadd.f32 0.0, %v4175
    %v4177 = vpop.f32.mrb[0].mxu0
    %4178 = vmatprep.mubr.bf16.mxu0 0
    %4179 = vmatmul.mubr.bf16.gmra.mrb[0].mxu0 %v4022
    %v4180 = vpop.f32.mrb[0].mxu0
    %v4181 = vadd.f32 0.0, %v4180
    %v4182 = vpop.f32.mrb[0].mxu0
    %v4183 = vpop.f32.mrb[0].mxu0
    %v4184 = vadd.f32 0.0, %v4183
    %v4185 = vpop.f32.mrb[0].mxu0
    %4186 = vmatprep.mubr.bf16.mxu0 0
    %4187 = vmatmul.mubr.bf16.gmra.mrb[0].mxu0 %v4023
    %v4188 = vpop.f32.mrb[0].mxu0
    %v4189 = vadd.f32 0.0, %v4188
    %v4190 = vpop.f32.mrb[0].mxu0
    %v4191 = vpop.f32.mrb[0].mxu0
    %v4192 = vadd.f32 0.0, %v4191
    %v4193 = vpop.f32.mrb[0].mxu0
    %4194 = vmatprep.mubr.bf16.mxu0 0
    %4195 = vmatmul.mubr.bf16.gmra.mrb[0].mxu0 %v4024
    %v4196 = vpop.f32.mrb[0].mxu0
    %v4197 = vadd.f32 0.0, %v4196
    %v4198 = vpop.f32.mrb[0].mxu0
    %v4199 = vpop.f32.mrb[0].mxu0
    %v4200 = vadd.f32 0.0, %v4199
    %v4201 = vpop.f32.mrb[0].mxu0
    %4202 = vmatprep.mubr.bf16.mxu0 0
    %4203 = vmatmul.mubr.bf16.gmra.mrb[0].mxu0 %v4025
    %v4204 = vpop.f32.mrb[0].mxu0
    %v4205 = vadd.f32 0.0, %v4204
    %v4206 = vpop.f32.mrb[0].mxu0
    %v4207 = vpop.f32.mrb[0].mxu0
    %v4208 = vadd.f32 0.0, %v4207
    %v4209 = vpop.f32.mrb[0].mxu0
    %4210 = vmatprep.mubr.bf16.mxu0 0
    %4211 = vmatmul.mubr.bf16.gmra.mrb[0].mxu0 %v4026
    %v4212 = vpop.f32.mrb[0].mxu0
    %v4213 = vadd.f32 0.0, %v4212
    %v4214 = vpop.f32.mrb[0].mxu0
    %v4215 = vpop.f32.mrb[0].mxu0
    %v4216 = vadd.f32 0.0, %v4215
    %v4217 = vpop.f32.mrb[0].mxu0
    %4218 = vmatprep.mubr.bf16.mxu0 0
    %4219 = vmatmul.mubr.bf16.gmra.mrb[0].mxu0 %v4027
    %v4220 = vpop.f32.mrb[0].mxu0
    %v4221 = vadd.f32 0.0, %v4220
    %v4222 = vpop.f32.mrb[0].mxu0
    %v4223 = vpop.f32.mrb[0].mxu0
    %v4224 = vadd.f32 0.0, %v4223
    %v4225 = vpop.f32.mrb[0].mxu0
    %4226 = vmatprep.mubr.bf16.mxu0 0
    %4227 = vmatmul.mubr.bf16.gmra.mrb[0].mxu0 %v4028
    %v4228 = vpop.f32.mrb[0].mxu0
    %v4229 = vadd.f32 0.0, %v4228
    %v4230 = vpop.f32.mrb[0].mxu0
    %v4231 = vpop.f32.mrb[0].mxu0
    %v4232 = vadd.f32 0.0, %v4231
    %v4233 = vpop.f32.mrb[0].mxu0
    %4234 = vmatprep.mubr.bf16.mxu0 0
    %4235 = vmatmul.mubr.bf16.gmra.mrb[0].mxu0 %v4029
    %v4236 = vpop.f32.mrb[0].mxu0
    %v4237 = vadd.f32 0.0, %v4236
    %v4238 = vpop.f32.mrb[0].mxu0
    %v4239 = vpop.f32.mrb[0].mxu0
    %v4240 = vadd.f32 0.0, %v4239
    %v4241 = vpop.f32.mrb[0].mxu0
    %4242 = vmatprep.mubr.bf16.mxu0 0
    %4243 = vmatmul.mubr.bf16.gmra.mrb[0].mxu0 %v4030
    %v4244 = vpop.f32.mrb[0].mxu0
    %v4245 = vadd.f32 0.0, %v4244
    %v4246 = vpop.f32.mrb[0].mxu0
    %v4247 = vpop.f32.mrb[0].mxu0
    %v4248 = vadd.f32 0.0, %v4247
    %v4249 = vpop.f32.mrb[0].mxu0
    %4250 = vmatprep.mubr.bf16.mxu0 0
    %4251 = vmatmul.mubr.bf16.gmra.mrb[0].mxu0 %v4031
    %v4252 = vpop.f32.mrb[0].mxu0
    %v4253 = vadd.f32 0.0, %v4252
    %v4254 = vpop.f32.mrb[0].mxu0
    %v4255 = vpop.f32.mrb[0].mxu0
    %v4256 = vadd.f32 0.0, %v4255
    %v4257 = vpop.f32.mrb[0].mxu0
    %4258 = vmatprep.mubr.bf16.mxu0 0
    %4259 = vmatmul.mubr.bf16.gmra.mrb[0].mxu0 %v4032
    %v4260 = vpop.f32.mrb[0].mxu0
    %v4261 = vadd.f32 0.0, %v4260
    %v4262 = vpop.f32.mrb[0].mxu0
    %v4263 = vpop.f32.mrb[0].mxu0
    %v4264 = vadd.f32 0.0, %v4263
    %v4265 = vpop.f32.mrb[0].mxu0
    %4266 = vmatprep.mubr.bf16.mxu0 0
    %4267 = vmatmul.mubr.bf16.gmra.mrb[0].mxu0 %v4033
    %v4268 = vpop.f32.mrb[0].mxu0
    %v4269 = vadd.f32 0.0, %v4268
    %v4270 = vpop.f32.mrb[0].mxu0
    %v4271 = vpop.f32.mrb[0].mxu0
    %v4272 = vadd.f32 0.0, %v4271
    %v4273 = vpop.f32.mrb[0].mxu0
    %4274 = vmatprep.mubr.bf16.mxu0 0
    %4275 = vmatmul.mubr.bf16.gmra.mrb[0].mxu0 %v4034
    %v4276 = vpop.f32.mrb[0].mxu0
    %v4277 = vadd.f32 0.0, %v4276
    %v4278 = vpop.f32.mrb[0].mxu0
    %v4279 = vpop.f32.mrb[0].mxu0
    %v4280 = vadd.f32 0.0, %v4279
    %v4281 = vpop.f32.mrb[0].mxu0
    %4282 = vmatprep.mubr.bf16.mxu0 0
    %4283 = vmatmul.mubr.bf16.gmra.mrb[0].mxu0 %v4035
    %v4284 = vpop.f32.mrb[0].mxu0
    %v4285 = vadd.f32 0.0, %v4284
    %v4286 = vpop.f32.mrb[0].mxu0
    %v4287 = vpop.f32.mrb[0].mxu0
    %v4288 = vadd.f32 0.0, %v4287
    %v4289 = vpop.f32.mrb[0].mxu0
    %4290 = vmatprep.mubr.bf16.mxu0 0
    %4291 = vmatmul.mubr.bf16.gmra.mrb[0].mxu0 %v4036
    %v4292 = vpop.f32.mrb[0].mxu0
    %v4293 = vadd.f32 0.0, %v4292
    %v4294 = vpop.f32.mrb[0].mxu0
    %v4295 = vpop.f32.mrb[0].mxu0
    %v4296 = vadd.f32 0.0, %v4295
    %v4297 = vpop.f32.mrb[0].mxu0
    %4298 = vmatprep.mubr.bf16.mxu0 0
    %4299 = vmatmul.mubr.bf16.gmra.mrb[0].mxu0 %v4037
    %v4300 = vpop.f32.mrb[0].mxu0
    %v4301 = vadd.f32 0.0, %v4300
    %v4302 = vpop.f32.mrb[0].mxu0
    %v4303 = vpop.f32.mrb[0].mxu0
    %v4304 = vadd.f32 0.0, %v4303
    %v4305 = vpop.f32.mrb[0].mxu0
    %4306 = vmatprep.mubr.bf16.mxu0 0
    %4307 = vmatmul.mubr.bf16.gmra.mrb[0].mxu0 %v4038
    %v4308 = vpop.f32.mrb[0].mxu0
    %v4309 = vadd.f32 0.0, %v4308
    %v4310 = vpop.f32.mrb[0].mxu0
    %v4311 = vpop.f32.mrb[0].mxu0
    %v4312 = vadd.f32 0.0, %v4311
    %v4313 = vpop.f32.mrb[0].mxu0
    %4314 = vmatprep.mubr.bf16.mxu0 0
    %4315 = vmatmul.mubr.bf16.gmra.mrb[0].mxu0 %v4039
    %v4316 = vpop.f32.mrb[0].mxu0
    %v4317 = vadd.f32 0.0, %v4316
    %v4318 = vpop.f32.mrb[0].mxu0
    %v4319 = vpop.f32.mrb[0].mxu0
    %v4320 = vadd.f32 0.0, %v4319
    %v4321 = vpop.f32.mrb[0].mxu0
    %4322 = vmatprep.mubr.bf16.mxu0 0
    %4323 = vmatmul.mubr.bf16.gmra.mrb[0].mxu0 %v4040
    %v4324 = vpop.f32.mrb[0].mxu0
    %v4325 = vadd.f32 0.0, %v4324
    %v4326 = vpop.f32.mrb[0].mxu0
    %v4327 = vpop.f32.mrb[0].mxu0
    %v4328 = vadd.f32 0.0, %v4327
    %v4329 = vpop.f32.mrb[0].mxu0
    %4330 = vmatprep.mubr.bf16.mxu0 0
    %4331 = vmatmul.mubr.bf16.gmra.mrb[0].mxu0 %v4041
    %v4332 = vpop.f32.mrb[0].mxu0
    %v4333 = vadd.f32 0.0, %v4332
    %v4334 = vpop.f32.mrb[0].mxu0
    %v4335 = vpop.f32.mrb[0].mxu0
    %v4336 = vadd.f32 0.0, %v4335
    %v4337 = vpop.f32.mrb[0].mxu0
    %4338 = vmatprep.mubr.bf16.mxu0 0
    %4339 = vmatmul.mubr.bf16.gmra.mrb[0].mxu0 %v4042
    %v4340 = vpop.f32.mrb[0].mxu0
    %v4341 = vadd.f32 0.0, %v4340
    %v4342 = vpop.f32.mrb[0].mxu0
    %v4343 = vpop.f32.mrb[0].mxu0
    %v4344 = vadd.f32 0.0, %v4343
    %v4345 = vpop.f32.mrb[0].mxu0
    %4346 = vmatprep.mubr.bf16.mxu0 0
    %4347 = vmatmul.mubr.bf16.gmra.mrb[0].mxu0 %v4043
    %v4348 = vpop.f32.mrb[0].mxu0
    %v4349 = vadd.f32 0.0, %v4348
    %v4350 = vpop.f32.mrb[0].mxu0
    %v4351 = vpop.f32.mrb[0].mxu0
    %v4352 = vadd.f32 0.0, %v4351
    %v4353 = vpop.f32.mrb[0].mxu0
    %4354 = vmatprep.mubr.bf16.mxu0 0
    %4355 = vmatmul.mubr.bf16.gmra.mrb[0].mxu0 %v4044
    %v4356 = vpop.f32.mrb[0].mxu0
    %v4357 = vadd.f32 0.0, %v4356
    %v4358 = vpop.f32.mrb[0].mxu0
    %v4359 = vpop.f32.mrb[0].mxu0
    %v4360 = vadd.f32 0.0, %v4359
    %v4361 = vpop.f32.mrb[0].mxu0
    %4362 = vmatprep.mubr.bf16.mxu0 0
    %4363 = vmatmul.mubr.bf16.gmra.mrb[0].mxu0 %v4045
    %v4364 = vpop.f32.mrb[0].mxu0
    %v4365 = vadd.f32 0.0, %v4364
    %v4366 = vpop.f32.mrb[0].mxu0
    %v4367 = vpop.f32.mrb[0].mxu0
    %v4368 = vadd.f32 0.0, %v4367
    %v4369 = vpop.f32.mrb[0].mxu0
    %4370 = vmatprep.mubr.bf16.mxu0 0
    %4371 = vmatmul.mubr.bf16.gmra.mrb[0].mxu0 %v4046
    %v4372 = vpop.f32.mrb[0].mxu0
    %v4373 = vadd.f32 0.0, %v4372
    %v4374 = vpop.f32.mrb[0].mxu0
    %v4375 = vpop.f32.mrb[0].mxu0
    %v4376 = vadd.f32 0.0, %v4375
    %v4377 = vpop.f32.mrb[0].mxu0
    %4378 = vmatprep.mubr.bf16.mxu0 0
    %4379 = vmatmul.mubr.bf16.gmra.mrb[0].mxu0 %v4047
    %v4380 = vpop.f32.mrb[0].mxu0
    %v4381 = vadd.f32 0.0, %v4380
    %v4382 = vpop.f32.mrb[0].mxu0
    %v4383 = vpop.f32.mrb[0].mxu0
    %v4384 = vadd.f32 0.0, %v4383
    %v4385 = vpop.f32.mrb[0].mxu0
    %4386 = vmatprep.mubr.bf16.mxu0 0
    %4387 = vmatmul.mubr.bf16.gmra.mrb[0].mxu0 %v4048
    %v4388 = vpop.f32.mrb[0].mxu0
    %v4389 = vadd.f32 0.0, %v4388
    %v4390 = vpop.f32.mrb[0].mxu0
    %v4391 = vpop.f32.mrb[0].mxu0
    %v4392 = vadd.f32 0.0, %v4391
    %v4393 = vpop.f32.mrb[0].mxu0
    %4394 = vmatprep.mubr.bf16.mxu0 0
    %4395 = vmatmul.mubr.bf16.gmra.mrb[0].mxu0 %v4049
    %v4396 = vpop.f32.mrb[0].mxu0
    %v4397 = vadd.f32 0.0, %v4396
    %v4398 = vpop.f32.mrb[0].mxu0
    %v4399 = vpop.f32.mrb[0].mxu0
    %v4400 = vadd.f32 0.0, %v4399
    %v4401 = vpop.f32.mrb[0].mxu0
    %4402 = vdwg.mxu0
    %v4403 = vadd.f32 %v3890, %v4149
    %v4404 = vadd.f32 %v3891, %v4152
    %v4405 = vadd.f32 %v3892, %v4157
    %v4406 = vadd.f32 %v3893, %v4160
    %v4407 = vadd.f32 %v3894, %v4165
    %v4408 = vadd.f32 %v3895, %v4168
    %v4409 = vadd.f32 %v3896, %v4173
    %v4410 = vadd.f32 %v3897, %v4176
    %v4411 = vadd.f32 %v3898, %v4181
    %v4412 = vadd.f32 %v3899, %v4184
    %v4413 = vadd.f32 %v3900, %v4189
    %v4414 = vadd.f32 %v3901, %v4192
    %v4415 = vadd.f32 %v3902, %v4197
    %v4416 = vadd.f32 %v3903, %v4200
    %v4417 = vadd.f32 %v3904, %v4205
    %v4418 = vadd.f32 %v3905, %v4208
    %v4419 = vadd.f32 %v3906, %v4213
    %v4420 = vadd.f32 %v3907, %v4216
    %v4421 = vadd.f32 %v3908, %v4221
    %v4422 = vadd.f32 %v3909, %v4224
    %v4423 = vadd.f32 %v3910, %v4229
    %v4424 = vadd.f32 %v3911, %v4232
    %v4425 = vadd.f32 %v3912, %v4237
    %v4426 = vadd.f32 %v3913, %v4240
    %v4427 = vadd.f32 %v3914, %v4245
    %v4428 = vadd.f32 %v3915, %v4248
    %v4429 = vadd.f32 %v3916, %v4253
    %v4430 = vadd.f32 %v3917, %v4256
    %v4431 = vadd.f32 %v3918, %v4261
    %v4432 = vadd.f32 %v3919, %v4264
    %v4433 = vadd.f32 %v3920, %v4269
    %v4434 = vadd.f32 %v3921, %v4272
    %v4435 = vadd.f32 %v3922, %v4277
    %v4436 = vadd.f32 %v3923, %v4280
    %v4437 = vadd.f32 %v3924, %v4285
    %v4438 = vadd.f32 %v3925, %v4288
    %v4439 = vadd.f32 %v3926, %v4293
    %v4440 = vadd.f32 %v3927, %v4296
    %v4441 = vadd.f32 %v3928, %v4301
    %v4442 = vadd.f32 %v3929, %v4304
    %v4443 = vadd.f32 %v3930, %v4309
    %v4444 = vadd.f32 %v3931, %v4312
    %v4445 = vadd.f32 %v3932, %v4317
    %v4446 = vadd.f32 %v3933, %v4320
    %v4447 = vadd.f32 %v3934, %v4325
    %v4448 = vadd.f32 %v3935, %v4328
    %v4449 = vadd.f32 %v3936, %v4333
    %v4450 = vadd.f32 %v3937, %v4336
    %v4451 = vadd.f32 %v3938, %v4341
    %v4452 = vadd.f32 %v3939, %v4344
    %v4453 = vadd.f32 %v3940, %v4349
    %v4454 = vadd.f32 %v3941, %v4352
    %v4455 = vadd.f32 %v3942, %v4357
    %v4456 = vadd.f32 %v3943, %v4360
    %v4457 = vadd.f32 %v3944, %v4365
    %v4458 = vadd.f32 %v3945, %v4368
    %v4459 = vadd.f32 %v3946, %v4373
    %v4460 = vadd.f32 %v3947, %v4376
    %v4461 = vadd.f32 %v3948, %v4381
    %v4462 = vadd.f32 %v3949, %v4384
    %v4463 = vadd.f32 %v3950, %v4389
    %v4464 = vadd.f32 %v3951, %v4392
    %v4465 = vadd.f32 %v3952, %v4397
    %v4466 = vadd.f32 %v3953, %v4400
    %s4467 = scalar_lea.vmem [#allocation2], 48
    %v4468 = vld [vmem:[%s4467] sm:$0xff]
    %v4469 = vld [vmem:[%s4467 + $0x8] sm:$0xff]
    %v4470 = vld [vmem:[%s4467 + $0x18] sm:$0xff]
    %v4471 = vld [vmem:[%s4467 + $0x20] sm:$0xff]
    %v4472 = vld [vmem:[%s4467 + $0x30] sm:$0xff]
    %v4473 = vld [vmem:[%s4467 + $0x38] sm:$0xff]
    %v4474 = vld [vmem:[%s4467 + $0x48] sm:$0xff]
    %v4475 = vld [vmem:[%s4467 + $0x50] sm:$0xff]
    %v4476 = vld [vmem:[%s4467 + $0x60] sm:$0xff]
    %v4477 = vld [vmem:[%s4467 + $0x68] sm:$0xff]
    %v4478 = vld [vmem:[%s4467 + $0x78] sm:$0xff]
    %v4479 = vld [vmem:[%s4467 + $0x80] sm:$0xff]
    %v4480 = vld [vmem:[%s4467 + $0x90] sm:$0xff]
    %v4481 = vld [vmem:[%s4467 + $0x98] sm:$0xff]
    %v4482 = vld [vmem:[%s4467 + $0xa8] sm:$0xff]
    %v4483 = vld [vmem:[%s4467 + $0xb0] sm:$0xff]
    %v4484 = vld [vmem:[%s4467 + $0xc0] sm:$0xff]
    %v4485 = vld [vmem:[%s4467 + $0xc8] sm:$0xff]
    %v4486 = vld [vmem:[%s4467 + $0xd8] sm:$0xff]
    %v4487 = vld [vmem:[%s4467 + $0xe0] sm:$0xff]
    %v4488 = vld [vmem:[%s4467 + $0xf0] sm:$0xff]
    %v4489 = vld [vmem:[%s4467 + $0xf8] sm:$0xff]
    %v4490 = vld [vmem:[%s4467 + $0x108] sm:$0xff]
    %v4491 = vld [vmem:[%s4467 + $0x110] sm:$0xff]
    %v4492 = vld [vmem:[%s4467 + $0x120] sm:$0xff]
    %v4493 = vld [vmem:[%s4467 + $0x128] sm:$0xff]
    %v4494 = vld [vmem:[%s4467 + $0x138] sm:$0xff]
    %v4495 = vld [vmem:[%s4467 + $0x140] sm:$0xff]
    %v4496 = vld [vmem:[%s4467 + $0x150] sm:$0xff]
    %v4497 = vld [vmem:[%s4467 + $0x158] sm:$0xff]
    %v4498 = vld [vmem:[%s4467 + $0x168] sm:$0xff]
    %v4499 = vld [vmem:[%s4467 + $0x170] sm:$0xff]
    %v4500 = vld [vmem:[%s4467 + $0x1b0] sm:$0xff]
    %v4501 = vld [vmem:[%s4467 + $0x1b8] sm:$0xff]
    %v4502 = vld [vmem:[%s4467 + $0x1c8] sm:$0xff]
    %v4503 = vld [vmem:[%s4467 + $0x1d0] sm:$0xff]
    %v4504 = vld [vmem:[%s4467 + $0x1e0] sm:$0xff]
    %v4505 = vld [vmem:[%s4467 + $0x1e8] sm:$0xff]
    %v4506 = vld [vmem:[%s4467 + $0x1f8] sm:$0xff]
    %v4507 = vld [vmem:[%s4467 + $0x200] sm:$0xff]
    %v4508 = vld [vmem:[%s4467 + $0x210] sm:$0xff]
    %v4509 = vld [vmem:[%s4467 + $0x218] sm:$0xff]
    %v4510 = vld [vmem:[%s4467 + $0x228] sm:$0xff]
    %v4511 = vld [vmem:[%s4467 + $0x230] sm:$0xff]
    %v4512 = vld [vmem:[%s4467 + $0x240] sm:$0xff]
    %v4513 = vld [vmem:[%s4467 + $0x248] sm:$0xff]
    %v4514 = vld [vmem:[%s4467 + $0x258] sm:$0xff]
    %v4515 = vld [vmem:[%s4467 + $0x260] sm:$0xff]
    %v4516 = vld [vmem:[%s4467 + $0x270] sm:$0xff]
    %v4517 = vld [vmem:[%s4467 + $0x278] sm:$0xff]
    %v4518 = vld [vmem:[%s4467 + $0x288] sm:$0xff]
    %v4519 = vld [vmem:[%s4467 + $0x290] sm:$0xff]
    %v4520 = vld [vmem:[%s4467 + $0x2a0] sm:$0xff]
    %v4521 = vld [vmem:[%s4467 + $0x2a8] sm:$0xff]
    %v4522 = vld [vmem:[%s4467 + $0x2b8] sm:$0xff]
    %v4523 = vld [vmem:[%s4467 + $0x2c0] sm:$0xff]
    %v4524 = vld [vmem:[%s4467 + $0x2d0] sm:$0xff]
    %v4525 = vld [vmem:[%s4467 + $0x2d8] sm:$0xff]
    %v4526 = vld [vmem:[%s4467 + $0x2e8] sm:$0xff]
    %v4527 = vld [vmem:[%s4467 + $0x2f0] sm:$0xff]
    %v4528 = vld [vmem:[%s4467 + $0x300] sm:$0xff]
    %v4529 = vld [vmem:[%s4467 + $0x308] sm:$0xff]
    %v4530 = vld [vmem:[%s4467 + $0x318] sm:$0xff]
    %v4531 = vld [vmem:[%s4467 + $0x320] sm:$0xff]
    %v4532 = vpack.c.bf16 %v4469, %v4468
    %v4533 = vpack.c.bf16 %v4471, %v4470
    %v4534 = vpack.c.bf16 %v4473, %v4472
    %v4535 = vpack.c.bf16 %v4475, %v4474
    %v4536 = vpack.c.bf16 %v4477, %v4476
    %v4537 = vpack.c.bf16 %v4479, %v4478
    %v4538 = vpack.c.bf16 %v4481, %v4480
    %v4539 = vpack.c.bf16 %v4483, %v4482
    %v4540 = vpack.c.bf16 %v4485, %v4484
    %v4541 = vpack.c.bf16 %v4487, %v4486
    %v4542 = vpack.c.bf16 %v4489, %v4488
    %v4543 = vpack.c.bf16 %v4491, %v4490
    %v4544 = vpack.c.bf16 %v4493, %v4492
    %v4545 = vpack.c.bf16 %v4495, %v4494
    %v4546 = vpack.c.bf16 %v4497, %v4496
    %v4547 = vpack.c.bf16 %v4499, %v4498
    %v4548 = vpack.c.bf16 %v4501, %v4500
    %v4549 = vpack.c.bf16 %v4503, %v4502
    %v4550 = vpack.c.bf16 %v4505, %v4504
    %v4551 = vpack.c.bf16 %v4507, %v4506
    %v4552 = vpack.c.bf16 %v4509, %v4508
    %v4553 = vpack.c.bf16 %v4511, %v4510
    %v4554 = vpack.c.bf16 %v4513, %v4512
    %v4555 = vpack.c.bf16 %v4515, %v4514
    %v4556 = vpack.c.bf16 %v4517, %v4516
    %v4557 = vpack.c.bf16 %v4519, %v4518
    %v4558 = vpack.c.bf16 %v4521, %v4520
    %v4559 = vpack.c.bf16 %v4523, %v4522
    %v4560 = vpack.c.bf16 %v4525, %v4524
    %v4561 = vpack.c.bf16 %v4527, %v4526
    %v4562 = vpack.c.bf16 %v4529, %v4528
    %v4563 = vpack.c.bf16 %v4531, %v4530
    %v4564 = vld [vmem:[%s5 + $0x180] sm:$0xf]
    %v4565 = vld [vmem:[%s5 + $0x184] sm:$0xf]
    %v4566 = vld [vmem:[%s5 + $0x188] sm:$0xf]
    %v4567 = vld [vmem:[%s5 + $0x18c] sm:$0xf]
    %v4568 = vld [vmem:[%s5 + $0x190] sm:$0xf]
    %v4569 = vld [vmem:[%s5 + $0x194] sm:$0xf]
    %v4570 = vld [vmem:[%s5 + $0x198] sm:$0xf]
    %v4571 = vld [vmem:[%s5 + $0x19c] sm:$0xf]
    %v4572 = vld [vmem:[%s5 + $0x1a0] sm:$0xf]
    %v4573 = vld [vmem:[%s5 + $0x1a4] sm:$0xf]
    %v4574 = vld [vmem:[%s5 + $0x1a8] sm:$0xf]
    %v4575 = vld [vmem:[%s5 + $0x1ac] sm:$0xf]
    %v4576 = vld [vmem:[%s5 + $0x1b0] sm:$0xf]
    %v4577 = vld [vmem:[%s5 + $0x1b4] sm:$0xf]
    %v4578 = vld [vmem:[%s5 + $0x1b8] sm:$0xf]
    %v4579 = vld [vmem:[%s5 + $0x1bc] sm:$0xf]
    %v4596 = vunpack.c.l.b16 %v4564
    %v4597 = vunpack.c.l.b16 %v4565
    %v4598 = vunpack.c.l.b16 %v4566
    %v4599 = vunpack.c.l.b16 %v4567
    %v4600 = vunpack.c.l.b16 %v4568
    %v4601 = vunpack.c.l.b16 %v4569
    %v4602 = vunpack.c.l.b16 %v4570
    %v4603 = vunpack.c.l.b16 %v4571
    %v4604 = vunpack.c.l.b16 %v4572
    %v4605 = vunpack.c.l.b16 %v4573
    %v4606 = vunpack.c.l.b16 %v4574
    %v4607 = vunpack.c.l.b16 %v4575
    %v4608 = vunpack.c.l.b16 %v4576
    %v4609 = vunpack.c.l.b16 %v4577
    %v4610 = vunpack.c.l.b16 %v4578
    %v4611 = vunpack.c.l.b16 %v4579
    %v4612 = vpack.c.b16 %v4597, %v4596
    %v4613 = vpack.c.b16 %v4599, %v4598
    %v4614 = vpack.c.b16 %v4601, %v4600
    %v4615 = vpack.c.b16 %v4603, %v4602
    %v4616 = vpack.c.b16 %v4605, %v4604
    %v4617 = vpack.c.b16 %v4607, %v4606
    %v4618 = vpack.c.b16 %v4609, %v4608
    %v4619 = vpack.c.b16 %v4611, %v4610
    %4628 = vmatprep.subr.bf16.mxu0 0
    %4629 = vmatpush1.bf16.msra.mxu0 %v4612
    %4630 = vmatprep.subr.bf16.mxu0 0
    %4631 = vmatpush1.bf16.msra.mxu0 %v4613
    %4632 = vmatprep.subr.bf16.mxu0 0
    %4633 = vmatpush1.bf16.msra.mxu0 %v4614
    %4634 = vmatprep.subr.bf16.mxu0 0
    %4635 = vmatpush1.bf16.msra.mxu0 %v4615
    %4636 = vmatprep.subr.bf16.mxu0 0
    %4637 = vmatpush1.bf16.msra.mxu0 %v4616
    %4638 = vmatprep.subr.bf16.mxu0 0
    %4639 = vmatpush1.bf16.msra.mxu0 %v4617
    %4640 = vmatprep.subr.bf16.mxu0 0
    %4641 = vmatpush1.bf16.msra.mxu0 %v4618
    %4642 = vmatprep.subr.bf16.mxu0 0
    %4643 = vmatpush1.bf16.msra.mxu0 %v4619
    %4644 = vmatprep.subr.bf16.mxu0 0
    %4645 = vmatpush1.bf16.msra.mxu0 0
    %4646 = vmatprep.subr.bf16.mxu0 0
    %4647 = vmatpush1.bf16.msra.mxu0 0
    %4648 = vmatprep.subr.bf16.mxu0 0
    %4649 = vmatpush1.bf16.msra.mxu0 0
    %4650 = vmatprep.subr.bf16.mxu0 0
    %4651 = vmatpush1.bf16.msra.mxu0 0
    %4652 = vmatprep.subr.bf16.mxu0 0
    %4653 = vmatpush1.bf16.msra.mxu0 0
    %4654 = vmatprep.subr.bf16.mxu0 0
    %4655 = vmatpush1.bf16.msra.mxu0 0
    %4656 = vmatprep.subr.bf16.mxu0 0
    %4657 = vmatpush1.bf16.msra.mxu0 0
    %4658 = vmatprep.subr.bf16.mxu0 0
    %4659 = vmatpush1.bf16.msra.mxu0 0
    %4660 = vmatprep.mubr.bf16.mxu0 0
    %4661 = vmatmul.mubr.bf16.gmra.mrb[0].mxu0 %v4532
    %v4662 = vpop.f32.mrb[0].mxu0
    %v4663 = vadd.f32 0.0, %v4662
    %v4664 = vpop.f32.mrb[0].mxu0
    %v4665 = vpop.f32.mrb[0].mxu0
    %v4666 = vadd.f32 0.0, %v4665
    %v4667 = vpop.f32.mrb[0].mxu0
    %4668 = vmatprep.mubr.bf16.mxu0 0
    %4669 = vmatmul.mubr.bf16.gmra.mrb[0].mxu0 %v4533
    %v4670 = vpop.f32.mrb[0].mxu0
    %v4671 = vadd.f32 0.0, %v4670
    %v4672 = vpop.f32.mrb[0].mxu0
    %v4673 = vpop.f32.mrb[0].mxu0
    %v4674 = vadd.f32 0.0, %v4673
    %v4675 = vpop.f32.mrb[0].mxu0
    %4676 = vmatprep.mubr.bf16.mxu0 0
    %4677 = vmatmul.mubr.bf16.gmra.mrb[0].mxu0 %v4534
    %v4678 = vpop.f32.mrb[0].mxu0
    %v4679 = vadd.f32 0.0, %v4678
    %v4680 = vpop.f32.mrb[0].mxu0
    %v4681 = vpop.f32.mrb[0].mxu0
    %v4682 = vadd.f32 0.0, %v4681
    %v4683 = vpop.f32.mrb[0].mxu0
    %4684 = vmatprep.mubr.bf16.mxu0 0
    %4685 = vmatmul.mubr.bf16.gmra.mrb[0].mxu0 %v4535
    %v4686 = vpop.f32.mrb[0].mxu0
    %v4687 = vadd.f32 0.0, %v4686
    %v4688 = vpop.f32.mrb[0].mxu0
    %v4689 = vpop.f32.mrb[0].mxu0
    %v4690 = vadd.f32 0.0, %v4689
    %v4691 = vpop.f32.mrb[0].mxu0
    %4692 = vmatprep.mubr.bf16.mxu0 0
    %4693 = vmatmul.mubr.bf16.gmra.mrb[0].mxu0 %v4536
    %v4694 = vpop.f32.mrb[0].mxu0
    %v4695 = vadd.f32 0.0, %v4694
    %v4696 = vpop.f32.mrb[0].mxu0
    %v4697 = vpop.f32.mrb[0].mxu0
    %v4698 = vadd.f32 0.0, %v4697
    %v4699 = vpop.f32.mrb[0].mxu0
    %4700 = vmatprep.mubr.bf16.mxu0 0
    %4701 = vmatmul.mubr.bf16.gmra.mrb[0].mxu0 %v4537
    %v4702 = vpop.f32.mrb[0].mxu0
    %v4703 = vadd.f32 0.0, %v4702
    %v4704 = vpop.f32.mrb[0].mxu0
    %v4705 = vpop.f32.mrb[0].mxu0
    %v4706 = vadd.f32 0.0, %v4705
    %v4707 = vpop.f32.mrb[0].mxu0
    %4708 = vmatprep.mubr.bf16.mxu0 0
    %4709 = vmatmul.mubr.bf16.gmra.mrb[0].mxu0 %v4538
    %v4710 = vpop.f32.mrb[0].mxu0
    %v4711 = vadd.f32 0.0, %v4710
    %v4712 = vpop.f32.mrb[0].mxu0
    %v4713 = vpop.f32.mrb[0].mxu0
    %v4714 = vadd.f32 0.0, %v4713
    %v4715 = vpop.f32.mrb[0].mxu0
    %4716 = vmatprep.mubr.bf16.mxu0 0
    %4717 = vmatmul.mubr.bf16.gmra.mrb[0].mxu0 %v4539
    %v4718 = vpop.f32.mrb[0].mxu0
    %v4719 = vadd.f32 0.0, %v4718
    %v4720 = vpop.f32.mrb[0].mxu0
    %v4721 = vpop.f32.mrb[0].mxu0
    %v4722 = vadd.f32 0.0, %v4721
    %v4723 = vpop.f32.mrb[0].mxu0
    %4724 = vmatprep.mubr.bf16.mxu0 0
    %4725 = vmatmul.mubr.bf16.gmra.mrb[0].mxu0 %v4540
    %v4726 = vpop.f32.mrb[0].mxu0
    %v4727 = vadd.f32 0.0, %v4726
    %v4728 = vpop.f32.mrb[0].mxu0
    %v4729 = vpop.f32.mrb[0].mxu0
    %v4730 = vadd.f32 0.0, %v4729
    %v4731 = vpop.f32.mrb[0].mxu0
    %4732 = vmatprep.mubr.bf16.mxu0 0
    %4733 = vmatmul.mubr.bf16.gmra.mrb[0].mxu0 %v4541
    %v4734 = vpop.f32.mrb[0].mxu0
    %v4735 = vadd.f32 0.0, %v4734
    %v4736 = vpop.f32.mrb[0].mxu0
    %v4737 = vpop.f32.mrb[0].mxu0
    %v4738 = vadd.f32 0.0, %v4737
    %v4739 = vpop.f32.mrb[0].mxu0
    %4740 = vmatprep.mubr.bf16.mxu0 0
    %4741 = vmatmul.mubr.bf16.gmra.mrb[0].mxu0 %v4542
    %v4742 = vpop.f32.mrb[0].mxu0
    %v4743 = vadd.f32 0.0, %v4742
    %v4744 = vpop.f32.mrb[0].mxu0
    %v4745 = vpop.f32.mrb[0].mxu0
    %v4746 = vadd.f32 0.0, %v4745
    %v4747 = vpop.f32.mrb[0].mxu0
    %4748 = vmatprep.mubr.bf16.mxu0 0
    %4749 = vmatmul.mubr.bf16.gmra.mrb[0].mxu0 %v4543
    %v4750 = vpop.f32.mrb[0].mxu0
    %v4751 = vadd.f32 0.0, %v4750
    %v4752 = vpop.f32.mrb[0].mxu0
    %v4753 = vpop.f32.mrb[0].mxu0
    %v4754 = vadd.f32 0.0, %v4753
    %v4755 = vpop.f32.mrb[0].mxu0
    %4756 = vmatprep.mubr.bf16.mxu0 0
    %4757 = vmatmul.mubr.bf16.gmra.mrb[0].mxu0 %v4544
    %v4758 = vpop.f32.mrb[0].mxu0
    %v4759 = vadd.f32 0.0, %v4758
    %v4760 = vpop.f32.mrb[0].mxu0
    %v4761 = vpop.f32.mrb[0].mxu0
    %v4762 = vadd.f32 0.0, %v4761
    %v4763 = vpop.f32.mrb[0].mxu0
    %4764 = vmatprep.mubr.bf16.mxu0 0
    %4765 = vmatmul.mubr.bf16.gmra.mrb[0].mxu0 %v4545
    %v4766 = vpop.f32.mrb[0].mxu0
    %v4767 = vadd.f32 0.0, %v4766
    %v4768 = vpop.f32.mrb[0].mxu0
    %v4769 = vpop.f32.mrb[0].mxu0
    %v4770 = vadd.f32 0.0, %v4769
    %v4771 = vpop.f32.mrb[0].mxu0
    %4772 = vmatprep.mubr.bf16.mxu0 0
    %4773 = vmatmul.mubr.bf16.gmra.mrb[0].mxu0 %v4546
    %v4774 = vpop.f32.mrb[0].mxu0
    %v4775 = vadd.f32 0.0, %v4774
    %v4776 = vpop.f32.mrb[0].mxu0
    %v4777 = vpop.f32.mrb[0].mxu0
    %v4778 = vadd.f32 0.0, %v4777
    %v4779 = vpop.f32.mrb[0].mxu0
    %4780 = vmatprep.mubr.bf16.mxu0 0
    %4781 = vmatmul.mubr.bf16.gmra.mrb[0].mxu0 %v4547
    %v4782 = vpop.f32.mrb[0].mxu0
    %v4783 = vadd.f32 0.0, %v4782
    %v4784 = vpop.f32.mrb[0].mxu0
    %v4785 = vpop.f32.mrb[0].mxu0
    %v4786 = vadd.f32 0.0, %v4785
    %v4787 = vpop.f32.mrb[0].mxu0
    %4788 = vmatprep.mubr.bf16.mxu0 0
    %4789 = vmatmul.mubr.bf16.gmra.mrb[0].mxu0 %v4548
    %v4790 = vpop.f32.mrb[0].mxu0
    %v4791 = vadd.f32 0.0, %v4790
    %v4792 = vpop.f32.mrb[0].mxu0
    %v4793 = vpop.f32.mrb[0].mxu0
    %v4794 = vadd.f32 0.0, %v4793
    %v4795 = vpop.f32.mrb[0].mxu0
    %4796 = vmatprep.mubr.bf16.mxu0 0
    %4797 = vmatmul.mubr.bf16.gmra.mrb[0].mxu0 %v4549
    %v4798 = vpop.f32.mrb[0].mxu0
    %v4799 = vadd.f32 0.0, %v4798
    %v4800 = vpop.f32.mrb[0].mxu0
    %v4801 = vpop.f32.mrb[0].mxu0
    %v4802 = vadd.f32 0.0, %v4801
    %v4803 = vpop.f32.mrb[0].mxu0
    %4804 = vmatprep.mubr.bf16.mxu0 0
    %4805 = vmatmul.mubr.bf16.gmra.mrb[0].mxu0 %v4550
    %v4806 = vpop.f32.mrb[0].mxu0
    %v4807 = vadd.f32 0.0, %v4806
    %v4808 = vpop.f32.mrb[0].mxu0
    %v4809 = vpop.f32.mrb[0].mxu0
    %v4810 = vadd.f32 0.0, %v4809
    %v4811 = vpop.f32.mrb[0].mxu0
    %4812 = vmatprep.mubr.bf16.mxu0 0
    %4813 = vmatmul.mubr.bf16.gmra.mrb[0].mxu0 %v4551
    %v4814 = vpop.f32.mrb[0].mxu0
    %v4815 = vadd.f32 0.0, %v4814
    %v4816 = vpop.f32.mrb[0].mxu0
    %v4817 = vpop.f32.mrb[0].mxu0
    %v4818 = vadd.f32 0.0, %v4817
    %v4819 = vpop.f32.mrb[0].mxu0
    %4820 = vmatprep.mubr.bf16.mxu0 0
    %4821 = vmatmul.mubr.bf16.gmra.mrb[0].mxu0 %v4552
    %v4822 = vpop.f32.mrb[0].mxu0
    %v4823 = vadd.f32 0.0, %v4822
    %v4824 = vpop.f32.mrb[0].mxu0
    %v4825 = vpop.f32.mrb[0].mxu0
    %v4826 = vadd.f32 0.0, %v4825
    %v4827 = vpop.f32.mrb[0].mxu0
    %4828 = vmatprep.mubr.bf16.mxu0 0
    %4829 = vmatmul.mubr.bf16.gmra.mrb[0].mxu0 %v4553
    %v4830 = vpop.f32.mrb[0].mxu0
    %v4831 = vadd.f32 0.0, %v4830
    %v4832 = vpop.f32.mrb[0].mxu0
    %v4833 = vpop.f32.mrb[0].mxu0
    %v4834 = vadd.f32 0.0, %v4833
    %v4835 = vpop.f32.mrb[0].mxu0
    %4836 = vmatprep.mubr.bf16.mxu0 0
    %4837 = vmatmul.mubr.bf16.gmra.mrb[0].mxu0 %v4554
    %v4838 = vpop.f32.mrb[0].mxu0
    %v4839 = vadd.f32 0.0, %v4838
    %v4840 = vpop.f32.mrb[0].mxu0
    %v4841 = vpop.f32.mrb[0].mxu0
    %v4842 = vadd.f32 0.0, %v4841
    %v4843 = vpop.f32.mrb[0].mxu0
    %4844 = vmatprep.mubr.bf16.mxu0 0
    %4845 = vmatmul.mubr.bf16.gmra.mrb[0].mxu0 %v4555
    %v4846 = vpop.f32.mrb[0].mxu0
    %v4847 = vadd.f32 0.0, %v4846
    %v4848 = vpop.f32.mrb[0].mxu0
    %v4849 = vpop.f32.mrb[0].mxu0
    %v4850 = vadd.f32 0.0, %v4849
    %v4851 = vpop.f32.mrb[0].mxu0
    %4852 = vmatprep.mubr.bf16.mxu0 0
    %4853 = vmatmul.mubr.bf16.gmra.mrb[0].mxu0 %v4556
    %v4854 = vpop.f32.mrb[0].mxu0
    %v4855 = vadd.f32 0.0, %v4854
    %v4856 = vpop.f32.mrb[0].mxu0
    %v4857 = vpop.f32.mrb[0].mxu0
    %v4858 = vadd.f32 0.0, %v4857
    %v4859 = vpop.f32.mrb[0].mxu0
    %4860 = vmatprep.mubr.bf16.mxu0 0
    %4861 = vmatmul.mubr.bf16.gmra.mrb[0].mxu0 %v4557
    %v4862 = vpop.f32.mrb[0].mxu0
    %v4863 = vadd.f32 0.0, %v4862
    %v4864 = vpop.f32.mrb[0].mxu0
    %v4865 = vpop.f32.mrb[0].mxu0
    %v4866 = vadd.f32 0.0, %v4865
    %v4867 = vpop.f32.mrb[0].mxu0
    %4868 = vmatprep.mubr.bf16.mxu0 0
    %4869 = vmatmul.mubr.bf16.gmra.mrb[0].mxu0 %v4558
    %v4870 = vpop.f32.mrb[0].mxu0
    %v4871 = vadd.f32 0.0, %v4870
    %v4872 = vpop.f32.mrb[0].mxu0
    %v4873 = vpop.f32.mrb[0].mxu0
    %v4874 = vadd.f32 0.0, %v4873
    %v4875 = vpop.f32.mrb[0].mxu0
    %4876 = vmatprep.mubr.bf16.mxu0 0
    %4877 = vmatmul.mubr.bf16.gmra.mrb[0].mxu0 %v4559
    %v4878 = vpop.f32.mrb[0].mxu0
    %v4879 = vadd.f32 0.0, %v4878
    %v4880 = vpop.f32.mrb[0].mxu0
    %v4881 = vpop.f32.mrb[0].mxu0
    %v4882 = vadd.f32 0.0, %v4881
    %v4883 = vpop.f32.mrb[0].mxu0
    %4884 = vmatprep.mubr.bf16.mxu0 0
    %4885 = vmatmul.mubr.bf16.gmra.mrb[0].mxu0 %v4560
    %v4886 = vpop.f32.mrb[0].mxu0
    %v4887 = vadd.f32 0.0, %v4886
    %v4888 = vpop.f32.mrb[0].mxu0
    %v4889 = vpop.f32.mrb[0].mxu0
    %v4890 = vadd.f32 0.0, %v4889
    %v4891 = vpop.f32.mrb[0].mxu0
    %4892 = vmatprep.mubr.bf16.mxu0 0
    %4893 = vmatmul.mubr.bf16.gmra.mrb[0].mxu0 %v4561
    %v4894 = vpop.f32.mrb[0].mxu0
    %v4895 = vadd.f32 0.0, %v4894
    %v4896 = vpop.f32.mrb[0].mxu0
    %v4897 = vpop.f32.mrb[0].mxu0
    %v4898 = vadd.f32 0.0, %v4897
    %v4899 = vpop.f32.mrb[0].mxu0
    %4900 = vmatprep.mubr.bf16.mxu0 0
    %4901 = vmatmul.mubr.bf16.gmra.mrb[0].mxu0 %v4562
    %v4902 = vpop.f32.mrb[0].mxu0
    %v4903 = vadd.f32 0.0, %v4902
    %v4904 = vpop.f32.mrb[0].mxu0
    %v4905 = vpop.f32.mrb[0].mxu0
    %v4906 = vadd.f32 0.0, %v4905
    %v4907 = vpop.f32.mrb[0].mxu0
    %4908 = vmatprep.mubr.bf16.mxu0 0
    %4909 = vmatmul.mubr.bf16.gmra.mrb[0].mxu0 %v4563
    %v4910 = vpop.f32.mrb[0].mxu0
    %v4911 = vadd.f32 0.0, %v4910
    %v4912 = vpop.f32.mrb[0].mxu0
    %v4913 = vpop.f32.mrb[0].mxu0
    %v4914 = vadd.f32 0.0, %v4913
    %v4915 = vpop.f32.mrb[0].mxu0
    %4916 = vdwg.mxu0
    %v4917 = vadd.f32 %v4403, %v4663
    %v4918 = vadd.f32 %v4404, %v4666
    %v4919 = vadd.f32 %v4405, %v4671
    %v4920 = vadd.f32 %v4406, %v4674
    %v4921 = vadd.f32 %v4407, %v4679
    %v4922 = vadd.f32 %v4408, %v4682
    %v4923 = vadd.f32 %v4409, %v4687
    %v4924 = vadd.f32 %v4410, %v4690
    %v4925 = vadd.f32 %v4411, %v4695
    %v4926 = vadd.f32 %v4412, %v4698
    %v4927 = vadd.f32 %v4413, %v4703
    %v4928 = vadd.f32 %v4414, %v4706
    %v4929 = vadd.f32 %v4415, %v4711
    %v4930 = vadd.f32 %v4416, %v4714
    %v4931 = vadd.f32 %v4417, %v4719
    %v4932 = vadd.f32 %v4418, %v4722
    %v4933 = vadd.f32 %v4419, %v4727
    %v4934 = vadd.f32 %v4420, %v4730
    %v4935 = vadd.f32 %v4421, %v4735
    %v4936 = vadd.f32 %v4422, %v4738
    %v4937 = vadd.f32 %v4423, %v4743
    %v4938 = vadd.f32 %v4424, %v4746
    %v4939 = vadd.f32 %v4425, %v4751
    %v4940 = vadd.f32 %v4426, %v4754
    %v4941 = vadd.f32 %v4427, %v4759
    %v4942 = vadd.f32 %v4428, %v4762
    %v4943 = vadd.f32 %v4429, %v4767
    %v4944 = vadd.f32 %v4430, %v4770
    %v4945 = vadd.f32 %v4431, %v4775
    %v4946 = vadd.f32 %v4432, %v4778
    %v4947 = vadd.f32 %v4433, %v4783
    %v4948 = vadd.f32 %v4434, %v4786
    %v4949 = vadd.f32 %v4435, %v4791
    %v4950 = vadd.f32 %v4436, %v4794
    %v4951 = vadd.f32 %v4437, %v4799
    %v4952 = vadd.f32 %v4438, %v4802
    %v4953 = vadd.f32 %v4439, %v4807
    %v4954 = vadd.f32 %v4440, %v4810
    %v4955 = vadd.f32 %v4441, %v4815
    %v4956 = vadd.f32 %v4442, %v4818
    %v4957 = vadd.f32 %v4443, %v4823
    %v4958 = vadd.f32 %v4444, %v4826
    %v4959 = vadd.f32 %v4445, %v4831
    %v4960 = vadd.f32 %v4446, %v4834
    %v4961 = vadd.f32 %v4447, %v4839
    %v4962 = vadd.f32 %v4448, %v4842
    %v4963 = vadd.f32 %v4449, %v4847
    %v4964 = vadd.f32 %v4450, %v4850
    %v4965 = vadd.f32 %v4451, %v4855
    %v4966 = vadd.f32 %v4452, %v4858
    %v4967 = vadd.f32 %v4453, %v4863
    %v4968 = vadd.f32 %v4454, %v4866
    %v4969 = vadd.f32 %v4455, %v4871
    %v4970 = vadd.f32 %v4456, %v4874
    %v4971 = vadd.f32 %v4457, %v4879
    %v4972 = vadd.f32 %v4458, %v4882
    %v4973 = vadd.f32 %v4459, %v4887
    %v4974 = vadd.f32 %v4460, %v4890
    %v4975 = vadd.f32 %v4461, %v4895
    %v4976 = vadd.f32 %v4462, %v4898
    %v4977 = vadd.f32 %v4463, %v4903
    %v4978 = vadd.f32 %v4464, %v4906
    %v4979 = vadd.f32 %v4465, %v4911
    %v4980 = vadd.f32 %v4466, %v4914
    %v4981 = vld [vmem:[%s4467 + $0x1] sm:$0xff]
    %v4982 = vld [vmem:[%s4467 + $0x9] sm:$0xff]
    %v4983 = vld [vmem:[%s4467 + $0x19] sm:$0xff]
    %v4984 = vld [vmem:[%s4467 + $0x21] sm:$0xff]
    %v4985 = vld [vmem:[%s4467 + $0x31] sm:$0xff]
    %v4986 = vld [vmem:[%s4467 + $0x39] sm:$0xff]
    %v4987 = vld [vmem:[%s4467 + $0x49] sm:$0xff]
    %v4988 = vld [vmem:[%s4467 + $0x51] sm:$0xff]
    %v4989 = vld [vmem:[%s4467 + $0x61] sm:$0xff]
    %v4990 = vld [vmem:[%s4467 + $0x69] sm:$0xff]
    %v4991 = vld [vmem:[%s4467 + $0x79] sm:$0xff]
    %v4992 = vld [vmem:[%s4467 + $0x81] sm:$0xff]
    %v4993 = vld [vmem:[%s4467 + $0x91] sm:$0xff]
    %v4994 = vld [vmem:[%s4467 + $0x99] sm:$0xff]
    %v4995 = vld [vmem:[%s4467 + $0xa9] sm:$0xff]
    %v4996 = vld [vmem:[%s4467 + $0xb1] sm:$0xff]
    %v4997 = vld [vmem:[%s4467 + $0xc1] sm:$0xff]
    %v4998 = vld [vmem:[%s4467 + $0xc9] sm:$0xff]
    %v4999 = vld [vmem:[%s4467 + $0xd9] sm:$0xff]
    %v5000 = vld [vmem:[%s4467 + $0xe1] sm:$0xff]
    %v5001 = vld [vmem:[%s4467 + $0xf1] sm:$0xff]
    %v5002 = vld [vmem:[%s4467 + $0xf9] sm:$0xff]
    %v5003 = vld [vmem:[%s4467 + $0x109] sm:$0xff]
    %v5004 = vld [vmem:[%s4467 + $0x111] sm:$0xff]
    %v5005 = vld [vmem:[%s4467 + $0x121] sm:$0xff]
    %v5006 = vld [vmem:[%s4467 + $0x129] sm:$0xff]
    %v5007 = vld [vmem:[%s4467 + $0x139] sm:$0xff]
    %v5008 = vld [vmem:[%s4467 + $0x141] sm:$0xff]
    %v5009 = vld [vmem:[%s4467 + $0x151] sm:$0xff]
    %v5010 = vld [vmem:[%s4467 + $0x159] sm:$0xff]
    %v5011 = vld [vmem:[%s4467 + $0x169] sm:$0xff]
    %v5012 = vld [vmem:[%s4467 + $0x171] sm:$0xff]
    %v5013 = vld [vmem:[%s4467 + $0x1b1] sm:$0xff]
    %v5014 = vld [vmem:[%s4467 + $0x1b9] sm:$0xff]
    %v5015 = vld [vmem:[%s4467 + $0x1c9] sm:$0xff]
    %v5016 = vld [vmem:[%s4467 + $0x1d1] sm:$0xff]
    %v5017 = vld [vmem:[%s4467 + $0x1e1] sm:$0xff]
    %v5018 = vld [vmem:[%s4467 + $0x1e9] sm:$0xff]
    %v5019 = vld [vmem:[%s4467 + $0x1f9] sm:$0xff]
    %v5020 = vld [vmem:[%s4467 + $0x201] sm:$0xff]
    %v5021 = vld [vmem:[%s4467 + $0x211] sm:$0xff]
    %v5022 = vld [vmem:[%s4467 + $0x219] sm:$0xff]
    %v5023 = vld [vmem:[%s4467 + $0x229] sm:$0xff]
    %v5024 = vld [vmem:[%s4467 + $0x231] sm:$0xff]
    %v5025 = vld [vmem:[%s4467 + $0x241] sm:$0xff]
    %v5026 = vld [vmem:[%s4467 + $0x249] sm:$0xff]
    %v5027 = vld [vmem:[%s4467 + $0x259] sm:$0xff]
    %v5028 = vld [vmem:[%s4467 + $0x261] sm:$0xff]
    %v5029 = vld [vmem:[%s4467 + $0x271] sm:$0xff]
    %v5030 = vld [vmem:[%s4467 + $0x279] sm:$0xff]
    %v5031 = vld [vmem:[%s4467 + $0x289] sm:$0xff]
    %v5032 = vld [vmem:[%s4467 + $0x291] sm:$0xff]
    %v5033 = vld [vmem:[%s4467 + $0x2a1] sm:$0xff]
    %v5034 = vld [vmem:[%s4467 + $0x2a9] sm:$0xff]
    %v5035 = vld [vmem:[%s4467 + $0x2b9] sm:$0xff]
    %v5036 = vld [vmem:[%s4467 + $0x2c1] sm:$0xff]
    %v5037 = vld [vmem:[%s4467 + $0x2d1] sm:$0xff]
    %v5038 = vld [vmem:[%s4467 + $0x2d9] sm:$0xff]
    %v5039 = vld [vmem:[%s4467 + $0x2e9] sm:$0xff]
    %v5040 = vld [vmem:[%s4467 + $0x2f1] sm:$0xff]
    %v5041 = vld [vmem:[%s4467 + $0x301] sm:$0xff]
    %v5042 = vld [vmem:[%s4467 + $0x309] sm:$0xff]
    %v5043 = vld [vmem:[%s4467 + $0x319] sm:$0xff]
    %v5044 = vld [vmem:[%s4467 + $0x321] sm:$0xff]
    %v5045 = vpack.c.bf16 %v4982, %v4981
    %v5046 = vpack.c.bf16 %v4984, %v4983
    %v5047 = vpack.c.bf16 %v4986, %v4985
    %v5048 = vpack.c.bf16 %v4988, %v4987
    %v5049 = vpack.c.bf16 %v4990, %v4989
    %v5050 = vpack.c.bf16 %v4992, %v4991
    %v5051 = vpack.c.bf16 %v4994, %v4993
    %v5052 = vpack.c.bf16 %v4996, %v4995
    %v5053 = vpack.c.bf16 %v4998, %v4997
    %v5054 = vpack.c.bf16 %v5000, %v4999
    %v5055 = vpack.c.bf16 %v5002, %v5001
    %v5056 = vpack.c.bf16 %v5004, %v5003
    %v5057 = vpack.c.bf16 %v5006, %v5005
    %v5058 = vpack.c.bf16 %v5008, %v5007
    %v5059 = vpack.c.bf16 %v5010, %v5009
    %v5060 = vpack.c.bf16 %v5012, %v5011
    %v5061 = vpack.c.bf16 %v5014, %v5013
    %v5062 = vpack.c.bf16 %v5016, %v5015
    %v5063 = vpack.c.bf16 %v5018, %v5017
    %v5064 = vpack.c.bf16 %v5020, %v5019
    %v5065 = vpack.c.bf16 %v5022, %v5021
    %v5066 = vpack.c.bf16 %v5024, %v5023
    %v5067 = vpack.c.bf16 %v5026, %v5025
    %v5068 = vpack.c.bf16 %v5028, %v5027
    %v5069 = vpack.c.bf16 %v5030, %v5029
    %v5070 = vpack.c.bf16 %v5032, %v5031
    %v5071 = vpack.c.bf16 %v5034, %v5033
    %v5072 = vpack.c.bf16 %v5036, %v5035
    %v5073 = vpack.c.bf16 %v5038, %v5037
    %v5074 = vpack.c.bf16 %v5040, %v5039
    %v5075 = vpack.c.bf16 %v5042, %v5041
    %v5076 = vpack.c.bf16 %v5044, %v5043
    %v5077 = vld [vmem:[%s5 + $0x1c0] sm:$0xf]
    %v5078 = vld [vmem:[%s5 + $0x1c4] sm:$0xf]
    %v5079 = vld [vmem:[%s5 + $0x1c8] sm:$0xf]
    %v5080 = vld [vmem:[%s5 + $0x1cc] sm:$0xf]
    %v5081 = vld [vmem:[%s5 + $0x1d0] sm:$0xf]
    %v5082 = vld [vmem:[%s5 + $0x1d4] sm:$0xf]
    %v5083 = vld [vmem:[%s5 + $0x1d8] sm:$0xf]
    %v5084 = vld [vmem:[%s5 + $0x1dc] sm:$0xf]
    %v5085 = vld [vmem:[%s5 + $0x1e0] sm:$0xf]
    %v5086 = vld [vmem:[%s5 + $0x1e4] sm:$0xf]
    %v5087 = vld [vmem:[%s5 + $0x1e8] sm:$0xf]
    %v5088 = vld [vmem:[%s5 + $0x1ec] sm:$0xf]
    %v5089 = vld [vmem:[%s5 + $0x1f0] sm:$0xf]
    %v5090 = vld [vmem:[%s5 + $0x1f4] sm:$0xf]
    %v5091 = vld [vmem:[%s5 + $0x1f8] sm:$0xf]
    %v5092 = vld [vmem:[%s5 + $0x1fc] sm:$0xf]
    %v5109 = vunpack.c.l.b16 %v5077
    %v5110 = vunpack.c.l.b16 %v5078
    %v5111 = vunpack.c.l.b16 %v5079
    %v5112 = vunpack.c.l.b16 %v5080
    %v5113 = vunpack.c.l.b16 %v5081
    %v5114 = vunpack.c.l.b16 %v5082
    %v5115 = vunpack.c.l.b16 %v5083
    %v5116 = vunpack.c.l.b16 %v5084
    %v5117 = vunpack.c.l.b16 %v5085
    %v5118 = vunpack.c.l.b16 %v5086
    %v5119 = vunpack.c.l.b16 %v5087
    %v5120 = vunpack.c.l.b16 %v5088
    %v5121 = vunpack.c.l.b16 %v5089
    %v5122 = vunpack.c.l.b16 %v5090
    %v5123 = vunpack.c.l.b16 %v5091
    %v5124 = vunpack.c.l.b16 %v5092
    %v5125 = vpack.c.b16 %v5110, %v5109
    %v5126 = vpack.c.b16 %v5112, %v5111
    %v5127 = vpack.c.b16 %v5114, %v5113
    %v5128 = vpack.c.b16 %v5116, %v5115
    %v5129 = vpack.c.b16 %v5118, %v5117
    %v5130 = vpack.c.b16 %v5120, %v5119
    %v5131 = vpack.c.b16 %v5122, %v5121
    %v5132 = vpack.c.b16 %v5124, %v5123
    %5141 = vmatprep.subr.bf16.mxu0 0
    %5142 = vmatpush1.bf16.msra.mxu0 %v5125
    %5143 = vmatprep.subr.bf16.mxu0 0
    %5144 = vmatpush1.bf16.msra.mxu0 %v5126
    %5145 = vmatprep.subr.bf16.mxu0 0
    %5146 = vmatpush1.bf16.msra.mxu0 %v5127
    %5147 = vmatprep.subr.bf16.mxu0 0
    %5148 = vmatpush1.bf16.msra.mxu0 %v5128
    %5149 = vmatprep.subr.bf16.mxu0 0
    %5150 = vmatpush1.bf16.msra.mxu0 %v5129
    %5151 = vmatprep.subr.bf16.mxu0 0
    %5152 = vmatpush1.bf16.msra.mxu0 %v5130
    %5153 = vmatprep.subr.bf16.mxu0 0
    %5154 = vmatpush1.bf16.msra.mxu0 %v5131
    %5155 = vmatprep.subr.bf16.mxu0 0
    %5156 = vmatpush1.bf16.msra.mxu0 %v5132
    %5157 = vmatprep.subr.bf16.mxu0 0
    %5158 = vmatpush1.bf16.msra.mxu0 0
    %5159 = vmatprep.subr.bf16.mxu0 0
    %5160 = vmatpush1.bf16.msra.mxu0 0
    %5161 = vmatprep.subr.bf16.mxu0 0
    %5162 = vmatpush1.bf16.msra.mxu0 0
    %5163 = vmatprep.subr.bf16.mxu0 0
    %5164 = vmatpush1.bf16.msra.mxu0 0
    %5165 = vmatprep.subr.bf16.mxu0 0
    %5166 = vmatpush1.bf16.msra.mxu0 0
    %5167 = vmatprep.subr.bf16.mxu0 0
    %5168 = vmatpush1.bf16.msra.mxu0 0
    %5169 = vmatprep.subr.bf16.mxu0 0
    %5170 = vmatpush1.bf16.msra.mxu0 0
    %5171 = vmatprep.subr.bf16.mxu0 0
    %5172 = vmatpush1.bf16.msra.mxu0 0
    %5173 = vmatprep.mubr.bf16.mxu0 0
    %5174 = vmatmul.mubr.bf16.gmra.mrb[0].mxu0 %v5045
    %v5175 = vpop.f32.mrb[0].mxu0
    %v5176 = vadd.f32 0.0, %v5175
    %v5177 = vpop.f32.mrb[0].mxu0
    %v5178 = vpop.f32.mrb[0].mxu0
    %v5179 = vadd.f32 0.0, %v5178
    %v5180 = vpop.f32.mrb[0].mxu0
    %5181 = vmatprep.mubr.bf16.mxu0 0
    %5182 = vmatmul.mubr.bf16.gmra.mrb[0].mxu0 %v5046
    %v5183 = vpop.f32.mrb[0].mxu0
    %v5184 = vadd.f32 0.0, %v5183
    %v5185 = vpop.f32.mrb[0].mxu0
    %v5186 = vpop.f32.mrb[0].mxu0
    %v5187 = vadd.f32 0.0, %v5186
    %v5188 = vpop.f32.mrb[0].mxu0
    %5189 = vmatprep.mubr.bf16.mxu0 0
    %5190 = vmatmul.mubr.bf16.gmra.mrb[0].mxu0 %v5047
    %v5191 = vpop.f32.mrb[0].mxu0
    %v5192 = vadd.f32 0.0, %v5191
    %v5193 = vpop.f32.mrb[0].mxu0
    %v5194 = vpop.f32.mrb[0].mxu0
    %v5195 = vadd.f32 0.0, %v5194
    %v5196 = vpop.f32.mrb[0].mxu0
    %5197 = vmatprep.mubr.bf16.mxu0 0
    %5198 = vmatmul.mubr.bf16.gmra.mrb[0].mxu0 %v5048
    %v5199 = vpop.f32.mrb[0].mxu0
    %v5200 = vadd.f32 0.0, %v5199
    %v5201 = vpop.f32.mrb[0].mxu0
    %v5202 = vpop.f32.mrb[0].mxu0
    %v5203 = vadd.f32 0.0, %v5202
    %v5204 = vpop.f32.mrb[0].mxu0
    %5205 = vmatprep.mubr.bf16.mxu0 0
    %5206 = vmatmul.mubr.bf16.gmra.mrb[0].mxu0 %v5049
    %v5207 = vpop.f32.mrb[0].mxu0
    %v5208 = vadd.f32 0.0, %v5207
    %v5209 = vpop.f32.mrb[0].mxu0
    %v5210 = vpop.f32.mrb[0].mxu0
    %v5211 = vadd.f32 0.0, %v5210
    %v5212 = vpop.f32.mrb[0].mxu0
    %5213 = vmatprep.mubr.bf16.mxu0 0
    %5214 = vmatmul.mubr.bf16.gmra.mrb[0].mxu0 %v5050
    %v5215 = vpop.f32.mrb[0].mxu0
    %v5216 = vadd.f32 0.0, %v5215
    %v5217 = vpop.f32.mrb[0].mxu0
    %v5218 = vpop.f32.mrb[0].mxu0
    %v5219 = vadd.f32 0.0, %v5218
    %v5220 = vpop.f32.mrb[0].mxu0
    %5221 = vmatprep.mubr.bf16.mxu0 0
    %5222 = vmatmul.mubr.bf16.gmra.mrb[0].mxu0 %v5051
    %v5223 = vpop.f32.mrb[0].mxu0
    %v5224 = vadd.f32 0.0, %v5223
    %v5225 = vpop.f32.mrb[0].mxu0
    %v5226 = vpop.f32.mrb[0].mxu0
    %v5227 = vadd.f32 0.0, %v5226
    %v5228 = vpop.f32.mrb[0].mxu0
    %5229 = vmatprep.mubr.bf16.mxu0 0
    %5230 = vmatmul.mubr.bf16.gmra.mrb[0].mxu0 %v5052
    %v5231 = vpop.f32.mrb[0].mxu0
    %v5232 = vadd.f32 0.0, %v5231
    %v5233 = vpop.f32.mrb[0].mxu0
    %v5234 = vpop.f32.mrb[0].mxu0
    %v5235 = vadd.f32 0.0, %v5234
    %v5236 = vpop.f32.mrb[0].mxu0
    %5237 = vmatprep.mubr.bf16.mxu0 0
    %5238 = vmatmul.mubr.bf16.gmra.mrb[0].mxu0 %v5053
    %v5239 = vpop.f32.mrb[0].mxu0
    %v5240 = vadd.f32 0.0, %v5239
    %v5241 = vpop.f32.mrb[0].mxu0
    %v5242 = vpop.f32.mrb[0].mxu0
    %v5243 = vadd.f32 0.0, %v5242
    %v5244 = vpop.f32.mrb[0].mxu0
    %5245 = vmatprep.mubr.bf16.mxu0 0
    %5246 = vmatmul.mubr.bf16.gmra.mrb[0].mxu0 %v5054
    %v5247 = vpop.f32.mrb[0].mxu0
    %v5248 = vadd.f32 0.0, %v5247
    %v5249 = vpop.f32.mrb[0].mxu0
    %v5250 = vpop.f32.mrb[0].mxu0
    %v5251 = vadd.f32 0.0, %v5250
    %v5252 = vpop.f32.mrb[0].mxu0
    %5253 = vmatprep.mubr.bf16.mxu0 0
    %5254 = vmatmul.mubr.bf16.gmra.mrb[0].mxu0 %v5055
    %v5255 = vpop.f32.mrb[0].mxu0
    %v5256 = vadd.f32 0.0, %v5255
    %v5257 = vpop.f32.mrb[0].mxu0
    %v5258 = vpop.f32.mrb[0].mxu0
    %v5259 = vadd.f32 0.0, %v5258
    %v5260 = vpop.f32.mrb[0].mxu0
    %5261 = vmatprep.mubr.bf16.mxu0 0
    %5262 = vmatmul.mubr.bf16.gmra.mrb[0].mxu0 %v5056
    %v5263 = vpop.f32.mrb[0].mxu0
    %v5264 = vadd.f32 0.0, %v5263
    %v5265 = vpop.f32.mrb[0].mxu0
    %v5266 = vpop.f32.mrb[0].mxu0
    %v5267 = vadd.f32 0.0, %v5266
    %v5268 = vpop.f32.mrb[0].mxu0
    %5269 = vmatprep.mubr.bf16.mxu0 0
    %5270 = vmatmul.mubr.bf16.gmra.mrb[0].mxu0 %v5057
    %v5271 = vpop.f32.mrb[0].mxu0
    %v5272 = vadd.f32 0.0, %v5271
    %v5273 = vpop.f32.mrb[0].mxu0
    %v5274 = vpop.f32.mrb[0].mxu0
    %v5275 = vadd.f32 0.0, %v5274
    %v5276 = vpop.f32.mrb[0].mxu0
    %5277 = vmatprep.mubr.bf16.mxu0 0
    %5278 = vmatmul.mubr.bf16.gmra.mrb[0].mxu0 %v5058
    %v5279 = vpop.f32.mrb[0].mxu0
    %v5280 = vadd.f32 0.0, %v5279
    %v5281 = vpop.f32.mrb[0].mxu0
    %v5282 = vpop.f32.mrb[0].mxu0
    %v5283 = vadd.f32 0.0, %v5282
    %v5284 = vpop.f32.mrb[0].mxu0
    %5285 = vmatprep.mubr.bf16.mxu0 0
    %5286 = vmatmul.mubr.bf16.gmra.mrb[0].mxu0 %v5059
    %v5287 = vpop.f32.mrb[0].mxu0
    %v5288 = vadd.f32 0.0, %v5287
    %v5289 = vpop.f32.mrb[0].mxu0
    %v5290 = vpop.f32.mrb[0].mxu0
    %v5291 = vadd.f32 0.0, %v5290
    %v5292 = vpop.f32.mrb[0].mxu0
    %5293 = vmatprep.mubr.bf16.mxu0 0
    %5294 = vmatmul.mubr.bf16.gmra.mrb[0].mxu0 %v5060
    %v5295 = vpop.f32.mrb[0].mxu0
    %v5296 = vadd.f32 0.0, %v5295
    %v5297 = vpop.f32.mrb[0].mxu0
    %v5298 = vpop.f32.mrb[0].mxu0
    %v5299 = vadd.f32 0.0, %v5298
    %v5300 = vpop.f32.mrb[0].mxu0
    %5301 = vmatprep.mubr.bf16.mxu0 0
    %5302 = vmatmul.mubr.bf16.gmra.mrb[0].mxu0 %v5061
    %v5303 = vpop.f32.mrb[0].mxu0
    %v5304 = vadd.f32 0.0, %v5303
    %v5305 = vpop.f32.mrb[0].mxu0
    %v5306 = vpop.f32.mrb[0].mxu0
    %v5307 = vadd.f32 0.0, %v5306
    %v5308 = vpop.f32.mrb[0].mxu0
    %5309 = vmatprep.mubr.bf16.mxu0 0
    %5310 = vmatmul.mubr.bf16.gmra.mrb[0].mxu0 %v5062
    %v5311 = vpop.f32.mrb[0].mxu0
    %v5312 = vadd.f32 0.0, %v5311
    %v5313 = vpop.f32.mrb[0].mxu0
    %v5314 = vpop.f32.mrb[0].mxu0
    %v5315 = vadd.f32 0.0, %v5314
    %v5316 = vpop.f32.mrb[0].mxu0
    %5317 = vmatprep.mubr.bf16.mxu0 0
    %5318 = vmatmul.mubr.bf16.gmra.mrb[0].mxu0 %v5063
    %v5319 = vpop.f32.mrb[0].mxu0
    %v5320 = vadd.f32 0.0, %v5319
    %v5321 = vpop.f32.mrb[0].mxu0
    %v5322 = vpop.f32.mrb[0].mxu0
    %v5323 = vadd.f32 0.0, %v5322
    %v5324 = vpop.f32.mrb[0].mxu0
    %5325 = vmatprep.mubr.bf16.mxu0 0
    %5326 = vmatmul.mubr.bf16.gmra.mrb[0].mxu0 %v5064
    %v5327 = vpop.f32.mrb[0].mxu0
    %v5328 = vadd.f32 0.0, %v5327
    %v5329 = vpop.f32.mrb[0].mxu0
    %v5330 = vpop.f32.mrb[0].mxu0
    %v5331 = vadd.f32 0.0, %v5330
    %v5332 = vpop.f32.mrb[0].mxu0
    %5333 = vmatprep.mubr.bf16.mxu0 0
    %5334 = vmatmul.mubr.bf16.gmra.mrb[0].mxu0 %v5065
    %v5335 = vpop.f32.mrb[0].mxu0
    %v5336 = vadd.f32 0.0, %v5335
    %v5337 = vpop.f32.mrb[0].mxu0
    %v5338 = vpop.f32.mrb[0].mxu0
    %v5339 = vadd.f32 0.0, %v5338
    %v5340 = vpop.f32.mrb[0].mxu0
    %5341 = vmatprep.mubr.bf16.mxu0 0
    %5342 = vmatmul.mubr.bf16.gmra.mrb[0].mxu0 %v5066
    %v5343 = vpop.f32.mrb[0].mxu0
    %v5344 = vadd.f32 0.0, %v5343
    %v5345 = vpop.f32.mrb[0].mxu0
    %v5346 = vpop.f32.mrb[0].mxu0
    %v5347 = vadd.f32 0.0, %v5346
    %v5348 = vpop.f32.mrb[0].mxu0
    %5349 = vmatprep.mubr.bf16.mxu0 0
    %5350 = vmatmul.mubr.bf16.gmra.mrb[0].mxu0 %v5067
    %v5351 = vpop.f32.mrb[0].mxu0
    %v5352 = vadd.f32 0.0, %v5351
    %v5353 = vpop.f32.mrb[0].mxu0
    %v5354 = vpop.f32.mrb[0].mxu0
    %v5355 = vadd.f32 0.0, %v5354
    %v5356 = vpop.f32.mrb[0].mxu0
    %5357 = vmatprep.mubr.bf16.mxu0 0
    %5358 = vmatmul.mubr.bf16.gmra.mrb[0].mxu0 %v5068
    %v5359 = vpop.f32.mrb[0].mxu0
    %v5360 = vadd.f32 0.0, %v5359
    %v5361 = vpop.f32.mrb[0].mxu0
    %v5362 = vpop.f32.mrb[0].mxu0
    %v5363 = vadd.f32 0.0, %v5362
    %v5364 = vpop.f32.mrb[0].mxu0
    %5365 = vmatprep.mubr.bf16.mxu0 0
    %5366 = vmatmul.mubr.bf16.gmra.mrb[0].mxu0 %v5069
    %v5367 = vpop.f32.mrb[0].mxu0
    %v5368 = vadd.f32 0.0, %v5367
    %v5369 = vpop.f32.mrb[0].mxu0
    %v5370 = vpop.f32.mrb[0].mxu0
    %v5371 = vadd.f32 0.0, %v5370
    %v5372 = vpop.f32.mrb[0].mxu0
    %5373 = vmatprep.mubr.bf16.mxu0 0
    %5374 = vmatmul.mubr.bf16.gmra.mrb[0].mxu0 %v5070
    %v5375 = vpop.f32.mrb[0].mxu0
    %v5376 = vadd.f32 0.0, %v5375
    %v5377 = vpop.f32.mrb[0].mxu0
    %v5378 = vpop.f32.mrb[0].mxu0
    %v5379 = vadd.f32 0.0, %v5378
    %v5380 = vpop.f32.mrb[0].mxu0
    %5381 = vmatprep.mubr.bf16.mxu0 0
    %5382 = vmatmul.mubr.bf16.gmra.mrb[0].mxu0 %v5071
    %v5383 = vpop.f32.mrb[0].mxu0
    %v5384 = vadd.f32 0.0, %v5383
    %v5385 = vpop.f32.mrb[0].mxu0
    %v5386 = vpop.f32.mrb[0].mxu0
    %v5387 = vadd.f32 0.0, %v5386
    %v5388 = vpop.f32.mrb[0].mxu0
    %5389 = vmatprep.mubr.bf16.mxu0 0
    %5390 = vmatmul.mubr.bf16.gmra.mrb[0].mxu0 %v5072
    %v5391 = vpop.f32.mrb[0].mxu0
    %v5392 = vadd.f32 0.0, %v5391
    %v5393 = vpop.f32.mrb[0].mxu0
    %v5394 = vpop.f32.mrb[0].mxu0
    %v5395 = vadd.f32 0.0, %v5394
    %v5396 = vpop.f32.mrb[0].mxu0
    %5397 = vmatprep.mubr.bf16.mxu0 0
    %5398 = vmatmul.mubr.bf16.gmra.mrb[0].mxu0 %v5073
    %v5399 = vpop.f32.mrb[0].mxu0
    %v5400 = vadd.f32 0.0, %v5399
    %v5401 = vpop.f32.mrb[0].mxu0
    %v5402 = vpop.f32.mrb[0].mxu0
    %v5403 = vadd.f32 0.0, %v5402
    %v5404 = vpop.f32.mrb[0].mxu0
    %5405 = vmatprep.mubr.bf16.mxu0 0
    %5406 = vmatmul.mubr.bf16.gmra.mrb[0].mxu0 %v5074
    %v5407 = vpop.f32.mrb[0].mxu0
    %v5408 = vadd.f32 0.0, %v5407
    %v5409 = vpop.f32.mrb[0].mxu0
    %v5410 = vpop.f32.mrb[0].mxu0
    %v5411 = vadd.f32 0.0, %v5410
    %v5412 = vpop.f32.mrb[0].mxu0
    %5413 = vmatprep.mubr.bf16.mxu0 0
    %5414 = vmatmul.mubr.bf16.gmra.mrb[0].mxu0 %v5075
    %v5415 = vpop.f32.mrb[0].mxu0
    %v5416 = vadd.f32 0.0, %v5415
    %v5417 = vpop.f32.mrb[0].mxu0
    %v5418 = vpop.f32.mrb[0].mxu0
    %v5419 = vadd.f32 0.0, %v5418
    %v5420 = vpop.f32.mrb[0].mxu0
    %5421 = vmatprep.mubr.bf16.mxu0 0
    %5422 = vmatmul.mubr.bf16.gmra.mrb[0].mxu0 %v5076
    %v5423 = vpop.f32.mrb[0].mxu0
    %v5424 = vadd.f32 0.0, %v5423
    %v5425 = vpop.f32.mrb[0].mxu0
    %v5426 = vpop.f32.mrb[0].mxu0
    %v5427 = vadd.f32 0.0, %v5426
    %v5428 = vpop.f32.mrb[0].mxu0
    %5429 = vdwg.mxu0
    %v5430 = vadd.f32 %v4917, %v5176
    %v5431 = vadd.f32 %v4918, %v5179
    %v5432 = vadd.f32 %v4919, %v5184
    %v5433 = vadd.f32 %v4920, %v5187
    %v5434 = vadd.f32 %v4921, %v5192
    %v5435 = vadd.f32 %v4922, %v5195
    %v5436 = vadd.f32 %v4923, %v5200
    %v5437 = vadd.f32 %v4924, %v5203
    %v5438 = vadd.f32 %v4925, %v5208
    %v5439 = vadd.f32 %v4926, %v5211
    %v5440 = vadd.f32 %v4927, %v5216
    %v5441 = vadd.f32 %v4928, %v5219
    %v5442 = vadd.f32 %v4929, %v5224
    %v5443 = vadd.f32 %v4930, %v5227
    %v5444 = vadd.f32 %v4931, %v5232
    %v5445 = vadd.f32 %v4932, %v5235
    %v5446 = vadd.f32 %v4933, %v5240
    %v5447 = vadd.f32 %v4934, %v5243
    %v5448 = vadd.f32 %v4935, %v5248
    %v5449 = vadd.f32 %v4936, %v5251
    %v5450 = vadd.f32 %v4937, %v5256
    %v5451 = vadd.f32 %v4938, %v5259
    %v5452 = vadd.f32 %v4939, %v5264
    %v5453 = vadd.f32 %v4940, %v5267
    %v5454 = vadd.f32 %v4941, %v5272
    %v5455 = vadd.f32 %v4942, %v5275
    %v5456 = vadd.f32 %v4943, %v5280
    %v5457 = vadd.f32 %v4944, %v5283
    %v5458 = vadd.f32 %v4945, %v5288
    %v5459 = vadd.f32 %v4946, %v5291
    %v5460 = vadd.f32 %v4947, %v5296
    %v5461 = vadd.f32 %v4948, %v5299
    %v5462 = vadd.f32 %v4949, %v5304
    %v5463 = vadd.f32 %v4950, %v5307
    %v5464 = vadd.f32 %v4951, %v5312
    %v5465 = vadd.f32 %v4952, %v5315
    %v5466 = vadd.f32 %v4953, %v5320
    %v5467 = vadd.f32 %v4954, %v5323
    %v5468 = vadd.f32 %v4955, %v5328
    %v5469 = vadd.f32 %v4956, %v5331
    %v5470 = vadd.f32 %v4957, %v5336
    %v5471 = vadd.f32 %v4958, %v5339
    %v5472 = vadd.f32 %v4959, %v5344
    %v5473 = vadd.f32 %v4960, %v5347
    %v5474 = vadd.f32 %v4961, %v5352
    %v5475 = vadd.f32 %v4962, %v5355
    %v5476 = vadd.f32 %v4963, %v5360
    %v5477 = vadd.f32 %v4964, %v5363
    %v5478 = vadd.f32 %v4965, %v5368
    %v5479 = vadd.f32 %v4966, %v5371
    %v5480 = vadd.f32 %v4967, %v5376
    %v5481 = vadd.f32 %v4968, %v5379
    %v5482 = vadd.f32 %v4969, %v5384
    %v5483 = vadd.f32 %v4970, %v5387
    %v5484 = vadd.f32 %v4971, %v5392
    %v5485 = vadd.f32 %v4972, %v5395
    %v5486 = vadd.f32 %v4973, %v5400
    %v5487 = vadd.f32 %v4974, %v5403
    %v5488 = vadd.f32 %v4975, %v5408
    %v5489 = vadd.f32 %v4976, %v5411
    %v5490 = vadd.f32 %v4977, %v5416
    %v5491 = vadd.f32 %v4978, %v5419
    %v5492 = vadd.f32 %v4979, %v5424
    %v5493 = vadd.f32 %v4980, %v5427
    %v5494 = vld [vmem:[%s4467 + $0x2] sm:$0xff]
    %v5495 = vld [vmem:[%s4467 + $0xa] sm:$0xff]
    %v5496 = vld [vmem:[%s4467 + $0x1a] sm:$0xff]
    %v5497 = vld [vmem:[%s4467 + $0x22] sm:$0xff]
    %v5498 = vld [vmem:[%s4467 + $0x32] sm:$0xff]
    %v5499 = vld [vmem:[%s4467 + $0x3a] sm:$0xff]
    %v5500 = vld [vmem:[%s4467 + $0x4a] sm:$0xff]
    %v5501 = vld [vmem:[%s4467 + $0x52] sm:$0xff]
    %v5502 = vld [vmem:[%s4467 + $0x62] sm:$0xff]
    %v5503 = vld [vmem:[%s4467 + $0x6a] sm:$0xff]
    %v5504 = vld [vmem:[%s4467 + $0x7a] sm:$0xff]
    %v5505 = vld [vmem:[%s4467 + $0x82] sm:$0xff]
    %v5506 = vld [vmem:[%s4467 + $0x92] sm:$0xff]
    %v5507 = vld [vmem:[%s4467 + $0x9a] sm:$0xff]
    %v5508 = vld [vmem:[%s4467 + $0xaa] sm:$0xff]
    %v5509 = vld [vmem:[%s4467 + $0xb2] sm:$0xff]
    %v5510 = vld [vmem:[%s4467 + $0xc2] sm:$0xff]
    %v5511 = vld [vmem:[%s4467 + $0xca] sm:$0xff]
    %v5512 = vld [vmem:[%s4467 + $0xda] sm:$0xff]
    %v5513 = vld [vmem:[%s4467 + $0xe2] sm:$0xff]
    %v5514 = vld [vmem:[%s4467 + $0xf2] sm:$0xff]
    %v5515 = vld [vmem:[%s4467 + $0xfa] sm:$0xff]
    %v5516 = vld [vmem:[%s4467 + $0x10a] sm:$0xff]
    %v5517 = vld [vmem:[%s4467 + $0x112] sm:$0xff]
    %v5518 = vld [vmem:[%s4467 + $0x122] sm:$0xff]
    %v5519 = vld [vmem:[%s4467 + $0x12a] sm:$0xff]
    %v5520 = vld [vmem:[%s4467 + $0x13a] sm:$0xff]
    %v5521 = vld [vmem:[%s4467 + $0x142] sm:$0xff]
    %v5522 = vld [vmem:[%s4467 + $0x152] sm:$0xff]
    %v5523 = vld [vmem:[%s4467 + $0x15a] sm:$0xff]
    %v5524 = vld [vmem:[%s4467 + $0x16a] sm:$0xff]
    %v5525 = vld [vmem:[%s4467 + $0x172] sm:$0xff]
    %v5526 = vld [vmem:[%s4467 + $0x1b2] sm:$0xff]
    %v5527 = vld [vmem:[%s4467 + $0x1ba] sm:$0xff]
    %v5528 = vld [vmem:[%s4467 + $0x1ca] sm:$0xff]
    %v5529 = vld [vmem:[%s4467 + $0x1d2] sm:$0xff]
    %v5530 = vld [vmem:[%s4467 + $0x1e2] sm:$0xff]
    %v5531 = vld [vmem:[%s4467 + $0x1ea] sm:$0xff]
    %v5532 = vld [vmem:[%s4467 + $0x1fa] sm:$0xff]
    %v5533 = vld [vmem:[%s4467 + $0x202] sm:$0xff]
    %v5534 = vld [vmem:[%s4467 + $0x212] sm:$0xff]
    %v5535 = vld [vmem:[%s4467 + $0x21a] sm:$0xff]
    %v5536 = vld [vmem:[%s4467 + $0x22a] sm:$0xff]
    %v5537 = vld [vmem:[%s4467 + $0x232] sm:$0xff]
    %v5538 = vld [vmem:[%s4467 + $0x242] sm:$0xff]
    %v5539 = vld [vmem:[%s4467 + $0x24a] sm:$0xff]
    %v5540 = vld [vmem:[%s4467 + $0x25a] sm:$0xff]
    %v5541 = vld [vmem:[%s4467 + $0x262] sm:$0xff]
    %v5542 = vld [vmem:[%s4467 + $0x272] sm:$0xff]
    %v5543 = vld [vmem:[%s4467 + $0x27a] sm:$0xff]
    %v5544 = vld [vmem:[%s4467 + $0x28a] sm:$0xff]
    %v5545 = vld [vmem:[%s4467 + $0x292] sm:$0xff]
    %v5546 = vld [vmem:[%s4467 + $0x2a2] sm:$0xff]
    %v5547 = vld [vmem:[%s4467 + $0x2aa] sm:$0xff]
    %v5548 = vld [vmem:[%s4467 + $0x2ba] sm:$0xff]
    %v5549 = vld [vmem:[%s4467 + $0x2c2] sm:$0xff]
    %v5550 = vld [vmem:[%s4467 + $0x2d2] sm:$0xff]
    %v5551 = vld [vmem:[%s4467 + $0x2da] sm:$0xff]
    %v5552 = vld [vmem:[%s4467 + $0x2ea] sm:$0xff]
    %v5553 = vld [vmem:[%s4467 + $0x2f2] sm:$0xff]
    %v5554 = vld [vmem:[%s4467 + $0x302] sm:$0xff]
    %v5555 = vld [vmem:[%s4467 + $0x30a] sm:$0xff]
    %v5556 = vld [vmem:[%s4467 + $0x31a] sm:$0xff]
    %v5557 = vld [vmem:[%s4467 + $0x322] sm:$0xff]
    %v5558 = vpack.c.bf16 %v5495, %v5494
    %v5559 = vpack.c.bf16 %v5497, %v5496
    %v5560 = vpack.c.bf16 %v5499, %v5498
    %v5561 = vpack.c.bf16 %v5501, %v5500
    %v5562 = vpack.c.bf16 %v5503, %v5502
    %v5563 = vpack.c.bf16 %v5505, %v5504
    %v5564 = vpack.c.bf16 %v5507, %v5506
    %v5565 = vpack.c.bf16 %v5509, %v5508
    %v5566 = vpack.c.bf16 %v5511, %v5510
    %v5567 = vpack.c.bf16 %v5513, %v5512
    %v5568 = vpack.c.bf16 %v5515, %v5514
    %v5569 = vpack.c.bf16 %v5517, %v5516
    %v5570 = vpack.c.bf16 %v5519, %v5518
    %v5571 = vpack.c.bf16 %v5521, %v5520
    %v5572 = vpack.c.bf16 %v5523, %v5522
    %v5573 = vpack.c.bf16 %v5525, %v5524
    %v5574 = vpack.c.bf16 %v5527, %v5526
    %v5575 = vpack.c.bf16 %v5529, %v5528
    %v5576 = vpack.c.bf16 %v5531, %v5530
    %v5577 = vpack.c.bf16 %v5533, %v5532
    %v5578 = vpack.c.bf16 %v5535, %v5534
    %v5579 = vpack.c.bf16 %v5537, %v5536
    %v5580 = vpack.c.bf16 %v5539, %v5538
    %v5581 = vpack.c.bf16 %v5541, %v5540
    %v5582 = vpack.c.bf16 %v5543, %v5542
    %v5583 = vpack.c.bf16 %v5545, %v5544
    %v5584 = vpack.c.bf16 %v5547, %v5546
    %v5585 = vpack.c.bf16 %v5549, %v5548
    %v5586 = vpack.c.bf16 %v5551, %v5550
    %v5587 = vpack.c.bf16 %v5553, %v5552
    %v5588 = vpack.c.bf16 %v5555, %v5554
    %v5589 = vpack.c.bf16 %v5557, %v5556
    %v5590 = vld [vmem:[%s5 + $0x200] sm:$0xf]
    %v5591 = vld [vmem:[%s5 + $0x204] sm:$0xf]
    %v5592 = vld [vmem:[%s5 + $0x208] sm:$0xf]
    %v5593 = vld [vmem:[%s5 + $0x20c] sm:$0xf]
    %v5594 = vld [vmem:[%s5 + $0x210] sm:$0xf]
    %v5595 = vld [vmem:[%s5 + $0x214] sm:$0xf]
    %v5596 = vld [vmem:[%s5 + $0x218] sm:$0xf]
    %v5597 = vld [vmem:[%s5 + $0x21c] sm:$0xf]
    %v5598 = vld [vmem:[%s5 + $0x220] sm:$0xf]
    %v5599 = vld [vmem:[%s5 + $0x224] sm:$0xf]
    %v5600 = vld [vmem:[%s5 + $0x228] sm:$0xf]
    %v5601 = vld [vmem:[%s5 + $0x22c] sm:$0xf]
    %v5602 = vld [vmem:[%s5 + $0x230] sm:$0xf]
    %v5603 = vld [vmem:[%s5 + $0x234] sm:$0xf]
    %v5604 = vld [vmem:[%s5 + $0x238] sm:$0xf]
    %v5605 = vld [vmem:[%s5 + $0x23c] sm:$0xf]
    %v5622 = vunpack.c.l.b16 %v5590
    %v5623 = vunpack.c.l.b16 %v5591
    %v5624 = vunpack.c.l.b16 %v5592
    %v5625 = vunpack.c.l.b16 %v5593
    %v5626 = vunpack.c.l.b16 %v5594
    %v5627 = vunpack.c.l.b16 %v5595
    %v5628 = vunpack.c.l.b16 %v5596
    %v5629 = vunpack.c.l.b16 %v5597
    %v5630 = vunpack.c.l.b16 %v5598
    %v5631 = vunpack.c.l.b16 %v5599
    %v5632 = vunpack.c.l.b16 %v5600
    %v5633 = vunpack.c.l.b16 %v5601
    %v5634 = vunpack.c.l.b16 %v5602
    %v5635 = vunpack.c.l.b16 %v5603
    %v5636 = vunpack.c.l.b16 %v5604
    %v5637 = vunpack.c.l.b16 %v5605
    %v5638 = vpack.c.b16 %v5623, %v5622
    %v5639 = vpack.c.b16 %v5625, %v5624
    %v5640 = vpack.c.b16 %v5627, %v5626
    %v5641 = vpack.c.b16 %v5629, %v5628
    %v5642 = vpack.c.b16 %v5631, %v5630
    %v5643 = vpack.c.b16 %v5633, %v5632
    %v5644 = vpack.c.b16 %v5635, %v5634
    %v5645 = vpack.c.b16 %v5637, %v5636
    %5654 = vmatprep.subr.bf16.mxu0 0
    %5655 = vmatpush1.bf16.msra.mxu0 %v5638
    %5656 = vmatprep.subr.bf16.mxu0 0
    %5657 = vmatpush1.bf16.msra.mxu0 %v5639
    %5658 = vmatprep.subr.bf16.mxu0 0
    %5659 = vmatpush1.bf16.msra.mxu0 %v5640
    %5660 = vmatprep.subr.bf16.mxu0 0
    %5661 = vmatpush1.bf16.msra.mxu0 %v5641
    %5662 = vmatprep.subr.bf16.mxu0 0
    %5663 = vmatpush1.bf16.msra.mxu0 %v5642
    %5664 = vmatprep.subr.bf16.mxu0 0
    %5665 = vmatpush1.bf16.msra.mxu0 %v5643
    %5666 = vmatprep.subr.bf16.mxu0 0
    %5667 = vmatpush1.bf16.msra.mxu0 %v5644
    %5668 = vmatprep.subr.bf16.mxu0 0
    %5669 = vmatpush1.bf16.msra.mxu0 %v5645
    %5670 = vmatprep.subr.bf16.mxu0 0
    %5671 = vmatpush1.bf16.msra.mxu0 0
    %5672 = vmatprep.subr.bf16.mxu0 0
    %5673 = vmatpush1.bf16.msra.mxu0 0
    %5674 = vmatprep.subr.bf16.mxu0 0
    %5675 = vmatpush1.bf16.msra.mxu0 0
    %5676 = vmatprep.subr.bf16.mxu0 0
    %5677 = vmatpush1.bf16.msra.mxu0 0
    %5678 = vmatprep.subr.bf16.mxu0 0
    %5679 = vmatpush1.bf16.msra.mxu0 0
    %5680 = vmatprep.subr.bf16.mxu0 0
    %5681 = vmatpush1.bf16.msra.mxu0 0
    %5682 = vmatprep.subr.bf16.mxu0 0
    %5683 = vmatpush1.bf16.msra.mxu0 0
    %5684 = vmatprep.subr.bf16.mxu0 0
    %5685 = vmatpush1.bf16.msra.mxu0 0
    %5686 = vmatprep.mubr.bf16.mxu0 0
    %5687 = vmatmul.mubr.bf16.gmra.mrb[0].mxu0 %v5558
    %v5688 = vpop.f32.mrb[0].mxu0
    %v5689 = vadd.f32 0.0, %v5688
    %v5690 = vpop.f32.mrb[0].mxu0
    %v5691 = vpop.f32.mrb[0].mxu0
    %v5692 = vadd.f32 0.0, %v5691
    %v5693 = vpop.f32.mrb[0].mxu0
    %5694 = vmatprep.mubr.bf16.mxu0 0
    %5695 = vmatmul.mubr.bf16.gmra.mrb[0].mxu0 %v5559
    %v5696 = vpop.f32.mrb[0].mxu0
    %v5697 = vadd.f32 0.0, %v5696
    %v5698 = vpop.f32.mrb[0].mxu0
    %v5699 = vpop.f32.mrb[0].mxu0
    %v5700 = vadd.f32 0.0, %v5699
    %v5701 = vpop.f32.mrb[0].mxu0
    %5702 = vmatprep.mubr.bf16.mxu0 0
    %5703 = vmatmul.mubr.bf16.gmra.mrb[0].mxu0 %v5560
    %v5704 = vpop.f32.mrb[0].mxu0
    %v5705 = vadd.f32 0.0, %v5704
    %v5706 = vpop.f32.mrb[0].mxu0
    %v5707 = vpop.f32.mrb[0].mxu0
    %v5708 = vadd.f32 0.0, %v5707
    %v5709 = vpop.f32.mrb[0].mxu0
    %5710 = vmatprep.mubr.bf16.mxu0 0
    %5711 = vmatmul.mubr.bf16.gmra.mrb[0].mxu0 %v5561
    %v5712 = vpop.f32.mrb[0].mxu0
    %v5713 = vadd.f32 0.0, %v5712
    %v5714 = vpop.f32.mrb[0].mxu0
    %v5715 = vpop.f32.mrb[0].mxu0
    %v5716 = vadd.f32 0.0, %v5715
    %v5717 = vpop.f32.mrb[0].mxu0
    %5718 = vmatprep.mubr.bf16.mxu0 0
    %5719 = vmatmul.mubr.bf16.gmra.mrb[0].mxu0 %v5562
    %v5720 = vpop.f32.mrb[0].mxu0
    %v5721 = vadd.f32 0.0, %v5720
    %v5722 = vpop.f32.mrb[0].mxu0
    %v5723 = vpop.f32.mrb[0].mxu0
    %v5724 = vadd.f32 0.0, %v5723
    %v5725 = vpop.f32.mrb[0].mxu0
    %5726 = vmatprep.mubr.bf16.mxu0 0
    %5727 = vmatmul.mubr.bf16.gmra.mrb[0].mxu0 %v5563
    %v5728 = vpop.f32.mrb[0].mxu0
    %v5729 = vadd.f32 0.0, %v5728
    %v5730 = vpop.f32.mrb[0].mxu0
    %v5731 = vpop.f32.mrb[0].mxu0
    %v5732 = vadd.f32 0.0, %v5731
    %v5733 = vpop.f32.mrb[0].mxu0
    %5734 = vmatprep.mubr.bf16.mxu0 0
    %5735 = vmatmul.mubr.bf16.gmra.mrb[0].mxu0 %v5564
    %v5736 = vpop.f32.mrb[0].mxu0
    %v5737 = vadd.f32 0.0, %v5736
    %v5738 = vpop.f32.mrb[0].mxu0
    %v5739 = vpop.f32.mrb[0].mxu0
    %v5740 = vadd.f32 0.0, %v5739
    %v5741 = vpop.f32.mrb[0].mxu0
    %5742 = vmatprep.mubr.bf16.mxu0 0
    %5743 = vmatmul.mubr.bf16.gmra.mrb[0].mxu0 %v5565
    %v5744 = vpop.f32.mrb[0].mxu0
    %v5745 = vadd.f32 0.0, %v5744
    %v5746 = vpop.f32.mrb[0].mxu0
    %v5747 = vpop.f32.mrb[0].mxu0
    %v5748 = vadd.f32 0.0, %v5747
    %v5749 = vpop.f32.mrb[0].mxu0
    %5750 = vmatprep.mubr.bf16.mxu0 0
    %5751 = vmatmul.mubr.bf16.gmra.mrb[0].mxu0 %v5566
    %v5752 = vpop.f32.mrb[0].mxu0
    %v5753 = vadd.f32 0.0, %v5752
    %v5754 = vpop.f32.mrb[0].mxu0
    %v5755 = vpop.f32.mrb[0].mxu0
    %v5756 = vadd.f32 0.0, %v5755
    %v5757 = vpop.f32.mrb[0].mxu0
    %5758 = vmatprep.mubr.bf16.mxu0 0
    %5759 = vmatmul.mubr.bf16.gmra.mrb[0].mxu0 %v5567
    %v5760 = vpop.f32.mrb[0].mxu0
    %v5761 = vadd.f32 0.0, %v5760
    %v5762 = vpop.f32.mrb[0].mxu0
    %v5763 = vpop.f32.mrb[0].mxu0
    %v5764 = vadd.f32 0.0, %v5763
    %v5765 = vpop.f32.mrb[0].mxu0
    %5766 = vmatprep.mubr.bf16.mxu0 0
    %5767 = vmatmul.mubr.bf16.gmra.mrb[0].mxu0 %v5568
    %v5768 = vpop.f32.mrb[0].mxu0
    %v5769 = vadd.f32 0.0, %v5768
    %v5770 = vpop.f32.mrb[0].mxu0
    %v5771 = vpop.f32.mrb[0].mxu0
    %v5772 = vadd.f32 0.0, %v5771
    %v5773 = vpop.f32.mrb[0].mxu0
    %5774 = vmatprep.mubr.bf16.mxu0 0
    %5775 = vmatmul.mubr.bf16.gmra.mrb[0].mxu0 %v5569
    %v5776 = vpop.f32.mrb[0].mxu0
    %v5777 = vadd.f32 0.0, %v5776
    %v5778 = vpop.f32.mrb[0].mxu0
    %v5779 = vpop.f32.mrb[0].mxu0
    %v5780 = vadd.f32 0.0, %v5779
    %v5781 = vpop.f32.mrb[0].mxu0
    %5782 = vmatprep.mubr.bf16.mxu0 0
    %5783 = vmatmul.mubr.bf16.gmra.mrb[0].mxu0 %v5570
    %v5784 = vpop.f32.mrb[0].mxu0
    %v5785 = vadd.f32 0.0, %v5784
    %v5786 = vpop.f32.mrb[0].mxu0
    %v5787 = vpop.f32.mrb[0].mxu0
    %v5788 = vadd.f32 0.0, %v5787
    %v5789 = vpop.f32.mrb[0].mxu0
    %5790 = vmatprep.mubr.bf16.mxu0 0
    %5791 = vmatmul.mubr.bf16.gmra.mrb[0].mxu0 %v5571
    %v5792 = vpop.f32.mrb[0].mxu0
    %v5793 = vadd.f32 0.0, %v5792
    %v5794 = vpop.f32.mrb[0].mxu0
    %v5795 = vpop.f32.mrb[0].mxu0
    %v5796 = vadd.f32 0.0, %v5795
    %v5797 = vpop.f32.mrb[0].mxu0
    %5798 = vmatprep.mubr.bf16.mxu0 0
    %5799 = vmatmul.mubr.bf16.gmra.mrb[0].mxu0 %v5572
    %v5800 = vpop.f32.mrb[0].mxu0
    %v5801 = vadd.f32 0.0, %v5800
    %v5802 = vpop.f32.mrb[0].mxu0
    %v5803 = vpop.f32.mrb[0].mxu0
    %v5804 = vadd.f32 0.0, %v5803
    %v5805 = vpop.f32.mrb[0].mxu0
    %5806 = vmatprep.mubr.bf16.mxu0 0
    %5807 = vmatmul.mubr.bf16.gmra.mrb[0].mxu0 %v5573
    %v5808 = vpop.f32.mrb[0].mxu0
    %v5809 = vadd.f32 0.0, %v5808
    %v5810 = vpop.f32.mrb[0].mxu0
    %v5811 = vpop.f32.mrb[0].mxu0
    %v5812 = vadd.f32 0.0, %v5811
    %v5813 = vpop.f32.mrb[0].mxu0
    %5814 = vmatprep.mubr.bf16.mxu0 0
    %5815 = vmatmul.mubr.bf16.gmra.mrb[0].mxu0 %v5574
    %v5816 = vpop.f32.mrb[0].mxu0
    %v5817 = vadd.f32 0.0, %v5816
    %v5818 = vpop.f32.mrb[0].mxu0
    %v5819 = vpop.f32.mrb[0].mxu0
    %v5820 = vadd.f32 0.0, %v5819
    %v5821 = vpop.f32.mrb[0].mxu0
    %5822 = vmatprep.mubr.bf16.mxu0 0
    %5823 = vmatmul.mubr.bf16.gmra.mrb[0].mxu0 %v5575
    %v5824 = vpop.f32.mrb[0].mxu0
    %v5825 = vadd.f32 0.0, %v5824
    %v5826 = vpop.f32.mrb[0].mxu0
    %v5827 = vpop.f32.mrb[0].mxu0
    %v5828 = vadd.f32 0.0, %v5827
    %v5829 = vpop.f32.mrb[0].mxu0
    %5830 = vmatprep.mubr.bf16.mxu0 0
    %5831 = vmatmul.mubr.bf16.gmra.mrb[0].mxu0 %v5576
    %v5832 = vpop.f32.mrb[0].mxu0
    %v5833 = vadd.f32 0.0, %v5832
    %v5834 = vpop.f32.mrb[0].mxu0
    %v5835 = vpop.f32.mrb[0].mxu0
    %v5836 = vadd.f32 0.0, %v5835
    %v5837 = vpop.f32.mrb[0].mxu0
    %5838 = vmatprep.mubr.bf16.mxu0 0
    %5839 = vmatmul.mubr.bf16.gmra.mrb[0].mxu0 %v5577
    %v5840 = vpop.f32.mrb[0].mxu0
    %v5841 = vadd.f32 0.0, %v5840
    %v5842 = vpop.f32.mrb[0].mxu0
    %v5843 = vpop.f32.mrb[0].mxu0
    %v5844 = vadd.f32 0.0, %v5843
    %v5845 = vpop.f32.mrb[0].mxu0
    %5846 = vmatprep.mubr.bf16.mxu0 0
    %5847 = vmatmul.mubr.bf16.gmra.mrb[0].mxu0 %v5578
    %v5848 = vpop.f32.mrb[0].mxu0
    %v5849 = vadd.f32 0.0, %v5848
    %v5850 = vpop.f32.mrb[0].mxu0
    %v5851 = vpop.f32.mrb[0].mxu0
    %v5852 = vadd.f32 0.0, %v5851
    %v5853 = vpop.f32.mrb[0].mxu0
    %5854 = vmatprep.mubr.bf16.mxu0 0
    %5855 = vmatmul.mubr.bf16.gmra.mrb[0].mxu0 %v5579
    %v5856 = vpop.f32.mrb[0].mxu0
    %v5857 = vadd.f32 0.0, %v5856
    %v5858 = vpop.f32.mrb[0].mxu0
    %v5859 = vpop.f32.mrb[0].mxu0
    %v5860 = vadd.f32 0.0, %v5859
    %v5861 = vpop.f32.mrb[0].mxu0
    %5862 = vmatprep.mubr.bf16.mxu0 0
    %5863 = vmatmul.mubr.bf16.gmra.mrb[0].mxu0 %v5580
    %v5864 = vpop.f32.mrb[0].mxu0
    %v5865 = vadd.f32 0.0, %v5864
    %v5866 = vpop.f32.mrb[0].mxu0
    %v5867 = vpop.f32.mrb[0].mxu0
    %v5868 = vadd.f32 0.0, %v5867
    %v5869 = vpop.f32.mrb[0].mxu0
    %5870 = vmatprep.mubr.bf16.mxu0 0
    %5871 = vmatmul.mubr.bf16.gmra.mrb[0].mxu0 %v5581
    %v5872 = vpop.f32.mrb[0].mxu0
    %v5873 = vadd.f32 0.0, %v5872
    %v5874 = vpop.f32.mrb[0].mxu0
    %v5875 = vpop.f32.mrb[0].mxu0
    %v5876 = vadd.f32 0.0, %v5875
    %v5877 = vpop.f32.mrb[0].mxu0
    %5878 = vmatprep.mubr.bf16.mxu0 0
    %5879 = vmatmul.mubr.bf16.gmra.mrb[0].mxu0 %v5582
    %v5880 = vpop.f32.mrb[0].mxu0
    %v5881 = vadd.f32 0.0, %v5880
    %v5882 = vpop.f32.mrb[0].mxu0
    %v5883 = vpop.f32.mrb[0].mxu0
    %v5884 = vadd.f32 0.0, %v5883
    %v5885 = vpop.f32.mrb[0].mxu0
    %5886 = vmatprep.mubr.bf16.mxu0 0
    %5887 = vmatmul.mubr.bf16.gmra.mrb[0].mxu0 %v5583
    %v5888 = vpop.f32.mrb[0].mxu0
    %v5889 = vadd.f32 0.0, %v5888
    %v5890 = vpop.f32.mrb[0].mxu0
    %v5891 = vpop.f32.mrb[0].mxu0
    %v5892 = vadd.f32 0.0, %v5891
    %v5893 = vpop.f32.mrb[0].mxu0
    %5894 = vmatprep.mubr.bf16.mxu0 0
    %5895 = vmatmul.mubr.bf16.gmra.mrb[0].mxu0 %v5584
    %v5896 = vpop.f32.mrb[0].mxu0
    %v5897 = vadd.f32 0.0, %v5896
    %v5898 = vpop.f32.mrb[0].mxu0
    %v5899 = vpop.f32.mrb[0].mxu0
    %v5900 = vadd.f32 0.0, %v5899
    %v5901 = vpop.f32.mrb[0].mxu0
    %5902 = vmatprep.mubr.bf16.mxu0 0
    %5903 = vmatmul.mubr.bf16.gmra.mrb[0].mxu0 %v5585
    %v5904 = vpop.f32.mrb[0].mxu0
    %v5905 = vadd.f32 0.0, %v5904
    %v5906 = vpop.f32.mrb[0].mxu0
    %v5907 = vpop.f32.mrb[0].mxu0
    %v5908 = vadd.f32 0.0, %v5907
    %v5909 = vpop.f32.mrb[0].mxu0
    %5910 = vmatprep.mubr.bf16.mxu0 0
    %5911 = vmatmul.mubr.bf16.gmra.mrb[0].mxu0 %v5586
    %v5912 = vpop.f32.mrb[0].mxu0
    %v5913 = vadd.f32 0.0, %v5912
    %v5914 = vpop.f32.mrb[0].mxu0
    %v5915 = vpop.f32.mrb[0].mxu0
    %v5916 = vadd.f32 0.0, %v5915
    %v5917 = vpop.f32.mrb[0].mxu0
    %5918 = vmatprep.mubr.bf16.mxu0 0
    %5919 = vmatmul.mubr.bf16.gmra.mrb[0].mxu0 %v5587
    %v5920 = vpop.f32.mrb[0].mxu0
    %v5921 = vadd.f32 0.0, %v5920
    %v5922 = vpop.f32.mrb[0].mxu0
    %v5923 = vpop.f32.mrb[0].mxu0
    %v5924 = vadd.f32 0.0, %v5923
    %v5925 = vpop.f32.mrb[0].mxu0
    %5926 = vmatprep.mubr.bf16.mxu0 0
    %5927 = vmatmul.mubr.bf16.gmra.mrb[0].mxu0 %v5588
    %v5928 = vpop.f32.mrb[0].mxu0
    %v5929 = vadd.f32 0.0, %v5928
    %v5930 = vpop.f32.mrb[0].mxu0
    %v5931 = vpop.f32.mrb[0].mxu0
    %v5932 = vadd.f32 0.0, %v5931
    %v5933 = vpop.f32.mrb[0].mxu0
    %5934 = vmatprep.mubr.bf16.mxu0 0
    %5935 = vmatmul.mubr.bf16.gmra.mrb[0].mxu0 %v5589
    %v5936 = vpop.f32.mrb[0].mxu0
    %v5937 = vadd.f32 0.0, %v5936
    %v5938 = vpop.f32.mrb[0].mxu0
    %v5939 = vpop.f32.mrb[0].mxu0
    %v5940 = vadd.f32 0.0, %v5939
    %v5941 = vpop.f32.mrb[0].mxu0
    %5942 = vdwg.mxu0
    %v5943 = vadd.f32 %v5430, %v5689
    %v5944 = vadd.f32 %v5431, %v5692
    %v5945 = vadd.f32 %v5432, %v5697
    %v5946 = vadd.f32 %v5433, %v5700
    %v5947 = vadd.f32 %v5434, %v5705
    %v5948 = vadd.f32 %v5435, %v5708
    %v5949 = vadd.f32 %v5436, %v5713
    %v5950 = vadd.f32 %v5437, %v5716
    %v5951 = vadd.f32 %v5438, %v5721
    %v5952 = vadd.f32 %v5439, %v5724
    %v5953 = vadd.f32 %v5440, %v5729
    %v5954 = vadd.f32 %v5441, %v5732
    %v5955 = vadd.f32 %v5442, %v5737
    %v5956 = vadd.f32 %v5443, %v5740
    %v5957 = vadd.f32 %v5444, %v5745
    %v5958 = vadd.f32 %v5445, %v5748
    %v5959 = vadd.f32 %v5446, %v5753
    %v5960 = vadd.f32 %v5447, %v5756
    %v5961 = vadd.f32 %v5448, %v5761
    %v5962 = vadd.f32 %v5449, %v5764
    %v5963 = vadd.f32 %v5450, %v5769
    %v5964 = vadd.f32 %v5451, %v5772
    %v5965 = vadd.f32 %v5452, %v5777
    %v5966 = vadd.f32 %v5453, %v5780
    %v5967 = vadd.f32 %v5454, %v5785
    %v5968 = vadd.f32 %v5455, %v5788
    %v5969 = vadd.f32 %v5456, %v5793
    %v5970 = vadd.f32 %v5457, %v5796
    %v5971 = vadd.f32 %v5458, %v5801
    %v5972 = vadd.f32 %v5459, %v5804
    %v5973 = vadd.f32 %v5460, %v5809
    %v5974 = vadd.f32 %v5461, %v5812
    %v5975 = vadd.f32 %v5462, %v5817
    %v5976 = vadd.f32 %v5463, %v5820
    %v5977 = vadd.f32 %v5464, %v5825
    %v5978 = vadd.f32 %v5465, %v5828
    %v5979 = vadd.f32 %v5466, %v5833
    %v5980 = vadd.f32 %v5467, %v5836
    %v5981 = vadd.f32 %v5468, %v5841
    %v5982 = vadd.f32 %v5469, %v5844
    %v5983 = vadd.f32 %v5470, %v5849
    %v5984 = vadd.f32 %v5471, %v5852
    %v5985 = vadd.f32 %v5472, %v5857
    %v5986 = vadd.f32 %v5473, %v5860
    %v5987 = vadd.f32 %v5474, %v5865
    %v5988 = vadd.f32 %v5475, %v5868
    %v5989 = vadd.f32 %v5476, %v5873
    %v5990 = vadd.f32 %v5477, %v5876
    %v5991 = vadd.f32 %v5478, %v5881
    %v5992 = vadd.f32 %v5479, %v5884
    %v5993 = vadd.f32 %v5480, %v5889
    %v5994 = vadd.f32 %v5481, %v5892
    %v5995 = vadd.f32 %v5482, %v5897
    %v5996 = vadd.f32 %v5483, %v5900
    %v5997 = vadd.f32 %v5484, %v5905
    %v5998 = vadd.f32 %v5485, %v5908
    %v5999 = vadd.f32 %v5486, %v5913
    %v6000 = vadd.f32 %v5487, %v5916
    %v6001 = vadd.f32 %v5488, %v5921
    %v6002 = vadd.f32 %v5489, %v5924
    %v6003 = vadd.f32 %v5490, %v5929
    %v6004 = vadd.f32 %v5491, %v5932
    %v6005 = vadd.f32 %v5492, %v5937
    %v6006 = vadd.f32 %v5493, %v5940
    %v6007 = vld [vmem:[%s6] sm:$0x1]
    %v6008 = vld [vmem:[%s7] sm:$0x1]
    %v6009 = vld [vmem:[%s8] sm:$0x1]
    %v6011 = vlaneseq
    %v6012 = vshrl.u32 %v6011, 7
    %v6013 = vsub.s32 0, %v6012
    %v6014 = vrot.slane %v6007, %v6013
    %v6016 = vadd.f32 %v5943, %v6014
    %v6017 = vadd.f32 %v5944, %v6014
    %v6018 = vadd.f32 %v5945, %v6014
    %v6019 = vadd.f32 %v5946, %v6014
    %v6020 = vadd.f32 %v5947, %v6014
    %v6021 = vadd.f32 %v5948, %v6014
    %v6022 = vadd.f32 %v5949, %v6014
    %v6023 = vadd.f32 %v5950, %v6014
    %v6024 = vadd.f32 %v5951, %v6014
    %v6025 = vadd.f32 %v5952, %v6014
    %v6026 = vadd.f32 %v5953, %v6014
    %v6027 = vadd.f32 %v5954, %v6014
    %v6028 = vadd.f32 %v5955, %v6014
    %v6029 = vadd.f32 %v5956, %v6014
    %v6030 = vadd.f32 %v5957, %v6014
    %v6031 = vadd.f32 %v5958, %v6014
    %v6032 = vadd.f32 %v5959, %v6014
    %v6033 = vadd.f32 %v5960, %v6014
    %v6034 = vadd.f32 %v5961, %v6014
    %v6035 = vadd.f32 %v5962, %v6014
    %v6036 = vadd.f32 %v5963, %v6014
    %v6037 = vadd.f32 %v5964, %v6014
    %v6038 = vadd.f32 %v5965, %v6014
    %v6039 = vadd.f32 %v5966, %v6014
    %v6040 = vadd.f32 %v5967, %v6014
    %v6041 = vadd.f32 %v5968, %v6014
    %v6042 = vadd.f32 %v5969, %v6014
    %v6043 = vadd.f32 %v5970, %v6014
    %v6044 = vadd.f32 %v5971, %v6014
    %v6045 = vadd.f32 %v5972, %v6014
    %v6046 = vadd.f32 %v5973, %v6014
    %v6047 = vadd.f32 %v5974, %v6014
    %v6048 = vadd.f32 %v5975, %v6014
    %v6049 = vadd.f32 %v5976, %v6014
    %v6050 = vadd.f32 %v5977, %v6014
    %v6051 = vadd.f32 %v5978, %v6014
    %v6052 = vadd.f32 %v5979, %v6014
    %v6053 = vadd.f32 %v5980, %v6014
    %v6054 = vadd.f32 %v5981, %v6014
    %v6055 = vadd.f32 %v5982, %v6014
    %v6056 = vadd.f32 %v5983, %v6014
    %v6057 = vadd.f32 %v5984, %v6014
    %v6058 = vadd.f32 %v5985, %v6014
    %v6059 = vadd.f32 %v5986, %v6014
    %v6060 = vadd.f32 %v5987, %v6014
    %v6061 = vadd.f32 %v5988, %v6014
    %v6062 = vadd.f32 %v5989, %v6014
    %v6063 = vadd.f32 %v5990, %v6014
    %v6064 = vadd.f32 %v5991, %v6014
    %v6065 = vadd.f32 %v5992, %v6014
    %v6066 = vadd.f32 %v5993, %v6014
    %v6067 = vadd.f32 %v5994, %v6014
    %v6068 = vadd.f32 %v5995, %v6014
    %v6069 = vadd.f32 %v5996, %v6014
    %v6070 = vadd.f32 %v5997, %v6014
    %v6071 = vadd.f32 %v5998, %v6014
    %v6072 = vadd.f32 %v5999, %v6014
    %v6073 = vadd.f32 %v6000, %v6014
    %v6074 = vadd.f32 %v6001, %v6014
    %v6075 = vadd.f32 %v6002, %v6014
    %v6076 = vadd.f32 %v6003, %v6014
    %v6077 = vadd.f32 %v6004, %v6014
    %v6078 = vadd.f32 %v6005, %v6014
    %v6079 = vadd.f32 %v6006, %v6014
    %v6080 = vmax.f32 %v6016, 0.0
    %v6081 = vmax.f32 %v6017, 0.0
    %v6082 = vmax.f32 %v6018, 0.0
    %v6083 = vmax.f32 %v6019, 0.0
    %v6084 = vmax.f32 %v6020, 0.0
    %v6085 = vmax.f32 %v6021, 0.0
    %v6086 = vmax.f32 %v6022, 0.0
    %v6087 = vmax.f32 %v6023, 0.0
    %v6088 = vmax.f32 %v6024, 0.0
    %v6089 = vmax.f32 %v6025, 0.0
    %v6090 = vmax.f32 %v6026, 0.0
    %v6091 = vmax.f32 %v6027, 0.0
    %v6092 = vmax.f32 %v6028, 0.0
    %v6093 = vmax.f32 %v6029, 0.0
    %v6094 = vmax.f32 %v6030, 0.0
    %v6095 = vmax.f32 %v6031, 0.0
    %v6096 = vmax.f32 %v6032, 0.0
    %v6097 = vmax.f32 %v6033, 0.0
    %v6098 = vmax.f32 %v6034, 0.0
    %v6099 = vmax.f32 %v6035, 0.0
    %v6100 = vmax.f32 %v6036, 0.0
    %v6101 = vmax.f32 %v6037, 0.0
    %v6102 = vmax.f32 %v6038, 0.0
    %v6103 = vmax.f32 %v6039, 0.0
    %v6104 = vmax.f32 %v6040, 0.0
    %v6105 = vmax.f32 %v6041, 0.0
    %v6106 = vmax.f32 %v6042, 0.0
    %v6107 = vmax.f32 %v6043, 0.0
    %v6108 = vmax.f32 %v6044, 0.0
    %v6109 = vmax.f32 %v6045, 0.0
    %v6110 = vmax.f32 %v6046, 0.0
    %v6111 = vmax.f32 %v6047, 0.0
    %v6112 = vmax.f32 %v6048, 0.0
    %v6113 = vmax.f32 %v6049, 0.0
    %v6114 = vmax.f32 %v6050, 0.0
    %v6115 = vmax.f32 %v6051, 0.0
    %v6116 = vmax.f32 %v6052, 0.0
    %v6117 = vmax.f32 %v6053, 0.0
    %v6118 = vmax.f32 %v6054, 0.0
    %v6119 = vmax.f32 %v6055, 0.0
    %v6120 = vmax.f32 %v6056, 0.0
    %v6121 = vmax.f32 %v6057, 0.0
    %v6122 = vmax.f32 %v6058, 0.0
    %v6123 = vmax.f32 %v6059, 0.0
    %v6124 = vmax.f32 %v6060, 0.0
    %v6125 = vmax.f32 %v6061, 0.0
    %v6126 = vmax.f32 %v6062, 0.0
    %v6127 = vmax.f32 %v6063, 0.0
    %v6128 = vmax.f32 %v6064, 0.0
    %v6129 = vmax.f32 %v6065, 0.0
    %v6130 = vmax.f32 %v6066, 0.0
    %v6131 = vmax.f32 %v6067, 0.0
    %v6132 = vmax.f32 %v6068, 0.0
    %v6133 = vmax.f32 %v6069, 0.0
    %v6134 = vmax.f32 %v6070, 0.0
    %v6135 = vmax.f32 %v6071, 0.0
    %v6136 = vmax.f32 %v6072, 0.0
    %v6137 = vmax.f32 %v6073, 0.0
    %v6138 = vmax.f32 %v6074, 0.0
    %v6139 = vmax.f32 %v6075, 0.0
    %v6140 = vmax.f32 %v6076, 0.0
    %v6141 = vmax.f32 %v6077, 0.0
    %v6142 = vmax.f32 %v6078, 0.0
    %v6143 = vmax.f32 %v6079, 0.0
    %v6144 = vadd.f32 %v6080, %v6081
    %v6145 = vadd.f32 %v6144, %v6082
    %v6146 = vadd.f32 %v6145, %v6083
    %v6147 = vadd.f32 %v6146, %v6084
    %v6148 = vadd.f32 %v6147, %v6085
    %v6149 = vadd.f32 %v6148, %v6086
    %v6150 = vadd.f32 %v6149, %v6087
    %v6151 = vadd.f32 %v6150, %v6088
    %v6152 = vadd.f32 %v6151, %v6089
    %v6153 = vadd.f32 %v6152, %v6090
    %v6154 = vadd.f32 %v6153, %v6091
    %v6155 = vadd.f32 %v6154, %v6092
    %v6156 = vadd.f32 %v6155, %v6093
    %v6157 = vadd.f32 %v6156, %v6094
    %v6158 = vadd.f32 %v6157, %v6095
    %v6159 = vadd.f32 %v6158, %v6096
    %v6160 = vadd.f32 %v6159, %v6097
    %v6161 = vadd.f32 %v6160, %v6098
    %v6162 = vadd.f32 %v6161, %v6099
    %v6163 = vadd.f32 %v6162, %v6100
    %v6164 = vadd.f32 %v6163, %v6101
    %v6165 = vadd.f32 %v6164, %v6102
    %v6166 = vadd.f32 %v6165, %v6103
    %v6167 = vadd.f32 %v6166, %v6104
    %v6168 = vadd.f32 %v6167, %v6105
    %v6169 = vadd.f32 %v6168, %v6106
    %v6170 = vadd.f32 %v6169, %v6107
    %v6171 = vadd.f32 %v6170, %v6108
    %v6172 = vadd.f32 %v6171, %v6109
    %v6173 = vadd.f32 %v6172, %v6110
    %v6174 = vadd.f32 %v6173, %v6111
    %v6175 = vadd.f32 %v6174, %v6112
    %v6176 = vadd.f32 %v6175, %v6113
    %v6177 = vadd.f32 %v6176, %v6114
    %v6178 = vadd.f32 %v6177, %v6115
    %v6179 = vadd.f32 %v6178, %v6116
    %v6180 = vadd.f32 %v6179, %v6117
    %v6181 = vadd.f32 %v6180, %v6118
    %v6182 = vadd.f32 %v6181, %v6119
    %v6183 = vadd.f32 %v6182, %v6120
    %v6184 = vadd.f32 %v6183, %v6121
    %v6185 = vadd.f32 %v6184, %v6122
    %v6186 = vadd.f32 %v6185, %v6123
    %v6187 = vadd.f32 %v6186, %v6124
    %v6188 = vadd.f32 %v6187, %v6125
    %v6189 = vadd.f32 %v6188, %v6126
    %v6190 = vadd.f32 %v6189, %v6127
    %v6191 = vadd.f32 %v6190, %v6128
    %v6192 = vadd.f32 %v6191, %v6129
    %v6193 = vadd.f32 %v6192, %v6130
    %v6194 = vadd.f32 %v6193, %v6131
    %v6195 = vadd.f32 %v6194, %v6132
    %v6196 = vadd.f32 %v6195, %v6133
    %v6197 = vadd.f32 %v6196, %v6134
    %v6198 = vadd.f32 %v6197, %v6135
    %v6199 = vadd.f32 %v6198, %v6136
    %v6200 = vadd.f32 %v6199, %v6137
    %v6201 = vadd.f32 %v6200, %v6138
    %v6202 = vadd.f32 %v6201, %v6139
    %v6203 = vadd.f32 %v6202, %v6140
    %v6204 = vadd.f32 %v6203, %v6141
    %v6205 = vadd.f32 %v6204, %v6142
    %v6206 = vadd.f32 %v6205, %v6143
    %v6207 = vrot.slane %v6206, 4
    %v6208 = vadd.f32 %v6206, %v6207
    %v6209 = vrot.slane %v6208, 2
    %v6210 = vadd.f32 %v6208, %v6209
    %v6211 = vrot.slane %v6210, 1
    %v6212 = vadd.f32 %v6210, %v6211
    %v6213 = vmul.f32 %v6212, 0.001953125
    %v6214 = vmul.f32 %v6080, %v6080
    %v6215 = vmul.f32 %v6081, %v6081
    %v6216 = vmul.f32 %v6082, %v6082
    %v6217 = vmul.f32 %v6083, %v6083
    %v6218 = vmul.f32 %v6084, %v6084
    %v6219 = vmul.f32 %v6085, %v6085
    %v6220 = vmul.f32 %v6086, %v6086
    %v6221 = vmul.f32 %v6087, %v6087
    %v6222 = vmul.f32 %v6088, %v6088
    %v6223 = vmul.f32 %v6089, %v6089
    %v6224 = vmul.f32 %v6090, %v6090
    %v6225 = vmul.f32 %v6091, %v6091
    %v6226 = vmul.f32 %v6092, %v6092
    %v6227 = vmul.f32 %v6093, %v6093
    %v6228 = vmul.f32 %v6094, %v6094
    %v6229 = vmul.f32 %v6095, %v6095
    %v6230 = vmul.f32 %v6096, %v6096
    %v6231 = vmul.f32 %v6097, %v6097
    %v6232 = vmul.f32 %v6098, %v6098
    %v6233 = vmul.f32 %v6099, %v6099
    %v6234 = vmul.f32 %v6100, %v6100
    %v6235 = vmul.f32 %v6101, %v6101
    %v6236 = vmul.f32 %v6102, %v6102
    %v6237 = vmul.f32 %v6103, %v6103
    %v6238 = vmul.f32 %v6104, %v6104
    %v6239 = vmul.f32 %v6105, %v6105
    %v6240 = vmul.f32 %v6106, %v6106
    %v6241 = vmul.f32 %v6107, %v6107
    %v6242 = vmul.f32 %v6108, %v6108
    %v6243 = vmul.f32 %v6109, %v6109
    %v6244 = vmul.f32 %v6110, %v6110
    %v6245 = vmul.f32 %v6111, %v6111
    %v6246 = vmul.f32 %v6112, %v6112
    %v6247 = vmul.f32 %v6113, %v6113
    %v6248 = vmul.f32 %v6114, %v6114
    %v6249 = vmul.f32 %v6115, %v6115
    %v6250 = vmul.f32 %v6116, %v6116
    %v6251 = vmul.f32 %v6117, %v6117
    %v6252 = vmul.f32 %v6118, %v6118
    %v6253 = vmul.f32 %v6119, %v6119
    %v6254 = vmul.f32 %v6120, %v6120
    %v6255 = vmul.f32 %v6121, %v6121
    %v6256 = vmul.f32 %v6122, %v6122
    %v6257 = vmul.f32 %v6123, %v6123
    %v6258 = vmul.f32 %v6124, %v6124
    %v6259 = vmul.f32 %v6125, %v6125
    %v6260 = vmul.f32 %v6126, %v6126
    %v6261 = vmul.f32 %v6127, %v6127
    %v6262 = vmul.f32 %v6128, %v6128
    %v6263 = vmul.f32 %v6129, %v6129
    %v6264 = vmul.f32 %v6130, %v6130
    %v6265 = vmul.f32 %v6131, %v6131
    %v6266 = vmul.f32 %v6132, %v6132
    %v6267 = vmul.f32 %v6133, %v6133
    %v6268 = vmul.f32 %v6134, %v6134
    %v6269 = vmul.f32 %v6135, %v6135
    %v6270 = vmul.f32 %v6136, %v6136
    %v6271 = vmul.f32 %v6137, %v6137
    %v6272 = vmul.f32 %v6138, %v6138
    %v6273 = vmul.f32 %v6139, %v6139
    %v6274 = vmul.f32 %v6140, %v6140
    %v6275 = vmul.f32 %v6141, %v6141
    %v6276 = vmul.f32 %v6142, %v6142
    %v6277 = vmul.f32 %v6143, %v6143
    %v6278 = vadd.f32 %v6214, %v6215
    %v6279 = vadd.f32 %v6278, %v6216
    %v6280 = vadd.f32 %v6279, %v6217
    %v6281 = vadd.f32 %v6280, %v6218
    %v6282 = vadd.f32 %v6281, %v6219
    %v6283 = vadd.f32 %v6282, %v6220
    %v6284 = vadd.f32 %v6283, %v6221
    %v6285 = vadd.f32 %v6284, %v6222
    %v6286 = vadd.f32 %v6285, %v6223
    %v6287 = vadd.f32 %v6286, %v6224
    %v6288 = vadd.f32 %v6287, %v6225
    %v6289 = vadd.f32 %v6288, %v6226
    %v6290 = vadd.f32 %v6289, %v6227
    %v6291 = vadd.f32 %v6290, %v6228
    %v6292 = vadd.f32 %v6291, %v6229
    %v6293 = vadd.f32 %v6292, %v6230
    %v6294 = vadd.f32 %v6293, %v6231
    %v6295 = vadd.f32 %v6294, %v6232
    %v6296 = vadd.f32 %v6295, %v6233
    %v6297 = vadd.f32 %v6296, %v6234
    %v6298 = vadd.f32 %v6297, %v6235
    %v6299 = vadd.f32 %v6298, %v6236
    %v6300 = vadd.f32 %v6299, %v6237
    %v6301 = vadd.f32 %v6300, %v6238
    %v6302 = vadd.f32 %v6301, %v6239
    %v6303 = vadd.f32 %v6302, %v6240
    %v6304 = vadd.f32 %v6303, %v6241
    %v6305 = vadd.f32 %v6304, %v6242
    %v6306 = vadd.f32 %v6305, %v6243
    %v6307 = vadd.f32 %v6306, %v6244
    %v6308 = vadd.f32 %v6307, %v6245
    %v6309 = vadd.f32 %v6308, %v6246
    %v6310 = vadd.f32 %v6309, %v6247
    %v6311 = vadd.f32 %v6310, %v6248
    %v6312 = vadd.f32 %v6311, %v6249
    %v6313 = vadd.f32 %v6312, %v6250
    %v6314 = vadd.f32 %v6313, %v6251
    %v6315 = vadd.f32 %v6314, %v6252
    %v6316 = vadd.f32 %v6315, %v6253
    %v6317 = vadd.f32 %v6316, %v6254
    %v6318 = vadd.f32 %v6317, %v6255
    %v6319 = vadd.f32 %v6318, %v6256
    %v6320 = vadd.f32 %v6319, %v6257
    %v6321 = vadd.f32 %v6320, %v6258
    %v6322 = vadd.f32 %v6321, %v6259
    %v6323 = vadd.f32 %v6322, %v6260
    %v6324 = vadd.f32 %v6323, %v6261
    %v6325 = vadd.f32 %v6324, %v6262
    %v6326 = vadd.f32 %v6325, %v6263
    %v6327 = vadd.f32 %v6326, %v6264
    %v6328 = vadd.f32 %v6327, %v6265
    %v6329 = vadd.f32 %v6328, %v6266
    %v6330 = vadd.f32 %v6329, %v6267
    %v6331 = vadd.f32 %v6330, %v6268
    %v6332 = vadd.f32 %v6331, %v6269
    %v6333 = vadd.f32 %v6332, %v6270
    %v6334 = vadd.f32 %v6333, %v6271
    %v6335 = vadd.f32 %v6334, %v6272
    %v6336 = vadd.f32 %v6335, %v6273
    %v6337 = vadd.f32 %v6336, %v6274
    %v6338 = vadd.f32 %v6337, %v6275
    %v6339 = vadd.f32 %v6338, %v6276
    %v6340 = vadd.f32 %v6339, %v6277
    %v6341 = vrot.slane %v6340, 4
    %v6342 = vadd.f32 %v6340, %v6341
    %v6343 = vrot.slane %v6342, 2
    %v6344 = vadd.f32 %v6342, %v6343
    %v6345 = vrot.slane %v6344, 1
    %v6346 = vadd.f32 %v6344, %v6345
    %v6347 = vmul.f32 %v6346, 0.001953125
    %v6348 = vmul.f32 %v6213, %v6213
    %v6349 = vsub.f32 %v6347, %v6348
    %v6350 = vmax.f32 %v6349, 0.0
    %v6351 = vadd.f32 %v6350, 1e-05
    %v6352 = vrsqrt.pop %v6351
    %v6353 = vmul.f32 %v6008, %v6352
    %v6355 = vlaneseq
    %v6356 = vshrl.u32 %v6355, 7
    %v6357 = vsub.s32 0, %v6356
    %v6358 = vrot.slane %v6353, %v6357
    %v6360 = vmul.f32 %v6080, %v6358
    %v6361 = vmul.f32 %v6081, %v6358
    %v6362 = vmul.f32 %v6082, %v6358
    %v6363 = vmul.f32 %v6083, %v6358
    %v6364 = vmul.f32 %v6084, %v6358
    %v6365 = vmul.f32 %v6085, %v6358
    %v6366 = vmul.f32 %v6086, %v6358
    %v6367 = vmul.f32 %v6087, %v6358
    %v6368 = vmul.f32 %v6088, %v6358
    %v6369 = vmul.f32 %v6089, %v6358
    %v6370 = vmul.f32 %v6090, %v6358
    %v6371 = vmul.f32 %v6091, %v6358
    %v6372 = vmul.f32 %v6092, %v6358
    %v6373 = vmul.f32 %v6093, %v6358
    %v6374 = vmul.f32 %v6094, %v6358
    %v6375 = vmul.f32 %v6095, %v6358
    %v6376 = vmul.f32 %v6096, %v6358
    %v6377 = vmul.f32 %v6097, %v6358
    %v6378 = vmul.f32 %v6098, %v6358
    %v6379 = vmul.f32 %v6099, %v6358
    %v6380 = vmul.f32 %v6100, %v6358
    %v6381 = vmul.f32 %v6101, %v6358
    %v6382 = vmul.f32 %v6102, %v6358
    %v6383 = vmul.f32 %v6103, %v6358
    %v6384 = vmul.f32 %v6104, %v6358
    %v6385 = vmul.f32 %v6105, %v6358
    %v6386 = vmul.f32 %v6106, %v6358
    %v6387 = vmul.f32 %v6107, %v6358
    %v6388 = vmul.f32 %v6108, %v6358
    %v6389 = vmul.f32 %v6109, %v6358
    %v6390 = vmul.f32 %v6110, %v6358
    %v6391 = vmul.f32 %v6111, %v6358
    %v6392 = vmul.f32 %v6112, %v6358
    %v6393 = vmul.f32 %v6113, %v6358
    %v6394 = vmul.f32 %v6114, %v6358
    %v6395 = vmul.f32 %v6115, %v6358
    %v6396 = vmul.f32 %v6116, %v6358
    %v6397 = vmul.f32 %v6117, %v6358
    %v6398 = vmul.f32 %v6118, %v6358
    %v6399 = vmul.f32 %v6119, %v6358
    %v6400 = vmul.f32 %v6120, %v6358
    %v6401 = vmul.f32 %v6121, %v6358
    %v6402 = vmul.f32 %v6122, %v6358
    %v6403 = vmul.f32 %v6123, %v6358
    %v6404 = vmul.f32 %v6124, %v6358
    %v6405 = vmul.f32 %v6125, %v6358
    %v6406 = vmul.f32 %v6126, %v6358
    %v6407 = vmul.f32 %v6127, %v6358
    %v6408 = vmul.f32 %v6128, %v6358
    %v6409 = vmul.f32 %v6129, %v6358
    %v6410 = vmul.f32 %v6130, %v6358
    %v6411 = vmul.f32 %v6131, %v6358
    %v6412 = vmul.f32 %v6132, %v6358
    %v6413 = vmul.f32 %v6133, %v6358
    %v6414 = vmul.f32 %v6134, %v6358
    %v6415 = vmul.f32 %v6135, %v6358
    %v6416 = vmul.f32 %v6136, %v6358
    %v6417 = vmul.f32 %v6137, %v6358
    %v6418 = vmul.f32 %v6138, %v6358
    %v6419 = vmul.f32 %v6139, %v6358
    %v6420 = vmul.f32 %v6140, %v6358
    %v6421 = vmul.f32 %v6141, %v6358
    %v6422 = vmul.f32 %v6142, %v6358
    %v6423 = vmul.f32 %v6143, %v6358
    %v6424 = vmul.f32 %v6213, %v6353
    %v6425 = vsub.f32 %v6009, %v6424
    %v6427 = vlaneseq
    %v6428 = vshrl.u32 %v6427, 7
    %v6429 = vsub.s32 0, %v6428
    %v6430 = vrot.slane %v6425, %v6429
    %v6432 = vadd.f32 %v6360, %v6430
    %v6433 = vadd.f32 %v6361, %v6430
    %v6434 = vadd.f32 %v6362, %v6430
    %v6435 = vadd.f32 %v6363, %v6430
    %v6436 = vadd.f32 %v6364, %v6430
    %v6437 = vadd.f32 %v6365, %v6430
    %v6438 = vadd.f32 %v6366, %v6430
    %v6439 = vadd.f32 %v6367, %v6430
    %v6440 = vadd.f32 %v6368, %v6430
    %v6441 = vadd.f32 %v6369, %v6430
    %v6442 = vadd.f32 %v6370, %v6430
    %v6443 = vadd.f32 %v6371, %v6430
    %v6444 = vadd.f32 %v6372, %v6430
    %v6445 = vadd.f32 %v6373, %v6430
    %v6446 = vadd.f32 %v6374, %v6430
    %v6447 = vadd.f32 %v6375, %v6430
    %v6448 = vadd.f32 %v6376, %v6430
    %v6449 = vadd.f32 %v6377, %v6430
    %v6450 = vadd.f32 %v6378, %v6430
    %v6451 = vadd.f32 %v6379, %v6430
    %v6452 = vadd.f32 %v6380, %v6430
    %v6453 = vadd.f32 %v6381, %v6430
    %v6454 = vadd.f32 %v6382, %v6430
    %v6455 = vadd.f32 %v6383, %v6430
    %v6456 = vadd.f32 %v6384, %v6430
    %v6457 = vadd.f32 %v6385, %v6430
    %v6458 = vadd.f32 %v6386, %v6430
    %v6459 = vadd.f32 %v6387, %v6430
    %v6460 = vadd.f32 %v6388, %v6430
    %v6461 = vadd.f32 %v6389, %v6430
    %v6462 = vadd.f32 %v6390, %v6430
    %v6463 = vadd.f32 %v6391, %v6430
    %v6464 = vadd.f32 %v6392, %v6430
    %v6465 = vadd.f32 %v6393, %v6430
    %v6466 = vadd.f32 %v6394, %v6430
    %v6467 = vadd.f32 %v6395, %v6430
    %v6468 = vadd.f32 %v6396, %v6430
    %v6469 = vadd.f32 %v6397, %v6430
    %v6470 = vadd.f32 %v6398, %v6430
    %v6471 = vadd.f32 %v6399, %v6430
    %v6472 = vadd.f32 %v6400, %v6430
    %v6473 = vadd.f32 %v6401, %v6430
    %v6474 = vadd.f32 %v6402, %v6430
    %v6475 = vadd.f32 %v6403, %v6430
    %v6476 = vadd.f32 %v6404, %v6430
    %v6477 = vadd.f32 %v6405, %v6430
    %v6478 = vadd.f32 %v6406, %v6430
    %v6479 = vadd.f32 %v6407, %v6430
    %v6480 = vadd.f32 %v6408, %v6430
    %v6481 = vadd.f32 %v6409, %v6430
    %v6482 = vadd.f32 %v6410, %v6430
    %v6483 = vadd.f32 %v6411, %v6430
    %v6484 = vadd.f32 %v6412, %v6430
    %v6485 = vadd.f32 %v6413, %v6430
    %v6486 = vadd.f32 %v6414, %v6430
    %v6487 = vadd.f32 %v6415, %v6430
    %v6488 = vadd.f32 %v6416, %v6430
    %v6489 = vadd.f32 %v6417, %v6430
    %v6490 = vadd.f32 %v6418, %v6430
    %v6491 = vadd.f32 %v6419, %v6430
    %v6492 = vadd.f32 %v6420, %v6430
    %v6493 = vadd.f32 %v6421, %v6430
    %v6494 = vadd.f32 %v6422, %v6430
    %v6495 = vadd.f32 %v6423, %v6430
    %6496 = vst [vmem:[#allocation5] sm:$0xff] %v6432
    %6497 = vst [vmem:[#allocation5 + $0x8] sm:$0xff] %v6433
    %6498 = vst [vmem:[#allocation5 + $0x10] sm:$0xff] %v6434
    %6499 = vst [vmem:[#allocation5 + $0x18] sm:$0xff] %v6435
    %6500 = vst [vmem:[#allocation5 + $0x20] sm:$0xff] %v6436
    %6501 = vst [vmem:[#allocation5 + $0x28] sm:$0xff] %v6437
    %6502 = vst [vmem:[#allocation5 + $0x30] sm:$0xff] %v6438
    %6503 = vst [vmem:[#allocation5 + $0x38] sm:$0xff] %v6439
    %6504 = vst [vmem:[#allocation5 + $0x40] sm:$0xff] %v6440
    %6505 = vst [vmem:[#allocation5 + $0x48] sm:$0xff] %v6441
    %6506 = vst [vmem:[#allocation5 + $0x50] sm:$0xff] %v6442
    %6507 = vst [vmem:[#allocation5 + $0x58] sm:$0xff] %v6443
    %6508 = vst [vmem:[#allocation5 + $0x60] sm:$0xff] %v6444
    %6509 = vst [vmem:[#allocation5 + $0x68] sm:$0xff] %v6445
    %6510 = vst [vmem:[#allocation5 + $0x70] sm:$0xff] %v6446
    %6511 = vst [vmem:[#allocation5 + $0x78] sm:$0xff] %v6447
    %6512 = vst [vmem:[#allocation5 + $0x80] sm:$0xff] %v6448
    %6513 = vst [vmem:[#allocation5 + $0x88] sm:$0xff] %v6449
    %6514 = vst [vmem:[#allocation5 + $0x90] sm:$0xff] %v6450
    %6515 = vst [vmem:[#allocation5 + $0x98] sm:$0xff] %v6451
    %6516 = vst [vmem:[#allocation5 + $0xa0] sm:$0xff] %v6452
    %6517 = vst [vmem:[#allocation5 + $0xa8] sm:$0xff] %v6453
    %6518 = vst [vmem:[#allocation5 + $0xb0] sm:$0xff] %v6454
    %6519 = vst [vmem:[#allocation5 + $0xb8] sm:$0xff] %v6455
    %6520 = vst [vmem:[#allocation5 + $0xc0] sm:$0xff] %v6456
    %6521 = vst [vmem:[#allocation5 + $0xc8] sm:$0xff] %v6457
    %6522 = vst [vmem:[#allocation5 + $0xd0] sm:$0xff] %v6458
    %6523 = vst [vmem:[#allocation5 + $0xd8] sm:$0xff] %v6459
    %6524 = vst [vmem:[#allocation5 + $0xe0] sm:$0xff] %v6460
    %6525 = vst [vmem:[#allocation5 + $0xe8] sm:$0xff] %v6461
    %6526 = vst [vmem:[#allocation5 + $0xf0] sm:$0xff] %v6462
    %6527 = vst [vmem:[#allocation5 + $0xf8] sm:$0xff] %v6463
    %6528 = vst [vmem:[#allocation5 + $0x100] sm:$0xff] %v6464
    %6529 = vst [vmem:[#allocation5 + $0x108] sm:$0xff] %v6465
    %6530 = vst [vmem:[#allocation5 + $0x110] sm:$0xff] %v6466
    %6531 = vst [vmem:[#allocation5 + $0x118] sm:$0xff] %v6467
    %6532 = vst [vmem:[#allocation5 + $0x120] sm:$0xff] %v6468
    %6533 = vst [vmem:[#allocation5 + $0x128] sm:$0xff] %v6469
    %6534 = vst [vmem:[#allocation5 + $0x130] sm:$0xff] %v6470
    %6535 = vst [vmem:[#allocation5 + $0x138] sm:$0xff] %v6471
    %6536 = vst [vmem:[#allocation5 + $0x140] sm:$0xff] %v6472
    %6537 = vst [vmem:[#allocation5 + $0x148] sm:$0xff] %v6473
    %6538 = vst [vmem:[#allocation5 + $0x150] sm:$0xff] %v6474
    %6539 = vst [vmem:[#allocation5 + $0x158] sm:$0xff] %v6475
    %6540 = vst [vmem:[#allocation5 + $0x160] sm:$0xff] %v6476
    %6541 = vst [vmem:[#allocation5 + $0x168] sm:$0xff] %v6477
    %6542 = vst [vmem:[#allocation5 + $0x170] sm:$0xff] %v6478
    %6543 = vst [vmem:[#allocation5 + $0x178] sm:$0xff] %v6479
    %6544 = vst [vmem:[#allocation5 + $0x180] sm:$0xff] %v6480
    %6545 = vst [vmem:[#allocation5 + $0x188] sm:$0xff] %v6481
    %6546 = vst [vmem:[#allocation5 + $0x190] sm:$0xff] %v6482
    %6547 = vst [vmem:[#allocation5 + $0x198] sm:$0xff] %v6483
    %6548 = vst [vmem:[#allocation5 + $0x1a0] sm:$0xff] %v6484
    %6549 = vst [vmem:[#allocation5 + $0x1a8] sm:$0xff] %v6485
    %6550 = vst [vmem:[#allocation5 + $0x1b0] sm:$0xff] %v6486
    %6551 = vst [vmem:[#allocation5 + $0x1b8] sm:$0xff] %v6487
    %6552 = vst [vmem:[#allocation5 + $0x1c0] sm:$0xff] %v6488
    %6553 = vst [vmem:[#allocation5 + $0x1c8] sm:$0xff] %v6489
    %6554 = vst [vmem:[#allocation5 + $0x1d0] sm:$0xff] %v6490
    %6555 = vst [vmem:[#allocation5 + $0x1d8] sm:$0xff] %v6491
    %6556 = vst [vmem:[#allocation5 + $0x1e0] sm:$0xff] %v6492
    %6557 = vst [vmem:[#allocation5 + $0x1e8] sm:$0xff] %v6493
    %6558 = vst [vmem:[#allocation5 + $0x1f0] sm:$0xff] %v6494
    %6559 = vst [vmem:[#allocation5 + $0x1f8] sm:$0xff] %v6495
    %v6560 = vld [vmem:[#allocation5] ss:$2 sm:$0xff]
    %s6561 = scalar_lea.vmem [#allocation5], 16
    %v6562 = vld [vmem:[%s6561] ss:$2 sm:$0xff]
    %s6563 = scalar_lea.vmem [#allocation5], 32
    %v6564 = vld [vmem:[%s6563] ss:$2 sm:$0xff]
    %s6565 = scalar_lea.vmem [#allocation5], 48
    %v6566 = vld [vmem:[%s6565] ss:$2 sm:$0xff]
    %s6567 = scalar_lea.vmem [#allocation5], 64
    %v6568 = vld [vmem:[%s6567] ss:$2 sm:$0xff]
    %s6569 = scalar_lea.vmem [#allocation5], 80
    %v6570 = vld [vmem:[%s6569] ss:$2 sm:$0xff]
    %s6571 = scalar_lea.vmem [#allocation5], 96
    %v6572 = vld [vmem:[%s6571] ss:$2 sm:$0xff]
    %s6573 = scalar_lea.vmem [#allocation5], 112
    %v6574 = vld [vmem:[%s6573] ss:$2 sm:$0xff]
    %s6575 = scalar_lea.vmem [#allocation5], 128
    %v6576 = vld [vmem:[%s6575] ss:$2 sm:$0xff]
    %s6577 = scalar_lea.vmem [#allocation5], 144
    %v6578 = vld [vmem:[%s6577] ss:$2 sm:$0xff]
    %s6579 = scalar_lea.vmem [#allocation5], 160
    %v6580 = vld [vmem:[%s6579] ss:$2 sm:$0xff]
    %s6581 = scalar_lea.vmem [#allocation5], 176
    %v6582 = vld [vmem:[%s6581] ss:$2 sm:$0xff]
    %s6583 = scalar_lea.vmem [#allocation5], 192
    %v6584 = vld [vmem:[%s6583] ss:$2 sm:$0xff]
    %s6585 = scalar_lea.vmem [#allocation5], 208
    %v6586 = vld [vmem:[%s6585] ss:$2 sm:$0xff]
    %s6587 = scalar_lea.vmem [#allocation5], 224
    %v6588 = vld [vmem:[%s6587] ss:$2 sm:$0xff]
    %s6589 = scalar_lea.vmem [#allocation5], 240
    %v6590 = vld [vmem:[%s6589] ss:$2 sm:$0xff]
    %s6591 = scalar_lea.vmem [#allocation5], 256
    %v6592 = vld [vmem:[%s6591] ss:$2 sm:$0xff]
    %s6593 = scalar_lea.vmem [#allocation5], 272
    %v6594 = vld [vmem:[%s6593] ss:$2 sm:$0xff]
    %s6595 = scalar_lea.vmem [#allocation5], 288
    %v6596 = vld [vmem:[%s6595] ss:$2 sm:$0xff]
    %s6597 = scalar_lea.vmem [#allocation5], 304
    %v6598 = vld [vmem:[%s6597] ss:$2 sm:$0xff]
    %s6599 = scalar_lea.vmem [#allocation5], 320
    %v6600 = vld [vmem:[%s6599] ss:$2 sm:$0xff]
    %s6601 = scalar_lea.vmem [#allocation5], 336
    %v6602 = vld [vmem:[%s6601] ss:$2 sm:$0xff]
    %s6603 = scalar_lea.vmem [#allocation5], 352
    %v6604 = vld [vmem:[%s6603] ss:$2 sm:$0xff]
    %s6605 = scalar_lea.vmem [#allocation5], 368
    %v6606 = vld [vmem:[%s6605] ss:$2 sm:$0xff]
    %s6607 = scalar_lea.vmem [#allocation5], 384
    %v6608 = vld [vmem:[%s6607] ss:$2 sm:$0xff]
    %s6609 = scalar_lea.vmem [#allocation5], 400
    %v6610 = vld [vmem:[%s6609] ss:$2 sm:$0xff]
    %s6611 = scalar_lea.vmem [#allocation5], 416
    %v6612 = vld [vmem:[%s6611] ss:$2 sm:$0xff]
    %s6613 = scalar_lea.vmem [#allocation5], 432
    %v6614 = vld [vmem:[%s6613] ss:$2 sm:$0xff]
    %s6615 = scalar_lea.vmem [#allocation5], 448
    %v6616 = vld [vmem:[%s6615] ss:$2 sm:$0xff]
    %s6617 = scalar_lea.vmem [#allocation5], 464
    %v6618 = vld [vmem:[%s6617] ss:$2 sm:$0xff]
    %s6619 = scalar_lea.vmem [#allocation5], 480
    %v6620 = vld [vmem:[%s6619] ss:$2 sm:$0xff]
    %s6621 = scalar_lea.vmem [#allocation5], 496
    %v6622 = vld [vmem:[%s6621] ss:$2 sm:$0xff]
    %s6623 = scalar_lea.vmem [#allocation5], 1
    %v6624 = vld [vmem:[%s6623] ss:$2 sm:$0xff]
    %s6625 = scalar_lea.vmem [#allocation5], 17
    %v6626 = vld [vmem:[%s6625] ss:$2 sm:$0xff]
    %s6627 = scalar_lea.vmem [#allocation5], 33
    %v6628 = vld [vmem:[%s6627] ss:$2 sm:$0xff]
    %s6629 = scalar_lea.vmem [#allocation5], 49
    %v6630 = vld [vmem:[%s6629] ss:$2 sm:$0xff]
    %s6631 = scalar_lea.vmem [#allocation5], 65
    %v6632 = vld [vmem:[%s6631] ss:$2 sm:$0xff]
    %s6633 = scalar_lea.vmem [#allocation5], 81
    %v6634 = vld [vmem:[%s6633] ss:$2 sm:$0xff]
    %s6635 = scalar_lea.vmem [#allocation5], 97
    %v6636 = vld [vmem:[%s6635] ss:$2 sm:$0xff]
    %s6637 = scalar_lea.vmem [#allocation5], 113
    %v6638 = vld [vmem:[%s6637] ss:$2 sm:$0xff]
    %s6639 = scalar_lea.vmem [#allocation5], 129
    %v6640 = vld [vmem:[%s6639] ss:$2 sm:$0xff]
    %s6641 = scalar_lea.vmem [#allocation5], 145
    %v6642 = vld [vmem:[%s6641] ss:$2 sm:$0xff]
    %s6643 = scalar_lea.vmem [#allocation5], 161
    %v6644 = vld [vmem:[%s6643] ss:$2 sm:$0xff]
    %s6645 = scalar_lea.vmem [#allocation5], 177
    %v6646 = vld [vmem:[%s6645] ss:$2 sm:$0xff]
    %s6647 = scalar_lea.vmem [#allocation5], 193
    %v6648 = vld [vmem:[%s6647] ss:$2 sm:$0xff]
    %s6649 = scalar_lea.vmem [#allocation5], 209
    %v6650 = vld [vmem:[%s6649] ss:$2 sm:$0xff]
    %s6651 = scalar_lea.vmem [#allocation5], 225
    %v6652 = vld [vmem:[%s6651] ss:$2 sm:$0xff]
    %s6653 = scalar_lea.vmem [#allocation5], 241
    %v6654 = vld [vmem:[%s6653] ss:$2 sm:$0xff]
    %s6655 = scalar_lea.vmem [#allocation5], 257
    %v6656 = vld [vmem:[%s6655] ss:$2 sm:$0xff]
    %s6657 = scalar_lea.vmem [#allocation5], 273
    %v6658 = vld [vmem:[%s6657] ss:$2 sm:$0xff]
    %s6659 = scalar_lea.vmem [#allocation5], 289
    %v6660 = vld [vmem:[%s6659] ss:$2 sm:$0xff]
    %s6661 = scalar_lea.vmem [#allocation5], 305
    %v6662 = vld [vmem:[%s6661] ss:$2 sm:$0xff]
    %s6663 = scalar_lea.vmem [#allocation5], 321
    %v6664 = vld [vmem:[%s6663] ss:$2 sm:$0xff]
    %s6665 = scalar_lea.vmem [#allocation5], 337
    %v6666 = vld [vmem:[%s6665] ss:$2 sm:$0xff]
    %s6667 = scalar_lea.vmem [#allocation5], 353
    %v6668 = vld [vmem:[%s6667] ss:$2 sm:$0xff]
    %s6669 = scalar_lea.vmem [#allocation5], 369
    %v6670 = vld [vmem:[%s6669] ss:$2 sm:$0xff]
    %s6671 = scalar_lea.vmem [#allocation5], 385
    %v6672 = vld [vmem:[%s6671] ss:$2 sm:$0xff]
    %s6673 = scalar_lea.vmem [#allocation5], 401
    %v6674 = vld [vmem:[%s6673] ss:$2 sm:$0xff]
    %s6675 = scalar_lea.vmem [#allocation5], 417
    %v6676 = vld [vmem:[%s6675] ss:$2 sm:$0xff]
    %s6677 = scalar_lea.vmem [#allocation5], 433
    %v6678 = vld [vmem:[%s6677] ss:$2 sm:$0xff]
    %s6679 = scalar_lea.vmem [#allocation5], 449
    %v6680 = vld [vmem:[%s6679] ss:$2 sm:$0xff]
    %s6681 = scalar_lea.vmem [#allocation5], 465
    %v6682 = vld [vmem:[%s6681] ss:$2 sm:$0xff]
    %s6683 = scalar_lea.vmem [#allocation5], 481
    %v6684 = vld [vmem:[%s6683] ss:$2 sm:$0xff]
    %s6685 = scalar_lea.vmem [#allocation5], 497
    %v6686 = vld [vmem:[%s6685] ss:$2 sm:$0xff]
    %v6687 = vmax.f32 %v6560, %v6624
    %v6688 = vmax.f32 %v6562, %v6626
    %v6689 = vmax.f32 %v6564, %v6628
    %v6690 = vmax.f32 %v6566, %v6630
    %v6691 = vmax.f32 %v6568, %v6632
    %v6692 = vmax.f32 %v6570, %v6634
    %v6693 = vmax.f32 %v6572, %v6636
    %v6694 = vmax.f32 %v6574, %v6638
    %v6695 = vmax.f32 %v6576, %v6640
    %v6696 = vmax.f32 %v6578, %v6642
    %v6697 = vmax.f32 %v6580, %v6644
    %v6698 = vmax.f32 %v6582, %v6646
    %v6699 = vmax.f32 %v6584, %v6648
    %v6700 = vmax.f32 %v6586, %v6650
    %v6701 = vmax.f32 %v6588, %v6652
    %v6702 = vmax.f32 %v6590, %v6654
    %v6703 = vmax.f32 %v6592, %v6656
    %v6704 = vmax.f32 %v6594, %v6658
    %v6705 = vmax.f32 %v6596, %v6660
    %v6706 = vmax.f32 %v6598, %v6662
    %v6707 = vmax.f32 %v6600, %v6664
    %v6708 = vmax.f32 %v6602, %v6666
    %v6709 = vmax.f32 %v6604, %v6668
    %v6710 = vmax.f32 %v6606, %v6670
    %v6711 = vmax.f32 %v6608, %v6672
    %v6712 = vmax.f32 %v6610, %v6674
    %v6713 = vmax.f32 %v6612, %v6676
    %v6714 = vmax.f32 %v6614, %v6678
    %v6715 = vmax.f32 %v6616, %v6680
    %v6716 = vmax.f32 %v6618, %v6682
    %v6717 = vmax.f32 %v6620, %v6684
    %v6718 = vmax.f32 %v6622, %v6686
    %v6719 = vmax.f32 %v6687, %v6688
    %v6720 = vmax.f32 %v6689, %v6690
    %v6721 = vmax.f32 %v6691, %v6692
    %v6722 = vmax.f32 %v6693, %v6694
    %v6723 = vmax.f32 %v6695, %v6696
    %v6724 = vmax.f32 %v6697, %v6698
    %v6725 = vmax.f32 %v6699, %v6700
    %v6726 = vmax.f32 %v6701, %v6702
    %v6727 = vmax.f32 %v6703, %v6704
    %v6728 = vmax.f32 %v6705, %v6706
    %v6729 = vmax.f32 %v6707, %v6708
    %v6730 = vmax.f32 %v6709, %v6710
    %v6731 = vmax.f32 %v6711, %v6712
    %v6732 = vmax.f32 %v6713, %v6714
    %v6733 = vmax.f32 %v6715, %v6716
    %v6734 = vmax.f32 %v6717, %v6718
    %s6735 = smul.u32 4, 144
    %s6736 = smul.u32 %s6735, 1
    %s6737 = sshll.u32 %s6736, 4
    %6738 = dma.done [#allocation9], %s6737
    %6739 = vst [vmem:[#allocation3] sm:$0xff] 0.0
    %6740 = vst [vmem:[#allocation3 + $0x8] sm:$0x3] 0.0
    %6741 = vst [vmem:[#allocation3 + $0x10] sm:$0xff] 0.0
    %6742 = vst [vmem:[#allocation3 + $0x18] sm:$0x3] 0.0
    %6743 = vst [vmem:[#allocation3 + $0x20] sm:$0xff] 0.0
    %6744 = vst [vmem:[#allocation3 + $0x28] sm:$0x3] 0.0
    %6745 = vst [vmem:[#allocation3 + $0x30] sm:$0xff] 0.0
    %6746 = vst [vmem:[#allocation3 + $0x38] sm:$0x3] 0.0
    %6747 = vst [vmem:[#allocation3 + $0x40] sm:$0xff] 0.0
    %6748 = vst [vmem:[#allocation3 + $0x48] sm:$0x3] 0.0
    %6749 = vst [vmem:[#allocation3 + $0x50] sm:$0xff] 0.0
    %6750 = vst [vmem:[#allocation3 + $0x58] sm:$0x3] 0.0
    %6751 = vst [vmem:[#allocation3 + $0x60] sm:$0xff] 0.0
    %6752 = vst [vmem:[#allocation3 + $0x68] sm:$0x3] 0.0
    %6753 = vst [vmem:[#allocation3 + $0x70] sm:$0xff] 0.0
    %6754 = vst [vmem:[#allocation3 + $0x78] sm:$0x3] 0.0
    %6755 = vst [vmem:[#allocation3 + $0x80] sm:$0xff] 0.0
    %6756 = vst [vmem:[#allocation3 + $0x88] sm:$0x3] 0.0
    %6757 = vst [vmem:[#allocation3 + $0x90] sm:$0xff] 0.0
    %6758 = vst [vmem:[#allocation3 + $0x98] sm:$0x3] 0.0
    %6759 = vst [vmem:[#allocation3 + $0xa0] sm:$0xff] 0.0
    %6760 = vst [vmem:[#allocation3 + $0xa8] sm:$0x3] 0.0
    %6761 = vst [vmem:[#allocation3 + $0xb0] sm:$0xff] 0.0
    %6762 = vst [vmem:[#allocation3 + $0xb8] sm:$0x3] 0.0
    %6763 = vst [vmem:[#allocation3 + $0xc0] sm:$0xff] 0.0
    %6764 = vst [vmem:[#allocation3 + $0xc8] sm:$0x3] 0.0
    %6765 = vst [vmem:[#allocation3 + $0xd0] sm:$0xff] 0.0
    %6766 = vst [vmem:[#allocation3 + $0xd8] sm:$0x3] 0.0
    %6767 = vst [vmem:[#allocation3 + $0xe0] sm:$0xff] 0.0
    %6768 = vst [vmem:[#allocation3 + $0xe8] sm:$0x3] 0.0
    %6769 = vst [vmem:[#allocation3 + $0xf0] sm:$0xff] 0.0
    %6770 = vst [vmem:[#allocation3 + $0xf8] sm:$0x3] 0.0
    %6771 = vst [vmem:[#allocation3 + $0x100] sm:$0xff] 0.0
    %6772 = vst [vmem:[#allocation3 + $0x108] sm:$0x3] 0.0
    %6773 = vst [vmem:[#allocation3 + $0x110] sm:$0xff] 0.0
    %6774 = vst [vmem:[#allocation3 + $0x118] sm:$0x3] 0.0
    %6775 = vst [vmem:[#allocation3 + $0x120] sm:$0xff] 0.0
    %6776 = vst [vmem:[#allocation3 + $0x128] sm:$0x3] 0.0
    %6777 = vst [vmem:[#allocation3 + $0x130] sm:$0xff] 0.0
    %6778 = vst [vmem:[#allocation3 + $0x138] sm:$0x3] 0.0
    %s6779 = scalar_lea.vmem [#allocation3], 16
    %6780 = vst [vmem:[%s6779 + $0x1] sm:$0xff] %v6719
    %6781 = vst [vmem:[%s6779 + $0x11] sm:$0xff] %v6720
    %6782 = vst [vmem:[%s6779 + $0x21] sm:$0xff] %v6721
    %6783 = vst [vmem:[%s6779 + $0x31] sm:$0xff] %v6722
    %6784 = vst [vmem:[%s6779 + $0x41] sm:$0xff] %v6723
    %6785 = vst [vmem:[%s6779 + $0x51] sm:$0xff] %v6724
    %6786 = vst [vmem:[%s6779 + $0x61] sm:$0xff] %v6725
    %6787 = vst [vmem:[%s6779 + $0x71] sm:$0xff] %v6726
    %6788 = vst [vmem:[%s6779 + $0xa1] sm:$0xff] %v6727
    %6789 = vst [vmem:[%s6779 + $0xb1] sm:$0xff] %v6728
    %6790 = vst [vmem:[%s6779 + $0xc1] sm:$0xff] %v6729
    %6791 = vst [vmem:[%s6779 + $0xd1] sm:$0xff] %v6730
    %6792 = vst [vmem:[%s6779 + $0xe1] sm:$0xff] %v6731
    %6793 = vst [vmem:[%s6779 + $0xf1] sm:$0xff] %v6732
    %6794 = vst [vmem:[%s6779 + $0x101] sm:$0xff] %v6733
    %6795 = vst [vmem:[%s6779 + $0x111] sm:$0xff] %v6734
    %v6796 = vld [vmem:[#allocation3] sm:$0xff]
    %v6797 = vld [vmem:[#allocation3 + $0x10] sm:$0xff]
    %v6798 = vld [vmem:[#allocation3 + $0x20] sm:$0xff]
    %v6799 = vld [vmem:[#allocation3 + $0x30] sm:$0xff]
    %v6800 = vld [vmem:[#allocation3 + $0x40] sm:$0xff]
    %v6801 = vld [vmem:[#allocation3 + $0x50] sm:$0xff]
    %v6802 = vld [vmem:[#allocation3 + $0x60] sm:$0xff]
    %v6803 = vld [vmem:[#allocation3 + $0x70] sm:$0xff]
    %v6804 = vld [vmem:[#allocation3 + $0xa0] sm:$0xff]
    %v6805 = vld [vmem:[#allocation3 + $0xb0] sm:$0xff]
    %v6806 = vld [vmem:[#allocation3 + $0xc0] sm:$0xff]
    %v6807 = vld [vmem:[#allocation3 + $0xd0] sm:$0xff]
    %v6808 = vld [vmem:[#allocation3 + $0xe0] sm:$0xff]
    %v6809 = vld [vmem:[#allocation3 + $0xf0] sm:$0xff]
    %v6810 = vld [vmem:[#allocation3 + $0x100] sm:$0xff]
    %v6811 = vld [vmem:[#allocation3 + $0x110] sm:$0xff]
    %v6812 = vpack.c.bf16 %v6797, %v6796
    %v6813 = vpack.c.bf16 %v6799, %v6798
    %v6814 = vpack.c.bf16 %v6801, %v6800
    %v6815 = vpack.c.bf16 %v6803, %v6802
    %v6816 = vpack.c.bf16 %v6805, %v6804
    %v6817 = vpack.c.bf16 %v6807, %v6806
    %v6818 = vpack.c.bf16 %v6809, %v6808
    %v6819 = vpack.c.bf16 %v6811, %v6810
    %v6820 = vld [vmem:[#allocation7] sm:$0xff]
    %v6821 = vld [vmem:[#allocation7 + $0x8] sm:$0xff]
    %v6822 = vld [vmem:[#allocation7 + $0x10] sm:$0xff]
    %v6823 = vld [vmem:[#allocation7 + $0x18] sm:$0xff]
    %v6824 = vld [vmem:[#allocation7 + $0x20] sm:$0xff]
    %v6825 = vld [vmem:[#allocation7 + $0x28] sm:$0xff]
    %v6826 = vld [vmem:[#allocation7 + $0x30] sm:$0xff]
    %v6827 = vld [vmem:[#allocation7 + $0x38] sm:$0xff]
    %v6828 = vld [vmem:[#allocation3 + $0x1] sm:$0xff]
    %v6829 = vld [vmem:[#allocation3 + $0x11] sm:$0xff]
    %v6830 = vld [vmem:[#allocation3 + $0x21] sm:$0xff]
    %v6831 = vld [vmem:[#allocation3 + $0x31] sm:$0xff]
    %v6832 = vld [vmem:[#allocation3 + $0x41] sm:$0xff]
    %v6833 = vld [vmem:[#allocation3 + $0x51] sm:$0xff]
    %v6834 = vld [vmem:[#allocation3 + $0x61] sm:$0xff]
    %v6835 = vld [vmem:[#allocation3 + $0x71] sm:$0xff]
    %v6836 = vld [vmem:[#allocation3 + $0xa1] sm:$0xff]
    %v6837 = vld [vmem:[#allocation3 + $0xb1] sm:$0xff]
    %v6838 = vld [vmem:[#allocation3 + $0xc1] sm:$0xff]
    %v6839 = vld [vmem:[#allocation3 + $0xd1] sm:$0xff]
    %v6840 = vld [vmem:[#allocation3 + $0xe1] sm:$0xff]
    %v6841 = vld [vmem:[#allocation3 + $0xf1] sm:$0xff]
    %v6842 = vld [vmem:[#allocation3 + $0x101] sm:$0xff]
    %v6843 = vld [vmem:[#allocation3 + $0x111] sm:$0xff]
    %v6844 = vpack.c.bf16 %v6829, %v6828
    %v6845 = vpack.c.bf16 %v6831, %v6830
    %v6846 = vpack.c.bf16 %v6833, %v6832
    %v6847 = vpack.c.bf16 %v6835, %v6834
    %v6848 = vpack.c.bf16 %v6837, %v6836
    %v6849 = vpack.c.bf16 %v6839, %v6838
    %v6850 = vpack.c.bf16 %v6841, %v6840
    %v6851 = vpack.c.bf16 %v6843, %v6842
    %v6852 = vld [vmem:[#allocation7 + $0x40] sm:$0xff]
    %v6853 = vld [vmem:[#allocation7 + $0x48] sm:$0xff]
    %v6854 = vld [vmem:[#allocation7 + $0x50] sm:$0xff]
    %v6855 = vld [vmem:[#allocation7 + $0x58] sm:$0xff]
    %v6856 = vld [vmem:[#allocation7 + $0x60] sm:$0xff]
    %v6857 = vld [vmem:[#allocation7 + $0x68] sm:$0xff]
    %v6858 = vld [vmem:[#allocation7 + $0x70] sm:$0xff]
    %v6859 = vld [vmem:[#allocation7 + $0x78] sm:$0xff]
    %6860 = vmatprep.subr.bf16.mxu0 0
    %6861 = vmatpush1.bf16.msra.mxu0 %v6852
    %6862 = vmatprep.subr.bf16.mxu0 0
    %6863 = vmatpush1.bf16.msra.mxu0 %v6853
    %6864 = vmatprep.subr.bf16.mxu0 0
    %6865 = vmatpush1.bf16.msra.mxu0 %v6854
    %6866 = vmatprep.subr.bf16.mxu0 0
    %6867 = vmatpush1.bf16.msra.mxu0 %v6855
    %6868 = vmatprep.subr.bf16.mxu0 0
    %6869 = vmatpush1.bf16.msra.mxu0 %v6856
    %6870 = vmatprep.subr.bf16.mxu0 0
    %6871 = vmatpush1.bf16.msra.mxu0 %v6857
    %6872 = vmatprep.subr.bf16.mxu0 0
    %6873 = vmatpush1.bf16.msra.mxu0 %v6858
    %6874 = vmatprep.subr.bf16.mxu0 0
    %6875 = vmatpush1.bf16.msra.mxu0 %v6859
    %6876 = vmatprep.subr.bf16.mxu0 0
    %6877 = vmatpush1.bf16.msra.mxu0 0
    %6878 = vmatprep.subr.bf16.mxu0 0
    %6879 = vmatpush1.bf16.msra.mxu0 0
    %6880 = vmatprep.subr.bf16.mxu0 0
    %6881 = vmatpush1.bf16.msra.mxu0 0
    %6882 = vmatprep.subr.bf16.mxu0 0
    %6883 = vmatpush1.bf16.msra.mxu0 0
    %6884 = vmatprep.subr.bf16.mxu0 0
    %6885 = vmatpush1.bf16.msra.mxu0 0
    %6886 = vmatprep.subr.bf16.mxu0 0
    %6887 = vmatpush1.bf16.msra.mxu0 0
    %6888 = vmatprep.subr.bf16.mxu0 0
    %6889 = vmatpush1.bf16.msra.mxu0 0
    %6890 = vmatprep.subr.bf16.mxu0 0
    %6891 = vmatpush1.bf16.msra.mxu0 0
    %6892 = vmatprep.mubr.bf16.mxu0 0
    %6893 = vmatmul.mubr.bf16.gmra.mrb[0].mxu0 %v6844
    %v6894 = vpop.f32.mrb[0].mxu0
    %v6895 = vadd.f32 0.0, %v6894
    %v6896 = vpop.f32.mrb[0].mxu0
    %v6897 = vpop.f32.mrb[0].mxu0
    %v6898 = vadd.f32 0.0, %v6897
    %v6899 = vpop.f32.mrb[0].mxu0
    %6900 = vmatprep.mubr.bf16.mxu0 0
    %6901 = vmatmul.mubr.bf16.gmra.mrb[0].mxu0 %v6845
    %v6902 = vpop.f32.mrb[0].mxu0
    %v6903 = vadd.f32 0.0, %v6902
    %v6904 = vpop.f32.mrb[0].mxu0
    %v6905 = vpop.f32.mrb[0].mxu0
    %v6906 = vadd.f32 0.0, %v6905
    %v6907 = vpop.f32.mrb[0].mxu0
    %6908 = vmatprep.mubr.bf16.mxu0 0
    %6909 = vmatmul.mubr.bf16.gmra.mrb[0].mxu0 %v6846
    %v6910 = vpop.f32.mrb[0].mxu0
    %v6911 = vadd.f32 0.0, %v6910
    %v6912 = vpop.f32.mrb[0].mxu0
    %v6913 = vpop.f32.mrb[0].mxu0
    %v6914 = vadd.f32 0.0, %v6913
    %v6915 = vpop.f32.mrb[0].mxu0
    %6916 = vmatprep.mubr.bf16.mxu0 0
    %6917 = vmatmul.mubr.bf16.gmra.mrb[0].mxu0 %v6847
    %v6918 = vpop.f32.mrb[0].mxu0
    %v6919 = vadd.f32 0.0, %v6918
    %v6920 = vpop.f32.mrb[0].mxu0
    %v6921 = vpop.f32.mrb[0].mxu0
    %v6922 = vadd.f32 0.0, %v6921
    %v6923 = vpop.f32.mrb[0].mxu0
    %6924 = vmatprep.mubr.bf16.mxu0 0
    %6925 = vmatmul.mubr.bf16.gmra.mrb[0].mxu0 %v6848
    %v6926 = vpop.f32.mrb[0].mxu0
    %v6927 = vadd.f32 0.0, %v6926
    %v6928 = vpop.f32.mrb[0].mxu0
    %v6929 = vpop.f32.mrb[0].mxu0
    %v6930 = vadd.f32 0.0, %v6929
    %v6931 = vpop.f32.mrb[0].mxu0
    %6932 = vmatprep.mubr.bf16.mxu0 0
    %6933 = vmatmul.mubr.bf16.gmra.mrb[0].mxu0 %v6849
    %v6934 = vpop.f32.mrb[0].mxu0
    %v6935 = vadd.f32 0.0, %v6934
    %v6936 = vpop.f32.mrb[0].mxu0
    %v6937 = vpop.f32.mrb[0].mxu0
    %v6938 = vadd.f32 0.0, %v6937
    %v6939 = vpop.f32.mrb[0].mxu0
    %6940 = vmatprep.mubr.bf16.mxu0 0
    %6941 = vmatmul.mubr.bf16.gmra.mrb[0].mxu0 %v6850
    %v6942 = vpop.f32.mrb[0].mxu0
    %v6943 = vadd.f32 0.0, %v6942
    %v6944 = vpop.f32.mrb[0].mxu0
    %v6945 = vpop.f32.mrb[0].mxu0
    %v6946 = vadd.f32 0.0, %v6945
    %v6947 = vpop.f32.mrb[0].mxu0
    %6948 = vmatprep.mubr.bf16.mxu0 0
    %6949 = vmatmul.mubr.bf16.gmra.mrb[0].mxu0 %v6851
    %v6950 = vpop.f32.mrb[0].mxu0
    %v6951 = vadd.f32 0.0, %v6950
    %v6952 = vpop.f32.mrb[0].mxu0
    %v6953 = vpop.f32.mrb[0].mxu0
    %v6954 = vadd.f32 0.0, %v6953
    %v6955 = vpop.f32.mrb[0].mxu0
    %6956 = vdwg.mxu0
    %6957 = vmatprep.subr.bf16.mxu0 0
    %6958 = vmatpush1.bf16.msra.mxu0 %v6820
    %6959 = vmatprep.subr.bf16.mxu0 0
    %6960 = vmatpush1.bf16.msra.mxu0 %v6821
    %6961 = vmatprep.subr.bf16.mxu0 0
    %6962 = vmatpush1.bf16.msra.mxu0 %v6822
    %6963 = vmatprep.subr.bf16.mxu0 0
    %6964 = vmatpush1.bf16.msra.mxu0 %v6823
    %6965 = vmatprep.subr.bf16.mxu0 0
    %6966 = vmatpush1.bf16.msra.mxu0 %v6824
    %6967 = vmatprep.subr.bf16.mxu0 0
    %6968 = vmatpush1.bf16.msra.mxu0 %v6825
    %6969 = vmatprep.subr.bf16.mxu0 0
    %6970 = vmatpush1.bf16.msra.mxu0 %v6826
    %6971 = vmatprep.subr.bf16.mxu0 0
    %6972 = vmatpush1.bf16.msra.mxu0 %v6827
    %6973 = vmatprep.subr.bf16.mxu0 0
    %6974 = vmatpush1.bf16.msra.mxu0 0
    %6975 = vmatprep.subr.bf16.mxu0 0
    %6976 = vmatpush1.bf16.msra.mxu0 0
    %6977 = vmatprep.subr.bf16.mxu0 0
    %6978 = vmatpush1.bf16.msra.mxu0 0
    %6979 = vmatprep.subr.bf16.mxu0 0
    %6980 = vmatpush1.bf16.msra.mxu0 0
    %6981 = vmatprep.subr.bf16.mxu0 0
    %6982 = vmatpush1.bf16.msra.mxu0 0
    %6983 = vmatprep.subr.bf16.mxu0 0
    %6984 = vmatpush1.bf16.msra.mxu0 0
    %6985 = vmatprep.subr.bf16.mxu0 0
    %6986 = vmatpush1.bf16.msra.mxu0 0
    %6987 = vmatprep.subr.bf16.mxu0 0
    %6988 = vmatpush1.bf16.msra.mxu0 0
    %6989 = vmatprep.mubr.bf16.mxu0 0
    %6990 = vmatmul.mubr.bf16.gmra.mrb[0].mxu0 %v6812
    %v6991 = vpop.f32.mrb[0].mxu0
    %v6992 = vadd.f32 %v6895, %v6991
    %v6993 = vpop.f32.mrb[0].mxu0
    %v6994 = vpop.f32.mrb[0].mxu0
    %v6995 = vadd.f32 %v6898, %v6994
    %v6996 = vpop.f32.mrb[0].mxu0
    %6997 = vmatprep.mubr.bf16.mxu0 0
    %6998 = vmatmul.mubr.bf16.gmra.mrb[0].mxu0 %v6813
    %v6999 = vpop.f32.mrb[0].mxu0
    %v7000 = vadd.f32 %v6903, %v6999
    %v7001 = vpop.f32.mrb[0].mxu0
    %v7002 = vpop.f32.mrb[0].mxu0
    %v7003 = vadd.f32 %v6906, %v7002
    %v7004 = vpop.f32.mrb[0].mxu0
    %7005 = vmatprep.mubr.bf16.mxu0 0
    %7006 = vmatmul.mubr.bf16.gmra.mrb[0].mxu0 %v6814
    %v7007 = vpop.f32.mrb[0].mxu0
    %v7008 = vadd.f32 %v6911, %v7007
    %v7009 = vpop.f32.mrb[0].mxu0
    %v7010 = vpop.f32.mrb[0].mxu0
    %v7011 = vadd.f32 %v6914, %v7010
    %v7012 = vpop.f32.mrb[0].mxu0
    %7013 = vmatprep.mubr.bf16.mxu0 0
    %7014 = vmatmul.mubr.bf16.gmra.mrb[0].mxu0 %v6815
    %v7015 = vpop.f32.mrb[0].mxu0
    %v7016 = vadd.f32 %v6919, %v7015
    %v7017 = vpop.f32.mrb[0].mxu0
    %v7018 = vpop.f32.mrb[0].mxu0
    %v7019 = vadd.f32 %v6922, %v7018
    %v7020 = vpop.f32.mrb[0].mxu0
    %7021 = vmatprep.mubr.bf16.mxu0 0
    %7022 = vmatmul.mubr.bf16.gmra.mrb[0].mxu0 %v6816
    %v7023 = vpop.f32.mrb[0].mxu0
    %v7024 = vadd.f32 %v6927, %v7023
    %v7025 = vpop.f32.mrb[0].mxu0
    %v7026 = vpop.f32.mrb[0].mxu0
    %v7027 = vadd.f32 %v6930, %v7026
    %v7028 = vpop.f32.mrb[0].mxu0
    %7029 = vmatprep.mubr.bf16.mxu0 0
    %7030 = vmatmul.mubr.bf16.gmra.mrb[0].mxu0 %v6817
    %v7031 = vpop.f32.mrb[0].mxu0
    %v7032 = vadd.f32 %v6935, %v7031
    %v7033 = vpop.f32.mrb[0].mxu0
    %v7034 = vpop.f32.mrb[0].mxu0
    %v7035 = vadd.f32 %v6938, %v7034
    %v7036 = vpop.f32.mrb[0].mxu0
    %7037 = vmatprep.mubr.bf16.mxu0 0
    %7038 = vmatmul.mubr.bf16.gmra.mrb[0].mxu0 %v6818
    %v7039 = vpop.f32.mrb[0].mxu0
    %v7040 = vadd.f32 %v6943, %v7039
    %v7041 = vpop.f32.mrb[0].mxu0
    %v7042 = vpop.f32.mrb[0].mxu0
    %v7043 = vadd.f32 %v6946, %v7042
    %v7044 = vpop.f32.mrb[0].mxu0
    %7045 = vmatprep.mubr.bf16.mxu0 0
    %7046 = vmatmul.mubr.bf16.gmra.mrb[0].mxu0 %v6819
    %v7047 = vpop.f32.mrb[0].mxu0
    %v7048 = vadd.f32 %v6951, %v7047
    %v7049 = vpop.f32.mrb[0].mxu0
    %v7050 = vpop.f32.mrb[0].mxu0
    %v7051 = vadd.f32 %v6954, %v7050
    %v7052 = vpop.f32.mrb[0].mxu0
    %7053 = vdwg.mxu0
    %v7054 = vld [vmem:[#allocation3 + $0x2] sm:$0xff]
    %v7055 = vld [vmem:[#allocation3 + $0x12] sm:$0xff]
    %v7056 = vld [vmem:[#allocation3 + $0x22] sm:$0xff]
    %v7057 = vld [vmem:[#allocation3 + $0x32] sm:$0xff]
    %v7058 = vld [vmem:[#allocation3 + $0x42] sm:$0xff]
    %v7059 = vld [vmem:[#allocation3 + $0x52] sm:$0xff]
    %v7060 = vld [vmem:[#allocation3 + $0x62] sm:$0xff]
    %v7061 = vld [vmem:[#allocation3 + $0x72] sm:$0xff]
    %v7062 = vld [vmem:[#allocation3 + $0xa2] sm:$0xff]
    %v7063 = vld [vmem:[#allocation3 + $0xb2] sm:$0xff]
    %v7064 = vld [vmem:[#allocation3 + $0xc2] sm:$0xff]
    %v7065 = vld [vmem:[#allocation3 + $0xd2] sm:$0xff]
    %v7066 = vld [vmem:[#allocation3 + $0xe2] sm:$0xff]
    %v7067 = vld [vmem:[#allocation3 + $0xf2] sm:$0xff]
    %v7068 = vld [vmem:[#allocation3 + $0x102] sm:$0xff]
    %v7069 = vld [vmem:[#allocation3 + $0x112] sm:$0xff]
    %v7070 = vpack.c.bf16 %v7055, %v7054
    %v7071 = vpack.c.bf16 %v7057, %v7056
    %v7072 = vpack.c.bf16 %v7059, %v7058
    %v7073 = vpack.c.bf16 %v7061, %v7060
    %v7074 = vpack.c.bf16 %v7063, %v7062
    %v7075 = vpack.c.bf16 %v7065, %v7064
    %v7076 = vpack.c.bf16 %v7067, %v7066
    %v7077 = vpack.c.bf16 %v7069, %v7068
    %v7078 = vld [vmem:[#allocation7 + $0x80] sm:$0xff]
    %v7079 = vld [vmem:[#allocation7 + $0x88] sm:$0xff]
    %v7080 = vld [vmem:[#allocation7 + $0x90] sm:$0xff]
    %v7081 = vld [vmem:[#allocation7 + $0x98] sm:$0xff]
    %v7082 = vld [vmem:[#allocation7 + $0xa0] sm:$0xff]
    %v7083 = vld [vmem:[#allocation7 + $0xa8] sm:$0xff]
    %v7084 = vld [vmem:[#allocation7 + $0xb0] sm:$0xff]
    %v7085 = vld [vmem:[#allocation7 + $0xb8] sm:$0xff]
    %7086 = vmatprep.subr.bf16.mxu0 0
    %7087 = vmatpush1.bf16.msra.mxu0 %v7078
    %7088 = vmatprep.subr.bf16.mxu0 0
    %7089 = vmatpush1.bf16.msra.mxu0 %v7079
    %7090 = vmatprep.subr.bf16.mxu0 0
    %7091 = vmatpush1.bf16.msra.mxu0 %v7080
    %7092 = vmatprep.subr.bf16.mxu0 0
    %7093 = vmatpush1.bf16.msra.mxu0 %v7081
    %7094 = vmatprep.subr.bf16.mxu0 0
    %7095 = vmatpush1.bf16.msra.mxu0 %v7082
    %7096 = vmatprep.subr.bf16.mxu0 0
    %7097 = vmatpush1.bf16.msra.mxu0 %v7083
    %7098 = vmatprep.subr.bf16.mxu0 0
    %7099 = vmatpush1.bf16.msra.mxu0 %v7084
    %7100 = vmatprep.subr.bf16.mxu0 0
    %7101 = vmatpush1.bf16.msra.mxu0 %v7085
    %7102 = vmatprep.subr.bf16.mxu0 0
    %7103 = vmatpush1.bf16.msra.mxu0 0
    %7104 = vmatprep.subr.bf16.mxu0 0
    %7105 = vmatpush1.bf16.msra.mxu0 0
    %7106 = vmatprep.subr.bf16.mxu0 0
    %7107 = vmatpush1.bf16.msra.mxu0 0
    %7108 = vmatprep.subr.bf16.mxu0 0
    %7109 = vmatpush1.bf16.msra.mxu0 0
    %7110 = vmatprep.subr.bf16.mxu0 0
    %7111 = vmatpush1.bf16.msra.mxu0 0
    %7112 = vmatprep.subr.bf16.mxu0 0
    %7113 = vmatpush1.bf16.msra.mxu0 0
    %7114 = vmatprep.subr.bf16.mxu0 0
    %7115 = vmatpush1.bf16.msra.mxu0 0
    %7116 = vmatprep.subr.bf16.mxu0 0
    %7117 = vmatpush1.bf16.msra.mxu0 0
    %7118 = vmatprep.mubr.bf16.mxu0 0
    %7119 = vmatmul.mubr.bf16.gmra.mrb[0].mxu0 %v7070
    %v7120 = vpop.f32.mrb[0].mxu0
    %v7121 = vadd.f32 0.0, %v7120
    %v7122 = vpop.f32.mrb[0].mxu0
    %v7123 = vpop.f32.mrb[0].mxu0
    %v7124 = vadd.f32 0.0, %v7123
    %v7125 = vpop.f32.mrb[0].mxu0
    %7126 = vmatprep.mubr.bf16.mxu0 0
    %7127 = vmatmul.mubr.bf16.gmra.mrb[0].mxu0 %v7071
    %v7128 = vpop.f32.mrb[0].mxu0
    %v7129 = vadd.f32 0.0, %v7128
    %v7130 = vpop.f32.mrb[0].mxu0
    %v7131 = vpop.f32.mrb[0].mxu0
    %v7132 = vadd.f32 0.0, %v7131
    %v7133 = vpop.f32.mrb[0].mxu0
    %7134 = vmatprep.mubr.bf16.mxu0 0
    %7135 = vmatmul.mubr.bf16.gmra.mrb[0].mxu0 %v7072
    %v7136 = vpop.f32.mrb[0].mxu0
    %v7137 = vadd.f32 0.0, %v7136
    %v7138 = vpop.f32.mrb[0].mxu0
    %v7139 = vpop.f32.mrb[0].mxu0
    %v7140 = vadd.f32 0.0, %v7139
    %v7141 = vpop.f32.mrb[0].mxu0
    %7142 = vmatprep.mubr.bf16.mxu0 0
    %7143 = vmatmul.mubr.bf16.gmra.mrb[0].mxu0 %v7073
    %v7144 = vpop.f32.mrb[0].mxu0
    %v7145 = vadd.f32 0.0, %v7144
    %v7146 = vpop.f32.mrb[0].mxu0
    %v7147 = vpop.f32.mrb[0].mxu0
    %v7148 = vadd.f32 0.0, %v7147
    %v7149 = vpop.f32.mrb[0].mxu0
    %7150 = vmatprep.mubr.bf16.mxu0 0
    %7151 = vmatmul.mubr.bf16.gmra.mrb[0].mxu0 %v7074
    %v7152 = vpop.f32.mrb[0].mxu0
    %v7153 = vadd.f32 0.0, %v7152
    %v7154 = vpop.f32.mrb[0].mxu0
    %v7155 = vpop.f32.mrb[0].mxu0
    %v7156 = vadd.f32 0.0, %v7155
    %v7157 = vpop.f32.mrb[0].mxu0
    %7158 = vmatprep.mubr.bf16.mxu0 0
    %7159 = vmatmul.mubr.bf16.gmra.mrb[0].mxu0 %v7075
    %v7160 = vpop.f32.mrb[0].mxu0
    %v7161 = vadd.f32 0.0, %v7160
    %v7162 = vpop.f32.mrb[0].mxu0
    %v7163 = vpop.f32.mrb[0].mxu0
    %v7164 = vadd.f32 0.0, %v7163
    %v7165 = vpop.f32.mrb[0].mxu0
    %7166 = vmatprep.mubr.bf16.mxu0 0
    %7167 = vmatmul.mubr.bf16.gmra.mrb[0].mxu0 %v7076
    %v7168 = vpop.f32.mrb[0].mxu0
    %v7169 = vadd.f32 0.0, %v7168
    %v7170 = vpop.f32.mrb[0].mxu0
    %v7171 = vpop.f32.mrb[0].mxu0
    %v7172 = vadd.f32 0.0, %v7171
    %v7173 = vpop.f32.mrb[0].mxu0
    %7174 = vmatprep.mubr.bf16.mxu0 0
    %7175 = vmatmul.mubr.bf16.gmra.mrb[0].mxu0 %v7077
    %v7176 = vpop.f32.mrb[0].mxu0
    %v7177 = vadd.f32 0.0, %v7176
    %v7178 = vpop.f32.mrb[0].mxu0
    %v7179 = vpop.f32.mrb[0].mxu0
    %v7180 = vadd.f32 0.0, %v7179
    %v7181 = vpop.f32.mrb[0].mxu0
    %7182 = vdwg.mxu0
    %v7183 = vadd.f32 %v6992, %v7121
    %v7184 = vadd.f32 %v6995, %v7124
    %v7185 = vadd.f32 %v7000, %v7129
    %v7186 = vadd.f32 %v7003, %v7132
    %v7187 = vadd.f32 %v7008, %v7137
    %v7188 = vadd.f32 %v7011, %v7140
    %v7189 = vadd.f32 %v7016, %v7145
    %v7190 = vadd.f32 %v7019, %v7148
    %v7191 = vadd.f32 %v7024, %v7153
    %v7192 = vadd.f32 %v7027, %v7156
    %v7193 = vadd.f32 %v7032, %v7161
    %v7194 = vadd.f32 %v7035, %v7164
    %v7195 = vadd.f32 %v7040, %v7169
    %v7196 = vadd.f32 %v7043, %v7172
    %v7197 = vadd.f32 %v7048, %v7177
    %v7198 = vadd.f32 %v7051, %v7180
    %v7199 = vld [vmem:[%s6779] sm:$0xff]
    %v7200 = vld [vmem:[%s6779 + $0x10] sm:$0xff]
    %v7201 = vld [vmem:[%s6779 + $0x20] sm:$0xff]
    %v7202 = vld [vmem:[%s6779 + $0x30] sm:$0xff]
    %v7203 = vld [vmem:[%s6779 + $0x40] sm:$0xff]
    %v7204 = vld [vmem:[%s6779 + $0x50] sm:$0xff]
    %v7205 = vld [vmem:[%s6779 + $0x60] sm:$0xff]
    %v7206 = vld [vmem:[%s6779 + $0x70] sm:$0xff]
    %v7207 = vld [vmem:[%s6779 + $0xa0] sm:$0xff]
    %v7208 = vld [vmem:[%s6779 + $0xb0] sm:$0xff]
    %v7209 = vld [vmem:[%s6779 + $0xc0] sm:$0xff]
    %v7210 = vld [vmem:[%s6779 + $0xd0] sm:$0xff]
    %v7211 = vld [vmem:[%s6779 + $0xe0] sm:$0xff]
    %v7212 = vld [vmem:[%s6779 + $0xf0] sm:$0xff]
    %v7213 = vld [vmem:[%s6779 + $0x100] sm:$0xff]
    %v7214 = vld [vmem:[%s6779 + $0x110] sm:$0xff]
    %v7215 = vpack.c.bf16 %v7200, %v7199
    %v7216 = vpack.c.bf16 %v7202, %v7201
    %v7217 = vpack.c.bf16 %v7204, %v7203
    %v7218 = vpack.c.bf16 %v7206, %v7205
    %v7219 = vpack.c.bf16 %v7208, %v7207
    %v7220 = vpack.c.bf16 %v7210, %v7209
    %v7221 = vpack.c.bf16 %v7212, %v7211
    %v7222 = vpack.c.bf16 %v7214, %v7213
    %v7223 = vld [vmem:[#allocation7 + $0xc0] sm:$0xff]
    %v7224 = vld [vmem:[#allocation7 + $0xc8] sm:$0xff]
    %v7225 = vld [vmem:[#allocation7 + $0xd0] sm:$0xff]
    %v7226 = vld [vmem:[#allocation7 + $0xd8] sm:$0xff]
    %v7227 = vld [vmem:[#allocation7 + $0xe0] sm:$0xff]
    %v7228 = vld [vmem:[#allocation7 + $0xe8] sm:$0xff]
    %v7229 = vld [vmem:[#allocation7 + $0xf0] sm:$0xff]
    %v7230 = vld [vmem:[#allocation7 + $0xf8] sm:$0xff]
    %7231 = vmatprep.subr.bf16.mxu0 0
    %7232 = vmatpush1.bf16.msra.mxu0 %v7223
    %7233 = vmatprep.subr.bf16.mxu0 0
    %7234 = vmatpush1.bf16.msra.mxu0 %v7224
    %7235 = vmatprep.subr.bf16.mxu0 0
    %7236 = vmatpush1.bf16.msra.mxu0 %v7225
    %7237 = vmatprep.subr.bf16.mxu0 0
    %7238 = vmatpush1.bf16.msra.mxu0 %v7226
    %7239 = vmatprep.subr.bf16.mxu0 0
    %7240 = vmatpush1.bf16.msra.mxu0 %v7227
    %7241 = vmatprep.subr.bf16.mxu0 0
    %7242 = vmatpush1.bf16.msra.mxu0 %v7228
    %7243 = vmatprep.subr.bf16.mxu0 0
    %7244 = vmatpush1.bf16.msra.mxu0 %v7229
    %7245 = vmatprep.subr.bf16.mxu0 0
    %7246 = vmatpush1.bf16.msra.mxu0 %v7230
    %7247 = vmatprep.subr.bf16.mxu0 0
    %7248 = vmatpush1.bf16.msra.mxu0 0
    %7249 = vmatprep.subr.bf16.mxu0 0
    %7250 = vmatpush1.bf16.msra.mxu0 0
    %7251 = vmatprep.subr.bf16.mxu0 0
    %7252 = vmatpush1.bf16.msra.mxu0 0
    %7253 = vmatprep.subr.bf16.mxu0 0
    %7254 = vmatpush1.bf16.msra.mxu0 0
    %7255 = vmatprep.subr.bf16.mxu0 0
    %7256 = vmatpush1.bf16.msra.mxu0 0
    %7257 = vmatprep.subr.bf16.mxu0 0
    %7258 = vmatpush1.bf16.msra.mxu0 0
    %7259 = vmatprep.subr.bf16.mxu0 0
    %7260 = vmatpush1.bf16.msra.mxu0 0
    %7261 = vmatprep.subr.bf16.mxu0 0
    %7262 = vmatpush1.bf16.msra.mxu0 0
    %7263 = vmatprep.mubr.bf16.mxu0 0
    %7264 = vmatmul.mubr.bf16.gmra.mrb[0].mxu0 %v7215
    %v7265 = vpop.f32.mrb[0].mxu0
    %v7266 = vadd.f32 0.0, %v7265
    %v7267 = vpop.f32.mrb[0].mxu0
    %v7268 = vpop.f32.mrb[0].mxu0
    %v7269 = vadd.f32 0.0, %v7268
    %v7270 = vpop.f32.mrb[0].mxu0
    %7271 = vmatprep.mubr.bf16.mxu0 0
    %7272 = vmatmul.mubr.bf16.gmra.mrb[0].mxu0 %v7216
    %v7273 = vpop.f32.mrb[0].mxu0
    %v7274 = vadd.f32 0.0, %v7273
    %v7275 = vpop.f32.mrb[0].mxu0
    %v7276 = vpop.f32.mrb[0].mxu0
    %v7277 = vadd.f32 0.0, %v7276
    %v7278 = vpop.f32.mrb[0].mxu0
    %7279 = vmatprep.mubr.bf16.mxu0 0
    %7280 = vmatmul.mubr.bf16.gmra.mrb[0].mxu0 %v7217
    %v7281 = vpop.f32.mrb[0].mxu0
    %v7282 = vadd.f32 0.0, %v7281
    %v7283 = vpop.f32.mrb[0].mxu0
    %v7284 = vpop.f32.mrb[0].mxu0
    %v7285 = vadd.f32 0.0, %v7284
    %v7286 = vpop.f32.mrb[0].mxu0
    %7287 = vmatprep.mubr.bf16.mxu0 0
    %7288 = vmatmul.mubr.bf16.gmra.mrb[0].mxu0 %v7218
    %v7289 = vpop.f32.mrb[0].mxu0
    %v7290 = vadd.f32 0.0, %v7289
    %v7291 = vpop.f32.mrb[0].mxu0
    %v7292 = vpop.f32.mrb[0].mxu0
    %v7293 = vadd.f32 0.0, %v7292
    %v7294 = vpop.f32.mrb[0].mxu0
    %7295 = vmatprep.mubr.bf16.mxu0 0
    %7296 = vmatmul.mubr.bf16.gmra.mrb[0].mxu0 %v7219
    %v7297 = vpop.f32.mrb[0].mxu0
    %v7298 = vadd.f32 0.0, %v7297
    %v7299 = vpop.f32.mrb[0].mxu0
    %v7300 = vpop.f32.mrb[0].mxu0
    %v7301 = vadd.f32 0.0, %v7300
    %v7302 = vpop.f32.mrb[0].mxu0
    %7303 = vmatprep.mubr.bf16.mxu0 0
    %7304 = vmatmul.mubr.bf16.gmra.mrb[0].mxu0 %v7220
    %v7305 = vpop.f32.mrb[0].mxu0
    %v7306 = vadd.f32 0.0, %v7305
    %v7307 = vpop.f32.mrb[0].mxu0
    %v7308 = vpop.f32.mrb[0].mxu0
    %v7309 = vadd.f32 0.0, %v7308
    %v7310 = vpop.f32.mrb[0].mxu0
    %7311 = vmatprep.mubr.bf16.mxu0 0
    %7312 = vmatmul.mubr.bf16.gmra.mrb[0].mxu0 %v7221
    %v7313 = vpop.f32.mrb[0].mxu0
    %v7314 = vadd.f32 0.0, %v7313
    %v7315 = vpop.f32.mrb[0].mxu0
    %v7316 = vpop.f32.mrb[0].mxu0
    %v7317 = vadd.f32 0.0, %v7316
    %v7318 = vpop.f32.mrb[0].mxu0
    %7319 = vmatprep.mubr.bf16.mxu0 0
    %7320 = vmatmul.mubr.bf16.gmra.mrb[0].mxu0 %v7222
    %v7321 = vpop.f32.mrb[0].mxu0
    %v7322 = vadd.f32 0.0, %v7321
    %v7323 = vpop.f32.mrb[0].mxu0
    %v7324 = vpop.f32.mrb[0].mxu0
    %v7325 = vadd.f32 0.0, %v7324
    %v7326 = vpop.f32.mrb[0].mxu0
    %7327 = vdwg.mxu0
    %v7328 = vadd.f32 %v7183, %v7266
    %v7329 = vadd.f32 %v7184, %v7269
    %v7330 = vadd.f32 %v7185, %v7274
    %v7331 = vadd.f32 %v7186, %v7277
    %v7332 = vadd.f32 %v7187, %v7282
    %v7333 = vadd.f32 %v7188, %v7285
    %v7334 = vadd.f32 %v7189, %v7290
    %v7335 = vadd.f32 %v7190, %v7293
    %v7336 = vadd.f32 %v7191, %v7298
    %v7337 = vadd.f32 %v7192, %v7301
    %v7338 = vadd.f32 %v7193, %v7306
    %v7339 = vadd.f32 %v7194, %v7309
    %v7340 = vadd.f32 %v7195, %v7314
    %v7341 = vadd.f32 %v7196, %v7317
    %v7342 = vadd.f32 %v7197, %v7322
    %v7343 = vadd.f32 %v7198, %v7325
    %v7344 = vld [vmem:[%s6779 + $0x1] sm:$0xff]
    %v7345 = vld [vmem:[%s6779 + $0x11] sm:$0xff]
    %v7346 = vld [vmem:[%s6779 + $0x21] sm:$0xff]
    %v7347 = vld [vmem:[%s6779 + $0x31] sm:$0xff]
    %v7348 = vld [vmem:[%s6779 + $0x41] sm:$0xff]
    %v7349 = vld [vmem:[%s6779 + $0x51] sm:$0xff]
    %v7350 = vld [vmem:[%s6779 + $0x61] sm:$0xff]
    %v7351 = vld [vmem:[%s6779 + $0x71] sm:$0xff]
    %v7352 = vld [vmem:[%s6779 + $0xa1] sm:$0xff]
    %v7353 = vld [vmem:[%s6779 + $0xb1] sm:$0xff]
    %v7354 = vld [vmem:[%s6779 + $0xc1] sm:$0xff]
    %v7355 = vld [vmem:[%s6779 + $0xd1] sm:$0xff]
    %v7356 = vld [vmem:[%s6779 + $0xe1] sm:$0xff]
    %v7357 = vld [vmem:[%s6779 + $0xf1] sm:$0xff]
    %v7358 = vld [vmem:[%s6779 + $0x101] sm:$0xff]
    %v7359 = vld [vmem:[%s6779 + $0x111] sm:$0xff]
    %v7360 = vpack.c.bf16 %v7345, %v7344
    %v7361 = vpack.c.bf16 %v7347, %v7346
    %v7362 = vpack.c.bf16 %v7349, %v7348
    %v7363 = vpack.c.bf16 %v7351, %v7350
    %v7364 = vpack.c.bf16 %v7353, %v7352
    %v7365 = vpack.c.bf16 %v7355, %v7354
    %v7366 = vpack.c.bf16 %v7357, %v7356
    %v7367 = vpack.c.bf16 %v7359, %v7358
    %v7368 = vld [vmem:[#allocation7 + $0x100] sm:$0xff]
    %v7369 = vld [vmem:[#allocation7 + $0x108] sm:$0xff]
    %v7370 = vld [vmem:[#allocation7 + $0x110] sm:$0xff]
    %v7371 = vld [vmem:[#allocation7 + $0x118] sm:$0xff]
    %v7372 = vld [vmem:[#allocation7 + $0x120] sm:$0xff]
    %v7373 = vld [vmem:[#allocation7 + $0x128] sm:$0xff]
    %v7374 = vld [vmem:[#allocation7 + $0x130] sm:$0xff]
    %v7375 = vld [vmem:[#allocation7 + $0x138] sm:$0xff]
    %7376 = vmatprep.subr.bf16.mxu0 0
    %7377 = vmatpush1.bf16.msra.mxu0 %v7368
    %7378 = vmatprep.subr.bf16.mxu0 0
    %7379 = vmatpush1.bf16.msra.mxu0 %v7369
    %7380 = vmatprep.subr.bf16.mxu0 0
    %7381 = vmatpush1.bf16.msra.mxu0 %v7370
    %7382 = vmatprep.subr.bf16.mxu0 0
    %7383 = vmatpush1.bf16.msra.mxu0 %v7371
    %7384 = vmatprep.subr.bf16.mxu0 0
    %7385 = vmatpush1.bf16.msra.mxu0 %v7372
    %7386 = vmatprep.subr.bf16.mxu0 0
    %7387 = vmatpush1.bf16.msra.mxu0 %v7373
    %7388 = vmatprep.subr.bf16.mxu0 0
    %7389 = vmatpush1.bf16.msra.mxu0 %v7374
    %7390 = vmatprep.subr.bf16.mxu0 0
    %7391 = vmatpush1.bf16.msra.mxu0 %v7375
    %7392 = vmatprep.subr.bf16.mxu0 0
    %7393 = vmatpush1.bf16.msra.mxu0 0
    %7394 = vmatprep.subr.bf16.mxu0 0
    %7395 = vmatpush1.bf16.msra.mxu0 0
    %7396 = vmatprep.subr.bf16.mxu0 0
    %7397 = vmatpush1.bf16.msra.mxu0 0
    %7398 = vmatprep.subr.bf16.mxu0 0
    %7399 = vmatpush1.bf16.msra.mxu0 0
    %7400 = vmatprep.subr.bf16.mxu0 0
    %7401 = vmatpush1.bf16.msra.mxu0 0
    %7402 = vmatprep.subr.bf16.mxu0 0
    %7403 = vmatpush1.bf16.msra.mxu0 0
    %7404 = vmatprep.subr.bf16.mxu0 0
    %7405 = vmatpush1.bf16.msra.mxu0 0
    %7406 = vmatprep.subr.bf16.mxu0 0
    %7407 = vmatpush1.bf16.msra.mxu0 0
    %7408 = vmatprep.mubr.bf16.mxu0 0
    %7409 = vmatmul.mubr.bf16.gmra.mrb[0].mxu0 %v7360
    %v7410 = vpop.f32.mrb[0].mxu0
    %v7411 = vadd.f32 0.0, %v7410
    %v7412 = vpop.f32.mrb[0].mxu0
    %v7413 = vpop.f32.mrb[0].mxu0
    %v7414 = vadd.f32 0.0, %v7413
    %v7415 = vpop.f32.mrb[0].mxu0
    %7416 = vmatprep.mubr.bf16.mxu0 0
    %7417 = vmatmul.mubr.bf16.gmra.mrb[0].mxu0 %v7361
    %v7418 = vpop.f32.mrb[0].mxu0
    %v7419 = vadd.f32 0.0, %v7418
    %v7420 = vpop.f32.mrb[0].mxu0
    %v7421 = vpop.f32.mrb[0].mxu0
    %v7422 = vadd.f32 0.0, %v7421
    %v7423 = vpop.f32.mrb[0].mxu0
    %7424 = vmatprep.mubr.bf16.mxu0 0
    %7425 = vmatmul.mubr.bf16.gmra.mrb[0].mxu0 %v7362
    %v7426 = vpop.f32.mrb[0].mxu0
    %v7427 = vadd.f32 0.0, %v7426
    %v7428 = vpop.f32.mrb[0].mxu0
    %v7429 = vpop.f32.mrb[0].mxu0
    %v7430 = vadd.f32 0.0, %v7429
    %v7431 = vpop.f32.mrb[0].mxu0
    %7432 = vmatprep.mubr.bf16.mxu0 0
    %7433 = vmatmul.mubr.bf16.gmra.mrb[0].mxu0 %v7363
    %v7434 = vpop.f32.mrb[0].mxu0
    %v7435 = vadd.f32 0.0, %v7434
    %v7436 = vpop.f32.mrb[0].mxu0
    %v7437 = vpop.f32.mrb[0].mxu0
    %v7438 = vadd.f32 0.0, %v7437
    %v7439 = vpop.f32.mrb[0].mxu0
    %7440 = vmatprep.mubr.bf16.mxu0 0
    %7441 = vmatmul.mubr.bf16.gmra.mrb[0].mxu0 %v7364
    %v7442 = vpop.f32.mrb[0].mxu0
    %v7443 = vadd.f32 0.0, %v7442
    %v7444 = vpop.f32.mrb[0].mxu0
    %v7445 = vpop.f32.mrb[0].mxu0
    %v7446 = vadd.f32 0.0, %v7445
    %v7447 = vpop.f32.mrb[0].mxu0
    %7448 = vmatprep.mubr.bf16.mxu0 0
    %7449 = vmatmul.mubr.bf16.gmra.mrb[0].mxu0 %v7365
    %v7450 = vpop.f32.mrb[0].mxu0
    %v7451 = vadd.f32 0.0, %v7450
    %v7452 = vpop.f32.mrb[0].mxu0
    %v7453 = vpop.f32.mrb[0].mxu0
    %v7454 = vadd.f32 0.0, %v7453
    %v7455 = vpop.f32.mrb[0].mxu0
    %7456 = vmatprep.mubr.bf16.mxu0 0
    %7457 = vmatmul.mubr.bf16.gmra.mrb[0].mxu0 %v7366
    %v7458 = vpop.f32.mrb[0].mxu0
    %v7459 = vadd.f32 0.0, %v7458
    %v7460 = vpop.f32.mrb[0].mxu0
    %v7461 = vpop.f32.mrb[0].mxu0
    %v7462 = vadd.f32 0.0, %v7461
    %v7463 = vpop.f32.mrb[0].mxu0
    %7464 = vmatprep.mubr.bf16.mxu0 0
    %7465 = vmatmul.mubr.bf16.gmra.mrb[0].mxu0 %v7367
    %v7466 = vpop.f32.mrb[0].mxu0
    %v7467 = vadd.f32 0.0, %v7466
    %v7468 = vpop.f32.mrb[0].mxu0
    %v7469 = vpop.f32.mrb[0].mxu0
    %v7470 = vadd.f32 0.0, %v7469
    %v7471 = vpop.f32.mrb[0].mxu0
    %7472 = vdwg.mxu0
    %v7473 = vadd.f32 %v7328, %v7411
    %v7474 = vadd.f32 %v7329, %v7414
    %v7475 = vadd.f32 %v7330, %v7419
    %v7476 = vadd.f32 %v7331, %v7422
    %v7477 = vadd.f32 %v7332, %v7427
    %v7478 = vadd.f32 %v7333, %v7430
    %v7479 = vadd.f32 %v7334, %v7435
    %v7480 = vadd.f32 %v7335, %v7438
    %v7481 = vadd.f32 %v7336, %v7443
    %v7482 = vadd.f32 %v7337, %v7446
    %v7483 = vadd.f32 %v7338, %v7451
    %v7484 = vadd.f32 %v7339, %v7454
    %v7485 = vadd.f32 %v7340, %v7459
    %v7486 = vadd.f32 %v7341, %v7462
    %v7487 = vadd.f32 %v7342, %v7467
    %v7488 = vadd.f32 %v7343, %v7470
    %v7489 = vld [vmem:[%s6779 + $0x2] sm:$0xff]
    %v7490 = vld [vmem:[%s6779 + $0x12] sm:$0xff]
    %v7491 = vld [vmem:[%s6779 + $0x22] sm:$0xff]
    %v7492 = vld [vmem:[%s6779 + $0x32] sm:$0xff]
    %v7493 = vld [vmem:[%s6779 + $0x42] sm:$0xff]
    %v7494 = vld [vmem:[%s6779 + $0x52] sm:$0xff]
    %v7495 = vld [vmem:[%s6779 + $0x62] sm:$0xff]
    %v7496 = vld [vmem:[%s6779 + $0x72] sm:$0xff]
    %v7497 = vld [vmem:[%s6779 + $0xa2] sm:$0xff]
    %v7498 = vld [vmem:[%s6779 + $0xb2] sm:$0xff]
    %v7499 = vld [vmem:[%s6779 + $0xc2] sm:$0xff]
    %v7500 = vld [vmem:[%s6779 + $0xd2] sm:$0xff]
    %v7501 = vld [vmem:[%s6779 + $0xe2] sm:$0xff]
    %v7502 = vld [vmem:[%s6779 + $0xf2] sm:$0xff]
    %v7503 = vld [vmem:[%s6779 + $0x102] sm:$0xff]
    %v7504 = vld [vmem:[%s6779 + $0x112] sm:$0xff]
    %v7505 = vpack.c.bf16 %v7490, %v7489
    %v7506 = vpack.c.bf16 %v7492, %v7491
    %v7507 = vpack.c.bf16 %v7494, %v7493
    %v7508 = vpack.c.bf16 %v7496, %v7495
    %v7509 = vpack.c.bf16 %v7498, %v7497
    %v7510 = vpack.c.bf16 %v7500, %v7499
    %v7511 = vpack.c.bf16 %v7502, %v7501
    %v7512 = vpack.c.bf16 %v7504, %v7503
    %v7513 = vld [vmem:[#allocation7 + $0x140] sm:$0xff]
    %v7514 = vld [vmem:[#allocation7 + $0x148] sm:$0xff]
    %v7515 = vld [vmem:[#allocation7 + $0x150] sm:$0xff]
    %v7516 = vld [vmem:[#allocation7 + $0x158] sm:$0xff]
    %v7517 = vld [vmem:[#allocation7 + $0x160] sm:$0xff]
    %v7518 = vld [vmem:[#allocation7 + $0x168] sm:$0xff]
    %v7519 = vld [vmem:[#allocation7 + $0x170] sm:$0xff]
    %v7520 = vld [vmem:[#allocation7 + $0x178] sm:$0xff]
    %7521 = vmatprep.subr.bf16.mxu0 0
    %7522 = vmatpush1.bf16.msra.mxu0 %v7513
    %7523 = vmatprep.subr.bf16.mxu0 0
    %7524 = vmatpush1.bf16.msra.mxu0 %v7514
    %7525 = vmatprep.subr.bf16.mxu0 0
    %7526 = vmatpush1.bf16.msra.mxu0 %v7515
    %7527 = vmatprep.subr.bf16.mxu0 0
    %7528 = vmatpush1.bf16.msra.mxu0 %v7516
    %7529 = vmatprep.subr.bf16.mxu0 0
    %7530 = vmatpush1.bf16.msra.mxu0 %v7517
    %7531 = vmatprep.subr.bf16.mxu0 0
    %7532 = vmatpush1.bf16.msra.mxu0 %v7518
    %7533 = vmatprep.subr.bf16.mxu0 0
    %7534 = vmatpush1.bf16.msra.mxu0 %v7519
    %7535 = vmatprep.subr.bf16.mxu0 0
    %7536 = vmatpush1.bf16.msra.mxu0 %v7520
    %7537 = vmatprep.subr.bf16.mxu0 0
    %7538 = vmatpush1.bf16.msra.mxu0 0
    %7539 = vmatprep.subr.bf16.mxu0 0
    %7540 = vmatpush1.bf16.msra.mxu0 0
    %7541 = vmatprep.subr.bf16.mxu0 0
    %7542 = vmatpush1.bf16.msra.mxu0 0
    %7543 = vmatprep.subr.bf16.mxu0 0
    %7544 = vmatpush1.bf16.msra.mxu0 0
    %7545 = vmatprep.subr.bf16.mxu0 0
    %7546 = vmatpush1.bf16.msra.mxu0 0
    %7547 = vmatprep.subr.bf16.mxu0 0
    %7548 = vmatpush1.bf16.msra.mxu0 0
    %7549 = vmatprep.subr.bf16.mxu0 0
    %7550 = vmatpush1.bf16.msra.mxu0 0
    %7551 = vmatprep.subr.bf16.mxu0 0
    %7552 = vmatpush1.bf16.msra.mxu0 0
    %7553 = vmatprep.mubr.bf16.mxu0 0
    %7554 = vmatmul.mubr.bf16.gmra.mrb[0].mxu0 %v7505
    %v7555 = vpop.f32.mrb[0].mxu0
    %v7556 = vadd.f32 0.0, %v7555
    %v7557 = vpop.f32.mrb[0].mxu0
    %v7558 = vpop.f32.mrb[0].mxu0
    %v7559 = vadd.f32 0.0, %v7558
    %v7560 = vpop.f32.mrb[0].mxu0
    %7561 = vmatprep.mubr.bf16.mxu0 0
    %7562 = vmatmul.mubr.bf16.gmra.mrb[0].mxu0 %v7506
    %v7563 = vpop.f32.mrb[0].mxu0
    %v7564 = vadd.f32 0.0, %v7563
    %v7565 = vpop.f32.mrb[0].mxu0
    %v7566 = vpop.f32.mrb[0].mxu0
    %v7567 = vadd.f32 0.0, %v7566
    %v7568 = vpop.f32.mrb[0].mxu0
    %7569 = vmatprep.mubr.bf16.mxu0 0
    %7570 = vmatmul.mubr.bf16.gmra.mrb[0].mxu0 %v7507
    %v7571 = vpop.f32.mrb[0].mxu0
    %v7572 = vadd.f32 0.0, %v7571
    %v7573 = vpop.f32.mrb[0].mxu0
    %v7574 = vpop.f32.mrb[0].mxu0
    %v7575 = vadd.f32 0.0, %v7574
    %v7576 = vpop.f32.mrb[0].mxu0
    %7577 = vmatprep.mubr.bf16.mxu0 0
    %7578 = vmatmul.mubr.bf16.gmra.mrb[0].mxu0 %v7508
    %v7579 = vpop.f32.mrb[0].mxu0
    %v7580 = vadd.f32 0.0, %v7579
    %v7581 = vpop.f32.mrb[0].mxu0
    %v7582 = vpop.f32.mrb[0].mxu0
    %v7583 = vadd.f32 0.0, %v7582
    %v7584 = vpop.f32.mrb[0].mxu0
    %7585 = vmatprep.mubr.bf16.mxu0 0
    %7586 = vmatmul.mubr.bf16.gmra.mrb[0].mxu0 %v7509
    %v7587 = vpop.f32.mrb[0].mxu0
    %v7588 = vadd.f32 0.0, %v7587
    %v7589 = vpop.f32.mrb[0].mxu0
    %v7590 = vpop.f32.mrb[0].mxu0
    %v7591 = vadd.f32 0.0, %v7590
    %v7592 = vpop.f32.mrb[0].mxu0
    %7593 = vmatprep.mubr.bf16.mxu0 0
    %7594 = vmatmul.mubr.bf16.gmra.mrb[0].mxu0 %v7510
    %v7595 = vpop.f32.mrb[0].mxu0
    %v7596 = vadd.f32 0.0, %v7595
    %v7597 = vpop.f32.mrb[0].mxu0
    %v7598 = vpop.f32.mrb[0].mxu0
    %v7599 = vadd.f32 0.0, %v7598
    %v7600 = vpop.f32.mrb[0].mxu0
    %7601 = vmatprep.mubr.bf16.mxu0 0
    %7602 = vmatmul.mubr.bf16.gmra.mrb[0].mxu0 %v7511
    %v7603 = vpop.f32.mrb[0].mxu0
    %v7604 = vadd.f32 0.0, %v7603
    %v7605 = vpop.f32.mrb[0].mxu0
    %v7606 = vpop.f32.mrb[0].mxu0
    %v7607 = vadd.f32 0.0, %v7606
    %v7608 = vpop.f32.mrb[0].mxu0
    %7609 = vmatprep.mubr.bf16.mxu0 0
    %7610 = vmatmul.mubr.bf16.gmra.mrb[0].mxu0 %v7512
    %v7611 = vpop.f32.mrb[0].mxu0
    %v7612 = vadd.f32 0.0, %v7611
    %v7613 = vpop.f32.mrb[0].mxu0
    %v7614 = vpop.f32.mrb[0].mxu0
    %v7615 = vadd.f32 0.0, %v7614
    %v7616 = vpop.f32.mrb[0].mxu0
    %7617 = vdwg.mxu0
    %v7618 = vadd.f32 %v7473, %v7556
    %v7619 = vadd.f32 %v7474, %v7559
    %v7620 = vadd.f32 %v7475, %v7564
    %v7621 = vadd.f32 %v7476, %v7567
    %v7622 = vadd.f32 %v7477, %v7572
    %v7623 = vadd.f32 %v7478, %v7575
    %v7624 = vadd.f32 %v7479, %v7580
    %v7625 = vadd.f32 %v7480, %v7583
    %v7626 = vadd.f32 %v7481, %v7588
    %v7627 = vadd.f32 %v7482, %v7591
    %v7628 = vadd.f32 %v7483, %v7596
    %v7629 = vadd.f32 %v7484, %v7599
    %v7630 = vadd.f32 %v7485, %v7604
    %v7631 = vadd.f32 %v7486, %v7607
    %v7632 = vadd.f32 %v7487, %v7612
    %v7633 = vadd.f32 %v7488, %v7615
    %s7634 = scalar_lea.vmem [#allocation3], 32
    %v7635 = vld [vmem:[%s7634] sm:$0xff]
    %v7636 = vld [vmem:[%s7634 + $0x10] sm:$0xff]
    %v7637 = vld [vmem:[%s7634 + $0x20] sm:$0xff]
    %v7638 = vld [vmem:[%s7634 + $0x30] sm:$0xff]
    %v7639 = vld [vmem:[%s7634 + $0x40] sm:$0xff]
    %v7640 = vld [vmem:[%s7634 + $0x50] sm:$0xff]
    %v7641 = vld [vmem:[%s7634 + $0x60] sm:$0xff]
    %v7642 = vld [vmem:[%s7634 + $0x70] sm:$0xff]
    %v7643 = vld [vmem:[%s7634 + $0xa0] sm:$0xff]
    %v7644 = vld [vmem:[%s7634 + $0xb0] sm:$0xff]
    %v7645 = vld [vmem:[%s7634 + $0xc0] sm:$0xff]
    %v7646 = vld [vmem:[%s7634 + $0xd0] sm:$0xff]
    %v7647 = vld [vmem:[%s7634 + $0xe0] sm:$0xff]
    %v7648 = vld [vmem:[%s7634 + $0xf0] sm:$0xff]
    %v7649 = vld [vmem:[%s7634 + $0x100] sm:$0xff]
    %v7650 = vld [vmem:[%s7634 + $0x110] sm:$0xff]
    %v7651 = vpack.c.bf16 %v7636, %v7635
    %v7652 = vpack.c.bf16 %v7638, %v7637
    %v7653 = vpack.c.bf16 %v7640, %v7639
    %v7654 = vpack.c.bf16 %v7642, %v7641
    %v7655 = vpack.c.bf16 %v7644, %v7643
    %v7656 = vpack.c.bf16 %v7646, %v7645
    %v7657 = vpack.c.bf16 %v7648, %v7647
    %v7658 = vpack.c.bf16 %v7650, %v7649
    %v7659 = vld [vmem:[#allocation7 + $0x180] sm:$0xff]
    %v7660 = vld [vmem:[#allocation7 + $0x188] sm:$0xff]
    %v7661 = vld [vmem:[#allocation7 + $0x190] sm:$0xff]
    %v7662 = vld [vmem:[#allocation7 + $0x198] sm:$0xff]
    %v7663 = vld [vmem:[#allocation7 + $0x1a0] sm:$0xff]
    %v7664 = vld [vmem:[#allocation7 + $0x1a8] sm:$0xff]
    %v7665 = vld [vmem:[#allocation7 + $0x1b0] sm:$0xff]
    %v7666 = vld [vmem:[#allocation7 + $0x1b8] sm:$0xff]
    %7667 = vmatprep.subr.bf16.mxu0 0
    %7668 = vmatpush1.bf16.msra.mxu0 %v7659
    %7669 = vmatprep.subr.bf16.mxu0 0
    %7670 = vmatpush1.bf16.msra.mxu0 %v7660
    %7671 = vmatprep.subr.bf16.mxu0 0
    %7672 = vmatpush1.bf16.msra.mxu0 %v7661
    %7673 = vmatprep.subr.bf16.mxu0 0
    %7674 = vmatpush1.bf16.msra.mxu0 %v7662
    %7675 = vmatprep.subr.bf16.mxu0 0
    %7676 = vmatpush1.bf16.msra.mxu0 %v7663
    %7677 = vmatprep.subr.bf16.mxu0 0
    %7678 = vmatpush1.bf16.msra.mxu0 %v7664
    %7679 = vmatprep.subr.bf16.mxu0 0
    %7680 = vmatpush1.bf16.msra.mxu0 %v7665
    %7681 = vmatprep.subr.bf16.mxu0 0
    %7682 = vmatpush1.bf16.msra.mxu0 %v7666
    %7683 = vmatprep.subr.bf16.mxu0 0
    %7684 = vmatpush1.bf16.msra.mxu0 0
    %7685 = vmatprep.subr.bf16.mxu0 0
    %7686 = vmatpush1.bf16.msra.mxu0 0
    %7687 = vmatprep.subr.bf16.mxu0 0
    %7688 = vmatpush1.bf16.msra.mxu0 0
    %7689 = vmatprep.subr.bf16.mxu0 0
    %7690 = vmatpush1.bf16.msra.mxu0 0
    %7691 = vmatprep.subr.bf16.mxu0 0
    %7692 = vmatpush1.bf16.msra.mxu0 0
    %7693 = vmatprep.subr.bf16.mxu0 0
    %7694 = vmatpush1.bf16.msra.mxu0 0
    %7695 = vmatprep.subr.bf16.mxu0 0
    %7696 = vmatpush1.bf16.msra.mxu0 0
    %7697 = vmatprep.subr.bf16.mxu0 0
    %7698 = vmatpush1.bf16.msra.mxu0 0
    %7699 = vmatprep.mubr.bf16.mxu0 0
    %7700 = vmatmul.mubr.bf16.gmra.mrb[0].mxu0 %v7651
    %v7701 = vpop.f32.mrb[0].mxu0
    %v7702 = vadd.f32 0.0, %v7701
    %v7703 = vpop.f32.mrb[0].mxu0
    %v7704 = vpop.f32.mrb[0].mxu0
    %v7705 = vadd.f32 0.0, %v7704
    %v7706 = vpop.f32.mrb[0].mxu0
    %7707 = vmatprep.mubr.bf16.mxu0 0
    %7708 = vmatmul.mubr.bf16.gmra.mrb[0].mxu0 %v7652
    %v7709 = vpop.f32.mrb[0].mxu0
    %v7710 = vadd.f32 0.0, %v7709
    %v7711 = vpop.f32.mrb[0].mxu0
    %v7712 = vpop.f32.mrb[0].mxu0
    %v7713 = vadd.f32 0.0, %v7712
    %v7714 = vpop.f32.mrb[0].mxu0
    %7715 = vmatprep.mubr.bf16.mxu0 0
    %7716 = vmatmul.mubr.bf16.gmra.mrb[0].mxu0 %v7653
    %v7717 = vpop.f32.mrb[0].mxu0
    %v7718 = vadd.f32 0.0, %v7717
    %v7719 = vpop.f32.mrb[0].mxu0
    %v7720 = vpop.f32.mrb[0].mxu0
    %v7721 = vadd.f32 0.0, %v7720
    %v7722 = vpop.f32.mrb[0].mxu0
    %7723 = vmatprep.mubr.bf16.mxu0 0
    %7724 = vmatmul.mubr.bf16.gmra.mrb[0].mxu0 %v7654
    %v7725 = vpop.f32.mrb[0].mxu0
    %v7726 = vadd.f32 0.0, %v7725
    %v7727 = vpop.f32.mrb[0].mxu0
    %v7728 = vpop.f32.mrb[0].mxu0
    %v7729 = vadd.f32 0.0, %v7728
    %v7730 = vpop.f32.mrb[0].mxu0
    %7731 = vmatprep.mubr.bf16.mxu0 0
    %7732 = vmatmul.mubr.bf16.gmra.mrb[0].mxu0 %v7655
    %v7733 = vpop.f32.mrb[0].mxu0
    %v7734 = vadd.f32 0.0, %v7733
    %v7735 = vpop.f32.mrb[0].mxu0
    %v7736 = vpop.f32.mrb[0].mxu0
    %v7737 = vadd.f32 0.0, %v7736
    %v7738 = vpop.f32.mrb[0].mxu0
    %7739 = vmatprep.mubr.bf16.mxu0 0
    %7740 = vmatmul.mubr.bf16.gmra.mrb[0].mxu0 %v7656
    %v7741 = vpop.f32.mrb[0].mxu0
    %v7742 = vadd.f32 0.0, %v7741
    %v7743 = vpop.f32.mrb[0].mxu0
    %v7744 = vpop.f32.mrb[0].mxu0
    %v7745 = vadd.f32 0.0, %v7744
    %v7746 = vpop.f32.mrb[0].mxu0
    %7747 = vmatprep.mubr.bf16.mxu0 0
    %7748 = vmatmul.mubr.bf16.gmra.mrb[0].mxu0 %v7657
    %v7749 = vpop.f32.mrb[0].mxu0
    %v7750 = vadd.f32 0.0, %v7749
    %v7751 = vpop.f32.mrb[0].mxu0
    %v7752 = vpop.f32.mrb[0].mxu0
    %v7753 = vadd.f32 0.0, %v7752
    %v7754 = vpop.f32.mrb[0].mxu0
    %7755 = vmatprep.mubr.bf16.mxu0 0
    %7756 = vmatmul.mubr.bf16.gmra.mrb[0].mxu0 %v7658
    %v7757 = vpop.f32.mrb[0].mxu0
    %v7758 = vadd.f32 0.0, %v7757
    %v7759 = vpop.f32.mrb[0].mxu0
    %v7760 = vpop.f32.mrb[0].mxu0
    %v7761 = vadd.f32 0.0, %v7760
    %v7762 = vpop.f32.mrb[0].mxu0
    %7763 = vdwg.mxu0
    %v7764 = vadd.f32 %v7618, %v7702
    %v7765 = vadd.f32 %v7619, %v7705
    %v7766 = vadd.f32 %v7620, %v7710
    %v7767 = vadd.f32 %v7621, %v7713
    %v7768 = vadd.f32 %v7622, %v7718
    %v7769 = vadd.f32 %v7623, %v7721
    %v7770 = vadd.f32 %v7624, %v7726
    %v7771 = vadd.f32 %v7625, %v7729
    %v7772 = vadd.f32 %v7626, %v7734
    %v7773 = vadd.f32 %v7627, %v7737
    %v7774 = vadd.f32 %v7628, %v7742
    %v7775 = vadd.f32 %v7629, %v7745
    %v7776 = vadd.f32 %v7630, %v7750
    %v7777 = vadd.f32 %v7631, %v7753
    %v7778 = vadd.f32 %v7632, %v7758
    %v7779 = vadd.f32 %v7633, %v7761
    %v7780 = vld [vmem:[%s7634 + $0x1] sm:$0xff]
    %v7781 = vld [vmem:[%s7634 + $0x11] sm:$0xff]
    %v7782 = vld [vmem:[%s7634 + $0x21] sm:$0xff]
    %v7783 = vld [vmem:[%s7634 + $0x31] sm:$0xff]
    %v7784 = vld [vmem:[%s7634 + $0x41] sm:$0xff]
    %v7785 = vld [vmem:[%s7634 + $0x51] sm:$0xff]
    %v7786 = vld [vmem:[%s7634 + $0x61] sm:$0xff]
    %v7787 = vld [vmem:[%s7634 + $0x71] sm:$0xff]
    %v7788 = vld [vmem:[%s7634 + $0xa1] sm:$0xff]
    %v7789 = vld [vmem:[%s7634 + $0xb1] sm:$0xff]
    %v7790 = vld [vmem:[%s7634 + $0xc1] sm:$0xff]
    %v7791 = vld [vmem:[%s7634 + $0xd1] sm:$0xff]
    %v7792 = vld [vmem:[%s7634 + $0xe1] sm:$0xff]
    %v7793 = vld [vmem:[%s7634 + $0xf1] sm:$0xff]
    %v7794 = vld [vmem:[%s7634 + $0x101] sm:$0xff]
    %v7795 = vld [vmem:[%s7634 + $0x111] sm:$0xff]
    %v7796 = vpack.c.bf16 %v7781, %v7780
    %v7797 = vpack.c.bf16 %v7783, %v7782
    %v7798 = vpack.c.bf16 %v7785, %v7784
    %v7799 = vpack.c.bf16 %v7787, %v7786
    %v7800 = vpack.c.bf16 %v7789, %v7788
    %v7801 = vpack.c.bf16 %v7791, %v7790
    %v7802 = vpack.c.bf16 %v7793, %v7792
    %v7803 = vpack.c.bf16 %v7795, %v7794
    %v7804 = vld [vmem:[#allocation7 + $0x1c0] sm:$0xff]
    %v7805 = vld [vmem:[#allocation7 + $0x1c8] sm:$0xff]
    %v7806 = vld [vmem:[#allocation7 + $0x1d0] sm:$0xff]
    %v7807 = vld [vmem:[#allocation7 + $0x1d8] sm:$0xff]
    %v7808 = vld [vmem:[#allocation7 + $0x1e0] sm:$0xff]
    %v7809 = vld [vmem:[#allocation7 + $0x1e8] sm:$0xff]
    %v7810 = vld [vmem:[#allocation7 + $0x1f0] sm:$0xff]
    %v7811 = vld [vmem:[#allocation7 + $0x1f8] sm:$0xff]
    %7812 = vmatprep.subr.bf16.mxu0 0
    %7813 = vmatpush1.bf16.msra.mxu0 %v7804
    %7814 = vmatprep.subr.bf16.mxu0 0
    %7815 = vmatpush1.bf16.msra.mxu0 %v7805
    %7816 = vmatprep.subr.bf16.mxu0 0
    %7817 = vmatpush1.bf16.msra.mxu0 %v7806
    %7818 = vmatprep.subr.bf16.mxu0 0
    %7819 = vmatpush1.bf16.msra.mxu0 %v7807
    %7820 = vmatprep.subr.bf16.mxu0 0
    %7821 = vmatpush1.bf16.msra.mxu0 %v7808
    %7822 = vmatprep.subr.bf16.mxu0 0
    %7823 = vmatpush1.bf16.msra.mxu0 %v7809
    %7824 = vmatprep.subr.bf16.mxu0 0
    %7825 = vmatpush1.bf16.msra.mxu0 %v7810
    %7826 = vmatprep.subr.bf16.mxu0 0
    %7827 = vmatpush1.bf16.msra.mxu0 %v7811
    %7828 = vmatprep.subr.bf16.mxu0 0
    %7829 = vmatpush1.bf16.msra.mxu0 0
    %7830 = vmatprep.subr.bf16.mxu0 0
    %7831 = vmatpush1.bf16.msra.mxu0 0
    %7832 = vmatprep.subr.bf16.mxu0 0
    %7833 = vmatpush1.bf16.msra.mxu0 0
    %7834 = vmatprep.subr.bf16.mxu0 0
    %7835 = vmatpush1.bf16.msra.mxu0 0
    %7836 = vmatprep.subr.bf16.mxu0 0
    %7837 = vmatpush1.bf16.msra.mxu0 0
    %7838 = vmatprep.subr.bf16.mxu0 0
    %7839 = vmatpush1.bf16.msra.mxu0 0
    %7840 = vmatprep.subr.bf16.mxu0 0
    %7841 = vmatpush1.bf16.msra.mxu0 0
    %7842 = vmatprep.subr.bf16.mxu0 0
    %7843 = vmatpush1.bf16.msra.mxu0 0
    %7844 = vmatprep.mubr.bf16.mxu0 0
    %7845 = vmatmul.mubr.bf16.gmra.mrb[0].mxu0 %v7796
    %v7846 = vpop.f32.mrb[0].mxu0
    %v7847 = vadd.f32 0.0, %v7846
    %v7848 = vpop.f32.mrb[0].mxu0
    %v7849 = vpop.f32.mrb[0].mxu0
    %v7850 = vadd.f32 0.0, %v7849
    %v7851 = vpop.f32.mrb[0].mxu0
    %7852 = vmatprep.mubr.bf16.mxu0 0
    %7853 = vmatmul.mubr.bf16.gmra.mrb[0].mxu0 %v7797
    %v7854 = vpop.f32.mrb[0].mxu0
    %v7855 = vadd.f32 0.0, %v7854
    %v7856 = vpop.f32.mrb[0].mxu0
    %v7857 = vpop.f32.mrb[0].mxu0
    %v7858 = vadd.f32 0.0, %v7857
    %v7859 = vpop.f32.mrb[0].mxu0
    %7860 = vmatprep.mubr.bf16.mxu0 0
    %7861 = vmatmul.mubr.bf16.gmra.mrb[0].mxu0 %v7798
    %v7862 = vpop.f32.mrb[0].mxu0
    %v7863 = vadd.f32 0.0, %v7862
    %v7864 = vpop.f32.mrb[0].mxu0
    %v7865 = vpop.f32.mrb[0].mxu0
    %v7866 = vadd.f32 0.0, %v7865
    %v7867 = vpop.f32.mrb[0].mxu0
    %7868 = vmatprep.mubr.bf16.mxu0 0
    %7869 = vmatmul.mubr.bf16.gmra.mrb[0].mxu0 %v7799
    %v7870 = vpop.f32.mrb[0].mxu0
    %v7871 = vadd.f32 0.0, %v7870
    %v7872 = vpop.f32.mrb[0].mxu0
    %v7873 = vpop.f32.mrb[0].mxu0
    %v7874 = vadd.f32 0.0, %v7873
    %v7875 = vpop.f32.mrb[0].mxu0
    %7876 = vmatprep.mubr.bf16.mxu0 0
    %7877 = vmatmul.mubr.bf16.gmra.mrb[0].mxu0 %v7800
    %v7878 = vpop.f32.mrb[0].mxu0
    %v7879 = vadd.f32 0.0, %v7878
    %v7880 = vpop.f32.mrb[0].mxu0
    %v7881 = vpop.f32.mrb[0].mxu0
    %v7882 = vadd.f32 0.0, %v7881
    %v7883 = vpop.f32.mrb[0].mxu0
    %7884 = vmatprep.mubr.bf16.mxu0 0
    %7885 = vmatmul.mubr.bf16.gmra.mrb[0].mxu0 %v7801
    %v7886 = vpop.f32.mrb[0].mxu0
    %v7887 = vadd.f32 0.0, %v7886
    %v7888 = vpop.f32.mrb[0].mxu0
    %v7889 = vpop.f32.mrb[0].mxu0
    %v7890 = vadd.f32 0.0, %v7889
    %v7891 = vpop.f32.mrb[0].mxu0
    %7892 = vmatprep.mubr.bf16.mxu0 0
    %7893 = vmatmul.mubr.bf16.gmra.mrb[0].mxu0 %v7802
    %v7894 = vpop.f32.mrb[0].mxu0
    %v7895 = vadd.f32 0.0, %v7894
    %v7896 = vpop.f32.mrb[0].mxu0
    %v7897 = vpop.f32.mrb[0].mxu0
    %v7898 = vadd.f32 0.0, %v7897
    %v7899 = vpop.f32.mrb[0].mxu0
    %7900 = vmatprep.mubr.bf16.mxu0 0
    %7901 = vmatmul.mubr.bf16.gmra.mrb[0].mxu0 %v7803
    %v7902 = vpop.f32.mrb[0].mxu0
    %v7903 = vadd.f32 0.0, %v7902
    %v7904 = vpop.f32.mrb[0].mxu0
    %v7905 = vpop.f32.mrb[0].mxu0
    %v7906 = vadd.f32 0.0, %v7905
    %v7907 = vpop.f32.mrb[0].mxu0
    %7908 = vdwg.mxu0
    %v7909 = vadd.f32 %v7764, %v7847
    %v7910 = vadd.f32 %v7765, %v7850
    %v7911 = vadd.f32 %v7766, %v7855
    %v7912 = vadd.f32 %v7767, %v7858
    %v7913 = vadd.f32 %v7768, %v7863
    %v7914 = vadd.f32 %v7769, %v7866
    %v7915 = vadd.f32 %v7770, %v7871
    %v7916 = vadd.f32 %v7771, %v7874
    %v7917 = vadd.f32 %v7772, %v7879
    %v7918 = vadd.f32 %v7773, %v7882
    %v7919 = vadd.f32 %v7774, %v7887
    %v7920 = vadd.f32 %v7775, %v7890
    %v7921 = vadd.f32 %v7776, %v7895
    %v7922 = vadd.f32 %v7777, %v7898
    %v7923 = vadd.f32 %v7778, %v7903
    %v7924 = vadd.f32 %v7779, %v7906
    %v7925 = vld [vmem:[%s7634 + $0x2] sm:$0xff]
    %v7926 = vld [vmem:[%s7634 + $0x12] sm:$0xff]
    %v7927 = vld [vmem:[%s7634 + $0x22] sm:$0xff]
    %v7928 = vld [vmem:[%s7634 + $0x32] sm:$0xff]
    %v7929 = vld [vmem:[%s7634 + $0x42] sm:$0xff]
    %v7930 = vld [vmem:[%s7634 + $0x52] sm:$0xff]
    %v7931 = vld [vmem:[%s7634 + $0x62] sm:$0xff]
    %v7932 = vld [vmem:[%s7634 + $0x72] sm:$0xff]
    %v7933 = vld [vmem:[%s7634 + $0xa2] sm:$0xff]
    %v7934 = vld [vmem:[%s7634 + $0xb2] sm:$0xff]
    %v7935 = vld [vmem:[%s7634 + $0xc2] sm:$0xff]
    %v7936 = vld [vmem:[%s7634 + $0xd2] sm:$0xff]
    %v7937 = vld [vmem:[%s7634 + $0xe2] sm:$0xff]
    %v7938 = vld [vmem:[%s7634 + $0xf2] sm:$0xff]
    %v7939 = vld [vmem:[%s7634 + $0x102] sm:$0xff]
    %v7940 = vld [vmem:[%s7634 + $0x112] sm:$0xff]
    %v7941 = vpack.c.bf16 %v7926, %v7925
    %v7942 = vpack.c.bf16 %v7928, %v7927
    %v7943 = vpack.c.bf16 %v7930, %v7929
    %v7944 = vpack.c.bf16 %v7932, %v7931
    %v7945 = vpack.c.bf16 %v7934, %v7933
    %v7946 = vpack.c.bf16 %v7936, %v7935
    %v7947 = vpack.c.bf16 %v7938, %v7937
    %v7948 = vpack.c.bf16 %v7940, %v7939
    %v7949 = vld [vmem:[#allocation7 + $0x200] sm:$0xff]
    %v7950 = vld [vmem:[#allocation7 + $0x208] sm:$0xff]
    %v7951 = vld [vmem:[#allocation7 + $0x210] sm:$0xff]
    %v7952 = vld [vmem:[#allocation7 + $0x218] sm:$0xff]
    %v7953 = vld [vmem:[#allocation7 + $0x220] sm:$0xff]
    %v7954 = vld [vmem:[#allocation7 + $0x228] sm:$0xff]
    %v7955 = vld [vmem:[#allocation7 + $0x230] sm:$0xff]
    %v7956 = vld [vmem:[#allocation7 + $0x238] sm:$0xff]
    %7957 = vmatprep.subr.bf16.mxu0 0
    %7958 = vmatpush1.bf16.msra.mxu0 %v7949
    %7959 = vmatprep.subr.bf16.mxu0 0
    %7960 = vmatpush1.bf16.msra.mxu0 %v7950
    %7961 = vmatprep.subr.bf16.mxu0 0
    %7962 = vmatpush1.bf16.msra.mxu0 %v7951
    %7963 = vmatprep.subr.bf16.mxu0 0
    %7964 = vmatpush1.bf16.msra.mxu0 %v7952
    %7965 = vmatprep.subr.bf16.mxu0 0
    %7966 = vmatpush1.bf16.msra.mxu0 %v7953
    %7967 = vmatprep.subr.bf16.mxu0 0
    %7968 = vmatpush1.bf16.msra.mxu0 %v7954
    %7969 = vmatprep.subr.bf16.mxu0 0
    %7970 = vmatpush1.bf16.msra.mxu0 %v7955
    %7971 = vmatprep.subr.bf16.mxu0 0
    %7972 = vmatpush1.bf16.msra.mxu0 %v7956
    %7973 = vmatprep.subr.bf16.mxu0 0
    %7974 = vmatpush1.bf16.msra.mxu0 0
    %7975 = vmatprep.subr.bf16.mxu0 0
    %7976 = vmatpush1.bf16.msra.mxu0 0
    %7977 = vmatprep.subr.bf16.mxu0 0
    %7978 = vmatpush1.bf16.msra.mxu0 0
    %7979 = vmatprep.subr.bf16.mxu0 0
    %7980 = vmatpush1.bf16.msra.mxu0 0
    %7981 = vmatprep.subr.bf16.mxu0 0
    %7982 = vmatpush1.bf16.msra.mxu0 0
    %7983 = vmatprep.subr.bf16.mxu0 0
    %7984 = vmatpush1.bf16.msra.mxu0 0
    %7985 = vmatprep.subr.bf16.mxu0 0
    %7986 = vmatpush1.bf16.msra.mxu0 0
    %7987 = vmatprep.subr.bf16.mxu0 0
    %7988 = vmatpush1.bf16.msra.mxu0 0
    %7989 = vmatprep.mubr.bf16.mxu0 0
    %7990 = vmatmul.mubr.bf16.gmra.mrb[0].mxu0 %v7941
    %v7991 = vpop.f32.mrb[0].mxu0
    %v7992 = vadd.f32 0.0, %v7991
    %v7993 = vpop.f32.mrb[0].mxu0
    %v7994 = vpop.f32.mrb[0].mxu0
    %v7995 = vadd.f32 0.0, %v7994
    %v7996 = vpop.f32.mrb[0].mxu0
    %7997 = vmatprep.mubr.bf16.mxu0 0
    %7998 = vmatmul.mubr.bf16.gmra.mrb[0].mxu0 %v7942
    %v7999 = vpop.f32.mrb[0].mxu0
    %v8000 = vadd.f32 0.0, %v7999
    %v8001 = vpop.f32.mrb[0].mxu0
    %v8002 = vpop.f32.mrb[0].mxu0
    %v8003 = vadd.f32 0.0, %v8002
    %v8004 = vpop.f32.mrb[0].mxu0
    %8005 = vmatprep.mubr.bf16.mxu0 0
    %8006 = vmatmul.mubr.bf16.gmra.mrb[0].mxu0 %v7943
    %v8007 = vpop.f32.mrb[0].mxu0
    %v8008 = vadd.f32 0.0, %v8007
    %v8009 = vpop.f32.mrb[0].mxu0
    %v8010 = vpop.f32.mrb[0].mxu0
    %v8011 = vadd.f32 0.0, %v8010
    %v8012 = vpop.f32.mrb[0].mxu0
    %8013 = vmatprep.mubr.bf16.mxu0 0
    %8014 = vmatmul.mubr.bf16.gmra.mrb[0].mxu0 %v7944
    %v8015 = vpop.f32.mrb[0].mxu0
    %v8016 = vadd.f32 0.0, %v8015
    %v8017 = vpop.f32.mrb[0].mxu0
    %v8018 = vpop.f32.mrb[0].mxu0
    %v8019 = vadd.f32 0.0, %v8018
    %v8020 = vpop.f32.mrb[0].mxu0
    %8021 = vmatprep.mubr.bf16.mxu0 0
    %8022 = vmatmul.mubr.bf16.gmra.mrb[0].mxu0 %v7945
    %v8023 = vpop.f32.mrb[0].mxu0
    %v8024 = vadd.f32 0.0, %v8023
    %v8025 = vpop.f32.mrb[0].mxu0
    %v8026 = vpop.f32.mrb[0].mxu0
    %v8027 = vadd.f32 0.0, %v8026
    %v8028 = vpop.f32.mrb[0].mxu0
    %8029 = vmatprep.mubr.bf16.mxu0 0
    %8030 = vmatmul.mubr.bf16.gmra.mrb[0].mxu0 %v7946
    %v8031 = vpop.f32.mrb[0].mxu0
    %v8032 = vadd.f32 0.0, %v8031
    %v8033 = vpop.f32.mrb[0].mxu0
    %v8034 = vpop.f32.mrb[0].mxu0
    %v8035 = vadd.f32 0.0, %v8034
    %v8036 = vpop.f32.mrb[0].mxu0
    %8037 = vmatprep.mubr.bf16.mxu0 0
    %8038 = vmatmul.mubr.bf16.gmra.mrb[0].mxu0 %v7947
    %v8039 = vpop.f32.mrb[0].mxu0
    %v8040 = vadd.f32 0.0, %v8039
    %v8041 = vpop.f32.mrb[0].mxu0
    %v8042 = vpop.f32.mrb[0].mxu0
    %v8043 = vadd.f32 0.0, %v8042
    %v8044 = vpop.f32.mrb[0].mxu0
    %8045 = vmatprep.mubr.bf16.mxu0 0
    %8046 = vmatmul.mubr.bf16.gmra.mrb[0].mxu0 %v7948
    %v8047 = vpop.f32.mrb[0].mxu0
    %v8048 = vadd.f32 0.0, %v8047
    %v8049 = vpop.f32.mrb[0].mxu0
    %v8050 = vpop.f32.mrb[0].mxu0
    %v8051 = vadd.f32 0.0, %v8050
    %v8052 = vpop.f32.mrb[0].mxu0
    %8053 = vdwg.mxu0
    %v8054 = vadd.f32 %v7909, %v7992
    %v8055 = vadd.f32 %v7910, %v7995
    %v8056 = vadd.f32 %v7911, %v8000
    %v8057 = vadd.f32 %v7912, %v8003
    %v8058 = vadd.f32 %v7913, %v8008
    %v8059 = vadd.f32 %v7914, %v8011
    %v8060 = vadd.f32 %v7915, %v8016
    %v8061 = vadd.f32 %v7916, %v8019
    %v8062 = vadd.f32 %v7917, %v8024
    %v8063 = vadd.f32 %v7918, %v8027
    %v8064 = vadd.f32 %v7919, %v8032
    %v8065 = vadd.f32 %v7920, %v8035
    %v8066 = vadd.f32 %v7921, %v8040
    %v8067 = vadd.f32 %v7922, %v8043
    %v8068 = vadd.f32 %v7923, %v8048
    %v8069 = vadd.f32 %v7924, %v8051
    %v8070 = vld [vmem:[%s10] sm:$0x1]
    %v8071 = vld [vmem:[%s11] sm:$0x1]
    %v8072 = vld [vmem:[%s12] sm:$0x1]
    %v8074 = vlaneseq
    %v8075 = vshrl.u32 %v8074, 7
    %v8076 = vsub.s32 0, %v8075
    %v8077 = vrot.slane %v8070, %v8076
    %v8079 = vadd.f32 %v8054, %v8077
    %v8080 = vadd.f32 %v8055, %v8077
    %v8081 = vadd.f32 %v8056, %v8077
    %v8082 = vadd.f32 %v8057, %v8077
    %v8083 = vadd.f32 %v8058, %v8077
    %v8084 = vadd.f32 %v8059, %v8077
    %v8085 = vadd.f32 %v8060, %v8077
    %v8086 = vadd.f32 %v8061, %v8077
    %v8087 = vadd.f32 %v8062, %v8077
    %v8088 = vadd.f32 %v8063, %v8077
    %v8089 = vadd.f32 %v8064, %v8077
    %v8090 = vadd.f32 %v8065, %v8077
    %v8091 = vadd.f32 %v8066, %v8077
    %v8092 = vadd.f32 %v8067, %v8077
    %v8093 = vadd.f32 %v8068, %v8077
    %v8094 = vadd.f32 %v8069, %v8077
    %v8095 = vmax.f32 %v8079, 0.0
    %v8096 = vmax.f32 %v8080, 0.0
    %v8097 = vmax.f32 %v8081, 0.0
    %v8098 = vmax.f32 %v8082, 0.0
    %v8099 = vmax.f32 %v8083, 0.0
    %v8100 = vmax.f32 %v8084, 0.0
    %v8101 = vmax.f32 %v8085, 0.0
    %v8102 = vmax.f32 %v8086, 0.0
    %v8103 = vmax.f32 %v8087, 0.0
    %v8104 = vmax.f32 %v8088, 0.0
    %v8105 = vmax.f32 %v8089, 0.0
    %v8106 = vmax.f32 %v8090, 0.0
    %v8107 = vmax.f32 %v8091, 0.0
    %v8108 = vmax.f32 %v8092, 0.0
    %v8109 = vmax.f32 %v8093, 0.0
    %v8110 = vmax.f32 %v8094, 0.0
    %v8111 = vadd.f32 %v8095, %v8096
    %v8112 = vadd.f32 %v8111, %v8097
    %v8113 = vadd.f32 %v8112, %v8098
    %v8114 = vadd.f32 %v8113, %v8099
    %v8115 = vadd.f32 %v8114, %v8100
    %v8116 = vadd.f32 %v8115, %v8101
    %v8117 = vadd.f32 %v8116, %v8102
    %v8118 = vadd.f32 %v8117, %v8103
    %v8119 = vadd.f32 %v8118, %v8104
    %v8120 = vadd.f32 %v8119, %v8105
    %v8121 = vadd.f32 %v8120, %v8106
    %v8122 = vadd.f32 %v8121, %v8107
    %v8123 = vadd.f32 %v8122, %v8108
    %v8124 = vadd.f32 %v8123, %v8109
    %v8125 = vadd.f32 %v8124, %v8110
    %v8126 = vrot.slane %v8125, 4
    %v8127 = vadd.f32 %v8125, %v8126
    %v8128 = vrot.slane %v8127, 2
    %v8129 = vadd.f32 %v8127, %v8128
    %v8130 = vrot.slane %v8129, 1
    %v8131 = vadd.f32 %v8129, %v8130
    %v8132 = vmul.f32 %v8131, 0.0078125
    %v8133 = vmul.f32 %v8095, %v8095
    %v8134 = vmul.f32 %v8096, %v8096
    %v8135 = vmul.f32 %v8097, %v8097
    %v8136 = vmul.f32 %v8098, %v8098
    %v8137 = vmul.f32 %v8099, %v8099
    %v8138 = vmul.f32 %v8100, %v8100
    %v8139 = vmul.f32 %v8101, %v8101
    %v8140 = vmul.f32 %v8102, %v8102
    %v8141 = vmul.f32 %v8103, %v8103
    %v8142 = vmul.f32 %v8104, %v8104
    %v8143 = vmul.f32 %v8105, %v8105
    %v8144 = vmul.f32 %v8106, %v8106
    %v8145 = vmul.f32 %v8107, %v8107
    %v8146 = vmul.f32 %v8108, %v8108
    %v8147 = vmul.f32 %v8109, %v8109
    %v8148 = vmul.f32 %v8110, %v8110
    %v8149 = vadd.f32 %v8133, %v8134
    %v8150 = vadd.f32 %v8149, %v8135
    %v8151 = vadd.f32 %v8150, %v8136
    %v8152 = vadd.f32 %v8151, %v8137
    %v8153 = vadd.f32 %v8152, %v8138
    %v8154 = vadd.f32 %v8153, %v8139
    %v8155 = vadd.f32 %v8154, %v8140
    %v8156 = vadd.f32 %v8155, %v8141
    %v8157 = vadd.f32 %v8156, %v8142
    %v8158 = vadd.f32 %v8157, %v8143
    %v8159 = vadd.f32 %v8158, %v8144
    %v8160 = vadd.f32 %v8159, %v8145
    %v8161 = vadd.f32 %v8160, %v8146
    %v8162 = vadd.f32 %v8161, %v8147
    %v8163 = vadd.f32 %v8162, %v8148
    %v8164 = vrot.slane %v8163, 4
    %v8165 = vadd.f32 %v8163, %v8164
    %v8166 = vrot.slane %v8165, 2
    %v8167 = vadd.f32 %v8165, %v8166
    %v8168 = vrot.slane %v8167, 1
    %v8169 = vadd.f32 %v8167, %v8168
    %v8170 = vmul.f32 %v8169, 0.0078125
    %v8171 = vmul.f32 %v8132, %v8132
    %v8172 = vsub.f32 %v8170, %v8171
    %v8173 = vmax.f32 %v8172, 0.0
    %v8174 = vadd.f32 %v8173, 1e-05
    %v8175 = vrsqrt.pop %v8174
    %v8176 = vmul.f32 %v8071, %v8175
    %v8178 = vlaneseq
    %v8179 = vshrl.u32 %v8178, 7
    %v8180 = vsub.s32 0, %v8179
    %v8181 = vrot.slane %v8176, %v8180
    %v8183 = vmul.f32 %v8095, %v8181
    %v8184 = vmul.f32 %v8096, %v8181
    %v8185 = vmul.f32 %v8097, %v8181
    %v8186 = vmul.f32 %v8098, %v8181
    %v8187 = vmul.f32 %v8099, %v8181
    %v8188 = vmul.f32 %v8100, %v8181
    %v8189 = vmul.f32 %v8101, %v8181
    %v8190 = vmul.f32 %v8102, %v8181
    %v8191 = vmul.f32 %v8103, %v8181
    %v8192 = vmul.f32 %v8104, %v8181
    %v8193 = vmul.f32 %v8105, %v8181
    %v8194 = vmul.f32 %v8106, %v8181
    %v8195 = vmul.f32 %v8107, %v8181
    %v8196 = vmul.f32 %v8108, %v8181
    %v8197 = vmul.f32 %v8109, %v8181
    %v8198 = vmul.f32 %v8110, %v8181
    %v8199 = vmul.f32 %v8132, %v8176
    %v8200 = vsub.f32 %v8072, %v8199
    %v8202 = vlaneseq
    %v8203 = vshrl.u32 %v8202, 7
    %v8204 = vsub.s32 0, %v8203
    %v8205 = vrot.slane %v8200, %v8204
    %v8207 = vadd.f32 %v8183, %v8205
    %v8208 = vadd.f32 %v8184, %v8205
    %v8209 = vadd.f32 %v8185, %v8205
    %v8210 = vadd.f32 %v8186, %v8205
    %v8211 = vadd.f32 %v8187, %v8205
    %v8212 = vadd.f32 %v8188, %v8205
    %v8213 = vadd.f32 %v8189, %v8205
    %v8214 = vadd.f32 %v8190, %v8205
    %v8215 = vadd.f32 %v8191, %v8205
    %v8216 = vadd.f32 %v8192, %v8205
    %v8217 = vadd.f32 %v8193, %v8205
    %v8218 = vadd.f32 %v8194, %v8205
    %v8219 = vadd.f32 %v8195, %v8205
    %v8220 = vadd.f32 %v8196, %v8205
    %v8221 = vadd.f32 %v8197, %v8205
    %v8222 = vadd.f32 %v8198, %v8205
    %s8223 = sshll.u32 %s6736, 4
    %8224 = dma.done %s238, %s8223
    %8225 = vst [vmem:[#allocation4] sm:$0xff] 0.0
    %8226 = vst [vmem:[#allocation4 + $0x8] sm:$0x3] 0.0
    %8227 = vst [vmem:[#allocation4 + $0x10] sm:$0xff] 0.0
    %8228 = vst [vmem:[#allocation4 + $0x18] sm:$0x3] 0.0
    %8229 = vst [vmem:[#allocation4 + $0x20] sm:$0xff] 0.0
    %8230 = vst [vmem:[#allocation4 + $0x28] sm:$0x3] 0.0
    %8231 = vst [vmem:[#allocation4 + $0x30] sm:$0xff] 0.0
    %8232 = vst [vmem:[#allocation4 + $0x38] sm:$0x3] 0.0
    %8233 = vst [vmem:[#allocation4 + $0x40] sm:$0xff] 0.0
    %8234 = vst [vmem:[#allocation4 + $0x48] sm:$0x3] 0.0
    %8235 = vst [vmem:[#allocation4 + $0x50] sm:$0xff] 0.0
    %8236 = vst [vmem:[#allocation4 + $0x58] sm:$0x3] 0.0
    %8237 = vst [vmem:[#allocation4 + $0x60] sm:$0xff] 0.0
    %8238 = vst [vmem:[#allocation4 + $0x68] sm:$0x3] 0.0
    %8239 = vst [vmem:[#allocation4 + $0x70] sm:$0xff] 0.0
    %8240 = vst [vmem:[#allocation4 + $0x78] sm:$0x3] 0.0
    %8241 = vst [vmem:[#allocation4 + $0x80] sm:$0xff] 0.0
    %8242 = vst [vmem:[#allocation4 + $0x88] sm:$0x3] 0.0
    %8243 = vst [vmem:[#allocation4 + $0x90] sm:$0xff] 0.0
    %8244 = vst [vmem:[#allocation4 + $0x98] sm:$0x3] 0.0
    %8245 = vst [vmem:[#allocation4 + $0xa0] sm:$0xff] 0.0
    %8246 = vst [vmem:[#allocation4 + $0xa8] sm:$0x3] 0.0
    %8247 = vst [vmem:[#allocation4 + $0xb0] sm:$0xff] 0.0
    %8248 = vst [vmem:[#allocation4 + $0xb8] sm:$0x3] 0.0
    %8249 = vst [vmem:[#allocation4 + $0xc0] sm:$0xff] 0.0
    %8250 = vst [vmem:[#allocation4 + $0xc8] sm:$0x3] 0.0
    %8251 = vst [vmem:[#allocation4 + $0xd0] sm:$0xff] 0.0
    %8252 = vst [vmem:[#allocation4 + $0xd8] sm:$0x3] 0.0
    %8253 = vst [vmem:[#allocation4 + $0xe0] sm:$0xff] 0.0
    %8254 = vst [vmem:[#allocation4 + $0xe8] sm:$0x3] 0.0
    %8255 = vst [vmem:[#allocation4 + $0xf0] sm:$0xff] 0.0
    %8256 = vst [vmem:[#allocation4 + $0xf8] sm:$0x3] 0.0
    %8257 = vst [vmem:[#allocation4 + $0x100] sm:$0xff] 0.0
    %8258 = vst [vmem:[#allocation4 + $0x108] sm:$0x3] 0.0
    %8259 = vst [vmem:[#allocation4 + $0x110] sm:$0xff] 0.0
    %8260 = vst [vmem:[#allocation4 + $0x118] sm:$0x3] 0.0
    %8261 = vst [vmem:[#allocation4 + $0x120] sm:$0xff] 0.0
    %8262 = vst [vmem:[#allocation4 + $0x128] sm:$0x3] 0.0
    %8263 = vst [vmem:[#allocation4 + $0x130] sm:$0xff] 0.0
    %8264 = vst [vmem:[#allocation4 + $0x138] sm:$0x3] 0.0
    %s8265 = scalar_lea.vmem [#allocation4], 16
    %8266 = vst [vmem:[%s8265 + $0x1] sm:$0xff] %v8207
    %8267 = vst [vmem:[%s8265 + $0x11] sm:$0xff] %v8208
    %8268 = vst [vmem:[%s8265 + $0x21] sm:$0xff] %v8209
    %8269 = vst [vmem:[%s8265 + $0x31] sm:$0xff] %v8210
    %8270 = vst [vmem:[%s8265 + $0x41] sm:$0xff] %v8211
    %8271 = vst [vmem:[%s8265 + $0x51] sm:$0xff] %v8212
    %8272 = vst [vmem:[%s8265 + $0x61] sm:$0xff] %v8213
    %8273 = vst [vmem:[%s8265 + $0x71] sm:$0xff] %v8214
    %8274 = vst [vmem:[%s8265 + $0xa1] sm:$0xff] %v8215
    %8275 = vst [vmem:[%s8265 + $0xb1] sm:$0xff] %v8216
    %8276 = vst [vmem:[%s8265 + $0xc1] sm:$0xff] %v8217
    %8277 = vst [vmem:[%s8265 + $0xd1] sm:$0xff] %v8218
    %8278 = vst [vmem:[%s8265 + $0xe1] sm:$0xff] %v8219
    %8279 = vst [vmem:[%s8265 + $0xf1] sm:$0xff] %v8220
    %8280 = vst [vmem:[%s8265 + $0x101] sm:$0xff] %v8221
    %8281 = vst [vmem:[%s8265 + $0x111] sm:$0xff] %v8222
    %v8282 = vld [vmem:[#allocation4] sm:$0xff]
    %v8283 = vld [vmem:[#allocation4 + $0x10] sm:$0xff]
    %v8284 = vld [vmem:[#allocation4 + $0x20] sm:$0xff]
    %v8285 = vld [vmem:[#allocation4 + $0x30] sm:$0xff]
    %v8286 = vld [vmem:[#allocation4 + $0x40] sm:$0xff]
    %v8287 = vld [vmem:[#allocation4 + $0x50] sm:$0xff]
    %v8288 = vld [vmem:[#allocation4 + $0x60] sm:$0xff]
    %v8289 = vld [vmem:[#allocation4 + $0x70] sm:$0xff]
    %v8290 = vld [vmem:[#allocation4 + $0xa0] sm:$0xff]
    %v8291 = vld [vmem:[#allocation4 + $0xb0] sm:$0xff]
    %v8292 = vld [vmem:[#allocation4 + $0xc0] sm:$0xff]
    %v8293 = vld [vmem:[#allocation4 + $0xd0] sm:$0xff]
    %v8294 = vld [vmem:[#allocation4 + $0xe0] sm:$0xff]
    %v8295 = vld [vmem:[#allocation4 + $0xf0] sm:$0xff]
    %v8296 = vld [vmem:[#allocation4 + $0x100] sm:$0xff]
    %v8297 = vld [vmem:[#allocation4 + $0x110] sm:$0xff]
    %v8298 = vpack.c.bf16 %v8283, %v8282
    %v8299 = vpack.c.bf16 %v8285, %v8284
    %v8300 = vpack.c.bf16 %v8287, %v8286
    %v8301 = vpack.c.bf16 %v8289, %v8288
    %v8302 = vpack.c.bf16 %v8291, %v8290
    %v8303 = vpack.c.bf16 %v8293, %v8292
    %v8304 = vpack.c.bf16 %v8295, %v8294
    %v8305 = vpack.c.bf16 %v8297, %v8296
    %v8306 = vld [vmem:[#allocation8] sm:$0xff]
    %v8307 = vld [vmem:[#allocation8 + $0x8] sm:$0xff]
    %v8308 = vld [vmem:[#allocation8 + $0x10] sm:$0xff]
    %v8309 = vld [vmem:[#allocation8 + $0x18] sm:$0xff]
    %v8310 = vld [vmem:[#allocation8 + $0x20] sm:$0xff]
    %v8311 = vld [vmem:[#allocation8 + $0x28] sm:$0xff]
    %v8312 = vld [vmem:[#allocation8 + $0x30] sm:$0xff]
    %v8313 = vld [vmem:[#allocation8 + $0x38] sm:$0xff]
    %v8314 = vld [vmem:[#allocation4 + $0x1] sm:$0xff]
    %v8315 = vld [vmem:[#allocation4 + $0x11] sm:$0xff]
    %v8316 = vld [vmem:[#allocation4 + $0x21] sm:$0xff]
    %v8317 = vld [vmem:[#allocation4 + $0x31] sm:$0xff]
    %v8318 = vld [vmem:[#allocation4 + $0x41] sm:$0xff]
    %v8319 = vld [vmem:[#allocation4 + $0x51] sm:$0xff]
    %v8320 = vld [vmem:[#allocation4 + $0x61] sm:$0xff]
    %v8321 = vld [vmem:[#allocation4 + $0x71] sm:$0xff]
    %v8322 = vld [vmem:[#allocation4 + $0xa1] sm:$0xff]
    %v8323 = vld [vmem:[#allocation4 + $0xb1] sm:$0xff]
    %v8324 = vld [vmem:[#allocation4 + $0xc1] sm:$0xff]
    %v8325 = vld [vmem:[#allocation4 + $0xd1] sm:$0xff]
    %v8326 = vld [vmem:[#allocation4 + $0xe1] sm:$0xff]
    %v8327 = vld [vmem:[#allocation4 + $0xf1] sm:$0xff]
    %v8328 = vld [vmem:[#allocation4 + $0x101] sm:$0xff]
    %v8329 = vld [vmem:[#allocation4 + $0x111] sm:$0xff]
    %v8330 = vpack.c.bf16 %v8315, %v8314
    %v8331 = vpack.c.bf16 %v8317, %v8316
    %v8332 = vpack.c.bf16 %v8319, %v8318
    %v8333 = vpack.c.bf16 %v8321, %v8320
    %v8334 = vpack.c.bf16 %v8323, %v8322
    %v8335 = vpack.c.bf16 %v8325, %v8324
    %v8336 = vpack.c.bf16 %v8327, %v8326
    %v8337 = vpack.c.bf16 %v8329, %v8328
    %v8338 = vld [vmem:[#allocation8 + $0x40] sm:$0xff]
    %v8339 = vld [vmem:[#allocation8 + $0x48] sm:$0xff]
    %v8340 = vld [vmem:[#allocation8 + $0x50] sm:$0xff]
    %v8341 = vld [vmem:[#allocation8 + $0x58] sm:$0xff]
    %v8342 = vld [vmem:[#allocation8 + $0x60] sm:$0xff]
    %v8343 = vld [vmem:[#allocation8 + $0x68] sm:$0xff]
    %v8344 = vld [vmem:[#allocation8 + $0x70] sm:$0xff]
    %v8345 = vld [vmem:[#allocation8 + $0x78] sm:$0xff]
    %8346 = vmatprep.subr.bf16.mxu0 0
    %8347 = vmatpush1.bf16.msra.mxu0 %v8338
    %8348 = vmatprep.subr.bf16.mxu0 0
    %8349 = vmatpush1.bf16.msra.mxu0 %v8339
    %8350 = vmatprep.subr.bf16.mxu0 0
    %8351 = vmatpush1.bf16.msra.mxu0 %v8340
    %8352 = vmatprep.subr.bf16.mxu0 0
    %8353 = vmatpush1.bf16.msra.mxu0 %v8341
    %8354 = vmatprep.subr.bf16.mxu0 0
    %8355 = vmatpush1.bf16.msra.mxu0 %v8342
    %8356 = vmatprep.subr.bf16.mxu0 0
    %8357 = vmatpush1.bf16.msra.mxu0 %v8343
    %8358 = vmatprep.subr.bf16.mxu0 0
    %8359 = vmatpush1.bf16.msra.mxu0 %v8344
    %8360 = vmatprep.subr.bf16.mxu0 0
    %8361 = vmatpush1.bf16.msra.mxu0 %v8345
    %8362 = vmatprep.subr.bf16.mxu0 0
    %8363 = vmatpush1.bf16.msra.mxu0 0
    %8364 = vmatprep.subr.bf16.mxu0 0
    %8365 = vmatpush1.bf16.msra.mxu0 0
    %8366 = vmatprep.subr.bf16.mxu0 0
    %8367 = vmatpush1.bf16.msra.mxu0 0
    %8368 = vmatprep.subr.bf16.mxu0 0
    %8369 = vmatpush1.bf16.msra.mxu0 0
    %8370 = vmatprep.subr.bf16.mxu0 0
    %8371 = vmatpush1.bf16.msra.mxu0 0
    %8372 = vmatprep.subr.bf16.mxu0 0
    %8373 = vmatpush1.bf16.msra.mxu0 0
    %8374 = vmatprep.subr.bf16.mxu0 0
    %8375 = vmatpush1.bf16.msra.mxu0 0
    %8376 = vmatprep.subr.bf16.mxu0 0
    %8377 = vmatpush1.bf16.msra.mxu0 0
    %8378 = vmatprep.mubr.bf16.mxu0 0
    %8379 = vmatmul.mubr.bf16.gmra.mrb[0].mxu0 %v8330
    %v8380 = vpop.f32.mrb[0].mxu0
    %v8381 = vadd.f32 0.0, %v8380
    %v8382 = vpop.f32.mrb[0].mxu0
    %v8383 = vpop.f32.mrb[0].mxu0
    %v8384 = vadd.f32 0.0, %v8383
    %v8385 = vpop.f32.mrb[0].mxu0
    %8386 = vmatprep.mubr.bf16.mxu0 0
    %8387 = vmatmul.mubr.bf16.gmra.mrb[0].mxu0 %v8331
    %v8388 = vpop.f32.mrb[0].mxu0
    %v8389 = vadd.f32 0.0, %v8388
    %v8390 = vpop.f32.mrb[0].mxu0
    %v8391 = vpop.f32.mrb[0].mxu0
    %v8392 = vadd.f32 0.0, %v8391
    %v8393 = vpop.f32.mrb[0].mxu0
    %8394 = vmatprep.mubr.bf16.mxu0 0
    %8395 = vmatmul.mubr.bf16.gmra.mrb[0].mxu0 %v8332
    %v8396 = vpop.f32.mrb[0].mxu0
    %v8397 = vadd.f32 0.0, %v8396
    %v8398 = vpop.f32.mrb[0].mxu0
    %v8399 = vpop.f32.mrb[0].mxu0
    %v8400 = vadd.f32 0.0, %v8399
    %v8401 = vpop.f32.mrb[0].mxu0
    %8402 = vmatprep.mubr.bf16.mxu0 0
    %8403 = vmatmul.mubr.bf16.gmra.mrb[0].mxu0 %v8333
    %v8404 = vpop.f32.mrb[0].mxu0
    %v8405 = vadd.f32 0.0, %v8404
    %v8406 = vpop.f32.mrb[0].mxu0
    %v8407 = vpop.f32.mrb[0].mxu0
    %v8408 = vadd.f32 0.0, %v8407
    %v8409 = vpop.f32.mrb[0].mxu0
    %8410 = vmatprep.mubr.bf16.mxu0 0
    %8411 = vmatmul.mubr.bf16.gmra.mrb[0].mxu0 %v8334
    %v8412 = vpop.f32.mrb[0].mxu0
    %v8413 = vadd.f32 0.0, %v8412
    %v8414 = vpop.f32.mrb[0].mxu0
    %v8415 = vpop.f32.mrb[0].mxu0
    %v8416 = vadd.f32 0.0, %v8415
    %v8417 = vpop.f32.mrb[0].mxu0
    %8418 = vmatprep.mubr.bf16.mxu0 0
    %8419 = vmatmul.mubr.bf16.gmra.mrb[0].mxu0 %v8335
    %v8420 = vpop.f32.mrb[0].mxu0
    %v8421 = vadd.f32 0.0, %v8420
    %v8422 = vpop.f32.mrb[0].mxu0
    %v8423 = vpop.f32.mrb[0].mxu0
    %v8424 = vadd.f32 0.0, %v8423
    %v8425 = vpop.f32.mrb[0].mxu0
    %8426 = vmatprep.mubr.bf16.mxu0 0
    %8427 = vmatmul.mubr.bf16.gmra.mrb[0].mxu0 %v8336
    %v8428 = vpop.f32.mrb[0].mxu0
    %v8429 = vadd.f32 0.0, %v8428
    %v8430 = vpop.f32.mrb[0].mxu0
    %v8431 = vpop.f32.mrb[0].mxu0
    %v8432 = vadd.f32 0.0, %v8431
    %v8433 = vpop.f32.mrb[0].mxu0
    %8434 = vmatprep.mubr.bf16.mxu0 0
    %8435 = vmatmul.mubr.bf16.gmra.mrb[0].mxu0 %v8337
    %v8436 = vpop.f32.mrb[0].mxu0
    %v8437 = vadd.f32 0.0, %v8436
    %v8438 = vpop.f32.mrb[0].mxu0
    %v8439 = vpop.f32.mrb[0].mxu0
    %v8440 = vadd.f32 0.0, %v8439
    %v8441 = vpop.f32.mrb[0].mxu0
    %8442 = vdwg.mxu0
    %8443 = vmatprep.subr.bf16.mxu0 0
    %8444 = vmatpush1.bf16.msra.mxu0 %v8306
    %8445 = vmatprep.subr.bf16.mxu0 0
    %8446 = vmatpush1.bf16.msra.mxu0 %v8307
    %8447 = vmatprep.subr.bf16.mxu0 0
    %8448 = vmatpush1.bf16.msra.mxu0 %v8308
    %8449 = vmatprep.subr.bf16.mxu0 0
    %8450 = vmatpush1.bf16.msra.mxu0 %v8309
    %8451 = vmatprep.subr.bf16.mxu0 0
    %8452 = vmatpush1.bf16.msra.mxu0 %v8310
    %8453 = vmatprep.subr.bf16.mxu0 0
    %8454 = vmatpush1.bf16.msra.mxu0 %v8311
    %8455 = vmatprep.subr.bf16.mxu0 0
    %8456 = vmatpush1.bf16.msra.mxu0 %v8312
    %8457 = vmatprep.subr.bf16.mxu0 0
    %8458 = vmatpush1.bf16.msra.mxu0 %v8313
    %8459 = vmatprep.subr.bf16.mxu0 0
    %8460 = vmatpush1.bf16.msra.mxu0 0
    %8461 = vmatprep.subr.bf16.mxu0 0
    %8462 = vmatpush1.bf16.msra.mxu0 0
    %8463 = vmatprep.subr.bf16.mxu0 0
    %8464 = vmatpush1.bf16.msra.mxu0 0
    %8465 = vmatprep.subr.bf16.mxu0 0
    %8466 = vmatpush1.bf16.msra.mxu0 0
    %8467 = vmatprep.subr.bf16.mxu0 0
    %8468 = vmatpush1.bf16.msra.mxu0 0
    %8469 = vmatprep.subr.bf16.mxu0 0
    %8470 = vmatpush1.bf16.msra.mxu0 0
    %8471 = vmatprep.subr.bf16.mxu0 0
    %8472 = vmatpush1.bf16.msra.mxu0 0
    %8473 = vmatprep.subr.bf16.mxu0 0
    %8474 = vmatpush1.bf16.msra.mxu0 0
    %8475 = vmatprep.mubr.bf16.mxu0 0
    %8476 = vmatmul.mubr.bf16.gmra.mrb[0].mxu0 %v8298
    %v8477 = vpop.f32.mrb[0].mxu0
    %v8478 = vadd.f32 %v8381, %v8477
    %v8479 = vpop.f32.mrb[0].mxu0
    %v8480 = vpop.f32.mrb[0].mxu0
    %v8481 = vadd.f32 %v8384, %v8480
    %v8482 = vpop.f32.mrb[0].mxu0
    %8483 = vmatprep.mubr.bf16.mxu0 0
    %8484 = vmatmul.mubr.bf16.gmra.mrb[0].mxu0 %v8299
    %v8485 = vpop.f32.mrb[0].mxu0
    %v8486 = vadd.f32 %v8389, %v8485
    %v8487 = vpop.f32.mrb[0].mxu0
    %v8488 = vpop.f32.mrb[0].mxu0
    %v8489 = vadd.f32 %v8392, %v8488
    %v8490 = vpop.f32.mrb[0].mxu0
    %8491 = vmatprep.mubr.bf16.mxu0 0
    %8492 = vmatmul.mubr.bf16.gmra.mrb[0].mxu0 %v8300
    %v8493 = vpop.f32.mrb[0].mxu0
    %v8494 = vadd.f32 %v8397, %v8493
    %v8495 = vpop.f32.mrb[0].mxu0
    %v8496 = vpop.f32.mrb[0].mxu0
    %v8497 = vadd.f32 %v8400, %v8496
    %v8498 = vpop.f32.mrb[0].mxu0
    %8499 = vmatprep.mubr.bf16.mxu0 0
    %8500 = vmatmul.mubr.bf16.gmra.mrb[0].mxu0 %v8301
    %v8501 = vpop.f32.mrb[0].mxu0
    %v8502 = vadd.f32 %v8405, %v8501
    %v8503 = vpop.f32.mrb[0].mxu0
    %v8504 = vpop.f32.mrb[0].mxu0
    %v8505 = vadd.f32 %v8408, %v8504
    %v8506 = vpop.f32.mrb[0].mxu0
    %8507 = vmatprep.mubr.bf16.mxu0 0
    %8508 = vmatmul.mubr.bf16.gmra.mrb[0].mxu0 %v8302
    %v8509 = vpop.f32.mrb[0].mxu0
    %v8510 = vadd.f32 %v8413, %v8509
    %v8511 = vpop.f32.mrb[0].mxu0
    %v8512 = vpop.f32.mrb[0].mxu0
    %v8513 = vadd.f32 %v8416, %v8512
    %v8514 = vpop.f32.mrb[0].mxu0
    %8515 = vmatprep.mubr.bf16.mxu0 0
    %8516 = vmatmul.mubr.bf16.gmra.mrb[0].mxu0 %v8303
    %v8517 = vpop.f32.mrb[0].mxu0
    %v8518 = vadd.f32 %v8421, %v8517
    %v8519 = vpop.f32.mrb[0].mxu0
    %v8520 = vpop.f32.mrb[0].mxu0
    %v8521 = vadd.f32 %v8424, %v8520
    %v8522 = vpop.f32.mrb[0].mxu0
    %8523 = vmatprep.mubr.bf16.mxu0 0
    %8524 = vmatmul.mubr.bf16.gmra.mrb[0].mxu0 %v8304
    %v8525 = vpop.f32.mrb[0].mxu0
    %v8526 = vadd.f32 %v8429, %v8525
    %v8527 = vpop.f32.mrb[0].mxu0
    %v8528 = vpop.f32.mrb[0].mxu0
    %v8529 = vadd.f32 %v8432, %v8528
    %v8530 = vpop.f32.mrb[0].mxu0
    %8531 = vmatprep.mubr.bf16.mxu0 0
    %8532 = vmatmul.mubr.bf16.gmra.mrb[0].mxu0 %v8305
    %v8533 = vpop.f32.mrb[0].mxu0
    %v8534 = vadd.f32 %v8437, %v8533
    %v8535 = vpop.f32.mrb[0].mxu0
    %v8536 = vpop.f32.mrb[0].mxu0
    %v8537 = vadd.f32 %v8440, %v8536
    %v8538 = vpop.f32.mrb[0].mxu0
    %8539 = vdwg.mxu0
    %v8540 = vld [vmem:[#allocation4 + $0x2] sm:$0xff]
    %v8541 = vld [vmem:[#allocation4 + $0x12] sm:$0xff]
    %v8542 = vld [vmem:[#allocation4 + $0x22] sm:$0xff]
    %v8543 = vld [vmem:[#allocation4 + $0x32] sm:$0xff]
    %v8544 = vld [vmem:[#allocation4 + $0x42] sm:$0xff]
    %v8545 = vld [vmem:[#allocation4 + $0x52] sm:$0xff]
    %v8546 = vld [vmem:[#allocation4 + $0x62] sm:$0xff]
    %v8547 = vld [vmem:[#allocation4 + $0x72] sm:$0xff]
    %v8548 = vld [vmem:[#allocation4 + $0xa2] sm:$0xff]
    %v8549 = vld [vmem:[#allocation4 + $0xb2] sm:$0xff]
    %v8550 = vld [vmem:[#allocation4 + $0xc2] sm:$0xff]
    %v8551 = vld [vmem:[#allocation4 + $0xd2] sm:$0xff]
    %v8552 = vld [vmem:[#allocation4 + $0xe2] sm:$0xff]
    %v8553 = vld [vmem:[#allocation4 + $0xf2] sm:$0xff]
    %v8554 = vld [vmem:[#allocation4 + $0x102] sm:$0xff]
    %v8555 = vld [vmem:[#allocation4 + $0x112] sm:$0xff]
    %v8556 = vpack.c.bf16 %v8541, %v8540
    %v8557 = vpack.c.bf16 %v8543, %v8542
    %v8558 = vpack.c.bf16 %v8545, %v8544
    %v8559 = vpack.c.bf16 %v8547, %v8546
    %v8560 = vpack.c.bf16 %v8549, %v8548
    %v8561 = vpack.c.bf16 %v8551, %v8550
    %v8562 = vpack.c.bf16 %v8553, %v8552
    %v8563 = vpack.c.bf16 %v8555, %v8554
    %v8564 = vld [vmem:[#allocation8 + $0x80] sm:$0xff]
    %v8565 = vld [vmem:[#allocation8 + $0x88] sm:$0xff]
    %v8566 = vld [vmem:[#allocation8 + $0x90] sm:$0xff]
    %v8567 = vld [vmem:[#allocation8 + $0x98] sm:$0xff]
    %v8568 = vld [vmem:[#allocation8 + $0xa0] sm:$0xff]
    %v8569 = vld [vmem:[#allocation8 + $0xa8] sm:$0xff]
    %v8570 = vld [vmem:[#allocation8 + $0xb0] sm:$0xff]
    %v8571 = vld [vmem:[#allocation8 + $0xb8] sm:$0xff]
    %8572 = vmatprep.subr.bf16.mxu0 0
    %8573 = vmatpush1.bf16.msra.mxu0 %v8564
    %8574 = vmatprep.subr.bf16.mxu0 0
    %8575 = vmatpush1.bf16.msra.mxu0 %v8565
    %8576 = vmatprep.subr.bf16.mxu0 0
    %8577 = vmatpush1.bf16.msra.mxu0 %v8566
    %8578 = vmatprep.subr.bf16.mxu0 0
    %8579 = vmatpush1.bf16.msra.mxu0 %v8567
    %8580 = vmatprep.subr.bf16.mxu0 0
    %8581 = vmatpush1.bf16.msra.mxu0 %v8568
    %8582 = vmatprep.subr.bf16.mxu0 0
    %8583 = vmatpush1.bf16.msra.mxu0 %v8569
    %8584 = vmatprep.subr.bf16.mxu0 0
    %8585 = vmatpush1.bf16.msra.mxu0 %v8570
    %8586 = vmatprep.subr.bf16.mxu0 0
    %8587 = vmatpush1.bf16.msra.mxu0 %v8571
    %8588 = vmatprep.subr.bf16.mxu0 0
    %8589 = vmatpush1.bf16.msra.mxu0 0
    %8590 = vmatprep.subr.bf16.mxu0 0
    %8591 = vmatpush1.bf16.msra.mxu0 0
    %8592 = vmatprep.subr.bf16.mxu0 0
    %8593 = vmatpush1.bf16.msra.mxu0 0
    %8594 = vmatprep.subr.bf16.mxu0 0
    %8595 = vmatpush1.bf16.msra.mxu0 0
    %8596 = vmatprep.subr.bf16.mxu0 0
    %8597 = vmatpush1.bf16.msra.mxu0 0
    %8598 = vmatprep.subr.bf16.mxu0 0
    %8599 = vmatpush1.bf16.msra.mxu0 0
    %8600 = vmatprep.subr.bf16.mxu0 0
    %8601 = vmatpush1.bf16.msra.mxu0 0
    %8602 = vmatprep.subr.bf16.mxu0 0
    %8603 = vmatpush1.bf16.msra.mxu0 0
    %8604 = vmatprep.mubr.bf16.mxu0 0
    %8605 = vmatmul.mubr.bf16.gmra.mrb[0].mxu0 %v8556
    %v8606 = vpop.f32.mrb[0].mxu0
    %v8607 = vadd.f32 0.0, %v8606
    %v8608 = vpop.f32.mrb[0].mxu0
    %v8609 = vpop.f32.mrb[0].mxu0
    %v8610 = vadd.f32 0.0, %v8609
    %v8611 = vpop.f32.mrb[0].mxu0
    %8612 = vmatprep.mubr.bf16.mxu0 0
    %8613 = vmatmul.mubr.bf16.gmra.mrb[0].mxu0 %v8557
    %v8614 = vpop.f32.mrb[0].mxu0
    %v8615 = vadd.f32 0.0, %v8614
    %v8616 = vpop.f32.mrb[0].mxu0
    %v8617 = vpop.f32.mrb[0].mxu0
    %v8618 = vadd.f32 0.0, %v8617
    %v8619 = vpop.f32.mrb[0].mxu0
    %8620 = vmatprep.mubr.bf16.mxu0 0
    %8621 = vmatmul.mubr.bf16.gmra.mrb[0].mxu0 %v8558
    %v8622 = vpop.f32.mrb[0].mxu0
    %v8623 = vadd.f32 0.0, %v8622
    %v8624 = vpop.f32.mrb[0].mxu0
    %v8625 = vpop.f32.mrb[0].mxu0
    %v8626 = vadd.f32 0.0, %v8625
    %v8627 = vpop.f32.mrb[0].mxu0
    %8628 = vmatprep.mubr.bf16.mxu0 0
    %8629 = vmatmul.mubr.bf16.gmra.mrb[0].mxu0 %v8559
    %v8630 = vpop.f32.mrb[0].mxu0
    %v8631 = vadd.f32 0.0, %v8630
    %v8632 = vpop.f32.mrb[0].mxu0
    %v8633 = vpop.f32.mrb[0].mxu0
    %v8634 = vadd.f32 0.0, %v8633
    %v8635 = vpop.f32.mrb[0].mxu0
    %8636 = vmatprep.mubr.bf16.mxu0 0
    %8637 = vmatmul.mubr.bf16.gmra.mrb[0].mxu0 %v8560
    %v8638 = vpop.f32.mrb[0].mxu0
    %v8639 = vadd.f32 0.0, %v8638
    %v8640 = vpop.f32.mrb[0].mxu0
    %v8641 = vpop.f32.mrb[0].mxu0
    %v8642 = vadd.f32 0.0, %v8641
    %v8643 = vpop.f32.mrb[0].mxu0
    %8644 = vmatprep.mubr.bf16.mxu0 0
    %8645 = vmatmul.mubr.bf16.gmra.mrb[0].mxu0 %v8561
    %v8646 = vpop.f32.mrb[0].mxu0
    %v8647 = vadd.f32 0.0, %v8646
    %v8648 = vpop.f32.mrb[0].mxu0
    %v8649 = vpop.f32.mrb[0].mxu0
    %v8650 = vadd.f32 0.0, %v8649
    %v8651 = vpop.f32.mrb[0].mxu0
    %8652 = vmatprep.mubr.bf16.mxu0 0
    %8653 = vmatmul.mubr.bf16.gmra.mrb[0].mxu0 %v8562
    %v8654 = vpop.f32.mrb[0].mxu0
    %v8655 = vadd.f32 0.0, %v8654
    %v8656 = vpop.f32.mrb[0].mxu0
    %v8657 = vpop.f32.mrb[0].mxu0
    %v8658 = vadd.f32 0.0, %v8657
    %v8659 = vpop.f32.mrb[0].mxu0
    %8660 = vmatprep.mubr.bf16.mxu0 0
    %8661 = vmatmul.mubr.bf16.gmra.mrb[0].mxu0 %v8563
    %v8662 = vpop.f32.mrb[0].mxu0
    %v8663 = vadd.f32 0.0, %v8662
    %v8664 = vpop.f32.mrb[0].mxu0
    %v8665 = vpop.f32.mrb[0].mxu0
    %v8666 = vadd.f32 0.0, %v8665
    %v8667 = vpop.f32.mrb[0].mxu0
    %8668 = vdwg.mxu0
    %v8669 = vadd.f32 %v8478, %v8607
    %v8670 = vadd.f32 %v8481, %v8610
    %v8671 = vadd.f32 %v8486, %v8615
    %v8672 = vadd.f32 %v8489, %v8618
    %v8673 = vadd.f32 %v8494, %v8623
    %v8674 = vadd.f32 %v8497, %v8626
    %v8675 = vadd.f32 %v8502, %v8631
    %v8676 = vadd.f32 %v8505, %v8634
    %v8677 = vadd.f32 %v8510, %v8639
    %v8678 = vadd.f32 %v8513, %v8642
    %v8679 = vadd.f32 %v8518, %v8647
    %v8680 = vadd.f32 %v8521, %v8650
    %v8681 = vadd.f32 %v8526, %v8655
    %v8682 = vadd.f32 %v8529, %v8658
    %v8683 = vadd.f32 %v8534, %v8663
    %v8684 = vadd.f32 %v8537, %v8666
    %v8685 = vld [vmem:[%s8265] sm:$0xff]
    %v8686 = vld [vmem:[%s8265 + $0x10] sm:$0xff]
    %v8687 = vld [vmem:[%s8265 + $0x20] sm:$0xff]
    %v8688 = vld [vmem:[%s8265 + $0x30] sm:$0xff]
    %v8689 = vld [vmem:[%s8265 + $0x40] sm:$0xff]
    %v8690 = vld [vmem:[%s8265 + $0x50] sm:$0xff]
    %v8691 = vld [vmem:[%s8265 + $0x60] sm:$0xff]
    %v8692 = vld [vmem:[%s8265 + $0x70] sm:$0xff]
    %v8693 = vld [vmem:[%s8265 + $0xa0] sm:$0xff]
    %v8694 = vld [vmem:[%s8265 + $0xb0] sm:$0xff]
    %v8695 = vld [vmem:[%s8265 + $0xc0] sm:$0xff]
    %v8696 = vld [vmem:[%s8265 + $0xd0] sm:$0xff]
    %v8697 = vld [vmem:[%s8265 + $0xe0] sm:$0xff]
    %v8698 = vld [vmem:[%s8265 + $0xf0] sm:$0xff]
    %v8699 = vld [vmem:[%s8265 + $0x100] sm:$0xff]
    %v8700 = vld [vmem:[%s8265 + $0x110] sm:$0xff]
    %v8701 = vpack.c.bf16 %v8686, %v8685
    %v8702 = vpack.c.bf16 %v8688, %v8687
    %v8703 = vpack.c.bf16 %v8690, %v8689
    %v8704 = vpack.c.bf16 %v8692, %v8691
    %v8705 = vpack.c.bf16 %v8694, %v8693
    %v8706 = vpack.c.bf16 %v8696, %v8695
    %v8707 = vpack.c.bf16 %v8698, %v8697
    %v8708 = vpack.c.bf16 %v8700, %v8699
    %v8709 = vld [vmem:[#allocation8 + $0xc0] sm:$0xff]
    %v8710 = vld [vmem:[#allocation8 + $0xc8] sm:$0xff]
    %v8711 = vld [vmem:[#allocation8 + $0xd0] sm:$0xff]
    %v8712 = vld [vmem:[#allocation8 + $0xd8] sm:$0xff]
    %v8713 = vld [vmem:[#allocation8 + $0xe0] sm:$0xff]
    %v8714 = vld [vmem:[#allocation8 + $0xe8] sm:$0xff]
    %v8715 = vld [vmem:[#allocation8 + $0xf0] sm:$0xff]
    %v8716 = vld [vmem:[#allocation8 + $0xf8] sm:$0xff]
    %8717 = vmatprep.subr.bf16.mxu0 0
    %8718 = vmatpush1.bf16.msra.mxu0 %v8709
    %8719 = vmatprep.subr.bf16.mxu0 0
    %8720 = vmatpush1.bf16.msra.mxu0 %v8710
    %8721 = vmatprep.subr.bf16.mxu0 0
    %8722 = vmatpush1.bf16.msra.mxu0 %v8711
    %8723 = vmatprep.subr.bf16.mxu0 0
    %8724 = vmatpush1.bf16.msra.mxu0 %v8712
    %8725 = vmatprep.subr.bf16.mxu0 0
    %8726 = vmatpush1.bf16.msra.mxu0 %v8713
    %8727 = vmatprep.subr.bf16.mxu0 0
    %8728 = vmatpush1.bf16.msra.mxu0 %v8714
    %8729 = vmatprep.subr.bf16.mxu0 0
    %8730 = vmatpush1.bf16.msra.mxu0 %v8715
    %8731 = vmatprep.subr.bf16.mxu0 0
    %8732 = vmatpush1.bf16.msra.mxu0 %v8716
    %8733 = vmatprep.subr.bf16.mxu0 0
    %8734 = vmatpush1.bf16.msra.mxu0 0
    %8735 = vmatprep.subr.bf16.mxu0 0
    %8736 = vmatpush1.bf16.msra.mxu0 0
    %8737 = vmatprep.subr.bf16.mxu0 0
    %8738 = vmatpush1.bf16.msra.mxu0 0
    %8739 = vmatprep.subr.bf16.mxu0 0
    %8740 = vmatpush1.bf16.msra.mxu0 0
    %8741 = vmatprep.subr.bf16.mxu0 0
    %8742 = vmatpush1.bf16.msra.mxu0 0
    %8743 = vmatprep.subr.bf16.mxu0 0
    %8744 = vmatpush1.bf16.msra.mxu0 0
    %8745 = vmatprep.subr.bf16.mxu0 0
    %8746 = vmatpush1.bf16.msra.mxu0 0
    %8747 = vmatprep.subr.bf16.mxu0 0
    %8748 = vmatpush1.bf16.msra.mxu0 0
    %8749 = vmatprep.mubr.bf16.mxu0 0
    %8750 = vmatmul.mubr.bf16.gmra.mrb[0].mxu0 %v8701
    %v8751 = vpop.f32.mrb[0].mxu0
    %v8752 = vadd.f32 0.0, %v8751
    %v8753 = vpop.f32.mrb[0].mxu0
    %v8754 = vpop.f32.mrb[0].mxu0
    %v8755 = vadd.f32 0.0, %v8754
    %v8756 = vpop.f32.mrb[0].mxu0
    %8757 = vmatprep.mubr.bf16.mxu0 0
    %8758 = vmatmul.mubr.bf16.gmra.mrb[0].mxu0 %v8702
    %v8759 = vpop.f32.mrb[0].mxu0
    %v8760 = vadd.f32 0.0, %v8759
    %v8761 = vpop.f32.mrb[0].mxu0
    %v8762 = vpop.f32.mrb[0].mxu0
    %v8763 = vadd.f32 0.0, %v8762
    %v8764 = vpop.f32.mrb[0].mxu0
    %8765 = vmatprep.mubr.bf16.mxu0 0
    %8766 = vmatmul.mubr.bf16.gmra.mrb[0].mxu0 %v8703
    %v8767 = vpop.f32.mrb[0].mxu0
    %v8768 = vadd.f32 0.0, %v8767
    %v8769 = vpop.f32.mrb[0].mxu0
    %v8770 = vpop.f32.mrb[0].mxu0
    %v8771 = vadd.f32 0.0, %v8770
    %v8772 = vpop.f32.mrb[0].mxu0
    %8773 = vmatprep.mubr.bf16.mxu0 0
    %8774 = vmatmul.mubr.bf16.gmra.mrb[0].mxu0 %v8704
    %v8775 = vpop.f32.mrb[0].mxu0
    %v8776 = vadd.f32 0.0, %v8775
    %v8777 = vpop.f32.mrb[0].mxu0
    %v8778 = vpop.f32.mrb[0].mxu0
    %v8779 = vadd.f32 0.0, %v8778
    %v8780 = vpop.f32.mrb[0].mxu0
    %8781 = vmatprep.mubr.bf16.mxu0 0
    %8782 = vmatmul.mubr.bf16.gmra.mrb[0].mxu0 %v8705
    %v8783 = vpop.f32.mrb[0].mxu0
    %v8784 = vadd.f32 0.0, %v8783
    %v8785 = vpop.f32.mrb[0].mxu0
    %v8786 = vpop.f32.mrb[0].mxu0
    %v8787 = vadd.f32 0.0, %v8786
    %v8788 = vpop.f32.mrb[0].mxu0
    %8789 = vmatprep.mubr.bf16.mxu0 0
    %8790 = vmatmul.mubr.bf16.gmra.mrb[0].mxu0 %v8706
    %v8791 = vpop.f32.mrb[0].mxu0
    %v8792 = vadd.f32 0.0, %v8791
    %v8793 = vpop.f32.mrb[0].mxu0
    %v8794 = vpop.f32.mrb[0].mxu0
    %v8795 = vadd.f32 0.0, %v8794
    %v8796 = vpop.f32.mrb[0].mxu0
    %8797 = vmatprep.mubr.bf16.mxu0 0
    %8798 = vmatmul.mubr.bf16.gmra.mrb[0].mxu0 %v8707
    %v8799 = vpop.f32.mrb[0].mxu0
    %v8800 = vadd.f32 0.0, %v8799
    %v8801 = vpop.f32.mrb[0].mxu0
    %v8802 = vpop.f32.mrb[0].mxu0
    %v8803 = vadd.f32 0.0, %v8802
    %v8804 = vpop.f32.mrb[0].mxu0
    %8805 = vmatprep.mubr.bf16.mxu0 0
    %8806 = vmatmul.mubr.bf16.gmra.mrb[0].mxu0 %v8708
    %v8807 = vpop.f32.mrb[0].mxu0
    %v8808 = vadd.f32 0.0, %v8807
    %v8809 = vpop.f32.mrb[0].mxu0
    %v8810 = vpop.f32.mrb[0].mxu0
    %v8811 = vadd.f32 0.0, %v8810
    %v8812 = vpop.f32.mrb[0].mxu0
    %8813 = vdwg.mxu0
    %v8814 = vadd.f32 %v8669, %v8752
    %v8815 = vadd.f32 %v8670, %v8755
    %v8816 = vadd.f32 %v8671, %v8760
    %v8817 = vadd.f32 %v8672, %v8763
    %v8818 = vadd.f32 %v8673, %v8768
    %v8819 = vadd.f32 %v8674, %v8771
    %v8820 = vadd.f32 %v8675, %v8776
    %v8821 = vadd.f32 %v8676, %v8779
    %v8822 = vadd.f32 %v8677, %v8784
    %v8823 = vadd.f32 %v8678, %v8787
    %v8824 = vadd.f32 %v8679, %v8792
    %v8825 = vadd.f32 %v8680, %v8795
    %v8826 = vadd.f32 %v8681, %v8800
    %v8827 = vadd.f32 %v8682, %v8803
    %v8828 = vadd.f32 %v8683, %v8808
    %v8829 = vadd.f32 %v8684, %v8811
    %v8830 = vld [vmem:[%s8265 + $0x1] sm:$0xff]
    %v8831 = vld [vmem:[%s8265 + $0x11] sm:$0xff]
    %v8832 = vld [vmem:[%s8265 + $0x21] sm:$0xff]
    %v8833 = vld [vmem:[%s8265 + $0x31] sm:$0xff]
    %v8834 = vld [vmem:[%s8265 + $0x41] sm:$0xff]
    %v8835 = vld [vmem:[%s8265 + $0x51] sm:$0xff]
    %v8836 = vld [vmem:[%s8265 + $0x61] sm:$0xff]
    %v8837 = vld [vmem:[%s8265 + $0x71] sm:$0xff]
    %v8838 = vld [vmem:[%s8265 + $0xa1] sm:$0xff]
    %v8839 = vld [vmem:[%s8265 + $0xb1] sm:$0xff]
    %v8840 = vld [vmem:[%s8265 + $0xc1] sm:$0xff]
    %v8841 = vld [vmem:[%s8265 + $0xd1] sm:$0xff]
    %v8842 = vld [vmem:[%s8265 + $0xe1] sm:$0xff]
    %v8843 = vld [vmem:[%s8265 + $0xf1] sm:$0xff]
    %v8844 = vld [vmem:[%s8265 + $0x101] sm:$0xff]
    %v8845 = vld [vmem:[%s8265 + $0x111] sm:$0xff]
    %v8846 = vpack.c.bf16 %v8831, %v8830
    %v8847 = vpack.c.bf16 %v8833, %v8832
    %v8848 = vpack.c.bf16 %v8835, %v8834
    %v8849 = vpack.c.bf16 %v8837, %v8836
    %v8850 = vpack.c.bf16 %v8839, %v8838
    %v8851 = vpack.c.bf16 %v8841, %v8840
    %v8852 = vpack.c.bf16 %v8843, %v8842
    %v8853 = vpack.c.bf16 %v8845, %v8844
    %v8854 = vld [vmem:[#allocation8 + $0x100] sm:$0xff]
    %v8855 = vld [vmem:[#allocation8 + $0x108] sm:$0xff]
    %v8856 = vld [vmem:[#allocation8 + $0x110] sm:$0xff]
    %v8857 = vld [vmem:[#allocation8 + $0x118] sm:$0xff]
    %v8858 = vld [vmem:[#allocation8 + $0x120] sm:$0xff]
    %v8859 = vld [vmem:[#allocation8 + $0x128] sm:$0xff]
    %v8860 = vld [vmem:[#allocation8 + $0x130] sm:$0xff]
    %v8861 = vld [vmem:[#allocation8 + $0x138] sm:$0xff]
    %8862 = vmatprep.subr.bf16.mxu0 0
    %8863 = vmatpush1.bf16.msra.mxu0 %v8854
    %8864 = vmatprep.subr.bf16.mxu0 0
    %8865 = vmatpush1.bf16.msra.mxu0 %v8855
    %8866 = vmatprep.subr.bf16.mxu0 0
    %8867 = vmatpush1.bf16.msra.mxu0 %v8856
    %8868 = vmatprep.subr.bf16.mxu0 0
    %8869 = vmatpush1.bf16.msra.mxu0 %v8857
    %8870 = vmatprep.subr.bf16.mxu0 0
    %8871 = vmatpush1.bf16.msra.mxu0 %v8858
    %8872 = vmatprep.subr.bf16.mxu0 0
    %8873 = vmatpush1.bf16.msra.mxu0 %v8859
    %8874 = vmatprep.subr.bf16.mxu0 0
    %8875 = vmatpush1.bf16.msra.mxu0 %v8860
    %8876 = vmatprep.subr.bf16.mxu0 0
    %8877 = vmatpush1.bf16.msra.mxu0 %v8861
    %8878 = vmatprep.subr.bf16.mxu0 0
    %8879 = vmatpush1.bf16.msra.mxu0 0
    %8880 = vmatprep.subr.bf16.mxu0 0
    %8881 = vmatpush1.bf16.msra.mxu0 0
    %8882 = vmatprep.subr.bf16.mxu0 0
    %8883 = vmatpush1.bf16.msra.mxu0 0
    %8884 = vmatprep.subr.bf16.mxu0 0
    %8885 = vmatpush1.bf16.msra.mxu0 0
    %8886 = vmatprep.subr.bf16.mxu0 0
    %8887 = vmatpush1.bf16.msra.mxu0 0
    %8888 = vmatprep.subr.bf16.mxu0 0
    %8889 = vmatpush1.bf16.msra.mxu0 0
    %8890 = vmatprep.subr.bf16.mxu0 0
    %8891 = vmatpush1.bf16.msra.mxu0 0
    %8892 = vmatprep.subr.bf16.mxu0 0
    %8893 = vmatpush1.bf16.msra.mxu0 0
    %8894 = vmatprep.mubr.bf16.mxu0 0
    %8895 = vmatmul.mubr.bf16.gmra.mrb[0].mxu0 %v8846
    %v8896 = vpop.f32.mrb[0].mxu0
    %v8897 = vadd.f32 0.0, %v8896
    %v8898 = vpop.f32.mrb[0].mxu0
    %v8899 = vpop.f32.mrb[0].mxu0
    %v8900 = vadd.f32 0.0, %v8899
    %v8901 = vpop.f32.mrb[0].mxu0
    %8902 = vmatprep.mubr.bf16.mxu0 0
    %8903 = vmatmul.mubr.bf16.gmra.mrb[0].mxu0 %v8847
    %v8904 = vpop.f32.mrb[0].mxu0
    %v8905 = vadd.f32 0.0, %v8904
    %v8906 = vpop.f32.mrb[0].mxu0
    %v8907 = vpop.f32.mrb[0].mxu0
    %v8908 = vadd.f32 0.0, %v8907
    %v8909 = vpop.f32.mrb[0].mxu0
    %8910 = vmatprep.mubr.bf16.mxu0 0
    %8911 = vmatmul.mubr.bf16.gmra.mrb[0].mxu0 %v8848
    %v8912 = vpop.f32.mrb[0].mxu0
    %v8913 = vadd.f32 0.0, %v8912
    %v8914 = vpop.f32.mrb[0].mxu0
    %v8915 = vpop.f32.mrb[0].mxu0
    %v8916 = vadd.f32 0.0, %v8915
    %v8917 = vpop.f32.mrb[0].mxu0
    %8918 = vmatprep.mubr.bf16.mxu0 0
    %8919 = vmatmul.mubr.bf16.gmra.mrb[0].mxu0 %v8849
    %v8920 = vpop.f32.mrb[0].mxu0
    %v8921 = vadd.f32 0.0, %v8920
    %v8922 = vpop.f32.mrb[0].mxu0
    %v8923 = vpop.f32.mrb[0].mxu0
    %v8924 = vadd.f32 0.0, %v8923
    %v8925 = vpop.f32.mrb[0].mxu0
    %8926 = vmatprep.mubr.bf16.mxu0 0
    %8927 = vmatmul.mubr.bf16.gmra.mrb[0].mxu0 %v8850
    %v8928 = vpop.f32.mrb[0].mxu0
    %v8929 = vadd.f32 0.0, %v8928
    %v8930 = vpop.f32.mrb[0].mxu0
    %v8931 = vpop.f32.mrb[0].mxu0
    %v8932 = vadd.f32 0.0, %v8931
    %v8933 = vpop.f32.mrb[0].mxu0
    %8934 = vmatprep.mubr.bf16.mxu0 0
    %8935 = vmatmul.mubr.bf16.gmra.mrb[0].mxu0 %v8851
    %v8936 = vpop.f32.mrb[0].mxu0
    %v8937 = vadd.f32 0.0, %v8936
    %v8938 = vpop.f32.mrb[0].mxu0
    %v8939 = vpop.f32.mrb[0].mxu0
    %v8940 = vadd.f32 0.0, %v8939
    %v8941 = vpop.f32.mrb[0].mxu0
    %8942 = vmatprep.mubr.bf16.mxu0 0
    %8943 = vmatmul.mubr.bf16.gmra.mrb[0].mxu0 %v8852
    %v8944 = vpop.f32.mrb[0].mxu0
    %v8945 = vadd.f32 0.0, %v8944
    %v8946 = vpop.f32.mrb[0].mxu0
    %v8947 = vpop.f32.mrb[0].mxu0
    %v8948 = vadd.f32 0.0, %v8947
    %v8949 = vpop.f32.mrb[0].mxu0
    %8950 = vmatprep.mubr.bf16.mxu0 0
    %8951 = vmatmul.mubr.bf16.gmra.mrb[0].mxu0 %v8853
    %v8952 = vpop.f32.mrb[0].mxu0
    %v8953 = vadd.f32 0.0, %v8952
    %v8954 = vpop.f32.mrb[0].mxu0
    %v8955 = vpop.f32.mrb[0].mxu0
    %v8956 = vadd.f32 0.0, %v8955
    %v8957 = vpop.f32.mrb[0].mxu0
    %8958 = vdwg.mxu0
    %v8959 = vadd.f32 %v8814, %v8897
    %v8960 = vadd.f32 %v8815, %v8900
    %v8961 = vadd.f32 %v8816, %v8905
    %v8962 = vadd.f32 %v8817, %v8908
    %v8963 = vadd.f32 %v8818, %v8913
    %v8964 = vadd.f32 %v8819, %v8916
    %v8965 = vadd.f32 %v8820, %v8921
    %v8966 = vadd.f32 %v8821, %v8924
    %v8967 = vadd.f32 %v8822, %v8929
    %v8968 = vadd.f32 %v8823, %v8932
    %v8969 = vadd.f32 %v8824, %v8937
    %v8970 = vadd.f32 %v8825, %v8940
    %v8971 = vadd.f32 %v8826, %v8945
    %v8972 = vadd.f32 %v8827, %v8948
    %v8973 = vadd.f32 %v8828, %v8953
    %v8974 = vadd.f32 %v8829, %v8956
    %v8975 = vld [vmem:[%s8265 + $0x2] sm:$0xff]
    %v8976 = vld [vmem:[%s8265 + $0x12] sm:$0xff]
    %v8977 = vld [vmem:[%s8265 + $0x22] sm:$0xff]
    %v8978 = vld [vmem:[%s8265 + $0x32] sm:$0xff]
    %v8979 = vld [vmem:[%s8265 + $0x42] sm:$0xff]
    %v8980 = vld [vmem:[%s8265 + $0x52] sm:$0xff]
    %v8981 = vld [vmem:[%s8265 + $0x62] sm:$0xff]
    %v8982 = vld [vmem:[%s8265 + $0x72] sm:$0xff]
    %v8983 = vld [vmem:[%s8265 + $0xa2] sm:$0xff]
    %v8984 = vld [vmem:[%s8265 + $0xb2] sm:$0xff]
    %v8985 = vld [vmem:[%s8265 + $0xc2] sm:$0xff]
    %v8986 = vld [vmem:[%s8265 + $0xd2] sm:$0xff]
    %v8987 = vld [vmem:[%s8265 + $0xe2] sm:$0xff]
    %v8988 = vld [vmem:[%s8265 + $0xf2] sm:$0xff]
    %v8989 = vld [vmem:[%s8265 + $0x102] sm:$0xff]
    %v8990 = vld [vmem:[%s8265 + $0x112] sm:$0xff]
    %v8991 = vpack.c.bf16 %v8976, %v8975
    %v8992 = vpack.c.bf16 %v8978, %v8977
    %v8993 = vpack.c.bf16 %v8980, %v8979
    %v8994 = vpack.c.bf16 %v8982, %v8981
    %v8995 = vpack.c.bf16 %v8984, %v8983
    %v8996 = vpack.c.bf16 %v8986, %v8985
    %v8997 = vpack.c.bf16 %v8988, %v8987
    %v8998 = vpack.c.bf16 %v8990, %v8989
    %v8999 = vld [vmem:[#allocation8 + $0x140] sm:$0xff]
    %v9000 = vld [vmem:[#allocation8 + $0x148] sm:$0xff]
    %v9001 = vld [vmem:[#allocation8 + $0x150] sm:$0xff]
    %v9002 = vld [vmem:[#allocation8 + $0x158] sm:$0xff]
    %v9003 = vld [vmem:[#allocation8 + $0x160] sm:$0xff]
    %v9004 = vld [vmem:[#allocation8 + $0x168] sm:$0xff]
    %v9005 = vld [vmem:[#allocation8 + $0x170] sm:$0xff]
    %v9006 = vld [vmem:[#allocation8 + $0x178] sm:$0xff]
    %9007 = vmatprep.subr.bf16.mxu0 0
    %9008 = vmatpush1.bf16.msra.mxu0 %v8999
    %9009 = vmatprep.subr.bf16.mxu0 0
    %9010 = vmatpush1.bf16.msra.mxu0 %v9000
    %9011 = vmatprep.subr.bf16.mxu0 0
    %9012 = vmatpush1.bf16.msra.mxu0 %v9001
    %9013 = vmatprep.subr.bf16.mxu0 0
    %9014 = vmatpush1.bf16.msra.mxu0 %v9002
    %9015 = vmatprep.subr.bf16.mxu0 0
    %9016 = vmatpush1.bf16.msra.mxu0 %v9003
    %9017 = vmatprep.subr.bf16.mxu0 0
    %9018 = vmatpush1.bf16.msra.mxu0 %v9004
    %9019 = vmatprep.subr.bf16.mxu0 0
    %9020 = vmatpush1.bf16.msra.mxu0 %v9005
    %9021 = vmatprep.subr.bf16.mxu0 0
    %9022 = vmatpush1.bf16.msra.mxu0 %v9006
    %9023 = vmatprep.subr.bf16.mxu0 0
    %9024 = vmatpush1.bf16.msra.mxu0 0
    %9025 = vmatprep.subr.bf16.mxu0 0
    %9026 = vmatpush1.bf16.msra.mxu0 0
    %9027 = vmatprep.subr.bf16.mxu0 0
    %9028 = vmatpush1.bf16.msra.mxu0 0
    %9029 = vmatprep.subr.bf16.mxu0 0
    %9030 = vmatpush1.bf16.msra.mxu0 0
    %9031 = vmatprep.subr.bf16.mxu0 0
    %9032 = vmatpush1.bf16.msra.mxu0 0
    %9033 = vmatprep.subr.bf16.mxu0 0
    %9034 = vmatpush1.bf16.msra.mxu0 0
    %9035 = vmatprep.subr.bf16.mxu0 0
    %9036 = vmatpush1.bf16.msra.mxu0 0
    %9037 = vmatprep.subr.bf16.mxu0 0
    %9038 = vmatpush1.bf16.msra.mxu0 0
    %9039 = vmatprep.mubr.bf16.mxu0 0
    %9040 = vmatmul.mubr.bf16.gmra.mrb[0].mxu0 %v8991
    %v9041 = vpop.f32.mrb[0].mxu0
    %v9042 = vadd.f32 0.0, %v9041
    %v9043 = vpop.f32.mrb[0].mxu0
    %v9044 = vpop.f32.mrb[0].mxu0
    %v9045 = vadd.f32 0.0, %v9044
    %v9046 = vpop.f32.mrb[0].mxu0
    %9047 = vmatprep.mubr.bf16.mxu0 0
    %9048 = vmatmul.mubr.bf16.gmra.mrb[0].mxu0 %v8992
    %v9049 = vpop.f32.mrb[0].mxu0
    %v9050 = vadd.f32 0.0, %v9049
    %v9051 = vpop.f32.mrb[0].mxu0
    %v9052 = vpop.f32.mrb[0].mxu0
    %v9053 = vadd.f32 0.0, %v9052
    %v9054 = vpop.f32.mrb[0].mxu0
    %9055 = vmatprep.mubr.bf16.mxu0 0
    %9056 = vmatmul.mubr.bf16.gmra.mrb[0].mxu0 %v8993
    %v9057 = vpop.f32.mrb[0].mxu0
    %v9058 = vadd.f32 0.0, %v9057
    %v9059 = vpop.f32.mrb[0].mxu0
    %v9060 = vpop.f32.mrb[0].mxu0
    %v9061 = vadd.f32 0.0, %v9060
    %v9062 = vpop.f32.mrb[0].mxu0
    %9063 = vmatprep.mubr.bf16.mxu0 0
    %9064 = vmatmul.mubr.bf16.gmra.mrb[0].mxu0 %v8994
    %v9065 = vpop.f32.mrb[0].mxu0
    %v9066 = vadd.f32 0.0, %v9065
    %v9067 = vpop.f32.mrb[0].mxu0
    %v9068 = vpop.f32.mrb[0].mxu0
    %v9069 = vadd.f32 0.0, %v9068
    %v9070 = vpop.f32.mrb[0].mxu0
    %9071 = vmatprep.mubr.bf16.mxu0 0
    %9072 = vmatmul.mubr.bf16.gmra.mrb[0].mxu0 %v8995
    %v9073 = vpop.f32.mrb[0].mxu0
    %v9074 = vadd.f32 0.0, %v9073
    %v9075 = vpop.f32.mrb[0].mxu0
    %v9076 = vpop.f32.mrb[0].mxu0
    %v9077 = vadd.f32 0.0, %v9076
    %v9078 = vpop.f32.mrb[0].mxu0
    %9079 = vmatprep.mubr.bf16.mxu0 0
    %9080 = vmatmul.mubr.bf16.gmra.mrb[0].mxu0 %v8996
    %v9081 = vpop.f32.mrb[0].mxu0
    %v9082 = vadd.f32 0.0, %v9081
    %v9083 = vpop.f32.mrb[0].mxu0
    %v9084 = vpop.f32.mrb[0].mxu0
    %v9085 = vadd.f32 0.0, %v9084
    %v9086 = vpop.f32.mrb[0].mxu0
    %9087 = vmatprep.mubr.bf16.mxu0 0
    %9088 = vmatmul.mubr.bf16.gmra.mrb[0].mxu0 %v8997
    %v9089 = vpop.f32.mrb[0].mxu0
    %v9090 = vadd.f32 0.0, %v9089
    %v9091 = vpop.f32.mrb[0].mxu0
    %v9092 = vpop.f32.mrb[0].mxu0
    %v9093 = vadd.f32 0.0, %v9092
    %v9094 = vpop.f32.mrb[0].mxu0
    %9095 = vmatprep.mubr.bf16.mxu0 0
    %9096 = vmatmul.mubr.bf16.gmra.mrb[0].mxu0 %v8998
    %v9097 = vpop.f32.mrb[0].mxu0
    %v9098 = vadd.f32 0.0, %v9097
    %v9099 = vpop.f32.mrb[0].mxu0
    %v9100 = vpop.f32.mrb[0].mxu0
    %v9101 = vadd.f32 0.0, %v9100
    %v9102 = vpop.f32.mrb[0].mxu0
    %9103 = vdwg.mxu0
    %v9104 = vadd.f32 %v8959, %v9042
    %v9105 = vadd.f32 %v8960, %v9045
    %v9106 = vadd.f32 %v8961, %v9050
    %v9107 = vadd.f32 %v8962, %v9053
    %v9108 = vadd.f32 %v8963, %v9058
    %v9109 = vadd.f32 %v8964, %v9061
    %v9110 = vadd.f32 %v8965, %v9066
    %v9111 = vadd.f32 %v8966, %v9069
    %v9112 = vadd.f32 %v8967, %v9074
    %v9113 = vadd.f32 %v8968, %v9077
    %v9114 = vadd.f32 %v8969, %v9082
    %v9115 = vadd.f32 %v8970, %v9085
    %v9116 = vadd.f32 %v8971, %v9090
    %v9117 = vadd.f32 %v8972, %v9093
    %v9118 = vadd.f32 %v8973, %v9098
    %v9119 = vadd.f32 %v8974, %v9101
    %s9120 = scalar_lea.vmem [#allocation4], 32
    %v9121 = vld [vmem:[%s9120] sm:$0xff]
    %v9122 = vld [vmem:[%s9120 + $0x10] sm:$0xff]
    %v9123 = vld [vmem:[%s9120 + $0x20] sm:$0xff]
    %v9124 = vld [vmem:[%s9120 + $0x30] sm:$0xff]
    %v9125 = vld [vmem:[%s9120 + $0x40] sm:$0xff]
    %v9126 = vld [vmem:[%s9120 + $0x50] sm:$0xff]
    %v9127 = vld [vmem:[%s9120 + $0x60] sm:$0xff]
    %v9128 = vld [vmem:[%s9120 + $0x70] sm:$0xff]
    %v9129 = vld [vmem:[%s9120 + $0xa0] sm:$0xff]
    %v9130 = vld [vmem:[%s9120 + $0xb0] sm:$0xff]
    %v9131 = vld [vmem:[%s9120 + $0xc0] sm:$0xff]
    %v9132 = vld [vmem:[%s9120 + $0xd0] sm:$0xff]
    %v9133 = vld [vmem:[%s9120 + $0xe0] sm:$0xff]
    %v9134 = vld [vmem:[%s9120 + $0xf0] sm:$0xff]
    %v9135 = vld [vmem:[%s9120 + $0x100] sm:$0xff]
    %v9136 = vld [vmem:[%s9120 + $0x110] sm:$0xff]
    %v9137 = vpack.c.bf16 %v9122, %v9121
    %v9138 = vpack.c.bf16 %v9124, %v9123
    %v9139 = vpack.c.bf16 %v9126, %v9125
    %v9140 = vpack.c.bf16 %v9128, %v9127
    %v9141 = vpack.c.bf16 %v9130, %v9129
    %v9142 = vpack.c.bf16 %v9132, %v9131
    %v9143 = vpack.c.bf16 %v9134, %v9133
    %v9144 = vpack.c.bf16 %v9136, %v9135
    %v9145 = vld [vmem:[#allocation8 + $0x180] sm:$0xff]
    %v9146 = vld [vmem:[#allocation8 + $0x188] sm:$0xff]
    %v9147 = vld [vmem:[#allocation8 + $0x190] sm:$0xff]
    %v9148 = vld [vmem:[#allocation8 + $0x198] sm:$0xff]
    %v9149 = vld [vmem:[#allocation8 + $0x1a0] sm:$0xff]
    %v9150 = vld [vmem:[#allocation8 + $0x1a8] sm:$0xff]
    %v9151 = vld [vmem:[#allocation8 + $0x1b0] sm:$0xff]
    %v9152 = vld [vmem:[#allocation8 + $0x1b8] sm:$0xff]
    %9153 = vmatprep.subr.bf16.mxu0 0
    %9154 = vmatpush1.bf16.msra.mxu0 %v9145
    %9155 = vmatprep.subr.bf16.mxu0 0
    %9156 = vmatpush1.bf16.msra.mxu0 %v9146
    %9157 = vmatprep.subr.bf16.mxu0 0
    %9158 = vmatpush1.bf16.msra.mxu0 %v9147
    %9159 = vmatprep.subr.bf16.mxu0 0
    %9160 = vmatpush1.bf16.msra.mxu0 %v9148
    %9161 = vmatprep.subr.bf16.mxu0 0
    %9162 = vmatpush1.bf16.msra.mxu0 %v9149
    %9163 = vmatprep.subr.bf16.mxu0 0
    %9164 = vmatpush1.bf16.msra.mxu0 %v9150
    %9165 = vmatprep.subr.bf16.mxu0 0
    %9166 = vmatpush1.bf16.msra.mxu0 %v9151
    %9167 = vmatprep.subr.bf16.mxu0 0
    %9168 = vmatpush1.bf16.msra.mxu0 %v9152
    %9169 = vmatprep.subr.bf16.mxu0 0
    %9170 = vmatpush1.bf16.msra.mxu0 0
    %9171 = vmatprep.subr.bf16.mxu0 0
    %9172 = vmatpush1.bf16.msra.mxu0 0
    %9173 = vmatprep.subr.bf16.mxu0 0
    %9174 = vmatpush1.bf16.msra.mxu0 0
    %9175 = vmatprep.subr.bf16.mxu0 0
    %9176 = vmatpush1.bf16.msra.mxu0 0
    %9177 = vmatprep.subr.bf16.mxu0 0
    %9178 = vmatpush1.bf16.msra.mxu0 0
    %9179 = vmatprep.subr.bf16.mxu0 0
    %9180 = vmatpush1.bf16.msra.mxu0 0
    %9181 = vmatprep.subr.bf16.mxu0 0
    %9182 = vmatpush1.bf16.msra.mxu0 0
    %9183 = vmatprep.subr.bf16.mxu0 0
    %9184 = vmatpush1.bf16.msra.mxu0 0
    %9185 = vmatprep.mubr.bf16.mxu0 0
    %9186 = vmatmul.mubr.bf16.gmra.mrb[0].mxu0 %v9137
    %v9187 = vpop.f32.mrb[0].mxu0
    %v9188 = vadd.f32 0.0, %v9187
    %v9189 = vpop.f32.mrb[0].mxu0
    %v9190 = vpop.f32.mrb[0].mxu0
    %v9191 = vadd.f32 0.0, %v9190
    %v9192 = vpop.f32.mrb[0].mxu0
    %9193 = vmatprep.mubr.bf16.mxu0 0
    %9194 = vmatmul.mubr.bf16.gmra.mrb[0].mxu0 %v9138
    %v9195 = vpop.f32.mrb[0].mxu0
    %v9196 = vadd.f32 0.0, %v9195
    %v9197 = vpop.f32.mrb[0].mxu0
    %v9198 = vpop.f32.mrb[0].mxu0
    %v9199 = vadd.f32 0.0, %v9198
    %v9200 = vpop.f32.mrb[0].mxu0
    %9201 = vmatprep.mubr.bf16.mxu0 0
    %9202 = vmatmul.mubr.bf16.gmra.mrb[0].mxu0 %v9139
    %v9203 = vpop.f32.mrb[0].mxu0
    %v9204 = vadd.f32 0.0, %v9203
    %v9205 = vpop.f32.mrb[0].mxu0
    %v9206 = vpop.f32.mrb[0].mxu0
    %v9207 = vadd.f32 0.0, %v9206
    %v9208 = vpop.f32.mrb[0].mxu0
    %9209 = vmatprep.mubr.bf16.mxu0 0
    %9210 = vmatmul.mubr.bf16.gmra.mrb[0].mxu0 %v9140
    %v9211 = vpop.f32.mrb[0].mxu0
    %v9212 = vadd.f32 0.0, %v9211
    %v9213 = vpop.f32.mrb[0].mxu0
    %v9214 = vpop.f32.mrb[0].mxu0
    %v9215 = vadd.f32 0.0, %v9214
    %v9216 = vpop.f32.mrb[0].mxu0
    %9217 = vmatprep.mubr.bf16.mxu0 0
    %9218 = vmatmul.mubr.bf16.gmra.mrb[0].mxu0 %v9141
    %v9219 = vpop.f32.mrb[0].mxu0
    %v9220 = vadd.f32 0.0, %v9219
    %v9221 = vpop.f32.mrb[0].mxu0
    %v9222 = vpop.f32.mrb[0].mxu0
    %v9223 = vadd.f32 0.0, %v9222
    %v9224 = vpop.f32.mrb[0].mxu0
    %9225 = vmatprep.mubr.bf16.mxu0 0
    %9226 = vmatmul.mubr.bf16.gmra.mrb[0].mxu0 %v9142
    %v9227 = vpop.f32.mrb[0].mxu0
    %v9228 = vadd.f32 0.0, %v9227
    %v9229 = vpop.f32.mrb[0].mxu0
    %v9230 = vpop.f32.mrb[0].mxu0
    %v9231 = vadd.f32 0.0, %v9230
    %v9232 = vpop.f32.mrb[0].mxu0
    %9233 = vmatprep.mubr.bf16.mxu0 0
    %9234 = vmatmul.mubr.bf16.gmra.mrb[0].mxu0 %v9143
    %v9235 = vpop.f32.mrb[0].mxu0
    %v9236 = vadd.f32 0.0, %v9235
    %v9237 = vpop.f32.mrb[0].mxu0
    %v9238 = vpop.f32.mrb[0].mxu0
    %v9239 = vadd.f32 0.0, %v9238
    %v9240 = vpop.f32.mrb[0].mxu0
    %9241 = vmatprep.mubr.bf16.mxu0 0
    %9242 = vmatmul.mubr.bf16.gmra.mrb[0].mxu0 %v9144
    %v9243 = vpop.f32.mrb[0].mxu0
    %v9244 = vadd.f32 0.0, %v9243
    %v9245 = vpop.f32.mrb[0].mxu0
    %v9246 = vpop.f32.mrb[0].mxu0
    %v9247 = vadd.f32 0.0, %v9246
    %v9248 = vpop.f32.mrb[0].mxu0
    %9249 = vdwg.mxu0
    %v9250 = vadd.f32 %v9104, %v9188
    %v9251 = vadd.f32 %v9105, %v9191
    %v9252 = vadd.f32 %v9106, %v9196
    %v9253 = vadd.f32 %v9107, %v9199
    %v9254 = vadd.f32 %v9108, %v9204
    %v9255 = vadd.f32 %v9109, %v9207
    %v9256 = vadd.f32 %v9110, %v9212
    %v9257 = vadd.f32 %v9111, %v9215
    %v9258 = vadd.f32 %v9112, %v9220
    %v9259 = vadd.f32 %v9113, %v9223
    %v9260 = vadd.f32 %v9114, %v9228
    %v9261 = vadd.f32 %v9115, %v9231
    %v9262 = vadd.f32 %v9116, %v9236
    %v9263 = vadd.f32 %v9117, %v9239
    %v9264 = vadd.f32 %v9118, %v9244
    %v9265 = vadd.f32 %v9119, %v9247
    %v9266 = vld [vmem:[%s9120 + $0x1] sm:$0xff]
    %v9267 = vld [vmem:[%s9120 + $0x11] sm:$0xff]
    %v9268 = vld [vmem:[%s9120 + $0x21] sm:$0xff]
    %v9269 = vld [vmem:[%s9120 + $0x31] sm:$0xff]
    %v9270 = vld [vmem:[%s9120 + $0x41] sm:$0xff]
    %v9271 = vld [vmem:[%s9120 + $0x51] sm:$0xff]
    %v9272 = vld [vmem:[%s9120 + $0x61] sm:$0xff]
    %v9273 = vld [vmem:[%s9120 + $0x71] sm:$0xff]
    %v9274 = vld [vmem:[%s9120 + $0xa1] sm:$0xff]
    %v9275 = vld [vmem:[%s9120 + $0xb1] sm:$0xff]
    %v9276 = vld [vmem:[%s9120 + $0xc1] sm:$0xff]
    %v9277 = vld [vmem:[%s9120 + $0xd1] sm:$0xff]
    %v9278 = vld [vmem:[%s9120 + $0xe1] sm:$0xff]
    %v9279 = vld [vmem:[%s9120 + $0xf1] sm:$0xff]
    %v9280 = vld [vmem:[%s9120 + $0x101] sm:$0xff]
    %v9281 = vld [vmem:[%s9120 + $0x111] sm:$0xff]
    %v9282 = vpack.c.bf16 %v9267, %v9266
    %v9283 = vpack.c.bf16 %v9269, %v9268
    %v9284 = vpack.c.bf16 %v9271, %v9270
    %v9285 = vpack.c.bf16 %v9273, %v9272
    %v9286 = vpack.c.bf16 %v9275, %v9274
    %v9287 = vpack.c.bf16 %v9277, %v9276
    %v9288 = vpack.c.bf16 %v9279, %v9278
    %v9289 = vpack.c.bf16 %v9281, %v9280
    %v9290 = vld [vmem:[#allocation8 + $0x1c0] sm:$0xff]
    %v9291 = vld [vmem:[#allocation8 + $0x1c8] sm:$0xff]
    %v9292 = vld [vmem:[#allocation8 + $0x1d0] sm:$0xff]
    %v9293 = vld [vmem:[#allocation8 + $0x1d8] sm:$0xff]
    %v9294 = vld [vmem:[#allocation8 + $0x1e0] sm:$0xff]
    %v9295 = vld [vmem:[#allocation8 + $0x1e8] sm:$0xff]
    %v9296 = vld [vmem:[#allocation8 + $0x1f0] sm:$0xff]
    %v9297 = vld [vmem:[#allocation8 + $0x1f8] sm:$0xff]
    %9298 = vmatprep.subr.bf16.mxu0 0
    %9299 = vmatpush1.bf16.msra.mxu0 %v9290
    %9300 = vmatprep.subr.bf16.mxu0 0
    %9301 = vmatpush1.bf16.msra.mxu0 %v9291
    %9302 = vmatprep.subr.bf16.mxu0 0
    %9303 = vmatpush1.bf16.msra.mxu0 %v9292
    %9304 = vmatprep.subr.bf16.mxu0 0
    %9305 = vmatpush1.bf16.msra.mxu0 %v9293
    %9306 = vmatprep.subr.bf16.mxu0 0
    %9307 = vmatpush1.bf16.msra.mxu0 %v9294
    %9308 = vmatprep.subr.bf16.mxu0 0
    %9309 = vmatpush1.bf16.msra.mxu0 %v9295
    %9310 = vmatprep.subr.bf16.mxu0 0
    %9311 = vmatpush1.bf16.msra.mxu0 %v9296
    %9312 = vmatprep.subr.bf16.mxu0 0
    %9313 = vmatpush1.bf16.msra.mxu0 %v9297
    %9314 = vmatprep.subr.bf16.mxu0 0
    %9315 = vmatpush1.bf16.msra.mxu0 0
    %9316 = vmatprep.subr.bf16.mxu0 0
    %9317 = vmatpush1.bf16.msra.mxu0 0
    %9318 = vmatprep.subr.bf16.mxu0 0
    %9319 = vmatpush1.bf16.msra.mxu0 0
    %9320 = vmatprep.subr.bf16.mxu0 0
    %9321 = vmatpush1.bf16.msra.mxu0 0
    %9322 = vmatprep.subr.bf16.mxu0 0
    %9323 = vmatpush1.bf16.msra.mxu0 0
    %9324 = vmatprep.subr.bf16.mxu0 0
    %9325 = vmatpush1.bf16.msra.mxu0 0
    %9326 = vmatprep.subr.bf16.mxu0 0
    %9327 = vmatpush1.bf16.msra.mxu0 0
    %9328 = vmatprep.subr.bf16.mxu0 0
    %9329 = vmatpush1.bf16.msra.mxu0 0
    %9330 = vmatprep.mubr.bf16.mxu0 0
    %9331 = vmatmul.mubr.bf16.gmra.mrb[0].mxu0 %v9282
    %v9332 = vpop.f32.mrb[0].mxu0
    %v9333 = vadd.f32 0.0, %v9332
    %v9334 = vpop.f32.mrb[0].mxu0
    %v9335 = vpop.f32.mrb[0].mxu0
    %v9336 = vadd.f32 0.0, %v9335
    %v9337 = vpop.f32.mrb[0].mxu0
    %9338 = vmatprep.mubr.bf16.mxu0 0
    %9339 = vmatmul.mubr.bf16.gmra.mrb[0].mxu0 %v9283
    %v9340 = vpop.f32.mrb[0].mxu0
    %v9341 = vadd.f32 0.0, %v9340
    %v9342 = vpop.f32.mrb[0].mxu0
    %v9343 = vpop.f32.mrb[0].mxu0
    %v9344 = vadd.f32 0.0, %v9343
    %v9345 = vpop.f32.mrb[0].mxu0
    %9346 = vmatprep.mubr.bf16.mxu0 0
    %9347 = vmatmul.mubr.bf16.gmra.mrb[0].mxu0 %v9284
    %v9348 = vpop.f32.mrb[0].mxu0
    %v9349 = vadd.f32 0.0, %v9348
    %v9350 = vpop.f32.mrb[0].mxu0
    %v9351 = vpop.f32.mrb[0].mxu0
    %v9352 = vadd.f32 0.0, %v9351
    %v9353 = vpop.f32.mrb[0].mxu0
    %9354 = vmatprep.mubr.bf16.mxu0 0
    %9355 = vmatmul.mubr.bf16.gmra.mrb[0].mxu0 %v9285
    %v9356 = vpop.f32.mrb[0].mxu0
    %v9357 = vadd.f32 0.0, %v9356
    %v9358 = vpop.f32.mrb[0].mxu0
    %v9359 = vpop.f32.mrb[0].mxu0
    %v9360 = vadd.f32 0.0, %v9359
    %v9361 = vpop.f32.mrb[0].mxu0
    %9362 = vmatprep.mubr.bf16.mxu0 0
    %9363 = vmatmul.mubr.bf16.gmra.mrb[0].mxu0 %v9286
    %v9364 = vpop.f32.mrb[0].mxu0
    %v9365 = vadd.f32 0.0, %v9364
    %v9366 = vpop.f32.mrb[0].mxu0
    %v9367 = vpop.f32.mrb[0].mxu0
    %v9368 = vadd.f32 0.0, %v9367
    %v9369 = vpop.f32.mrb[0].mxu0
    %9370 = vmatprep.mubr.bf16.mxu0 0
    %9371 = vmatmul.mubr.bf16.gmra.mrb[0].mxu0 %v9287
    %v9372 = vpop.f32.mrb[0].mxu0
    %v9373 = vadd.f32 0.0, %v9372
    %v9374 = vpop.f32.mrb[0].mxu0
    %v9375 = vpop.f32.mrb[0].mxu0
    %v9376 = vadd.f32 0.0, %v9375
    %v9377 = vpop.f32.mrb[0].mxu0
    %9378 = vmatprep.mubr.bf16.mxu0 0
    %9379 = vmatmul.mubr.bf16.gmra.mrb[0].mxu0 %v9288
    %v9380 = vpop.f32.mrb[0].mxu0
    %v9381 = vadd.f32 0.0, %v9380
    %v9382 = vpop.f32.mrb[0].mxu0
    %v9383 = vpop.f32.mrb[0].mxu0
    %v9384 = vadd.f32 0.0, %v9383
    %v9385 = vpop.f32.mrb[0].mxu0
    %9386 = vmatprep.mubr.bf16.mxu0 0
    %9387 = vmatmul.mubr.bf16.gmra.mrb[0].mxu0 %v9289
    %v9388 = vpop.f32.mrb[0].mxu0
    %v9389 = vadd.f32 0.0, %v9388
    %v9390 = vpop.f32.mrb[0].mxu0
    %v9391 = vpop.f32.mrb[0].mxu0
    %v9392 = vadd.f32 0.0, %v9391
    %v9393 = vpop.f32.mrb[0].mxu0
    %9394 = vdwg.mxu0
    %v9395 = vadd.f32 %v9250, %v9333
    %v9396 = vadd.f32 %v9251, %v9336
    %v9397 = vadd.f32 %v9252, %v9341
    %v9398 = vadd.f32 %v9253, %v9344
    %v9399 = vadd.f32 %v9254, %v9349
    %v9400 = vadd.f32 %v9255, %v9352
    %v9401 = vadd.f32 %v9256, %v9357
    %v9402 = vadd.f32 %v9257, %v9360
    %v9403 = vadd.f32 %v9258, %v9365
    %v9404 = vadd.f32 %v9259, %v9368
    %v9405 = vadd.f32 %v9260, %v9373
    %v9406 = vadd.f32 %v9261, %v9376
    %v9407 = vadd.f32 %v9262, %v9381
    %v9408 = vadd.f32 %v9263, %v9384
    %v9409 = vadd.f32 %v9264, %v9389
    %v9410 = vadd.f32 %v9265, %v9392
    %v9411 = vld [vmem:[%s9120 + $0x2] sm:$0xff]
    %v9412 = vld [vmem:[%s9120 + $0x12] sm:$0xff]
    %v9413 = vld [vmem:[%s9120 + $0x22] sm:$0xff]
    %v9414 = vld [vmem:[%s9120 + $0x32] sm:$0xff]
    %v9415 = vld [vmem:[%s9120 + $0x42] sm:$0xff]
    %v9416 = vld [vmem:[%s9120 + $0x52] sm:$0xff]
    %v9417 = vld [vmem:[%s9120 + $0x62] sm:$0xff]
    %v9418 = vld [vmem:[%s9120 + $0x72] sm:$0xff]
    %v9419 = vld [vmem:[%s9120 + $0xa2] sm:$0xff]
    %v9420 = vld [vmem:[%s9120 + $0xb2] sm:$0xff]
    %v9421 = vld [vmem:[%s9120 + $0xc2] sm:$0xff]
    %v9422 = vld [vmem:[%s9120 + $0xd2] sm:$0xff]
    %v9423 = vld [vmem:[%s9120 + $0xe2] sm:$0xff]
    %v9424 = vld [vmem:[%s9120 + $0xf2] sm:$0xff]
    %v9425 = vld [vmem:[%s9120 + $0x102] sm:$0xff]
    %v9426 = vld [vmem:[%s9120 + $0x112] sm:$0xff]
    %v9427 = vpack.c.bf16 %v9412, %v9411
    %v9428 = vpack.c.bf16 %v9414, %v9413
    %v9429 = vpack.c.bf16 %v9416, %v9415
    %v9430 = vpack.c.bf16 %v9418, %v9417
    %v9431 = vpack.c.bf16 %v9420, %v9419
    %v9432 = vpack.c.bf16 %v9422, %v9421
    %v9433 = vpack.c.bf16 %v9424, %v9423
    %v9434 = vpack.c.bf16 %v9426, %v9425
    %v9435 = vld [vmem:[#allocation8 + $0x200] sm:$0xff]
    %v9436 = vld [vmem:[#allocation8 + $0x208] sm:$0xff]
    %v9437 = vld [vmem:[#allocation8 + $0x210] sm:$0xff]
    %v9438 = vld [vmem:[#allocation8 + $0x218] sm:$0xff]
    %v9439 = vld [vmem:[#allocation8 + $0x220] sm:$0xff]
    %v9440 = vld [vmem:[#allocation8 + $0x228] sm:$0xff]
    %v9441 = vld [vmem:[#allocation8 + $0x230] sm:$0xff]
    %v9442 = vld [vmem:[#allocation8 + $0x238] sm:$0xff]
    %9443 = vmatprep.subr.bf16.mxu0 0
    %9444 = vmatpush1.bf16.msra.mxu0 %v9435
    %9445 = vmatprep.subr.bf16.mxu0 0
    %9446 = vmatpush1.bf16.msra.mxu0 %v9436
    %9447 = vmatprep.subr.bf16.mxu0 0
    %9448 = vmatpush1.bf16.msra.mxu0 %v9437
    %9449 = vmatprep.subr.bf16.mxu0 0
    %9450 = vmatpush1.bf16.msra.mxu0 %v9438
    %9451 = vmatprep.subr.bf16.mxu0 0
    %9452 = vmatpush1.bf16.msra.mxu0 %v9439
    %9453 = vmatprep.subr.bf16.mxu0 0
    %9454 = vmatpush1.bf16.msra.mxu0 %v9440
    %9455 = vmatprep.subr.bf16.mxu0 0
    %9456 = vmatpush1.bf16.msra.mxu0 %v9441
    %9457 = vmatprep.subr.bf16.mxu0 0
    %9458 = vmatpush1.bf16.msra.mxu0 %v9442
    %9459 = vmatprep.subr.bf16.mxu0 0
    %9460 = vmatpush1.bf16.msra.mxu0 0
    %9461 = vmatprep.subr.bf16.mxu0 0
    %9462 = vmatpush1.bf16.msra.mxu0 0
    %9463 = vmatprep.subr.bf16.mxu0 0
    %9464 = vmatpush1.bf16.msra.mxu0 0
    %9465 = vmatprep.subr.bf16.mxu0 0
    %9466 = vmatpush1.bf16.msra.mxu0 0
    %9467 = vmatprep.subr.bf16.mxu0 0
    %9468 = vmatpush1.bf16.msra.mxu0 0
    %9469 = vmatprep.subr.bf16.mxu0 0
    %9470 = vmatpush1.bf16.msra.mxu0 0
    %9471 = vmatprep.subr.bf16.mxu0 0
    %9472 = vmatpush1.bf16.msra.mxu0 0
    %9473 = vmatprep.subr.bf16.mxu0 0
    %9474 = vmatpush1.bf16.msra.mxu0 0
    %9475 = vmatprep.mubr.bf16.mxu0 0
    %9476 = vmatmul.mubr.bf16.gmra.mrb[0].mxu0 %v9427
    %v9477 = vpop.f32.mrb[0].mxu0
    %v9478 = vadd.f32 0.0, %v9477
    %v9479 = vpop.f32.mrb[0].mxu0
    %v9480 = vpop.f32.mrb[0].mxu0
    %v9481 = vadd.f32 0.0, %v9480
    %v9482 = vpop.f32.mrb[0].mxu0
    %9483 = vmatprep.mubr.bf16.mxu0 0
    %9484 = vmatmul.mubr.bf16.gmra.mrb[0].mxu0 %v9428
    %v9485 = vpop.f32.mrb[0].mxu0
    %v9486 = vadd.f32 0.0, %v9485
    %v9487 = vpop.f32.mrb[0].mxu0
    %v9488 = vpop.f32.mrb[0].mxu0
    %v9489 = vadd.f32 0.0, %v9488
    %v9490 = vpop.f32.mrb[0].mxu0
    %9491 = vmatprep.mubr.bf16.mxu0 0
    %9492 = vmatmul.mubr.bf16.gmra.mrb[0].mxu0 %v9429
    %v9493 = vpop.f32.mrb[0].mxu0
    %v9494 = vadd.f32 0.0, %v9493
    %v9495 = vpop.f32.mrb[0].mxu0
    %v9496 = vpop.f32.mrb[0].mxu0
    %v9497 = vadd.f32 0.0, %v9496
    %v9498 = vpop.f32.mrb[0].mxu0
    %9499 = vmatprep.mubr.bf16.mxu0 0
    %9500 = vmatmul.mubr.bf16.gmra.mrb[0].mxu0 %v9430
    %v9501 = vpop.f32.mrb[0].mxu0
    %v9502 = vadd.f32 0.0, %v9501
    %v9503 = vpop.f32.mrb[0].mxu0
    %v9504 = vpop.f32.mrb[0].mxu0
    %v9505 = vadd.f32 0.0, %v9504
    %v9506 = vpop.f32.mrb[0].mxu0
    %9507 = vmatprep.mubr.bf16.mxu0 0
    %9508 = vmatmul.mubr.bf16.gmra.mrb[0].mxu0 %v9431
    %v9509 = vpop.f32.mrb[0].mxu0
    %v9510 = vadd.f32 0.0, %v9509
    %v9511 = vpop.f32.mrb[0].mxu0
    %v9512 = vpop.f32.mrb[0].mxu0
    %v9513 = vadd.f32 0.0, %v9512
    %v9514 = vpop.f32.mrb[0].mxu0
    %9515 = vmatprep.mubr.bf16.mxu0 0
    %9516 = vmatmul.mubr.bf16.gmra.mrb[0].mxu0 %v9432
    %v9517 = vpop.f32.mrb[0].mxu0
    %v9518 = vadd.f32 0.0, %v9517
    %v9519 = vpop.f32.mrb[0].mxu0
    %v9520 = vpop.f32.mrb[0].mxu0
    %v9521 = vadd.f32 0.0, %v9520
    %v9522 = vpop.f32.mrb[0].mxu0
    %9523 = vmatprep.mubr.bf16.mxu0 0
    %9524 = vmatmul.mubr.bf16.gmra.mrb[0].mxu0 %v9433
    %v9525 = vpop.f32.mrb[0].mxu0
    %v9526 = vadd.f32 0.0, %v9525
    %v9527 = vpop.f32.mrb[0].mxu0
    %v9528 = vpop.f32.mrb[0].mxu0
    %v9529 = vadd.f32 0.0, %v9528
    %v9530 = vpop.f32.mrb[0].mxu0
    %9531 = vmatprep.mubr.bf16.mxu0 0
    %9532 = vmatmul.mubr.bf16.gmra.mrb[0].mxu0 %v9434
    %v9533 = vpop.f32.mrb[0].mxu0
    %v9534 = vadd.f32 0.0, %v9533
    %v9535 = vpop.f32.mrb[0].mxu0
    %v9536 = vpop.f32.mrb[0].mxu0
    %v9537 = vadd.f32 0.0, %v9536
    %v9538 = vpop.f32.mrb[0].mxu0
    %9539 = vdwg.mxu0
    %v9540 = vadd.f32 %v9395, %v9478
    %v9541 = vadd.f32 %v9396, %v9481
    %v9542 = vadd.f32 %v9397, %v9486
    %v9543 = vadd.f32 %v9398, %v9489
    %v9544 = vadd.f32 %v9399, %v9494
    %v9545 = vadd.f32 %v9400, %v9497
    %v9546 = vadd.f32 %v9401, %v9502
    %v9547 = vadd.f32 %v9402, %v9505
    %v9548 = vadd.f32 %v9403, %v9510
    %v9549 = vadd.f32 %v9404, %v9513
    %v9550 = vadd.f32 %v9405, %v9518
    %v9551 = vadd.f32 %v9406, %v9521
    %v9552 = vadd.f32 %v9407, %v9526
    %v9553 = vadd.f32 %v9408, %v9529
    %v9554 = vadd.f32 %v9409, %v9534
    %v9555 = vadd.f32 %v9410, %v9537
    %v9556 = vld [vmem:[%s14] sm:$0x1]
    %v9558 = vlaneseq
    %v9559 = vshrl.u32 %v9558, 7
    %v9560 = vsub.s32 0, %v9559
    %v9561 = vrot.slane %v9556, %v9560
    %v9563 = vadd.f32 %v9540, %v9561
    %v9564 = vadd.f32 %v9541, %v9561
    %v9565 = vadd.f32 %v9542, %v9561
    %v9566 = vadd.f32 %v9543, %v9561
    %v9567 = vadd.f32 %v9544, %v9561
    %v9568 = vadd.f32 %v9545, %v9561
    %v9569 = vadd.f32 %v9546, %v9561
    %v9570 = vadd.f32 %v9547, %v9561
    %v9571 = vadd.f32 %v9548, %v9561
    %v9572 = vadd.f32 %v9549, %v9561
    %v9573 = vadd.f32 %v9550, %v9561
    %v9574 = vadd.f32 %v9551, %v9561
    %v9575 = vadd.f32 %v9552, %v9561
    %v9576 = vadd.f32 %v9553, %v9561
    %v9577 = vadd.f32 %v9554, %v9561
    %v9578 = vadd.f32 %v9555, %v9561
    %v9579 = vmax.f32 %v9563, 0.0
    %v9580 = vmax.f32 %v9564, 0.0
    %v9581 = vmax.f32 %v9565, 0.0
    %v9582 = vmax.f32 %v9566, 0.0
    %v9583 = vmax.f32 %v9567, 0.0
    %v9584 = vmax.f32 %v9568, 0.0
    %v9585 = vmax.f32 %v9569, 0.0
    %v9586 = vmax.f32 %v9570, 0.0
    %v9587 = vmax.f32 %v9571, 0.0
    %v9588 = vmax.f32 %v9572, 0.0
    %v9589 = vmax.f32 %v9573, 0.0
    %v9590 = vmax.f32 %v9574, 0.0
    %v9591 = vmax.f32 %v9575, 0.0
    %v9592 = vmax.f32 %v9576, 0.0
    %v9593 = vmax.f32 %v9577, 0.0
    %v9594 = vmax.f32 %v9578, 0.0
    %9595 = vst [vmem:[#allocation6] sm:$0xff] %v9579
    %9596 = vst [vmem:[#allocation6 + $0x8] sm:$0xff] %v9580
    %9597 = vst [vmem:[#allocation6 + $0x10] sm:$0xff] %v9581
    %9598 = vst [vmem:[#allocation6 + $0x18] sm:$0xff] %v9582
    %9599 = vst [vmem:[#allocation6 + $0x20] sm:$0xff] %v9583
    %9600 = vst [vmem:[#allocation6 + $0x28] sm:$0xff] %v9584
    %9601 = vst [vmem:[#allocation6 + $0x30] sm:$0xff] %v9585
    %9602 = vst [vmem:[#allocation6 + $0x38] sm:$0xff] %v9586
    %9603 = vst [vmem:[#allocation6 + $0x40] sm:$0xff] %v9587
    %9604 = vst [vmem:[#allocation6 + $0x48] sm:$0xff] %v9588
    %9605 = vst [vmem:[#allocation6 + $0x50] sm:$0xff] %v9589
    %9606 = vst [vmem:[#allocation6 + $0x58] sm:$0xff] %v9590
    %9607 = vst [vmem:[#allocation6 + $0x60] sm:$0xff] %v9591
    %9608 = vst [vmem:[#allocation6 + $0x68] sm:$0xff] %v9592
    %9609 = vst [vmem:[#allocation6 + $0x70] sm:$0xff] %v9593
    %9610 = vst [vmem:[#allocation6 + $0x78] sm:$0xff] %v9594
    %v9611 = vld [vmem:[#allocation6] ss:$2 sm:$0xf]
    %s9612 = scalar_lea.vmem [#allocation6], 8
    %v9613 = vld [vmem:[%s9612] ss:$2 sm:$0xf]
    %s9614 = scalar_lea.vmem [#allocation6], 16
    %v9615 = vld [vmem:[%s9614] ss:$2 sm:$0xf]
    %s9616 = scalar_lea.vmem [#allocation6], 24
    %v9617 = vld [vmem:[%s9616] ss:$2 sm:$0xf]
    %s9618 = scalar_lea.vmem [#allocation6], 32
    %v9619 = vld [vmem:[%s9618] ss:$2 sm:$0xf]
    %s9620 = scalar_lea.vmem [#allocation6], 40
    %v9621 = vld [vmem:[%s9620] ss:$2 sm:$0xf]
    %s9622 = scalar_lea.vmem [#allocation6], 48
    %v9623 = vld [vmem:[%s9622] ss:$2 sm:$0xf]
    %s9624 = scalar_lea.vmem [#allocation6], 56
    %v9625 = vld [vmem:[%s9624] ss:$2 sm:$0xf]
    %s9626 = scalar_lea.vmem [#allocation6], 64
    %v9627 = vld [vmem:[%s9626] ss:$2 sm:$0xf]
    %s9628 = scalar_lea.vmem [#allocation6], 72
    %v9629 = vld [vmem:[%s9628] ss:$2 sm:$0xf]
    %s9630 = scalar_lea.vmem [#allocation6], 80
    %v9631 = vld [vmem:[%s9630] ss:$2 sm:$0xf]
    %s9632 = scalar_lea.vmem [#allocation6], 88
    %v9633 = vld [vmem:[%s9632] ss:$2 sm:$0xf]
    %s9634 = scalar_lea.vmem [#allocation6], 96
    %v9635 = vld [vmem:[%s9634] ss:$2 sm:$0xf]
    %s9636 = scalar_lea.vmem [#allocation6], 104
    %v9637 = vld [vmem:[%s9636] ss:$2 sm:$0xf]
    %s9638 = scalar_lea.vmem [#allocation6], 112
    %v9639 = vld [vmem:[%s9638] ss:$2 sm:$0xf]
    %s9640 = scalar_lea.vmem [#allocation6], 120
    %v9641 = vld [vmem:[%s9640] ss:$2 sm:$0xf]
    %s9642 = scalar_lea.vmem [#allocation6], 1
    %v9643 = vld [vmem:[%s9642] ss:$2 sm:$0xf]
    %s9644 = scalar_lea.vmem [#allocation6], 9
    %v9645 = vld [vmem:[%s9644] ss:$2 sm:$0xf]
    %s9646 = scalar_lea.vmem [#allocation6], 17
    %v9647 = vld [vmem:[%s9646] ss:$2 sm:$0xf]
    %s9648 = scalar_lea.vmem [#allocation6], 25
    %v9649 = vld [vmem:[%s9648] ss:$2 sm:$0xf]
    %s9650 = scalar_lea.vmem [#allocation6], 33
    %v9651 = vld [vmem:[%s9650] ss:$2 sm:$0xf]
    %s9652 = scalar_lea.vmem [#allocation6], 41
    %v9653 = vld [vmem:[%s9652] ss:$2 sm:$0xf]
    %s9654 = scalar_lea.vmem [#allocation6], 49
    %v9655 = vld [vmem:[%s9654] ss:$2 sm:$0xf]
    %s9656 = scalar_lea.vmem [#allocation6], 57
    %v9657 = vld [vmem:[%s9656] ss:$2 sm:$0xf]
    %s9658 = scalar_lea.vmem [#allocation6], 65
    %v9659 = vld [vmem:[%s9658] ss:$2 sm:$0xf]
    %s9660 = scalar_lea.vmem [#allocation6], 73
    %v9661 = vld [vmem:[%s9660] ss:$2 sm:$0xf]
    %s9662 = scalar_lea.vmem [#allocation6], 81
    %v9663 = vld [vmem:[%s9662] ss:$2 sm:$0xf]
    %s9664 = scalar_lea.vmem [#allocation6], 89
    %v9665 = vld [vmem:[%s9664] ss:$2 sm:$0xf]
    %s9666 = scalar_lea.vmem [#allocation6], 97
    %v9667 = vld [vmem:[%s9666] ss:$2 sm:$0xf]
    %s9668 = scalar_lea.vmem [#allocation6], 105
    %v9669 = vld [vmem:[%s9668] ss:$2 sm:$0xf]
    %s9670 = scalar_lea.vmem [#allocation6], 113
    %v9671 = vld [vmem:[%s9670] ss:$2 sm:$0xf]
    %s9672 = scalar_lea.vmem [#allocation6], 121
    %v9673 = vld [vmem:[%s9672] ss:$2 sm:$0xf]
    %v9674 = vmax.f32 %v9611, %v9643
    %v9675 = vmax.f32 %v9613, %v9645
    %v9676 = vmax.f32 %v9615, %v9647
    %v9677 = vmax.f32 %v9617, %v9649
    %v9678 = vmax.f32 %v9619, %v9651
    %v9679 = vmax.f32 %v9621, %v9653
    %v9680 = vmax.f32 %v9623, %v9655
    %v9681 = vmax.f32 %v9625, %v9657
    %v9682 = vmax.f32 %v9627, %v9659
    %v9683 = vmax.f32 %v9629, %v9661
    %v9684 = vmax.f32 %v9631, %v9663
    %v9685 = vmax.f32 %v9633, %v9665
    %v9686 = vmax.f32 %v9635, %v9667
    %v9687 = vmax.f32 %v9637, %v9669
    %v9688 = vmax.f32 %v9639, %v9671
    %v9689 = vmax.f32 %v9641, %v9673
    %v9690 = vmax.f32 %v9674, %v9675
    %v9691 = vmax.f32 %v9676, %v9677
    %v9692 = vmax.f32 %v9678, %v9679
    %v9693 = vmax.f32 %v9680, %v9681
    %v9694 = vmax.f32 %v9682, %v9683
    %v9695 = vmax.f32 %v9684, %v9685
    %v9696 = vmax.f32 %v9686, %v9687
    %v9697 = vmax.f32 %v9688, %v9689
    %v9698 = vsel %vm632, %v9690, 0.0
    %v9699 = vsel %vm632, %v9691, 0.0
    %v9700 = vadd.f32 %v9698, %v9699
    %v9701 = vsel %vm632, %v9692, 0.0
    %v9702 = vadd.f32 %v9700, %v9701
    %v9703 = vsel %vm632, %v9693, 0.0
    %v9704 = vadd.f32 %v9702, %v9703
    %v9705 = vsel %vm632, %v9694, 0.0
    %v9706 = vsel %vm632, %v9695, 0.0
    %v9707 = vadd.f32 %v9705, %v9706
    %v9708 = vsel %vm632, %v9696, 0.0
    %v9709 = vadd.f32 %v9707, %v9708
    %v9710 = vsel %vm632, %v9697, 0.0
    %v9711 = vadd.f32 %v9709, %v9710
    %v9712 = vsel %vm632, %v9704, 0.0
    %v9713 = vrot.slane %v9712, 4
    %v9714 = vadd.f32 %v9712, %v9713
    %v9715 = vrot.slane %v9714, 2
    %v9716 = vadd.f32 %v9714, %v9715
    %v9717 = vrot.slane %v9716, 1
    %v9718 = vadd.f32 %v9716, %v9717
    %v9719 = vsel %vm632, %v9711, 0.0
    %v9720 = vrot.slane %v9719, 4
    %v9721 = vadd.f32 %v9719, %v9720
    %v9722 = vrot.slane %v9721, 2
    %v9723 = vadd.f32 %v9721, %v9722
    %v9724 = vrot.slane %v9723, 1
    %v9725 = vadd.f32 %v9723, %v9724
    %v9726 = vmul.f32 %v9718, 0.0625
    %v9727 = vmul.f32 %v9725, 0.0625
    %v9728 = vld [vmem:[%s15] sm:$0xff]
    %v9729 = vld [vmem:[%s15 + $0x8] sm:$0xff]
    %v9730 = vld [vmem:[%s15 + $0x10] sm:$0xff]
    %v9731 = vld [vmem:[%s15 + $0x18] sm:$0xff]
    %v9732 = vld [vmem:[%s15 + $0x20] sm:$0xff]
    %v9733 = vld [vmem:[%s15 + $0x28] sm:$0xff]
    %v9734 = vld [vmem:[%s15 + $0x30] sm:$0xff]
    %v9735 = vld [vmem:[%s15 + $0x38] sm:$0xff]
    %v9736 = vld [vmem:[%s15 + $0x40] sm:$0xff]
    %v9737 = vld [vmem:[%s15 + $0x48] sm:$0xff]
    %v9738 = vld [vmem:[%s15 + $0x50] sm:$0xff]
    %v9739 = vld [vmem:[%s15 + $0x58] sm:$0xff]
    %v9740 = vld [vmem:[%s15 + $0x60] sm:$0xff]
    %v9741 = vld [vmem:[%s15 + $0x68] sm:$0xff]
    %v9742 = vld [vmem:[%s15 + $0x70] sm:$0xff]
    %v9743 = vld [vmem:[%s15 + $0x78] sm:$0xff]
    %v9744 = vld [vmem:[%s16] sm:$0x1]
    %v9746 = vlaneseq
    %v9747 = vshrl.u32 %v9746, 7
    %v9748 = vsub.s32 0, %v9747
    %v9749 = vrot.slane %v9744, %v9748
    %vm9753 = vcmask 1041409
    %v9754 = vsel %vm9753, %v9727, %v9726
    %9756 = vmatprep.subr.mxu0 0.0
    %9757 = vmatpush1.msra.mxu0 %v9728
    %9758 = vmatprep.subr.mxu0 0.0
    %9759 = vmatpush1.msra.mxu0 %v9729
    %9760 = vmatprep.subr.mxu0 0.0
    %9761 = vmatpush1.msra.mxu0 %v9730
    %9762 = vmatprep.subr.mxu0 0.0
    %9763 = vmatpush1.msra.mxu0 %v9731
    %9764 = vmatprep.subr.mxu0 0.0
    %9765 = vmatpush1.msra.mxu0 %v9732
    %9766 = vmatprep.subr.mxu0 0.0
    %9767 = vmatpush1.msra.mxu0 %v9733
    %9768 = vmatprep.subr.mxu0 0.0
    %9769 = vmatpush1.msra.mxu0 %v9734
    %9770 = vmatprep.subr.mxu0 0.0
    %9771 = vmatpush1.msra.mxu0 %v9735
    %9772 = vmatprep.subr.mxu0 0.0
    %9773 = vmatpush1.msra.mxu0 %v9736
    %9774 = vmatprep.subr.mxu0 0.0
    %9775 = vmatpush1.msra.mxu0 %v9737
    %9776 = vmatprep.subr.mxu0 0.0
    %9777 = vmatpush1.msra.mxu0 %v9738
    %9778 = vmatprep.subr.mxu0 0.0
    %9779 = vmatpush1.msra.mxu0 %v9739
    %9780 = vmatprep.subr.mxu0 0.0
    %9781 = vmatpush1.msra.mxu0 %v9740
    %9782 = vmatprep.subr.mxu0 0.0
    %9783 = vmatpush1.msra.mxu0 %v9741
    %9784 = vmatprep.subr.mxu0 0.0
    %9785 = vmatpush1.msra.mxu0 %v9742
    %9786 = vmatprep.subr.mxu0 0.0
    %9787 = vmatpush1.msra.mxu0 %v9743
    %9788 = vmatprep.subr.mxu0 0.0
    %9789 = vmatpush1.msra.mxu0 0.0
    %9790 = vmatprep.subr.mxu0 0.0
    %9791 = vmatpush1.msra.mxu0 0.0
    %9792 = vmatprep.subr.mxu0 0.0
    %9793 = vmatpush1.msra.mxu0 0.0
    %9794 = vmatprep.subr.mxu0 0.0
    %9795 = vmatpush1.msra.mxu0 0.0
    %9796 = vmatprep.subr.mxu0 0.0
    %9797 = vmatpush1.msra.mxu0 0.0
    %9798 = vmatprep.subr.mxu0 0.0
    %9799 = vmatpush1.msra.mxu0 0.0
    %9800 = vmatprep.subr.mxu0 0.0
    %9801 = vmatpush1.msra.mxu0 0.0
    %9802 = vmatprep.subr.mxu0 0.0
    %9803 = vmatpush1.msra.mxu0 0.0
    %9804 = vmatprep.subr.mxu0 0.0
    %9805 = vmatpush1.msra.mxu0 0.0
    %9806 = vmatprep.subr.mxu0 0.0
    %9807 = vmatpush1.msra.mxu0 0.0
    %9808 = vmatprep.subr.mxu0 0.0
    %9809 = vmatpush1.msra.mxu0 0.0
    %9810 = vmatprep.subr.mxu0 0.0
    %9811 = vmatpush1.msra.mxu0 0.0
    %9812 = vmatprep.subr.mxu0 0.0
    %9813 = vmatpush1.msra.mxu0 0.0
    %9814 = vmatprep.subr.mxu0 0.0
    %9815 = vmatpush1.msra.mxu0 0.0
    %9816 = vmatprep.subr.mxu0 0.0
    %9817 = vmatpush1.msra.mxu0 0.0
    %9818 = vmatprep.subr.mxu0 0.0
    %9819 = vmatpush1.msra.mxu0 0.0
    %9820 = vmatprep.mubr.f32.mxu0 0.0
    %9821 = vmatmul.mubr.f32.gmra.mrb[0].mxu0 %v9754
    %v9822 = vpop.f32.mrb[0].mxu0
    %v9823 = vadd.f32 %v9749, %v9822
    %v9824 = vpop.f32.mrb[0].mxu0
    %9825 = vdwg.mxu0
    %vm9826 = vcmask 74752
    %v9827 = vsel %vm9826, %v9823, -inf
    %9828 = vmax.xlane.f32.xlu0 %v9827
    %v9829 = vpop.xlane.xlu0 %9828
    %v9830 = vsub.f32 %v9823, %v9829
    %v9831 = vmul.f32 %v9830, 1.442695
    %v9832 = vpow.pop %v9831
    %v9833 = vsel %vm9826, %v9832, 0.0
    %9834 = vadd.xlane.f32.xlu0 %v9833
    %v9835 = vpop.xlane.xlu0 %9834
    %v9836 = vrcp.pop %v9835
    %v9837 = vmul.f32 %v9832, %v9836
    %9838 = vst.msk [vmem:[#allocation10] sm:$0x3] %vm9826, %v9837
    // Predicated region
    $region130: #{fcnn_forward.1} parent=1 // pred_check
      _
    $region131: #{fcnn_forward.1} parent=1 // pred_check_branch
      %9840 = sbr.rel (0) target = $region133
    $region132: #{fcnn_forward.1} parent=1 // pred_region
      %s9842 = ssub.s32 32, 32
      %9843 = vsyncadd [#allocation11], %s9842
      %s9845 = sshll.u32 [#allocation10], 4
      %s9846 = int_to_ptr.vmem [resolvable:$true] %s9845
      %9848 = dma.vmem_to_hbm [thread:$0]  %s9846, 32, %s17, [#allocation11]
    $region133: #{fcnn_forward.1} parent=1 // pred_fallthru
      _
    // Predicated region
    $region134: #{fcnn_forward.1} parent=1 // pred_check
      _
    $region135: #{fcnn_forward.1} parent=1 // pred_check_branch
      %9850 = sbr.rel (0) target = $region137
    $region136: #{fcnn_forward.1} parent=1 // pred_region
      %9851 = dma.done [#allocation11], 32
    $region137: #{fcnn_forward.1} parent=1 // pred_fallthru
      _
    %9852 = vsyncpa [#allocation11], 1
  %9853 = vsyncmov [#allocation9]
  %s9854 = vpop.sfrf %9853
  %p9855 = scmp.eq.s32.totalorder %s9854, 0
  %p9856 = pneg %p9855
  %9858 = shalt.err (%p9856)
  %s9859 = scalar_lea.sflag [#allocation9], 1
  %9860 = vsyncmov %s9859
  %s9861 = vpop.sfrf %9860
  %p9862 = scmp.eq.s32.totalorder %s9861, 0
  %p9863 = pneg %p9862
  %9865 = shalt.err (%p9863)

</llo_original>
